<compile_context>
chip_gen: v7x
topology: tpu7x:2x2x1
jax: 0.10.0
libtpu: 0.0.40
codegen_flags: <defaults>
</compile_context>

<pallas_src>
import jax
import jax.numpy as jnp
from jax import lax
from jax.experimental import pallas as pl
from jax.experimental.pallas import tpu as pltpu


def _sigmoid(z):
    # sigmoid(z) == 0.5 * (tanh(z/2) + 1); tanh lowers to the EUP slot.
    return 0.5 * (jnp.tanh(0.5 * z) + 1.0)


# ---------------------------------------------------------------------------
# Host-side tables for the MXU formulation of the 7x7x7 spatial conv.
# ---------------------------------------------------------------------------
def _spatial_conv_tables(wconv, D, H, W):
    """at[kh*K+kw, d, c*D+dd] = wconv[0, c, dd-d+K//2, kh, kw] (0 if kd o.o.r.)
    masks[kh*K+kw, 0, h*W+w]  = 1 iff (h+kh-K//2, w+kw-K//2) is inside the volume."""
    K = wconv.shape[-1]
    w = wconv.astype(jnp.float32)[0]                                   # (2, K, K, K)

    d_out = jnp.arange(D)[:, None]
    d_in = jnp.arange(D)[None, :]
    kd = d_in - d_out + K // 2                                         # (D, D)
    valid = ((kd >= 0) & (kd < K)).astype(jnp.float32)
    taps = w[:, jnp.clip(kd, 0, K - 1), :, :]                          # (2, D, D, K, K)
    taps = taps * valid[None, :, :, None, None]
    at = jnp.transpose(taps, (3, 4, 1, 0, 2)).reshape(K * K, D, 2 * D)  # (K*K, D, 2D)

    off = jnp.arange(K) - K // 2
    h_ok = (jnp.arange(H)[None, :] + off[:, None] >= 0) & (jnp.arange(H)[None, :] + off[:, None] < H)
    w_ok = (jnp.arange(W)[None, :] + off[:, None] >= 0) & (jnp.arange(W)[None, :] + off[:, None] < W)
    masks = (h_ok[:, None, :, None] & w_ok[None, :, None, :]).astype(jnp.float32)  # (K, K, H, W)
    masks = masks.reshape(K * K, 1, H * W)
    return at, masks


# ---------------------------------------------------------------------------
# Fused CBAM kernel (one batch element per grid step).
# ---------------------------------------------------------------------------
def _make_cbam_kernel(D, H, W, K, pad):
    HW = H * W

    def kernel(x_ref, w1_ref, b1_ref, w2_ref, b2_ref, at_ref, mask_ref,
               out_ref, mlp_scr, pb_scr, sc_scr):
        # ---------------- channel gate (shared MLP on avg|max pools) --------
        x = x_ref[0]                                            # (C, S) f32, lane-dense
        mlp_scr[:, 0:1] = jnp.mean(x, axis=1, keepdims=True)    # F.avg_pool3d
        mlp_scr[:, 1:2] = jnp.max(x, axis=1, keepdims=True)     # F.max_pool3d
        pools = mlp_scr[...]                                    # (C, 2): both pools in one MLP pass
        h = jnp.dot(w1_ref[...], pools, preferred_element_type=jnp.float32) + b1_ref[...]
        h = jnp.maximum(h, 0.0)                                 # ReLU
        att2 = jnp.dot(w2_ref[...], h, preferred_element_type=jnp.float32) + b2_ref[...]
        att = att2[:, 0:1] + att2[:, 1:2]                       # avg-branch + max-branch
        cg = _sigmoid(att)                                      # (C, 1)
        xc = x * cg                                             # channel-gated features (C, S)

        # ------------- channel pool into a zero-padded row buffer -----------
        pmax = jnp.max(xc, axis=0, keepdims=True)               # (1, S)  ChannelPool max
        pmean = jnp.mean(xc, axis=0, keepdims=True)             # (1, S)  ChannelPool mean
        pb_scr[...] = jnp.zeros(pb_scr.shape, jnp.float32)      # zero bands = conv padding
        for d in range(D):                                      # rows 0..D-1: max, D..2D-1: mean
            pb_scr[d:d + 1, pad:pad + HW] = pmax[:, d * HW:(d + 1) * HW]
            pb_scr[D + d:D + d + 1, pad:pad + HW] = pmean[:, d * HW:(d + 1) * HW]
        pbw = pb_scr[...]                                       # (2D, HW + 2*pad)

        # ------------- 7x7x7 conv as K*K small MXU matmuls ------------------
        acc = jnp.zeros((D, HW), jnp.float32)
        k = 0
        for kh in range(K):                                     # fully unrolled
            for kw in range(K):
                delta = (kh - K // 2) * W + (kw - K // 2)       # flat (h, w) lane shift
                sh = pbw[:, pad + delta:pad + delta + HW]       # (2D, HW) shifted taps
                acc = acc + jnp.dot(at_ref[k], sh,
                                    preferred_element_type=jnp.float32) * mask_ref[k]
                k += 1

        # InstanceNorm3d(1, affine=False, eps=1e-5) over the D*H*W positions.
        mu = jnp.mean(acc)
        var = jnp.mean((acc - mu) ** 2)
        y = jnp.maximum((acc - mu) * lax.rsqrt(var + 1e-5), 0.0)  # BasicConv ReLU
        sg = _sigmoid(y)                                          # (D, HW) spatial gate

        # ------------- spatial gate multiply, lane-dense (C, S) store -------
        for d in range(D):
            sc_scr[:, d * HW:(d + 1) * HW] = sg[d:d + 1, :]       # flatten to (1, S)
        out_ref[0] = (xc * sc_scr[...]).astype(out_ref.dtype)

    return kernel


# ---------------------------------------------------------------------------
# Wrapper
# ---------------------------------------------------------------------------
def cbam_forward(x, w1, b1, w2, b2, wconv):
    """x: (N, C, D, H, W) f32.  Parameters in PyTorch convention:
    w1: (C//r, C), b1: (C//r,), w2: (C, C//r), b2: (C,), wconv: (1, 2, 7, 7, 7)."""
    N, C, D, H, W = x.shape
    S = D * H * W
    HW = H * W
    K = wconv.shape[-1]
    Ch = w1.shape[0]
    pad = (K // 2) * W + (K // 2)        # max |lane shift| over all (kh, kw) taps

    x2 = x.reshape(N, C, S).astype(jnp.float32)                 # lane-dense layout (free reshape)
    at, masks = _spatial_conv_tables(wconv, D, H, W)

    out = pl.pallas_call(
        _make_cbam_kernel(D, H, W, K, pad),
        grid=(N,),
        in_specs=[
            pl.BlockSpec((1, C, S), lambda n: (n, 0, 0)),
            pl.BlockSpec((Ch, C), lambda n: (0, 0)),
            pl.BlockSpec((Ch, 1), lambda n: (0, 0)),
            pl.BlockSpec((C, Ch), lambda n: (0, 0)),
            pl.BlockSpec((C, 1), lambda n: (0, 0)),
            pl.BlockSpec((K * K, D, 2 * D), lambda n: (0, 0, 0)),
            pl.BlockSpec((K * K, 1, HW), lambda n: (0, 0, 0)),
        ],
        out_specs=pl.BlockSpec((1, C, S), lambda n: (n, 0, 0)),
        out_shape=jax.ShapeDtypeStruct((N, C, S), jnp.float32),
        scratch_shapes=[
            pltpu.VMEM((C, 2), jnp.float32),                    # (avg|max) pooled MLP input
            pltpu.VMEM((2 * D, HW + 2 * pad), jnp.float32),     # zero-padded channel-pool rows
            pltpu.VMEM((1, S), jnp.float32),                    # flattened spatial-gate scale
        ],
        # At this toy size each (1, C, S) block is ~64 KiB, so the default VMEM
        # budget is ample on v5e/v6e/v7x.  At production sizes add an S-tile
        # grid axis (accumulating the pools with pl.when) and raise
        # vmem_limit_bytes here.
        compiler_params=pltpu.CompilerParams(dimension_semantics=("parallel",)),
    )(x2, w1.astype(jnp.float32), b1.reshape(Ch, 1).astype(jnp.float32),
      w2.astype(jnp.float32), b2.reshape(C, 1).astype(jnp.float32), at, masks)
    return out.reshape(N, C, D, H, W)


# ---------------------------------------------------------------------------
# Pure-JAX reference (mirrors the PyTorch forward) for a sanity check.
# ---------------------------------------------------------------------------
def cbam_reference(x, w1, b1, w2, b2, wconv):
    N, C, D, H, W = x.shape
    avg = x.mean(axis=(2, 3, 4))
    mx = x.max(axis=(2, 3, 4))

    def mlp(p):
        h = jnp.maximum(p @ w1.T + b1, 0.0)
        return h @ w2.T + b2

    scale = jax.nn.sigmoid(mlp(avg) + mlp(mx))[:, :, None, None, None]
    xc = x * scale
    pooled = jnp.stack([xc.max(axis=1), xc.mean(axis=1)], axis=1)        # (N,2,D,H,W)
    y = lax.conv_general_dilated(
        pooled, wconv, window_strides=(1, 1, 1), padding=[(3, 3)] * 3,
        dimension_numbers=("NCDHW", "OIDHW", "NCDHW"),
        precision=lax.Precision.HIGHEST)                                  # (N,1,D,H,W)
    mu = y.mean(axis=(2, 3, 4), keepdims=True)
    var = ((y - mu) ** 2).mean(axis=(2, 3, 4), keepdims=True)
    y = (y - mu) * lax.rsqrt(var + 1e-5)
    y = jnp.maximum(y, 0.0)
    return xc * jax.nn.sigmoid(y)


if __name__ == "__main__":
    # gate_channels=32, reduction_ratio=16 -> hidden=2 ; spatial 8x8x8, batch 2
    # (N=2 also keeps both v7x TensorCores busy via the "parallel" grid axis).
    N, C, D, H, W = 2, 32, 8, 8, 8
    Ch = C // 16

    key = jax.random.PRNGKey(0)
    kx, k1, k2, k3, k4, k5 = jax.random.split(key, 6)
    x = jax.random.normal(kx, (N, C, D, H, W), jnp.float32)
    w1 = jax.random.normal(k1, (Ch, C), jnp.float32) * (1.0 / jnp.sqrt(C))
    b1 = jax.random.normal(k2, (Ch,), jnp.float32) * 0.1
    w2 = jax.random.normal(k3, (C, Ch), jnp.float32) * (1.0 / jnp.sqrt(Ch))
    b2 = jax.random.normal(k4, (C,), jnp.float32) * 0.1
    wconv = jax.random.normal(k5, (1, 2, 7, 7, 7), jnp.float32) * (1.0 / jnp.sqrt(2 * 7 * 7 * 7))

    out = jax.block_until_ready(cbam_forward(x, w1, b1, w2, b2, wconv))
    ref = jax.block_until_ready(cbam_reference(x, w1, b1, w2, b2, wconv))

    assert out.shape == (N, C, D, H, W)
    max_err = float(jnp.max(jnp.abs(out - ref)))
    # 2e-3: the 7x7x7 conv now accumulates on the MXU, whose rounding /
    # accumulation order differs from the HIGHEST-precision lax.conv reference.
    assert max_err < 2e-3, f"mismatch vs reference: {max_err}"
    print("KERNEL_OK")
</pallas_src>

<mosaic_0001>
module attributes {stable_mosaic.version = 11 : i64} {
  func.func @kernel(%arg0: i32, %arg1: memref<1x32x512xf32, #tpu.memory_space<vmem>>, %arg2: memref<2x32xf32, #tpu.memory_space<vmem>>, %arg3: memref<2x1xf32, #tpu.memory_space<vmem>>, %arg4: memref<32x2xf32, #tpu.memory_space<vmem>>, %arg5: memref<32x1xf32, #tpu.memory_space<vmem>>, %arg6: memref<49x8x16xf32, #tpu.memory_space<vmem>>, %arg7: memref<49x1x64xf32, #tpu.memory_space<vmem>>, %arg8: memref<1x32x512xf32, #tpu.memory_space<vmem>>, %arg9: memref<32x2xf32, #tpu.memory_space<vmem>>, %arg10: memref<16x118xf32, #tpu.memory_space<vmem>>, %arg11: memref<1x512xf32, #tpu.memory_space<vmem>>) attributes {dimension_semantics = [#tpu.dimension_semantics<parallel>], iteration_bounds = array<i64: 2>, scalar_prefetch = 0 : i64, scratch_operands = 3 : i64, tpu.core_type = #tpu.core_type<tc>, window_params = [{transform_indices = @transform_0, window_bounds = array<i64: 1, 32, 512>}, {pipeline_mode = #tpu.pipeline_mode<synchronous>, transform_indices = @transform_1, window_bounds = array<i64: 2, 32>}, {pipeline_mode = #tpu.pipeline_mode<synchronous>, transform_indices = @transform_2, window_bounds = array<i64: 2, 1>}, {pipeline_mode = #tpu.pipeline_mode<synchronous>, transform_indices = @transform_3, window_bounds = array<i64: 32, 2>}, {pipeline_mode = #tpu.pipeline_mode<synchronous>, transform_indices = @transform_4, window_bounds = array<i64: 32, 1>}, {pipeline_mode = #tpu.pipeline_mode<synchronous>, transform_indices = @transform_5, window_bounds = array<i64: 49, 8, 16>}, {pipeline_mode = #tpu.pipeline_mode<synchronous>, transform_indices = @transform_6, window_bounds = array<i64: 49, 1, 64>}, {transform_indices = @transform_7, window_bounds = array<i64: 1, 32, 512>}]} {
    %c0 = arith.constant 0 : index
    %c0_0 = arith.constant 0 : index
    %c0_1 = arith.constant 0 : index
    %0 = vector.load %arg1[%c0, %c0_0, %c0_1] : memref<1x32x512xf32, #tpu.memory_space<vmem>>, vector<1x32x512xf32>
    %1 = vector.shape_cast %0 : vector<1x32x512xf32> to vector<32x512xf32>
    %cst = arith.constant dense<0.000000e+00> : vector<32xf32>
    %2 = vector.multi_reduction <add>, %1, %cst [1] : vector<32x512xf32> to vector<32xf32>
    %3 = vector.shape_cast %2 : vector<32xf32> to vector<32x1xf32>
    %cst_2 = arith.constant 5.120000e+02 : f32
    %4 = vector.broadcast %cst_2 : f32 to vector<32x1xf32>
    %5 = arith.divf %3, %4 : vector<32x1xf32>
    %c0_3 = arith.constant 0 : index
    %c0_4 = arith.constant 0 : index
    %6 = vector.load %arg9[%c0_3, %c0_4] : memref<32x2xf32, #tpu.memory_space<vmem>>, vector<32x1xf32>
    tpu.vector_store %arg9[%c0_3, %c0_4], %5 {strides = array<i32>} : memref<32x2xf32, #tpu.memory_space<vmem>>, vector<32x1xf32>,
    %cst_5 = arith.constant dense<0xFF800000> : vector<32xf32>
    %7 = vector.multi_reduction <maximumf>, %1, %cst_5 [1] : vector<32x512xf32> to vector<32xf32>
    %8 = vector.shape_cast %7 : vector<32xf32> to vector<32x1xf32>
    %c0_6 = arith.constant 0 : index
    %c1 = arith.constant 1 : index
    %9 = vector.load %arg9[%c0_6, %c1] : memref<32x2xf32, #tpu.memory_space<vmem>>, vector<32x1xf32>
    tpu.vector_store %arg9[%c0_6, %c1], %8 {strides = array<i32>} : memref<32x2xf32, #tpu.memory_space<vmem>>, vector<32x1xf32>,
    %c0_7 = arith.constant 0 : index
    %c0_8 = arith.constant 0 : index
    %10 = vector.load %arg9[%c0_7, %c0_8] : memref<32x2xf32, #tpu.memory_space<vmem>>, vector<32x2xf32>
    %c0_9 = arith.constant 0 : index
    %c0_10 = arith.constant 0 : index
    %11 = vector.load %arg2[%c0_9, %c0_10] : memref<2x32xf32, #tpu.memory_space<vmem>>, vector<2x32xf32>
    %cst_11 = arith.constant dense<0.000000e+00> : vector<2x2xf32>
    %12 = tpu.matmul %11, %10, %cst_11 {dimension_numbers = #tpu.dot_dimension_numbers<[1], [0], [0], [1], [0, 0, 1, 1], [], []>} : vector<2x32xf32>, vector<32x2xf32>, vector<2x2xf32> -> vector<2x2xf32>
    %c0_12 = arith.constant 0 : index
    %c0_13 = arith.constant 0 : index
    %13 = vector.load %arg3[%c0_12, %c0_13] : memref<2x1xf32, #tpu.memory_space<vmem>>, vector<2x1xf32>
    %14 = vector.broadcast %13 : vector<2x1xf32> to vector<2x2xf32>
    %15 = arith.addf %12, %14 : vector<2x2xf32>
    %cst_14 = arith.constant 0.000000e+00 : f32
    %16 = vector.broadcast %cst_14 : f32 to vector<2x2xf32>
    %17 = arith.maximumf %15, %16 : vector<2x2xf32>
    %c0_15 = arith.constant 0 : index
    %c0_16 = arith.constant 0 : index
    %18 = vector.load %arg4[%c0_15, %c0_16] : memref<32x2xf32, #tpu.memory_space<vmem>>, vector<32x2xf32>
    %cst_17 = arith.constant dense<0.000000e+00> : vector<32x2xf32>
    %19 = tpu.matmul %18, %17, %cst_17 {dimension_numbers = #tpu.dot_dimension_numbers<[1], [0], [0], [1], [0, 0, 1, 1], [], []>} : vector<32x2xf32>, vector<2x2xf32>, vector<32x2xf32> -> vector<32x2xf32>
    %c0_18 = arith.constant 0 : index
    %c0_19 = arith.constant 0 : index
    %20 = vector.load %arg5[%c0_18, %c0_19] : memref<32x1xf32, #tpu.memory_space<vmem>>, vector<32x1xf32>
    %21 = vector.broadcast %20 : vector<32x1xf32> to vector<32x2xf32>
    %22 = arith.addf %19, %21 : vector<32x2xf32>
    %23 = vector.extract_strided_slice %22 {offsets = [0, 0], sizes = [32, 1], strides = [1, 1]} : vector<32x2xf32> to vector<32x1xf32>
    %24 = vector.extract_strided_slice %22 {offsets = [0, 1], sizes = [32, 1], strides = [1, 1]} : vector<32x2xf32> to vector<32x1xf32>
    %25 = arith.addf %23, %24 : vector<32x1xf32>
    %cst_20 = arith.constant 5.000000e-01 : f32
    %26 = vector.broadcast %cst_20 : f32 to vector<32x1xf32>
    %27 = arith.mulf %26, %25 : vector<32x1xf32>
    %28 = math.tanh %27 : vector<32x1xf32>
    %cst_21 = arith.constant 1.000000e+00 : f32
    %29 = vector.broadcast %cst_21 : f32 to vector<32x1xf32>
    %30 = arith.addf %28, %29 : vector<32x1xf32>
    %cst_22 = arith.constant 5.000000e-01 : f32
    %31 = vector.broadcast %cst_22 : f32 to vector<32x1xf32>
    %32 = arith.mulf %31, %30 : vector<32x1xf32>
    %33 = vector.broadcast %32 : vector<32x1xf32> to vector<32x512xf32>
    %34 = arith.mulf %1, %33 : vector<32x512xf32>
    %cst_23 = arith.constant dense<0xFF800000> : vector<512xf32>
    %35 = vector.multi_reduction <maximumf>, %34, %cst_23 [0] : vector<32x512xf32> to vector<512xf32>
    %36 = vector.shape_cast %35 : vector<512xf32> to vector<1x512xf32>
    %cst_24 = arith.constant dense<0.000000e+00> : vector<512xf32>
    %37 = vector.multi_reduction <add>, %34, %cst_24 [0] : vector<32x512xf32> to vector<512xf32>
    %38 = vector.shape_cast %37 : vector<512xf32> to vector<1x512xf32>
    %cst_25 = arith.constant 3.200000e+01 : f32
    %39 = vector.broadcast %cst_25 : f32 to vector<1x512xf32>
    %40 = arith.divf %38, %39 : vector<1x512xf32>
    %cst_26 = arith.constant 0.000000e+00 : f32
    %41 = vector.broadcast %cst_26 : f32 to vector<16x118xf32>
    %c0_27 = arith.constant 0 : index
    %c0_28 = arith.constant 0 : index
    %42 = vector.load %arg10[%c0_27, %c0_28] : memref<16x118xf32, #tpu.memory_space<vmem>>, vector<16x118xf32>
    tpu.vector_store %arg10[%c0_27, %c0_28], %41 {strides = array<i32>} : memref<16x118xf32, #tpu.memory_space<vmem>>, vector<16x118xf32>,
    %43 = vector.extract_strided_slice %36 {offsets = [0, 0], sizes = [1, 64], strides = [1, 1]} : vector<1x512xf32> to vector<1x64xf32>
    %c0_29 = arith.constant 0 : index
    %c27 = arith.constant 27 : index
    %44 = vector.load %arg10[%c0_29, %c27] : memref<16x118xf32, #tpu.memory_space<vmem>>, vector<1x64xf32>
    tpu.vector_store %arg10[%c0_29, %c27], %43 {strides = array<i32>} : memref<16x118xf32, #tpu.memory_space<vmem>>, vector<1x64xf32>,
    %45 = vector.extract_strided_slice %40 {offsets = [0, 0], sizes = [1, 64], strides = [1, 1]} : vector<1x512xf32> to vector<1x64xf32>
    %c8 = arith.constant 8 : index
    %c27_30 = arith.constant 27 : index
    %46 = vector.load %arg10[%c8, %c27_30] : memref<16x118xf32, #tpu.memory_space<vmem>>, vector<1x64xf32>
    tpu.vector_store %arg10[%c8, %c27_30], %45 {strides = array<i32>} : memref<16x118xf32, #tpu.memory_space<vmem>>, vector<1x64xf32>,
    %47 = vector.extract_strided_slice %36 {offsets = [0, 64], sizes = [1, 64], strides = [1, 1]} : vector<1x512xf32> to vector<1x64xf32>
    %c1_31 = arith.constant 1 : index
    %c27_32 = arith.constant 27 : index
    %48 = vector.load %arg10[%c1_31, %c27_32] : memref<16x118xf32, #tpu.memory_space<vmem>>, vector<1x64xf32>
    tpu.vector_store %arg10[%c1_31, %c27_32], %47 {strides = array<i32>} : memref<16x118xf32, #tpu.memory_space<vmem>>, vector<1x64xf32>,
    %49 = vector.extract_strided_slice %40 {offsets = [0, 64], sizes = [1, 64], strides = [1, 1]} : vector<1x512xf32> to vector<1x64xf32>
    %c9 = arith.constant 9 : index
    %c27_33 = arith.constant 27 : index
    %50 = vector.load %arg10[%c9, %c27_33] : memref<16x118xf32, #tpu.memory_space<vmem>>, vector<1x64xf32>
    tpu.vector_store %arg10[%c9, %c27_33], %49 {strides = array<i32>} : memref<16x118xf32, #tpu.memory_space<vmem>>, vector<1x64xf32>,
    %51 = vector.extract_strided_slice %36 {offsets = [0, 128], sizes = [1, 64], strides = [1, 1]} : vector<1x512xf32> to vector<1x64xf32>
    %c2 = arith.constant 2 : index
    %c27_34 = arith.constant 27 : index
    %52 = vector.load %arg10[%c2, %c27_34] : memref<16x118xf32, #tpu.memory_space<vmem>>, vector<1x64xf32>
    tpu.vector_store %arg10[%c2, %c27_34], %51 {strides = array<i32>} : memref<16x118xf32, #tpu.memory_space<vmem>>, vector<1x64xf32>,
    %53 = vector.extract_strided_slice %40 {offsets = [0, 128], sizes = [1, 64], strides = [1, 1]} : vector<1x512xf32> to vector<1x64xf32>
    %c10 = arith.constant 10 : index
    %c27_35 = arith.constant 27 : index
    %54 = vector.load %arg10[%c10, %c27_35] : memref<16x118xf32, #tpu.memory_space<vmem>>, vector<1x64xf32>
    tpu.vector_store %arg10[%c10, %c27_35], %53 {strides = array<i32>} : memref<16x118xf32, #tpu.memory_space<vmem>>, vector<1x64xf32>,
    %55 = vector.extract_strided_slice %36 {offsets = [0, 192], sizes = [1, 64], strides = [1, 1]} : vector<1x512xf32> to vector<1x64xf32>
    %c3 = arith.constant 3 : index
    %c27_36 = arith.constant 27 : index
    %56 = vector.load %arg10[%c3, %c27_36] : memref<16x118xf32, #tpu.memory_space<vmem>>, vector<1x64xf32>
    tpu.vector_store %arg10[%c3, %c27_36], %55 {strides = array<i32>} : memref<16x118xf32, #tpu.memory_space<vmem>>, vector<1x64xf32>,
    %57 = vector.extract_strided_slice %40 {offsets = [0, 192], sizes = [1, 64], strides = [1, 1]} : vector<1x512xf32> to vector<1x64xf32>
    %c11 = arith.constant 11 : index
    %c27_37 = arith.constant 27 : index
    %58 = vector.load %arg10[%c11, %c27_37] : memref<16x118xf32, #tpu.memory_space<vmem>>, vector<1x64xf32>
    tpu.vector_store %arg10[%c11, %c27_37], %57 {strides = array<i32>} : memref<16x118xf32, #tpu.memory_space<vmem>>, vector<1x64xf32>,
    %59 = vector.extract_strided_slice %36 {offsets = [0, 256], sizes = [1, 64], strides = [1, 1]} : vector<1x512xf32> to vector<1x64xf32>
    %c4 = arith.constant 4 : index
    %c27_38 = arith.constant 27 : index
    %60 = vector.load %arg10[%c4, %c27_38] : memref<16x118xf32, #tpu.memory_space<vmem>>, vector<1x64xf32>
    tpu.vector_store %arg10[%c4, %c27_38], %59 {strides = array<i32>} : memref<16x118xf32, #tpu.memory_space<vmem>>, vector<1x64xf32>,
    %61 = vector.extract_strided_slice %40 {offsets = [0, 256], sizes = [1, 64], strides = [1, 1]} : vector<1x512xf32> to vector<1x64xf32>
    %c12 = arith.constant 12 : index
    %c27_39 = arith.constant 27 : index
    %62 = vector.load %arg10[%c12, %c27_39] : memref<16x118xf32, #tpu.memory_space<vmem>>, vector<1x64xf32>
    tpu.vector_store %arg10[%c12, %c27_39], %61 {strides = array<i32>} : memref<16x118xf32, #tpu.memory_space<vmem>>, vector<1x64xf32>,
    %63 = vector.extract_strided_slice %36 {offsets = [0, 320], sizes = [1, 64], strides = [1, 1]} : vector<1x512xf32> to vector<1x64xf32>
    %c5 = arith.constant 5 : index
    %c27_40 = arith.constant 27 : index
    %64 = vector.load %arg10[%c5, %c27_40] : memref<16x118xf32, #tpu.memory_space<vmem>>, vector<1x64xf32>
    tpu.vector_store %arg10[%c5, %c27_40], %63 {strides = array<i32>} : memref<16x118xf32, #tpu.memory_space<vmem>>, vector<1x64xf32>,
    %65 = vector.extract_strided_slice %40 {offsets = [0, 320], sizes = [1, 64], strides = [1, 1]} : vector<1x512xf32> to vector<1x64xf32>
    %c13 = arith.constant 13 : index
    %c27_41 = arith.constant 27 : index
    %66 = vector.load %arg10[%c13, %c27_41] : memref<16x118xf32, #tpu.memory_space<vmem>>, vector<1x64xf32>
    tpu.vector_store %arg10[%c13, %c27_41], %65 {strides = array<i32>} : memref<16x118xf32, #tpu.memory_space<vmem>>, vector<1x64xf32>,
    %67 = vector.extract_strided_slice %36 {offsets = [0, 384], sizes = [1, 64], strides = [1, 1]} : vector<1x512xf32> to vector<1x64xf32>
    %c6 = arith.constant 6 : index
    %c27_42 = arith.constant 27 : index
    %68 = vector.load %arg10[%c6, %c27_42] : memref<16x118xf32, #tpu.memory_space<vmem>>, vector<1x64xf32>
    tpu.vector_store %arg10[%c6, %c27_42], %67 {strides = array<i32>} : memref<16x118xf32, #tpu.memory_space<vmem>>, vector<1x64xf32>,
    %69 = vector.extract_strided_slice %40 {offsets = [0, 384], sizes = [1, 64], strides = [1, 1]} : vector<1x512xf32> to vector<1x64xf32>
    %c14 = arith.constant 14 : index
    %c27_43 = arith.constant 27 : index
    %70 = vector.load %arg10[%c14, %c27_43] : memref<16x118xf32, #tpu.memory_space<vmem>>, vector<1x64xf32>
    tpu.vector_store %arg10[%c14, %c27_43], %69 {strides = array<i32>} : memref<16x118xf32, #tpu.memory_space<vmem>>, vector<1x64xf32>,
    %71 = vector.extract_strided_slice %36 {offsets = [0, 448], sizes = [1, 64], strides = [1, 1]} : vector<1x512xf32> to vector<1x64xf32>
    %c7 = arith.constant 7 : index
    %c27_44 = arith.constant 27 : index
    %72 = vector.load %arg10[%c7, %c27_44] : memref<16x118xf32, #tpu.memory_space<vmem>>, vector<1x64xf32>
    tpu.vector_store %arg10[%c7, %c27_44], %71 {strides = array<i32>} : memref<16x118xf32, #tpu.memory_space<vmem>>, vector<1x64xf32>,
    %73 = vector.extract_strided_slice %40 {offsets = [0, 448], sizes = [1, 64], strides = [1, 1]} : vector<1x512xf32> to vector<1x64xf32>
    %c15 = arith.constant 15 : index
    %c27_45 = arith.constant 27 : index
    %74 = vector.load %arg10[%c15, %c27_45] : memref<16x118xf32, #tpu.memory_space<vmem>>, vector<1x64xf32>
    tpu.vector_store %arg10[%c15, %c27_45], %73 {strides = array<i32>} : memref<16x118xf32, #tpu.memory_space<vmem>>, vector<1x64xf32>,
    %c0_46 = arith.constant 0 : index
    %c0_47 = arith.constant 0 : index
    %75 = vector.load %arg10[%c0_46, %c0_47] : memref<16x118xf32, #tpu.memory_space<vmem>>, vector<16x118xf32>
    %cst_48 = arith.constant 0.000000e+00 : f32
    %76 = vector.broadcast %cst_48 : f32 to vector<8x64xf32>
    %77 = vector.extract_strided_slice %75 {offsets = [0, 0], sizes = [16, 64], strides = [1, 1]} : vector<16x118xf32> to vector<16x64xf32>
    %c0_49 = arith.constant 0 : index
    %c0_50 = arith.constant 0 : index
    %c0_51 = arith.constant 0 : index
    %78 = vector.load %arg6[%c0_49, %c0_50, %c0_51] : memref<49x8x16xf32, #tpu.memory_space<vmem>>, vector<1x8x16xf32>
    %79 = vector.shape_cast %78 : vector<1x8x16xf32> to vector<8x16xf32>
    %cst_52 = arith.constant dense<0.000000e+00> : vector<8x64xf32>
    %80 = tpu.matmul %79, %77, %cst_52 {dimension_numbers = #tpu.dot_dimension_numbers<[1], [0], [0], [1], [0, 0, 1, 1], [], []>} : vector<8x16xf32>, vector<16x64xf32>, vector<8x64xf32> -> vector<8x64xf32>
    %c0_53 = arith.constant 0 : index
    %c0_54 = arith.constant 0 : index
    %c0_55 = arith.constant 0 : index
    %81 = vector.load %arg7[%c0_53, %c0_54, %c0_55] : memref<49x1x64xf32, #tpu.memory_space<vmem>>, vector<1x1x64xf32>
    %82 = vector.shape_cast %81 : vector<1x1x64xf32> to vector<1x64xf32>
    %83 = vector.broadcast %82 : vector<1x64xf32> to vector<8x64xf32>
    %84 = arith.mulf %80, %83 : vector<8x64xf32>
    %85 = arith.addf %76, %84 : vector<8x64xf32>
    %86 = vector.extract_strided_slice %75 {offsets = [0, 1], sizes = [16, 64], strides = [1, 1]} : vector<16x118xf32> to vector<16x64xf32>
    %c1_56 = arith.constant 1 : index
    %c0_57 = arith.constant 0 : index
    %c0_58 = arith.constant 0 : index
    %87 = vector.load %arg6[%c1_56, %c0_57, %c0_58] : memref<49x8x16xf32, #tpu.memory_space<vmem>>, vector<1x8x16xf32>
    %88 = vector.shape_cast %87 : vector<1x8x16xf32> to vector<8x16xf32>
    %cst_59 = arith.constant dense<0.000000e+00> : vector<8x64xf32>
    %89 = tpu.matmul %88, %86, %cst_59 {dimension_numbers = #tpu.dot_dimension_numbers<[1], [0], [0], [1], [0, 0, 1, 1], [], []>} : vector<8x16xf32>, vector<16x64xf32>, vector<8x64xf32> -> vector<8x64xf32>
    %c1_60 = arith.constant 1 : index
    %c0_61 = arith.constant 0 : index
    %c0_62 = arith.constant 0 : index
    %90 = vector.load %arg7[%c1_60, %c0_61, %c0_62] : memref<49x1x64xf32, #tpu.memory_space<vmem>>, vector<1x1x64xf32>
    %91 = vector.shape_cast %90 : vector<1x1x64xf32> to vector<1x64xf32>
    %92 = vector.broadcast %91 : vector<1x64xf32> to vector<8x64xf32>
    %93 = arith.mulf %89, %92 : vector<8x64xf32>
    %94 = arith.addf %85, %93 : vector<8x64xf32>
    %95 = vector.extract_strided_slice %75 {offsets = [0, 2], sizes = [16, 64], strides = [1, 1]} : vector<16x118xf32> to vector<16x64xf32>
    %c2_63 = arith.constant 2 : index
    %c0_64 = arith.constant 0 : index
    %c0_65 = arith.constant 0 : index
    %96 = vector.load %arg6[%c2_63, %c0_64, %c0_65] : memref<49x8x16xf32, #tpu.memory_space<vmem>>, vector<1x8x16xf32>
    %97 = vector.shape_cast %96 : vector<1x8x16xf32> to vector<8x16xf32>
    %cst_66 = arith.constant dense<0.000000e+00> : vector<8x64xf32>
    %98 = tpu.matmul %97, %95, %cst_66 {dimension_numbers = #tpu.dot_dimension_numbers<[1], [0], [0], [1], [0, 0, 1, 1], [], []>} : vector<8x16xf32>, vector<16x64xf32>, vector<8x64xf32> -> vector<8x64xf32>
    %c2_67 = arith.constant 2 : index
    %c0_68 = arith.constant 0 : index
    %c0_69 = arith.constant 0 : index
    %99 = vector.load %arg7[%c2_67, %c0_68, %c0_69] : memref<49x1x64xf32, #tpu.memory_space<vmem>>, vector<1x1x64xf32>
    %100 = vector.shape_cast %99 : vector<1x1x64xf32> to vector<1x64xf32>
    %101 = vector.broadcast %100 : vector<1x64xf32> to vector<8x64xf32>
    %102 = arith.mulf %98, %101 : vector<8x64xf32>
    %103 = arith.addf %94, %102 : vector<8x64xf32>
    %104 = vector.extract_strided_slice %75 {offsets = [0, 3], sizes = [16, 64], strides = [1, 1]} : vector<16x118xf32> to vector<16x64xf32>
    %c3_70 = arith.constant 3 : index
    %c0_71 = arith.constant 0 : index
    %c0_72 = arith.constant 0 : index
    %105 = vector.load %arg6[%c3_70, %c0_71, %c0_72] : memref<49x8x16xf32, #tpu.memory_space<vmem>>, vector<1x8x16xf32>
    %106 = vector.shape_cast %105 : vector<1x8x16xf32> to vector<8x16xf32>
    %cst_73 = arith.constant dense<0.000000e+00> : vector<8x64xf32>
    %107 = tpu.matmul %106, %104, %cst_73 {dimension_numbers = #tpu.dot_dimension_numbers<[1], [0], [0], [1], [0, 0, 1, 1], [], []>} : vector<8x16xf32>, vector<16x64xf32>, vector<8x64xf32> -> vector<8x64xf32>
    %c3_74 = arith.constant 3 : index
    %c0_75 = arith.constant 0 : index
    %c0_76 = arith.constant 0 : index
    %108 = vector.load %arg7[%c3_74, %c0_75, %c0_76] : memref<49x1x64xf32, #tpu.memory_space<vmem>>, vector<1x1x64xf32>
    %109 = vector.shape_cast %108 : vector<1x1x64xf32> to vector<1x64xf32>
    %110 = vector.broadcast %109 : vector<1x64xf32> to vector<8x64xf32>
    %111 = arith.mulf %107, %110 : vector<8x64xf32>
    %112 = arith.addf %103, %111 : vector<8x64xf32>
    %113 = vector.extract_strided_slice %75 {offsets = [0, 4], sizes = [16, 64], strides = [1, 1]} : vector<16x118xf32> to vector<16x64xf32>
    %c4_77 = arith.constant 4 : index
    %c0_78 = arith.constant 0 : index
    %c0_79 = arith.constant 0 : index
    %114 = vector.load %arg6[%c4_77, %c0_78, %c0_79] : memref<49x8x16xf32, #tpu.memory_space<vmem>>, vector<1x8x16xf32>
    %115 = vector.shape_cast %114 : vector<1x8x16xf32> to vector<8x16xf32>
    %cst_80 = arith.constant dense<0.000000e+00> : vector<8x64xf32>
    %116 = tpu.matmul %115, %113, %cst_80 {dimension_numbers = #tpu.dot_dimension_numbers<[1], [0], [0], [1], [0, 0, 1, 1], [], []>} : vector<8x16xf32>, vector<16x64xf32>, vector<8x64xf32> -> vector<8x64xf32>
    %c4_81 = arith.constant 4 : index
    %c0_82 = arith.constant 0 : index
    %c0_83 = arith.constant 0 : index
    %117 = vector.load %arg7[%c4_81, %c0_82, %c0_83] : memref<49x1x64xf32, #tpu.memory_space<vmem>>, vector<1x1x64xf32>
    %118 = vector.shape_cast %117 : vector<1x1x64xf32> to vector<1x64xf32>
    %119 = vector.broadcast %118 : vector<1x64xf32> to vector<8x64xf32>
    %120 = arith.mulf %116, %119 : vector<8x64xf32>
    %121 = arith.addf %112, %120 : vector<8x64xf32>
    %122 = vector.extract_strided_slice %75 {offsets = [0, 5], sizes = [16, 64], strides = [1, 1]} : vector<16x118xf32> to vector<16x64xf32>
    %c5_84 = arith.constant 5 : index
    %c0_85 = arith.constant 0 : index
    %c0_86 = arith.constant 0 : index
    %123 = vector.load %arg6[%c5_84, %c0_85, %c0_86] : memref<49x8x16xf32, #tpu.memory_space<vmem>>, vector<1x8x16xf32>
    %124 = vector.shape_cast %123 : vector<1x8x16xf32> to vector<8x16xf32>
    %cst_87 = arith.constant dense<0.000000e+00> : vector<8x64xf32>
    %125 = tpu.matmul %124, %122, %cst_87 {dimension_numbers = #tpu.dot_dimension_numbers<[1], [0], [0], [1], [0, 0, 1, 1], [], []>} : vector<8x16xf32>, vector<16x64xf32>, vector<8x64xf32> -> vector<8x64xf32>
    %c5_88 = arith.constant 5 : index
    %c0_89 = arith.constant 0 : index
    %c0_90 = arith.constant 0 : index
    %126 = vector.load %arg7[%c5_88, %c0_89, %c0_90] : memref<49x1x64xf32, #tpu.memory_space<vmem>>, vector<1x1x64xf32>
    %127 = vector.shape_cast %126 : vector<1x1x64xf32> to vector<1x64xf32>
    %128 = vector.broadcast %127 : vector<1x64xf32> to vector<8x64xf32>
    %129 = arith.mulf %125, %128 : vector<8x64xf32>
    %130 = arith.addf %121, %129 : vector<8x64xf32>
    %131 = vector.extract_strided_slice %75 {offsets = [0, 6], sizes = [16, 64], strides = [1, 1]} : vector<16x118xf32> to vector<16x64xf32>
    %c6_91 = arith.constant 6 : index
    %c0_92 = arith.constant 0 : index
    %c0_93 = arith.constant 0 : index
    %132 = vector.load %arg6[%c6_91, %c0_92, %c0_93] : memref<49x8x16xf32, #tpu.memory_space<vmem>>, vector<1x8x16xf32>
    %133 = vector.shape_cast %132 : vector<1x8x16xf32> to vector<8x16xf32>
    %cst_94 = arith.constant dense<0.000000e+00> : vector<8x64xf32>
    %134 = tpu.matmul %133, %131, %cst_94 {dimension_numbers = #tpu.dot_dimension_numbers<[1], [0], [0], [1], [0, 0, 1, 1], [], []>} : vector<8x16xf32>, vector<16x64xf32>, vector<8x64xf32> -> vector<8x64xf32>
    %c6_95 = arith.constant 6 : index
    %c0_96 = arith.constant 0 : index
    %c0_97 = arith.constant 0 : index
    %135 = vector.load %arg7[%c6_95, %c0_96, %c0_97] : memref<49x1x64xf32, #tpu.memory_space<vmem>>, vector<1x1x64xf32>
    %136 = vector.shape_cast %135 : vector<1x1x64xf32> to vector<1x64xf32>
    %137 = vector.broadcast %136 : vector<1x64xf32> to vector<8x64xf32>
    %138 = arith.mulf %134, %137 : vector<8x64xf32>
    %139 = arith.addf %130, %138 : vector<8x64xf32>
    %140 = vector.extract_strided_slice %75 {offsets = [0, 8], sizes = [16, 64], strides = [1, 1]} : vector<16x118xf32> to vector<16x64xf32>
    %c7_98 = arith.constant 7 : index
    %c0_99 = arith.constant 0 : index
    %c0_100 = arith.constant 0 : index
    %141 = vector.load %arg6[%c7_98, %c0_99, %c0_100] : memref<49x8x16xf32, #tpu.memory_space<vmem>>, vector<1x8x16xf32>
    %142 = vector.shape_cast %141 : vector<1x8x16xf32> to vector<8x16xf32>
    %cst_101 = arith.constant dense<0.000000e+00> : vector<8x64xf32>
    %143 = tpu.matmul %142, %140, %cst_101 {dimension_numbers = #tpu.dot_dimension_numbers<[1], [0], [0], [1], [0, 0, 1, 1], [], []>} : vector<8x16xf32>, vector<16x64xf32>, vector<8x64xf32> -> vector<8x64xf32>
    %c7_102 = arith.constant 7 : index
    %c0_103 = arith.constant 0 : index
    %c0_104 = arith.constant 0 : index
    %144 = vector.load %arg7[%c7_102, %c0_103, %c0_104] : memref<49x1x64xf32, #tpu.memory_space<vmem>>, vector<1x1x64xf32>
    %145 = vector.shape_cast %144 : vector<1x1x64xf32> to vector<1x64xf32>
    %146 = vector.broadcast %145 : vector<1x64xf32> to vector<8x64xf32>
    %147 = arith.mulf %143, %146 : vector<8x64xf32>
    %148 = arith.addf %139, %147 : vector<8x64xf32>
    %149 = vector.extract_strided_slice %75 {offsets = [0, 9], sizes = [16, 64], strides = [1, 1]} : vector<16x118xf32> to vector<16x64xf32>
    %c8_105 = arith.constant 8 : index
    %c0_106 = arith.constant 0 : index
    %c0_107 = arith.constant 0 : index
    %150 = vector.load %arg6[%c8_105, %c0_106, %c0_107] : memref<49x8x16xf32, #tpu.memory_space<vmem>>, vector<1x8x16xf32>
    %151 = vector.shape_cast %150 : vector<1x8x16xf32> to vector<8x16xf32>
    %cst_108 = arith.constant dense<0.000000e+00> : vector<8x64xf32>
    %152 = tpu.matmul %151, %149, %cst_108 {dimension_numbers = #tpu.dot_dimension_numbers<[1], [0], [0], [1], [0, 0, 1, 1], [], []>} : vector<8x16xf32>, vector<16x64xf32>, vector<8x64xf32> -> vector<8x64xf32>
    %c8_109 = arith.constant 8 : index
    %c0_110 = arith.constant 0 : index
    %c0_111 = arith.constant 0 : index
    %153 = vector.load %arg7[%c8_109, %c0_110, %c0_111] : memref<49x1x64xf32, #tpu.memory_space<vmem>>, vector<1x1x64xf32>
    %154 = vector.shape_cast %153 : vector<1x1x64xf32> to vector<1x64xf32>
    %155 = vector.broadcast %154 : vector<1x64xf32> to vector<8x64xf32>
    %156 = arith.mulf %152, %155 : vector<8x64xf32>
    %157 = arith.addf %148, %156 : vector<8x64xf32>
    %158 = vector.extract_strided_slice %75 {offsets = [0, 10], sizes = [16, 64], strides = [1, 1]} : vector<16x118xf32> to vector<16x64xf32>
    %c9_112 = arith.constant 9 : index
    %c0_113 = arith.constant 0 : index
    %c0_114 = arith.constant 0 : index
    %159 = vector.load %arg6[%c9_112, %c0_113, %c0_114] : memref<49x8x16xf32, #tpu.memory_space<vmem>>, vector<1x8x16xf32>
    %160 = vector.shape_cast %159 : vector<1x8x16xf32> to vector<8x16xf32>
    %cst_115 = arith.constant dense<0.000000e+00> : vector<8x64xf32>
    %161 = tpu.matmul %160, %158, %cst_115 {dimension_numbers = #tpu.dot_dimension_numbers<[1], [0], [0], [1], [0, 0, 1, 1], [], []>} : vector<8x16xf32>, vector<16x64xf32>, vector<8x64xf32> -> vector<8x64xf32>
    %c9_116 = arith.constant 9 : index
    %c0_117 = arith.constant 0 : index
    %c0_118 = arith.constant 0 : index
    %162 = vector.load %arg7[%c9_116, %c0_117, %c0_118] : memref<49x1x64xf32, #tpu.memory_space<vmem>>, vector<1x1x64xf32>
    %163 = vector.shape_cast %162 : vector<1x1x64xf32> to vector<1x64xf32>
    %164 = vector.broadcast %163 : vector<1x64xf32> to vector<8x64xf32>
    %165 = arith.mulf %161, %164 : vector<8x64xf32>
    %166 = arith.addf %157, %165 : vector<8x64xf32>
    %167 = vector.extract_strided_slice %75 {offsets = [0, 11], sizes = [16, 64], strides = [1, 1]} : vector<16x118xf32> to vector<16x64xf32>
    %c10_119 = arith.constant 10 : index
    %c0_120 = arith.constant 0 : index
    %c0_121 = arith.constant 0 : index
    %168 = vector.load %arg6[%c10_119, %c0_120, %c0_121] : memref<49x8x16xf32, #tpu.memory_space<vmem>>, vector<1x8x16xf32>
    %169 = vector.shape_cast %168 : vector<1x8x16xf32> to vector<8x16xf32>
    %cst_122 = arith.constant dense<0.000000e+00> : vector<8x64xf32>
    %170 = tpu.matmul %169, %167, %cst_122 {dimension_numbers = #tpu.dot_dimension_numbers<[1], [0], [0], [1], [0, 0, 1, 1], [], []>} : vector<8x16xf32>, vector<16x64xf32>, vector<8x64xf32> -> vector<8x64xf32>
    %c10_123 = arith.constant 10 : index
    %c0_124 = arith.constant 0 : index
    %c0_125 = arith.constant 0 : index
    %171 = vector.load %arg7[%c10_123, %c0_124, %c0_125] : memref<49x1x64xf32, #tpu.memory_space<vmem>>, vector<1x1x64xf32>
    %172 = vector.shape_cast %171 : vector<1x1x64xf32> to vector<1x64xf32>
    %173 = vector.broadcast %172 : vector<1x64xf32> to vector<8x64xf32>
    %174 = arith.mulf %170, %173 : vector<8x64xf32>
    %175 = arith.addf %166, %174 : vector<8x64xf32>
    %176 = vector.extract_strided_slice %75 {offsets = [0, 12], sizes = [16, 64], strides = [1, 1]} : vector<16x118xf32> to vector<16x64xf32>
    %c11_126 = arith.constant 11 : index
    %c0_127 = arith.constant 0 : index
    %c0_128 = arith.constant 0 : index
    %177 = vector.load %arg6[%c11_126, %c0_127, %c0_128] : memref<49x8x16xf32, #tpu.memory_space<vmem>>, vector<1x8x16xf32>
    %178 = vector.shape_cast %177 : vector<1x8x16xf32> to vector<8x16xf32>
    %cst_129 = arith.constant dense<0.000000e+00> : vector<8x64xf32>
    %179 = tpu.matmul %178, %176, %cst_129 {dimension_numbers = #tpu.dot_dimension_numbers<[1], [0], [0], [1], [0, 0, 1, 1], [], []>} : vector<8x16xf32>, vector<16x64xf32>, vector<8x64xf32> -> vector<8x64xf32>
    %c11_130 = arith.constant 11 : index
    %c0_131 = arith.constant 0 : index
    %c0_132 = arith.constant 0 : index
    %180 = vector.load %arg7[%c11_130, %c0_131, %c0_132] : memref<49x1x64xf32, #tpu.memory_space<vmem>>, vector<1x1x64xf32>
    %181 = vector.shape_cast %180 : vector<1x1x64xf32> to vector<1x64xf32>
    %182 = vector.broadcast %181 : vector<1x64xf32> to vector<8x64xf32>
    %183 = arith.mulf %179, %182 : vector<8x64xf32>
    %184 = arith.addf %175, %183 : vector<8x64xf32>
    %185 = vector.extract_strided_slice %75 {offsets = [0, 13], sizes = [16, 64], strides = [1, 1]} : vector<16x118xf32> to vector<16x64xf32>
    %c12_133 = arith.constant 12 : index
    %c0_134 = arith.constant 0 : index
    %c0_135 = arith.constant 0 : index
    %186 = vector.load %arg6[%c12_133, %c0_134, %c0_135] : memref<49x8x16xf32, #tpu.memory_space<vmem>>, vector<1x8x16xf32>
    %187 = vector.shape_cast %186 : vector<1x8x16xf32> to vector<8x16xf32>
    %cst_136 = arith.constant dense<0.000000e+00> : vector<8x64xf32>
    %188 = tpu.matmul %187, %185, %cst_136 {dimension_numbers = #tpu.dot_dimension_numbers<[1], [0], [0], [1], [0, 0, 1, 1], [], []>} : vector<8x16xf32>, vector<16x64xf32>, vector<8x64xf32> -> vector<8x64xf32>
    %c12_137 = arith.constant 12 : index
    %c0_138 = arith.constant 0 : index
    %c0_139 = arith.constant 0 : index
    %189 = vector.load %arg7[%c12_137, %c0_138, %c0_139] : memref<49x1x64xf32, #tpu.memory_space<vmem>>, vector<1x1x64xf32>
    %190 = vector.shape_cast %189 : vector<1x1x64xf32> to vector<1x64xf32>
    %191 = vector.broadcast %190 : vector<1x64xf32> to vector<8x64xf32>
    %192 = arith.mulf %188, %191 : vector<8x64xf32>
    %193 = arith.addf %184, %192 : vector<8x64xf32>
    %194 = vector.extract_strided_slice %75 {offsets = [0, 14], sizes = [16, 64], strides = [1, 1]} : vector<16x118xf32> to vector<16x64xf32>
    %c13_140 = arith.constant 13 : index
    %c0_141 = arith.constant 0 : index
    %c0_142 = arith.constant 0 : index
    %195 = vector.load %arg6[%c13_140, %c0_141, %c0_142] : memref<49x8x16xf32, #tpu.memory_space<vmem>>, vector<1x8x16xf32>
    %196 = vector.shape_cast %195 : vector<1x8x16xf32> to vector<8x16xf32>
    %cst_143 = arith.constant dense<0.000000e+00> : vector<8x64xf32>
    %197 = tpu.matmul %196, %194, %cst_143 {dimension_numbers = #tpu.dot_dimension_numbers<[1], [0], [0], [1], [0, 0, 1, 1], [], []>} : vector<8x16xf32>, vector<16x64xf32>, vector<8x64xf32> -> vector<8x64xf32>
    %c13_144 = arith.constant 13 : index
    %c0_145 = arith.constant 0 : index
    %c0_146 = arith.constant 0 : index
    %198 = vector.load %arg7[%c13_144, %c0_145, %c0_146] : memref<49x1x64xf32, #tpu.memory_space<vmem>>, vector<1x1x64xf32>
    %199 = vector.shape_cast %198 : vector<1x1x64xf32> to vector<1x64xf32>
    %200 = vector.broadcast %199 : vector<1x64xf32> to vector<8x64xf32>
    %201 = arith.mulf %197, %200 : vector<8x64xf32>
    %202 = arith.addf %193, %201 : vector<8x64xf32>
    %203 = vector.extract_strided_slice %75 {offsets = [0, 16], sizes = [16, 64], strides = [1, 1]} : vector<16x118xf32> to vector<16x64xf32>
    %c14_147 = arith.constant 14 : index
    %c0_148 = arith.constant 0 : index
    %c0_149 = arith.constant 0 : index
    %204 = vector.load %arg6[%c14_147, %c0_148, %c0_149] : memref<49x8x16xf32, #tpu.memory_space<vmem>>, vector<1x8x16xf32>
    %205 = vector.shape_cast %204 : vector<1x8x16xf32> to vector<8x16xf32>
    %cst_150 = arith.constant dense<0.000000e+00> : vector<8x64xf32>
    %206 = tpu.matmul %205, %203, %cst_150 {dimension_numbers = #tpu.dot_dimension_numbers<[1], [0], [0], [1], [0, 0, 1, 1], [], []>} : vector<8x16xf32>, vector<16x64xf32>, vector<8x64xf32> -> vector<8x64xf32>
    %c14_151 = arith.constant 14 : index
    %c0_152 = arith.constant 0 : index
    %c0_153 = arith.constant 0 : index
    %207 = vector.load %arg7[%c14_151, %c0_152, %c0_153] : memref<49x1x64xf32, #tpu.memory_space<vmem>>, vector<1x1x64xf32>
    %208 = vector.shape_cast %207 : vector<1x1x64xf32> to vector<1x64xf32>
    %209 = vector.broadcast %208 : vector<1x64xf32> to vector<8x64xf32>
    %210 = arith.mulf %206, %209 : vector<8x64xf32>
    %211 = arith.addf %202, %210 : vector<8x64xf32>
    %212 = vector.extract_strided_slice %75 {offsets = [0, 17], sizes = [16, 64], strides = [1, 1]} : vector<16x118xf32> to vector<16x64xf32>
    %c15_154 = arith.constant 15 : index
    %c0_155 = arith.constant 0 : index
    %c0_156 = arith.constant 0 : index
    %213 = vector.load %arg6[%c15_154, %c0_155, %c0_156] : memref<49x8x16xf32, #tpu.memory_space<vmem>>, vector<1x8x16xf32>
    %214 = vector.shape_cast %213 : vector<1x8x16xf32> to vector<8x16xf32>
    %cst_157 = arith.constant dense<0.000000e+00> : vector<8x64xf32>
    %215 = tpu.matmul %214, %212, %cst_157 {dimension_numbers = #tpu.dot_dimension_numbers<[1], [0], [0], [1], [0, 0, 1, 1], [], []>} : vector<8x16xf32>, vector<16x64xf32>, vector<8x64xf32> -> vector<8x64xf32>
    %c15_158 = arith.constant 15 : index
    %c0_159 = arith.constant 0 : index
    %c0_160 = arith.constant 0 : index
    %216 = vector.load %arg7[%c15_158, %c0_159, %c0_160] : memref<49x1x64xf32, #tpu.memory_space<vmem>>, vector<1x1x64xf32>
    %217 = vector.shape_cast %216 : vector<1x1x64xf32> to vector<1x64xf32>
    %218 = vector.broadcast %217 : vector<1x64xf32> to vector<8x64xf32>
    %219 = arith.mulf %215, %218 : vector<8x64xf32>
    %220 = arith.addf %211, %219 : vector<8x64xf32>
    %221 = vector.extract_strided_slice %75 {offsets = [0, 18], sizes = [16, 64], strides = [1, 1]} : vector<16x118xf32> to vector<16x64xf32>
    %c16 = arith.constant 16 : index
    %c0_161 = arith.constant 0 : index
    %c0_162 = arith.constant 0 : index
    %222 = vector.load %arg6[%c16, %c0_161, %c0_162] : memref<49x8x16xf32, #tpu.memory_space<vmem>>, vector<1x8x16xf32>
    %223 = vector.shape_cast %222 : vector<1x8x16xf32> to vector<8x16xf32>
    %cst_163 = arith.constant dense<0.000000e+00> : vector<8x64xf32>
    %224 = tpu.matmul %223, %221, %cst_163 {dimension_numbers = #tpu.dot_dimension_numbers<[1], [0], [0], [1], [0, 0, 1, 1], [], []>} : vector<8x16xf32>, vector<16x64xf32>, vector<8x64xf32> -> vector<8x64xf32>
    %c16_164 = arith.constant 16 : index
    %c0_165 = arith.constant 0 : index
    %c0_166 = arith.constant 0 : index
    %225 = vector.load %arg7[%c16_164, %c0_165, %c0_166] : memref<49x1x64xf32, #tpu.memory_space<vmem>>, vector<1x1x64xf32>
    %226 = vector.shape_cast %225 : vector<1x1x64xf32> to vector<1x64xf32>
    %227 = vector.broadcast %226 : vector<1x64xf32> to vector<8x64xf32>
    %228 = arith.mulf %224, %227 : vector<8x64xf32>
    %229 = arith.addf %220, %228 : vector<8x64xf32>
    %230 = vector.extract_strided_slice %75 {offsets = [0, 19], sizes = [16, 64], strides = [1, 1]} : vector<16x118xf32> to vector<16x64xf32>
    %c17 = arith.constant 17 : index
    %c0_167 = arith.constant 0 : index
    %c0_168 = arith.constant 0 : index
    %231 = vector.load %arg6[%c17, %c0_167, %c0_168] : memref<49x8x16xf32, #tpu.memory_space<vmem>>, vector<1x8x16xf32>
    %232 = vector.shape_cast %231 : vector<1x8x16xf32> to vector<8x16xf32>
    %cst_169 = arith.constant dense<0.000000e+00> : vector<8x64xf32>
    %233 = tpu.matmul %232, %230, %cst_169 {dimension_numbers = #tpu.dot_dimension_numbers<[1], [0], [0], [1], [0, 0, 1, 1], [], []>} : vector<8x16xf32>, vector<16x64xf32>, vector<8x64xf32> -> vector<8x64xf32>
    %c17_170 = arith.constant 17 : index
    %c0_171 = arith.constant 0 : index
    %c0_172 = arith.constant 0 : index
    %234 = vector.load %arg7[%c17_170, %c0_171, %c0_172] : memref<49x1x64xf32, #tpu.memory_space<vmem>>, vector<1x1x64xf32>
    %235 = vector.shape_cast %234 : vector<1x1x64xf32> to vector<1x64xf32>
    %236 = vector.broadcast %235 : vector<1x64xf32> to vector<8x64xf32>
    %237 = arith.mulf %233, %236 : vector<8x64xf32>
    %238 = arith.addf %229, %237 : vector<8x64xf32>
    %239 = vector.extract_strided_slice %75 {offsets = [0, 20], sizes = [16, 64], strides = [1, 1]} : vector<16x118xf32> to vector<16x64xf32>
    %c18 = arith.constant 18 : index
    %c0_173 = arith.constant 0 : index
    %c0_174 = arith.constant 0 : index
    %240 = vector.load %arg6[%c18, %c0_173, %c0_174] : memref<49x8x16xf32, #tpu.memory_space<vmem>>, vector<1x8x16xf32>
    %241 = vector.shape_cast %240 : vector<1x8x16xf32> to vector<8x16xf32>
    %cst_175 = arith.constant dense<0.000000e+00> : vector<8x64xf32>
    %242 = tpu.matmul %241, %239, %cst_175 {dimension_numbers = #tpu.dot_dimension_numbers<[1], [0], [0], [1], [0, 0, 1, 1], [], []>} : vector<8x16xf32>, vector<16x64xf32>, vector<8x64xf32> -> vector<8x64xf32>
    %c18_176 = arith.constant 18 : index
    %c0_177 = arith.constant 0 : index
    %c0_178 = arith.constant 0 : index
    %243 = vector.load %arg7[%c18_176, %c0_177, %c0_178] : memref<49x1x64xf32, #tpu.memory_space<vmem>>, vector<1x1x64xf32>
    %244 = vector.shape_cast %243 : vector<1x1x64xf32> to vector<1x64xf32>
    %245 = vector.broadcast %244 : vector<1x64xf32> to vector<8x64xf32>
    %246 = arith.mulf %242, %245 : vector<8x64xf32>
    %247 = arith.addf %238, %246 : vector<8x64xf32>
    %248 = vector.extract_strided_slice %75 {offsets = [0, 21], sizes = [16, 64], strides = [1, 1]} : vector<16x118xf32> to vector<16x64xf32>
    %c19 = arith.constant 19 : index
    %c0_179 = arith.constant 0 : index
    %c0_180 = arith.constant 0 : index
    %249 = vector.load %arg6[%c19, %c0_179, %c0_180] : memref<49x8x16xf32, #tpu.memory_space<vmem>>, vector<1x8x16xf32>
    %250 = vector.shape_cast %249 : vector<1x8x16xf32> to vector<8x16xf32>
    %cst_181 = arith.constant dense<0.000000e+00> : vector<8x64xf32>
    %251 = tpu.matmul %250, %248, %cst_181 {dimension_numbers = #tpu.dot_dimension_numbers<[1], [0], [0], [1], [0, 0, 1, 1], [], []>} : vector<8x16xf32>, vector<16x64xf32>, vector<8x64xf32> -> vector<8x64xf32>
    %c19_182 = arith.constant 19 : index
    %c0_183 = arith.constant 0 : index
    %c0_184 = arith.constant 0 : index
    %252 = vector.load %arg7[%c19_182, %c0_183, %c0_184] : memref<49x1x64xf32, #tpu.memory_space<vmem>>, vector<1x1x64xf32>
    %253 = vector.shape_cast %252 : vector<1x1x64xf32> to vector<1x64xf32>
    %254 = vector.broadcast %253 : vector<1x64xf32> to vector<8x64xf32>
    %255 = arith.mulf %251, %254 : vector<8x64xf32>
    %256 = arith.addf %247, %255 : vector<8x64xf32>
    %257 = vector.extract_strided_slice %75 {offsets = [0, 22], sizes = [16, 64], strides = [1, 1]} : vector<16x118xf32> to vector<16x64xf32>
    %c20 = arith.constant 20 : index
    %c0_185 = arith.constant 0 : index
    %c0_186 = arith.constant 0 : index
    %258 = vector.load %arg6[%c20, %c0_185, %c0_186] : memref<49x8x16xf32, #tpu.memory_space<vmem>>, vector<1x8x16xf32>
    %259 = vector.shape_cast %258 : vector<1x8x16xf32> to vector<8x16xf32>
    %cst_187 = arith.constant dense<0.000000e+00> : vector<8x64xf32>
    %260 = tpu.matmul %259, %257, %cst_187 {dimension_numbers = #tpu.dot_dimension_numbers<[1], [0], [0], [1], [0, 0, 1, 1], [], []>} : vector<8x16xf32>, vector<16x64xf32>, vector<8x64xf32> -> vector<8x64xf32>
    %c20_188 = arith.constant 20 : index
    %c0_189 = arith.constant 0 : index
    %c0_190 = arith.constant 0 : index
    %261 = vector.load %arg7[%c20_188, %c0_189, %c0_190] : memref<49x1x64xf32, #tpu.memory_space<vmem>>, vector<1x1x64xf32>
    %262 = vector.shape_cast %261 : vector<1x1x64xf32> to vector<1x64xf32>
    %263 = vector.broadcast %262 : vector<1x64xf32> to vector<8x64xf32>
    %264 = arith.mulf %260, %263 : vector<8x64xf32>
    %265 = arith.addf %256, %264 : vector<8x64xf32>
    %266 = vector.extract_strided_slice %75 {offsets = [0, 24], sizes = [16, 64], strides = [1, 1]} : vector<16x118xf32> to vector<16x64xf32>
    %c21 = arith.constant 21 : index
    %c0_191 = arith.constant 0 : index
    %c0_192 = arith.constant 0 : index
    %267 = vector.load %arg6[%c21, %c0_191, %c0_192] : memref<49x8x16xf32, #tpu.memory_space<vmem>>, vector<1x8x16xf32>
    %268 = vector.shape_cast %267 : vector<1x8x16xf32> to vector<8x16xf32>
    %cst_193 = arith.constant dense<0.000000e+00> : vector<8x64xf32>
    %269 = tpu.matmul %268, %266, %cst_193 {dimension_numbers = #tpu.dot_dimension_numbers<[1], [0], [0], [1], [0, 0, 1, 1], [], []>} : vector<8x16xf32>, vector<16x64xf32>, vector<8x64xf32> -> vector<8x64xf32>
    %c21_194 = arith.constant 21 : index
    %c0_195 = arith.constant 0 : index
    %c0_196 = arith.constant 0 : index
    %270 = vector.load %arg7[%c21_194, %c0_195, %c0_196] : memref<49x1x64xf32, #tpu.memory_space<vmem>>, vector<1x1x64xf32>
    %271 = vector.shape_cast %270 : vector<1x1x64xf32> to vector<1x64xf32>
    %272 = vector.broadcast %271 : vector<1x64xf32> to vector<8x64xf32>
    %273 = arith.mulf %269, %272 : vector<8x64xf32>
    %274 = arith.addf %265, %273 : vector<8x64xf32>
    %275 = vector.extract_strided_slice %75 {offsets = [0, 25], sizes = [16, 64], strides = [1, 1]} : vector<16x118xf32> to vector<16x64xf32>
    %c22 = arith.constant 22 : index
    %c0_197 = arith.constant 0 : index
    %c0_198 = arith.constant 0 : index
    %276 = vector.load %arg6[%c22, %c0_197, %c0_198] : memref<49x8x16xf32, #tpu.memory_space<vmem>>, vector<1x8x16xf32>
    %277 = vector.shape_cast %276 : vector<1x8x16xf32> to vector<8x16xf32>
    %cst_199 = arith.constant dense<0.000000e+00> : vector<8x64xf32>
    %278 = tpu.matmul %277, %275, %cst_199 {dimension_numbers = #tpu.dot_dimension_numbers<[1], [0], [0], [1], [0, 0, 1, 1], [], []>} : vector<8x16xf32>, vector<16x64xf32>, vector<8x64xf32> -> vector<8x64xf32>
    %c22_200 = arith.constant 22 : index
    %c0_201 = arith.constant 0 : index
    %c0_202 = arith.constant 0 : index
    %279 = vector.load %arg7[%c22_200, %c0_201, %c0_202] : memref<49x1x64xf32, #tpu.memory_space<vmem>>, vector<1x1x64xf32>
    %280 = vector.shape_cast %279 : vector<1x1x64xf32> to vector<1x64xf32>
    %281 = vector.broadcast %280 : vector<1x64xf32> to vector<8x64xf32>
    %282 = arith.mulf %278, %281 : vector<8x64xf32>
    %283 = arith.addf %274, %282 : vector<8x64xf32>
    %284 = vector.extract_strided_slice %75 {offsets = [0, 26], sizes = [16, 64], strides = [1, 1]} : vector<16x118xf32> to vector<16x64xf32>
    %c23 = arith.constant 23 : index
    %c0_203 = arith.constant 0 : index
    %c0_204 = arith.constant 0 : index
    %285 = vector.load %arg6[%c23, %c0_203, %c0_204] : memref<49x8x16xf32, #tpu.memory_space<vmem>>, vector<1x8x16xf32>
    %286 = vector.shape_cast %285 : vector<1x8x16xf32> to vector<8x16xf32>
    %cst_205 = arith.constant dense<0.000000e+00> : vector<8x64xf32>
    %287 = tpu.matmul %286, %284, %cst_205 {dimension_numbers = #tpu.dot_dimension_numbers<[1], [0], [0], [1], [0, 0, 1, 1], [], []>} : vector<8x16xf32>, vector<16x64xf32>, vector<8x64xf32> -> vector<8x64xf32>
    %c23_206 = arith.constant 23 : index
    %c0_207 = arith.constant 0 : index
    %c0_208 = arith.constant 0 : index
    %288 = vector.load %arg7[%c23_206, %c0_207, %c0_208] : memref<49x1x64xf32, #tpu.memory_space<vmem>>, vector<1x1x64xf32>
    %289 = vector.shape_cast %288 : vector<1x1x64xf32> to vector<1x64xf32>
    %290 = vector.broadcast %289 : vector<1x64xf32> to vector<8x64xf32>
    %291 = arith.mulf %287, %290 : vector<8x64xf32>
    %292 = arith.addf %283, %291 : vector<8x64xf32>
    %293 = vector.extract_strided_slice %75 {offsets = [0, 27], sizes = [16, 64], strides = [1, 1]} : vector<16x118xf32> to vector<16x64xf32>
    %c24 = arith.constant 24 : index
    %c0_209 = arith.constant 0 : index
    %c0_210 = arith.constant 0 : index
    %294 = vector.load %arg6[%c24, %c0_209, %c0_210] : memref<49x8x16xf32, #tpu.memory_space<vmem>>, vector<1x8x16xf32>
    %295 = vector.shape_cast %294 : vector<1x8x16xf32> to vector<8x16xf32>
    %cst_211 = arith.constant dense<0.000000e+00> : vector<8x64xf32>
    %296 = tpu.matmul %295, %293, %cst_211 {dimension_numbers = #tpu.dot_dimension_numbers<[1], [0], [0], [1], [0, 0, 1, 1], [], []>} : vector<8x16xf32>, vector<16x64xf32>, vector<8x64xf32> -> vector<8x64xf32>
    %c24_212 = arith.constant 24 : index
    %c0_213 = arith.constant 0 : index
    %c0_214 = arith.constant 0 : index
    %297 = vector.load %arg7[%c24_212, %c0_213, %c0_214] : memref<49x1x64xf32, #tpu.memory_space<vmem>>, vector<1x1x64xf32>
    %298 = vector.shape_cast %297 : vector<1x1x64xf32> to vector<1x64xf32>
    %299 = vector.broadcast %298 : vector<1x64xf32> to vector<8x64xf32>
    %300 = arith.mulf %296, %299 : vector<8x64xf32>
    %301 = arith.addf %292, %300 : vector<8x64xf32>
    %302 = vector.extract_strided_slice %75 {offsets = [0, 28], sizes = [16, 64], strides = [1, 1]} : vector<16x118xf32> to vector<16x64xf32>
    %c25 = arith.constant 25 : index
    %c0_215 = arith.constant 0 : index
    %c0_216 = arith.constant 0 : index
    %303 = vector.load %arg6[%c25, %c0_215, %c0_216] : memref<49x8x16xf32, #tpu.memory_space<vmem>>, vector<1x8x16xf32>
    %304 = vector.shape_cast %303 : vector<1x8x16xf32> to vector<8x16xf32>
    %cst_217 = arith.constant dense<0.000000e+00> : vector<8x64xf32>
    %305 = tpu.matmul %304, %302, %cst_217 {dimension_numbers = #tpu.dot_dimension_numbers<[1], [0], [0], [1], [0, 0, 1, 1], [], []>} : vector<8x16xf32>, vector<16x64xf32>, vector<8x64xf32> -> vector<8x64xf32>
    %c25_218 = arith.constant 25 : index
    %c0_219 = arith.constant 0 : index
    %c0_220 = arith.constant 0 : index
    %306 = vector.load %arg7[%c25_218, %c0_219, %c0_220] : memref<49x1x64xf32, #tpu.memory_space<vmem>>, vector<1x1x64xf32>
    %307 = vector.shape_cast %306 : vector<1x1x64xf32> to vector<1x64xf32>
    %308 = vector.broadcast %307 : vector<1x64xf32> to vector<8x64xf32>
    %309 = arith.mulf %305, %308 : vector<8x64xf32>
    %310 = arith.addf %301, %309 : vector<8x64xf32>
    %311 = vector.extract_strided_slice %75 {offsets = [0, 29], sizes = [16, 64], strides = [1, 1]} : vector<16x118xf32> to vector<16x64xf32>
    %c26 = arith.constant 26 : index
    %c0_221 = arith.constant 0 : index
    %c0_222 = arith.constant 0 : index
    %312 = vector.load %arg6[%c26, %c0_221, %c0_222] : memref<49x8x16xf32, #tpu.memory_space<vmem>>, vector<1x8x16xf32>
    %313 = vector.shape_cast %312 : vector<1x8x16xf32> to vector<8x16xf32>
    %cst_223 = arith.constant dense<0.000000e+00> : vector<8x64xf32>
    %314 = tpu.matmul %313, %311, %cst_223 {dimension_numbers = #tpu.dot_dimension_numbers<[1], [0], [0], [1], [0, 0, 1, 1], [], []>} : vector<8x16xf32>, vector<16x64xf32>, vector<8x64xf32> -> vector<8x64xf32>
    %c26_224 = arith.constant 26 : index
    %c0_225 = arith.constant 0 : index
    %c0_226 = arith.constant 0 : index
    %315 = vector.load %arg7[%c26_224, %c0_225, %c0_226] : memref<49x1x64xf32, #tpu.memory_space<vmem>>, vector<1x1x64xf32>
    %316 = vector.shape_cast %315 : vector<1x1x64xf32> to vector<1x64xf32>
    %317 = vector.broadcast %316 : vector<1x64xf32> to vector<8x64xf32>
    %318 = arith.mulf %314, %317 : vector<8x64xf32>
    %319 = arith.addf %310, %318 : vector<8x64xf32>
    %320 = vector.extract_strided_slice %75 {offsets = [0, 30], sizes = [16, 64], strides = [1, 1]} : vector<16x118xf32> to vector<16x64xf32>
    %c27_227 = arith.constant 27 : index
    %c0_228 = arith.constant 0 : index
    %c0_229 = arith.constant 0 : index
    %321 = vector.load %arg6[%c27_227, %c0_228, %c0_229] : memref<49x8x16xf32, #tpu.memory_space<vmem>>, vector<1x8x16xf32>
    %322 = vector.shape_cast %321 : vector<1x8x16xf32> to vector<8x16xf32>
    %cst_230 = arith.constant dense<0.000000e+00> : vector<8x64xf32>
    %323 = tpu.matmul %322, %320, %cst_230 {dimension_numbers = #tpu.dot_dimension_numbers<[1], [0], [0], [1], [0, 0, 1, 1], [], []>} : vector<8x16xf32>, vector<16x64xf32>, vector<8x64xf32> -> vector<8x64xf32>
    %c27_231 = arith.constant 27 : index
    %c0_232 = arith.constant 0 : index
    %c0_233 = arith.constant 0 : index
    %324 = vector.load %arg7[%c27_231, %c0_232, %c0_233] : memref<49x1x64xf32, #tpu.memory_space<vmem>>, vector<1x1x64xf32>
    %325 = vector.shape_cast %324 : vector<1x1x64xf32> to vector<1x64xf32>
    %326 = vector.broadcast %325 : vector<1x64xf32> to vector<8x64xf32>
    %327 = arith.mulf %323, %326 : vector<8x64xf32>
    %328 = arith.addf %319, %327 : vector<8x64xf32>
    %329 = vector.extract_strided_slice %75 {offsets = [0, 32], sizes = [16, 64], strides = [1, 1]} : vector<16x118xf32> to vector<16x64xf32>
    %c28 = arith.constant 28 : index
    %c0_234 = arith.constant 0 : index
    %c0_235 = arith.constant 0 : index
    %330 = vector.load %arg6[%c28, %c0_234, %c0_235] : memref<49x8x16xf32, #tpu.memory_space<vmem>>, vector<1x8x16xf32>
    %331 = vector.shape_cast %330 : vector<1x8x16xf32> to vector<8x16xf32>
    %cst_236 = arith.constant dense<0.000000e+00> : vector<8x64xf32>
    %332 = tpu.matmul %331, %329, %cst_236 {dimension_numbers = #tpu.dot_dimension_numbers<[1], [0], [0], [1], [0, 0, 1, 1], [], []>} : vector<8x16xf32>, vector<16x64xf32>, vector<8x64xf32> -> vector<8x64xf32>
    %c28_237 = arith.constant 28 : index
    %c0_238 = arith.constant 0 : index
    %c0_239 = arith.constant 0 : index
    %333 = vector.load %arg7[%c28_237, %c0_238, %c0_239] : memref<49x1x64xf32, #tpu.memory_space<vmem>>, vector<1x1x64xf32>
    %334 = vector.shape_cast %333 : vector<1x1x64xf32> to vector<1x64xf32>
    %335 = vector.broadcast %334 : vector<1x64xf32> to vector<8x64xf32>
    %336 = arith.mulf %332, %335 : vector<8x64xf32>
    %337 = arith.addf %328, %336 : vector<8x64xf32>
    %338 = vector.extract_strided_slice %75 {offsets = [0, 33], sizes = [16, 64], strides = [1, 1]} : vector<16x118xf32> to vector<16x64xf32>
    %c29 = arith.constant 29 : index
    %c0_240 = arith.constant 0 : index
    %c0_241 = arith.constant 0 : index
    %339 = vector.load %arg6[%c29, %c0_240, %c0_241] : memref<49x8x16xf32, #tpu.memory_space<vmem>>, vector<1x8x16xf32>
    %340 = vector.shape_cast %339 : vector<1x8x16xf32> to vector<8x16xf32>
    %cst_242 = arith.constant dense<0.000000e+00> : vector<8x64xf32>
    %341 = tpu.matmul %340, %338, %cst_242 {dimension_numbers = #tpu.dot_dimension_numbers<[1], [0], [0], [1], [0, 0, 1, 1], [], []>} : vector<8x16xf32>, vector<16x64xf32>, vector<8x64xf32> -> vector<8x64xf32>
    %c29_243 = arith.constant 29 : index
    %c0_244 = arith.constant 0 : index
    %c0_245 = arith.constant 0 : index
    %342 = vector.load %arg7[%c29_243, %c0_244, %c0_245] : memref<49x1x64xf32, #tpu.memory_space<vmem>>, vector<1x1x64xf32>
    %343 = vector.shape_cast %342 : vector<1x1x64xf32> to vector<1x64xf32>
    %344 = vector.broadcast %343 : vector<1x64xf32> to vector<8x64xf32>
    %345 = arith.mulf %341, %344 : vector<8x64xf32>
    %346 = arith.addf %337, %345 : vector<8x64xf32>
    %347 = vector.extract_strided_slice %75 {offsets = [0, 34], sizes = [16, 64], strides = [1, 1]} : vector<16x118xf32> to vector<16x64xf32>
    %c30 = arith.constant 30 : index
    %c0_246 = arith.constant 0 : index
    %c0_247 = arith.constant 0 : index
    %348 = vector.load %arg6[%c30, %c0_246, %c0_247] : memref<49x8x16xf32, #tpu.memory_space<vmem>>, vector<1x8x16xf32>
    %349 = vector.shape_cast %348 : vector<1x8x16xf32> to vector<8x16xf32>
    %cst_248 = arith.constant dense<0.000000e+00> : vector<8x64xf32>
    %350 = tpu.matmul %349, %347, %cst_248 {dimension_numbers = #tpu.dot_dimension_numbers<[1], [0], [0], [1], [0, 0, 1, 1], [], []>} : vector<8x16xf32>, vector<16x64xf32>, vector<8x64xf32> -> vector<8x64xf32>
    %c30_249 = arith.constant 30 : index
    %c0_250 = arith.constant 0 : index
    %c0_251 = arith.constant 0 : index
    %351 = vector.load %arg7[%c30_249, %c0_250, %c0_251] : memref<49x1x64xf32, #tpu.memory_space<vmem>>, vector<1x1x64xf32>
    %352 = vector.shape_cast %351 : vector<1x1x64xf32> to vector<1x64xf32>
    %353 = vector.broadcast %352 : vector<1x64xf32> to vector<8x64xf32>
    %354 = arith.mulf %350, %353 : vector<8x64xf32>
    %355 = arith.addf %346, %354 : vector<8x64xf32>
    %356 = vector.extract_strided_slice %75 {offsets = [0, 35], sizes = [16, 64], strides = [1, 1]} : vector<16x118xf32> to vector<16x64xf32>
    %c31 = arith.constant 31 : index
    %c0_252 = arith.constant 0 : index
    %c0_253 = arith.constant 0 : index
    %357 = vector.load %arg6[%c31, %c0_252, %c0_253] : memref<49x8x16xf32, #tpu.memory_space<vmem>>, vector<1x8x16xf32>
    %358 = vector.shape_cast %357 : vector<1x8x16xf32> to vector<8x16xf32>
    %cst_254 = arith.constant dense<0.000000e+00> : vector<8x64xf32>
    %359 = tpu.matmul %358, %356, %cst_254 {dimension_numbers = #tpu.dot_dimension_numbers<[1], [0], [0], [1], [0, 0, 1, 1], [], []>} : vector<8x16xf32>, vector<16x64xf32>, vector<8x64xf32> -> vector<8x64xf32>
    %c31_255 = arith.constant 31 : index
    %c0_256 = arith.constant 0 : index
    %c0_257 = arith.constant 0 : index
    %360 = vector.load %arg7[%c31_255, %c0_256, %c0_257] : memref<49x1x64xf32, #tpu.memory_space<vmem>>, vector<1x1x64xf32>
    %361 = vector.shape_cast %360 : vector<1x1x64xf32> to vector<1x64xf32>
    %362 = vector.broadcast %361 : vector<1x64xf32> to vector<8x64xf32>
    %363 = arith.mulf %359, %362 : vector<8x64xf32>
    %364 = arith.addf %355, %363 : vector<8x64xf32>
    %365 = vector.extract_strided_slice %75 {offsets = [0, 36], sizes = [16, 64], strides = [1, 1]} : vector<16x118xf32> to vector<16x64xf32>
    %c32 = arith.constant 32 : index
    %c0_258 = arith.constant 0 : index
    %c0_259 = arith.constant 0 : index
    %366 = vector.load %arg6[%c32, %c0_258, %c0_259] : memref<49x8x16xf32, #tpu.memory_space<vmem>>, vector<1x8x16xf32>
    %367 = vector.shape_cast %366 : vector<1x8x16xf32> to vector<8x16xf32>
    %cst_260 = arith.constant dense<0.000000e+00> : vector<8x64xf32>
    %368 = tpu.matmul %367, %365, %cst_260 {dimension_numbers = #tpu.dot_dimension_numbers<[1], [0], [0], [1], [0, 0, 1, 1], [], []>} : vector<8x16xf32>, vector<16x64xf32>, vector<8x64xf32> -> vector<8x64xf32>
    %c32_261 = arith.constant 32 : index
    %c0_262 = arith.constant 0 : index
    %c0_263 = arith.constant 0 : index
    %369 = vector.load %arg7[%c32_261, %c0_262, %c0_263] : memref<49x1x64xf32, #tpu.memory_space<vmem>>, vector<1x1x64xf32>
    %370 = vector.shape_cast %369 : vector<1x1x64xf32> to vector<1x64xf32>
    %371 = vector.broadcast %370 : vector<1x64xf32> to vector<8x64xf32>
    %372 = arith.mulf %368, %371 : vector<8x64xf32>
    %373 = arith.addf %364, %372 : vector<8x64xf32>
    %374 = vector.extract_strided_slice %75 {offsets = [0, 37], sizes = [16, 64], strides = [1, 1]} : vector<16x118xf32> to vector<16x64xf32>
    %c33 = arith.constant 33 : index
    %c0_264 = arith.constant 0 : index
    %c0_265 = arith.constant 0 : index
    %375 = vector.load %arg6[%c33, %c0_264, %c0_265] : memref<49x8x16xf32, #tpu.memory_space<vmem>>, vector<1x8x16xf32>
    %376 = vector.shape_cast %375 : vector<1x8x16xf32> to vector<8x16xf32>
    %cst_266 = arith.constant dense<0.000000e+00> : vector<8x64xf32>
    %377 = tpu.matmul %376, %374, %cst_266 {dimension_numbers = #tpu.dot_dimension_numbers<[1], [0], [0], [1], [0, 0, 1, 1], [], []>} : vector<8x16xf32>, vector<16x64xf32>, vector<8x64xf32> -> vector<8x64xf32>
    %c33_267 = arith.constant 33 : index
    %c0_268 = arith.constant 0 : index
    %c0_269 = arith.constant 0 : index
    %378 = vector.load %arg7[%c33_267, %c0_268, %c0_269] : memref<49x1x64xf32, #tpu.memory_space<vmem>>, vector<1x1x64xf32>
    %379 = vector.shape_cast %378 : vector<1x1x64xf32> to vector<1x64xf32>
    %380 = vector.broadcast %379 : vector<1x64xf32> to vector<8x64xf32>
    %381 = arith.mulf %377, %380 : vector<8x64xf32>
    %382 = arith.addf %373, %381 : vector<8x64xf32>
    %383 = vector.extract_strided_slice %75 {offsets = [0, 38], sizes = [16, 64], strides = [1, 1]} : vector<16x118xf32> to vector<16x64xf32>
    %c34 = arith.constant 34 : index
    %c0_270 = arith.constant 0 : index
    %c0_271 = arith.constant 0 : index
    %384 = vector.load %arg6[%c34, %c0_270, %c0_271] : memref<49x8x16xf32, #tpu.memory_space<vmem>>, vector<1x8x16xf32>
    %385 = vector.shape_cast %384 : vector<1x8x16xf32> to vector<8x16xf32>
    %cst_272 = arith.constant dense<0.000000e+00> : vector<8x64xf32>
    %386 = tpu.matmul %385, %383, %cst_272 {dimension_numbers = #tpu.dot_dimension_numbers<[1], [0], [0], [1], [0, 0, 1, 1], [], []>} : vector<8x16xf32>, vector<16x64xf32>, vector<8x64xf32> -> vector<8x64xf32>
    %c34_273 = arith.constant 34 : index
    %c0_274 = arith.constant 0 : index
    %c0_275 = arith.constant 0 : index
    %387 = vector.load %arg7[%c34_273, %c0_274, %c0_275] : memref<49x1x64xf32, #tpu.memory_space<vmem>>, vector<1x1x64xf32>
    %388 = vector.shape_cast %387 : vector<1x1x64xf32> to vector<1x64xf32>
    %389 = vector.broadcast %388 : vector<1x64xf32> to vector<8x64xf32>
    %390 = arith.mulf %386, %389 : vector<8x64xf32>
    %391 = arith.addf %382, %390 : vector<8x64xf32>
    %392 = vector.extract_strided_slice %75 {offsets = [0, 40], sizes = [16, 64], strides = [1, 1]} : vector<16x118xf32> to vector<16x64xf32>
    %c35 = arith.constant 35 : index
    %c0_276 = arith.constant 0 : index
    %c0_277 = arith.constant 0 : index
    %393 = vector.load %arg6[%c35, %c0_276, %c0_277] : memref<49x8x16xf32, #tpu.memory_space<vmem>>, vector<1x8x16xf32>
    %394 = vector.shape_cast %393 : vector<1x8x16xf32> to vector<8x16xf32>
    %cst_278 = arith.constant dense<0.000000e+00> : vector<8x64xf32>
    %395 = tpu.matmul %394, %392, %cst_278 {dimension_numbers = #tpu.dot_dimension_numbers<[1], [0], [0], [1], [0, 0, 1, 1], [], []>} : vector<8x16xf32>, vector<16x64xf32>, vector<8x64xf32> -> vector<8x64xf32>
    %c35_279 = arith.constant 35 : index
    %c0_280 = arith.constant 0 : index
    %c0_281 = arith.constant 0 : index
    %396 = vector.load %arg7[%c35_279, %c0_280, %c0_281] : memref<49x1x64xf32, #tpu.memory_space<vmem>>, vector<1x1x64xf32>
    %397 = vector.shape_cast %396 : vector<1x1x64xf32> to vector<1x64xf32>
    %398 = vector.broadcast %397 : vector<1x64xf32> to vector<8x64xf32>
    %399 = arith.mulf %395, %398 : vector<8x64xf32>
    %400 = arith.addf %391, %399 : vector<8x64xf32>
    %401 = vector.extract_strided_slice %75 {offsets = [0, 41], sizes = [16, 64], strides = [1, 1]} : vector<16x118xf32> to vector<16x64xf32>
    %c36 = arith.constant 36 : index
    %c0_282 = arith.constant 0 : index
    %c0_283 = arith.constant 0 : index
    %402 = vector.load %arg6[%c36, %c0_282, %c0_283] : memref<49x8x16xf32, #tpu.memory_space<vmem>>, vector<1x8x16xf32>
    %403 = vector.shape_cast %402 : vector<1x8x16xf32> to vector<8x16xf32>
    %cst_284 = arith.constant dense<0.000000e+00> : vector<8x64xf32>
    %404 = tpu.matmul %403, %401, %cst_284 {dimension_numbers = #tpu.dot_dimension_numbers<[1], [0], [0], [1], [0, 0, 1, 1], [], []>} : vector<8x16xf32>, vector<16x64xf32>, vector<8x64xf32> -> vector<8x64xf32>
    %c36_285 = arith.constant 36 : index
    %c0_286 = arith.constant 0 : index
    %c0_287 = arith.constant 0 : index
    %405 = vector.load %arg7[%c36_285, %c0_286, %c0_287] : memref<49x1x64xf32, #tpu.memory_space<vmem>>, vector<1x1x64xf32>
    %406 = vector.shape_cast %405 : vector<1x1x64xf32> to vector<1x64xf32>
    %407 = vector.broadcast %406 : vector<1x64xf32> to vector<8x64xf32>
    %408 = arith.mulf %404, %407 : vector<8x64xf32>
    %409 = arith.addf %400, %408 : vector<8x64xf32>
    %410 = vector.extract_strided_slice %75 {offsets = [0, 42], sizes = [16, 64], strides = [1, 1]} : vector<16x118xf32> to vector<16x64xf32>
    %c37 = arith.constant 37 : index
    %c0_288 = arith.constant 0 : index
    %c0_289 = arith.constant 0 : index
    %411 = vector.load %arg6[%c37, %c0_288, %c0_289] : memref<49x8x16xf32, #tpu.memory_space<vmem>>, vector<1x8x16xf32>
    %412 = vector.shape_cast %411 : vector<1x8x16xf32> to vector<8x16xf32>
    %cst_290 = arith.constant dense<0.000000e+00> : vector<8x64xf32>
    %413 = tpu.matmul %412, %410, %cst_290 {dimension_numbers = #tpu.dot_dimension_numbers<[1], [0], [0], [1], [0, 0, 1, 1], [], []>} : vector<8x16xf32>, vector<16x64xf32>, vector<8x64xf32> -> vector<8x64xf32>
    %c37_291 = arith.constant 37 : index
    %c0_292 = arith.constant 0 : index
    %c0_293 = arith.constant 0 : index
    %414 = vector.load %arg7[%c37_291, %c0_292, %c0_293] : memref<49x1x64xf32, #tpu.memory_space<vmem>>, vector<1x1x64xf32>
    %415 = vector.shape_cast %414 : vector<1x1x64xf32> to vector<1x64xf32>
    %416 = vector.broadcast %415 : vector<1x64xf32> to vector<8x64xf32>
    %417 = arith.mulf %413, %416 : vector<8x64xf32>
    %418 = arith.addf %409, %417 : vector<8x64xf32>
    %419 = vector.extract_strided_slice %75 {offsets = [0, 43], sizes = [16, 64], strides = [1, 1]} : vector<16x118xf32> to vector<16x64xf32>
    %c38 = arith.constant 38 : index
    %c0_294 = arith.constant 0 : index
    %c0_295 = arith.constant 0 : index
    %420 = vector.load %arg6[%c38, %c0_294, %c0_295] : memref<49x8x16xf32, #tpu.memory_space<vmem>>, vector<1x8x16xf32>
    %421 = vector.shape_cast %420 : vector<1x8x16xf32> to vector<8x16xf32>
    %cst_296 = arith.constant dense<0.000000e+00> : vector<8x64xf32>
    %422 = tpu.matmul %421, %419, %cst_296 {dimension_numbers = #tpu.dot_dimension_numbers<[1], [0], [0], [1], [0, 0, 1, 1], [], []>} : vector<8x16xf32>, vector<16x64xf32>, vector<8x64xf32> -> vector<8x64xf32>
    %c38_297 = arith.constant 38 : index
    %c0_298 = arith.constant 0 : index
    %c0_299 = arith.constant 0 : index
    %423 = vector.load %arg7[%c38_297, %c0_298, %c0_299] : memref<49x1x64xf32, #tpu.memory_space<vmem>>, vector<1x1x64xf32>
    %424 = vector.shape_cast %423 : vector<1x1x64xf32> to vector<1x64xf32>
    %425 = vector.broadcast %424 : vector<1x64xf32> to vector<8x64xf32>
    %426 = arith.mulf %422, %425 : vector<8x64xf32>
    %427 = arith.addf %418, %426 : vector<8x64xf32>
    %428 = vector.extract_strided_slice %75 {offsets = [0, 44], sizes = [16, 64], strides = [1, 1]} : vector<16x118xf32> to vector<16x64xf32>
    %c39 = arith.constant 39 : index
    %c0_300 = arith.constant 0 : index
    %c0_301 = arith.constant 0 : index
    %429 = vector.load %arg6[%c39, %c0_300, %c0_301] : memref<49x8x16xf32, #tpu.memory_space<vmem>>, vector<1x8x16xf32>
    %430 = vector.shape_cast %429 : vector<1x8x16xf32> to vector<8x16xf32>
    %cst_302 = arith.constant dense<0.000000e+00> : vector<8x64xf32>
    %431 = tpu.matmul %430, %428, %cst_302 {dimension_numbers = #tpu.dot_dimension_numbers<[1], [0], [0], [1], [0, 0, 1, 1], [], []>} : vector<8x16xf32>, vector<16x64xf32>, vector<8x64xf32> -> vector<8x64xf32>
    %c39_303 = arith.constant 39 : index
    %c0_304 = arith.constant 0 : index
    %c0_305 = arith.constant 0 : index
    %432 = vector.load %arg7[%c39_303, %c0_304, %c0_305] : memref<49x1x64xf32, #tpu.memory_space<vmem>>, vector<1x1x64xf32>
    %433 = vector.shape_cast %432 : vector<1x1x64xf32> to vector<1x64xf32>
    %434 = vector.broadcast %433 : vector<1x64xf32> to vector<8x64xf32>
    %435 = arith.mulf %431, %434 : vector<8x64xf32>
    %436 = arith.addf %427, %435 : vector<8x64xf32>
    %437 = vector.extract_strided_slice %75 {offsets = [0, 45], sizes = [16, 64], strides = [1, 1]} : vector<16x118xf32> to vector<16x64xf32>
    %c40 = arith.constant 40 : index
    %c0_306 = arith.constant 0 : index
    %c0_307 = arith.constant 0 : index
    %438 = vector.load %arg6[%c40, %c0_306, %c0_307] : memref<49x8x16xf32, #tpu.memory_space<vmem>>, vector<1x8x16xf32>
    %439 = vector.shape_cast %438 : vector<1x8x16xf32> to vector<8x16xf32>
    %cst_308 = arith.constant dense<0.000000e+00> : vector<8x64xf32>
    %440 = tpu.matmul %439, %437, %cst_308 {dimension_numbers = #tpu.dot_dimension_numbers<[1], [0], [0], [1], [0, 0, 1, 1], [], []>} : vector<8x16xf32>, vector<16x64xf32>, vector<8x64xf32> -> vector<8x64xf32>
    %c40_309 = arith.constant 40 : index
    %c0_310 = arith.constant 0 : index
    %c0_311 = arith.constant 0 : index
    %441 = vector.load %arg7[%c40_309, %c0_310, %c0_311] : memref<49x1x64xf32, #tpu.memory_space<vmem>>, vector<1x1x64xf32>
    %442 = vector.shape_cast %441 : vector<1x1x64xf32> to vector<1x64xf32>
    %443 = vector.broadcast %442 : vector<1x64xf32> to vector<8x64xf32>
    %444 = arith.mulf %440, %443 : vector<8x64xf32>
    %445 = arith.addf %436, %444 : vector<8x64xf32>
    %446 = vector.extract_strided_slice %75 {offsets = [0, 46], sizes = [16, 64], strides = [1, 1]} : vector<16x118xf32> to vector<16x64xf32>
    %c41 = arith.constant 41 : index
    %c0_312 = arith.constant 0 : index
    %c0_313 = arith.constant 0 : index
    %447 = vector.load %arg6[%c41, %c0_312, %c0_313] : memref<49x8x16xf32, #tpu.memory_space<vmem>>, vector<1x8x16xf32>
    %448 = vector.shape_cast %447 : vector<1x8x16xf32> to vector<8x16xf32>
    %cst_314 = arith.constant dense<0.000000e+00> : vector<8x64xf32>
    %449 = tpu.matmul %448, %446, %cst_314 {dimension_numbers = #tpu.dot_dimension_numbers<[1], [0], [0], [1], [0, 0, 1, 1], [], []>} : vector<8x16xf32>, vector<16x64xf32>, vector<8x64xf32> -> vector<8x64xf32>
    %c41_315 = arith.constant 41 : index
    %c0_316 = arith.constant 0 : index
    %c0_317 = arith.constant 0 : index
    %450 = vector.load %arg7[%c41_315, %c0_316, %c0_317] : memref<49x1x64xf32, #tpu.memory_space<vmem>>, vector<1x1x64xf32>
    %451 = vector.shape_cast %450 : vector<1x1x64xf32> to vector<1x64xf32>
    %452 = vector.broadcast %451 : vector<1x64xf32> to vector<8x64xf32>
    %453 = arith.mulf %449, %452 : vector<8x64xf32>
    %454 = arith.addf %445, %453 : vector<8x64xf32>
    %455 = vector.extract_strided_slice %75 {offsets = [0, 48], sizes = [16, 64], strides = [1, 1]} : vector<16x118xf32> to vector<16x64xf32>
    %c42 = arith.constant 42 : index
    %c0_318 = arith.constant 0 : index
    %c0_319 = arith.constant 0 : index
    %456 = vector.load %arg6[%c42, %c0_318, %c0_319] : memref<49x8x16xf32, #tpu.memory_space<vmem>>, vector<1x8x16xf32>
    %457 = vector.shape_cast %456 : vector<1x8x16xf32> to vector<8x16xf32>
    %cst_320 = arith.constant dense<0.000000e+00> : vector<8x64xf32>
    %458 = tpu.matmul %457, %455, %cst_320 {dimension_numbers = #tpu.dot_dimension_numbers<[1], [0], [0], [1], [0, 0, 1, 1], [], []>} : vector<8x16xf32>, vector<16x64xf32>, vector<8x64xf32> -> vector<8x64xf32>
    %c42_321 = arith.constant 42 : index
    %c0_322 = arith.constant 0 : index
    %c0_323 = arith.constant 0 : index
    %459 = vector.load %arg7[%c42_321, %c0_322, %c0_323] : memref<49x1x64xf32, #tpu.memory_space<vmem>>, vector<1x1x64xf32>
    %460 = vector.shape_cast %459 : vector<1x1x64xf32> to vector<1x64xf32>
    %461 = vector.broadcast %460 : vector<1x64xf32> to vector<8x64xf32>
    %462 = arith.mulf %458, %461 : vector<8x64xf32>
    %463 = arith.addf %454, %462 : vector<8x64xf32>
    %464 = vector.extract_strided_slice %75 {offsets = [0, 49], sizes = [16, 64], strides = [1, 1]} : vector<16x118xf32> to vector<16x64xf32>
    %c43 = arith.constant 43 : index
    %c0_324 = arith.constant 0 : index
    %c0_325 = arith.constant 0 : index
    %465 = vector.load %arg6[%c43, %c0_324, %c0_325] : memref<49x8x16xf32, #tpu.memory_space<vmem>>, vector<1x8x16xf32>
    %466 = vector.shape_cast %465 : vector<1x8x16xf32> to vector<8x16xf32>
    %cst_326 = arith.constant dense<0.000000e+00> : vector<8x64xf32>
    %467 = tpu.matmul %466, %464, %cst_326 {dimension_numbers = #tpu.dot_dimension_numbers<[1], [0], [0], [1], [0, 0, 1, 1], [], []>} : vector<8x16xf32>, vector<16x64xf32>, vector<8x64xf32> -> vector<8x64xf32>
    %c43_327 = arith.constant 43 : index
    %c0_328 = arith.constant 0 : index
    %c0_329 = arith.constant 0 : index
    %468 = vector.load %arg7[%c43_327, %c0_328, %c0_329] : memref<49x1x64xf32, #tpu.memory_space<vmem>>, vector<1x1x64xf32>
    %469 = vector.shape_cast %468 : vector<1x1x64xf32> to vector<1x64xf32>
    %470 = vector.broadcast %469 : vector<1x64xf32> to vector<8x64xf32>
    %471 = arith.mulf %467, %470 : vector<8x64xf32>
    %472 = arith.addf %463, %471 : vector<8x64xf32>
    %473 = vector.extract_strided_slice %75 {offsets = [0, 50], sizes = [16, 64], strides = [1, 1]} : vector<16x118xf32> to vector<16x64xf32>
    %c44 = arith.constant 44 : index
    %c0_330 = arith.constant 0 : index
    %c0_331 = arith.constant 0 : index
    %474 = vector.load %arg6[%c44, %c0_330, %c0_331] : memref<49x8x16xf32, #tpu.memory_space<vmem>>, vector<1x8x16xf32>
    %475 = vector.shape_cast %474 : vector<1x8x16xf32> to vector<8x16xf32>
    %cst_332 = arith.constant dense<0.000000e+00> : vector<8x64xf32>
    %476 = tpu.matmul %475, %473, %cst_332 {dimension_numbers = #tpu.dot_dimension_numbers<[1], [0], [0], [1], [0, 0, 1, 1], [], []>} : vector<8x16xf32>, vector<16x64xf32>, vector<8x64xf32> -> vector<8x64xf32>
    %c44_333 = arith.constant 44 : index
    %c0_334 = arith.constant 0 : index
    %c0_335 = arith.constant 0 : index
    %477 = vector.load %arg7[%c44_333, %c0_334, %c0_335] : memref<49x1x64xf32, #tpu.memory_space<vmem>>, vector<1x1x64xf32>
    %478 = vector.shape_cast %477 : vector<1x1x64xf32> to vector<1x64xf32>
    %479 = vector.broadcast %478 : vector<1x64xf32> to vector<8x64xf32>
    %480 = arith.mulf %476, %479 : vector<8x64xf32>
    %481 = arith.addf %472, %480 : vector<8x64xf32>
    %482 = vector.extract_strided_slice %75 {offsets = [0, 51], sizes = [16, 64], strides = [1, 1]} : vector<16x118xf32> to vector<16x64xf32>
    %c45 = arith.constant 45 : index
    %c0_336 = arith.constant 0 : index
    %c0_337 = arith.constant 0 : index
    %483 = vector.load %arg6[%c45, %c0_336, %c0_337] : memref<49x8x16xf32, #tpu.memory_space<vmem>>, vector<1x8x16xf32>
    %484 = vector.shape_cast %483 : vector<1x8x16xf32> to vector<8x16xf32>
    %cst_338 = arith.constant dense<0.000000e+00> : vector<8x64xf32>
    %485 = tpu.matmul %484, %482, %cst_338 {dimension_numbers = #tpu.dot_dimension_numbers<[1], [0], [0], [1], [0, 0, 1, 1], [], []>} : vector<8x16xf32>, vector<16x64xf32>, vector<8x64xf32> -> vector<8x64xf32>
    %c45_339 = arith.constant 45 : index
    %c0_340 = arith.constant 0 : index
    %c0_341 = arith.constant 0 : index
    %486 = vector.load %arg7[%c45_339, %c0_340, %c0_341] : memref<49x1x64xf32, #tpu.memory_space<vmem>>, vector<1x1x64xf32>
    %487 = vector.shape_cast %486 : vector<1x1x64xf32> to vector<1x64xf32>
    %488 = vector.broadcast %487 : vector<1x64xf32> to vector<8x64xf32>
    %489 = arith.mulf %485, %488 : vector<8x64xf32>
    %490 = arith.addf %481, %489 : vector<8x64xf32>
    %491 = vector.extract_strided_slice %75 {offsets = [0, 52], sizes = [16, 64], strides = [1, 1]} : vector<16x118xf32> to vector<16x64xf32>
    %c46 = arith.constant 46 : index
    %c0_342 = arith.constant 0 : index
    %c0_343 = arith.constant 0 : index
    %492 = vector.load %arg6[%c46, %c0_342, %c0_343] : memref<49x8x16xf32, #tpu.memory_space<vmem>>, vector<1x8x16xf32>
    %493 = vector.shape_cast %492 : vector<1x8x16xf32> to vector<8x16xf32>
    %cst_344 = arith.constant dense<0.000000e+00> : vector<8x64xf32>
    %494 = tpu.matmul %493, %491, %cst_344 {dimension_numbers = #tpu.dot_dimension_numbers<[1], [0], [0], [1], [0, 0, 1, 1], [], []>} : vector<8x16xf32>, vector<16x64xf32>, vector<8x64xf32> -> vector<8x64xf32>
    %c46_345 = arith.constant 46 : index
    %c0_346 = arith.constant 0 : index
    %c0_347 = arith.constant 0 : index
    %495 = vector.load %arg7[%c46_345, %c0_346, %c0_347] : memref<49x1x64xf32, #tpu.memory_space<vmem>>, vector<1x1x64xf32>
    %496 = vector.shape_cast %495 : vector<1x1x64xf32> to vector<1x64xf32>
    %497 = vector.broadcast %496 : vector<1x64xf32> to vector<8x64xf32>
    %498 = arith.mulf %494, %497 : vector<8x64xf32>
    %499 = arith.addf %490, %498 : vector<8x64xf32>
    %500 = vector.extract_strided_slice %75 {offsets = [0, 53], sizes = [16, 64], strides = [1, 1]} : vector<16x118xf32> to vector<16x64xf32>
    %c47 = arith.constant 47 : index
    %c0_348 = arith.constant 0 : index
    %c0_349 = arith.constant 0 : index
    %501 = vector.load %arg6[%c47, %c0_348, %c0_349] : memref<49x8x16xf32, #tpu.memory_space<vmem>>, vector<1x8x16xf32>
    %502 = vector.shape_cast %501 : vector<1x8x16xf32> to vector<8x16xf32>
    %cst_350 = arith.constant dense<0.000000e+00> : vector<8x64xf32>
    %503 = tpu.matmul %502, %500, %cst_350 {dimension_numbers = #tpu.dot_dimension_numbers<[1], [0], [0], [1], [0, 0, 1, 1], [], []>} : vector<8x16xf32>, vector<16x64xf32>, vector<8x64xf32> -> vector<8x64xf32>
    %c47_351 = arith.constant 47 : index
    %c0_352 = arith.constant 0 : index
    %c0_353 = arith.constant 0 : index
    %504 = vector.load %arg7[%c47_351, %c0_352, %c0_353] : memref<49x1x64xf32, #tpu.memory_space<vmem>>, vector<1x1x64xf32>
    %505 = vector.shape_cast %504 : vector<1x1x64xf32> to vector<1x64xf32>
    %506 = vector.broadcast %505 : vector<1x64xf32> to vector<8x64xf32>
    %507 = arith.mulf %503, %506 : vector<8x64xf32>
    %508 = arith.addf %499, %507 : vector<8x64xf32>
    %509 = vector.extract_strided_slice %75 {offsets = [0, 54], sizes = [16, 64], strides = [1, 1]} : vector<16x118xf32> to vector<16x64xf32>
    %c48 = arith.constant 48 : index
    %c0_354 = arith.constant 0 : index
    %c0_355 = arith.constant 0 : index
    %510 = vector.load %arg6[%c48, %c0_354, %c0_355] : memref<49x8x16xf32, #tpu.memory_space<vmem>>, vector<1x8x16xf32>
    %511 = vector.shape_cast %510 : vector<1x8x16xf32> to vector<8x16xf32>
    %cst_356 = arith.constant dense<0.000000e+00> : vector<8x64xf32>
    %512 = tpu.matmul %511, %509, %cst_356 {dimension_numbers = #tpu.dot_dimension_numbers<[1], [0], [0], [1], [0, 0, 1, 1], [], []>} : vector<8x16xf32>, vector<16x64xf32>, vector<8x64xf32> -> vector<8x64xf32>
    %c48_357 = arith.constant 48 : index
    %c0_358 = arith.constant 0 : index
    %c0_359 = arith.constant 0 : index
    %513 = vector.load %arg7[%c48_357, %c0_358, %c0_359] : memref<49x1x64xf32, #tpu.memory_space<vmem>>, vector<1x1x64xf32>
    %514 = vector.shape_cast %513 : vector<1x1x64xf32> to vector<1x64xf32>
    %515 = vector.broadcast %514 : vector<1x64xf32> to vector<8x64xf32>
    %516 = arith.mulf %512, %515 : vector<8x64xf32>
    %517 = arith.addf %508, %516 : vector<8x64xf32>
    %518 = vector.shape_cast %517 : vector<8x64xf32> to vector<1x8x64xf32>
    %cst_360 = arith.constant dense<0.000000e+00> : vector<1xf32>
    %519 = vector.multi_reduction <add>, %518, %cst_360 [1, 2] : vector<1x8x64xf32> to vector<1xf32>
    %520 = vector.shape_cast %519 : vector<1xf32> to vector<1x1x1xf32>
    %521 = vector.extract %520[0, 0, 0] : f32 from vector<1x1x1xf32>
    %cst_361 = arith.constant 5.120000e+02 : f32
    %522 = arith.divf %521, %cst_361 : f32
    %523 = vector.broadcast %522 : f32 to vector<8x64xf32>
    %524 = arith.subf %517, %523 : vector<8x64xf32>
    %525 = arith.mulf %524, %524 : vector<8x64xf32>
    %526 = vector.shape_cast %525 : vector<8x64xf32> to vector<1x8x64xf32>
    %cst_362 = arith.constant dense<0.000000e+00> : vector<1xf32>
    %527 = vector.multi_reduction <add>, %526, %cst_362 [1, 2] : vector<1x8x64xf32> to vector<1xf32>
    %528 = vector.shape_cast %527 : vector<1xf32> to vector<1x1x1xf32>
    %529 = vector.extract %528[0, 0, 0] : f32 from vector<1x1x1xf32>
    %cst_363 = arith.constant 5.120000e+02 : f32
    %530 = arith.divf %529, %cst_363 : f32
    %531 = vector.broadcast %522 : f32 to vector<8x64xf32>
    %532 = arith.subf %517, %531 : vector<8x64xf32>
    %cst_364 = arith.constant 9.99999974E-6 : f32
    %533 = arith.addf %530, %cst_364 : f32
    %534 = math.rsqrt %533 : f32
    %535 = vector.broadcast %534 : f32 to vector<8x64xf32>
    %536 = arith.mulf %532, %535 : vector<8x64xf32>
    %cst_365 = arith.constant 0.000000e+00 : f32
    %537 = vector.broadcast %cst_365 : f32 to vector<8x64xf32>
    %538 = arith.maximumf %536, %537 : vector<8x64xf32>
    %cst_366 = arith.constant 5.000000e-01 : f32
    %539 = vector.broadcast %cst_366 : f32 to vector<8x64xf32>
    %540 = arith.mulf %539, %538 : vector<8x64xf32>
    %541 = math.tanh %540 : vector<8x64xf32>
    %cst_367 = arith.constant 1.000000e+00 : f32
    %542 = vector.broadcast %cst_367 : f32 to vector<8x64xf32>
    %543 = arith.addf %541, %542 : vector<8x64xf32>
    %cst_368 = arith.constant 5.000000e-01 : f32
    %544 = vector.broadcast %cst_368 : f32 to vector<8x64xf32>
    %545 = arith.mulf %544, %543 : vector<8x64xf32>
    %546 = vector.extract_strided_slice %545 {offsets = [0, 0], sizes = [1, 64], strides = [1, 1]} : vector<8x64xf32> to vector<1x64xf32>
    %c0_369 = arith.constant 0 : index
    %c0_370 = arith.constant 0 : index
    %547 = vector.load %arg11[%c0_369, %c0_370] : memref<1x512xf32, #tpu.memory_space<vmem>>, vector<1x64xf32>
    tpu.vector_store %arg11[%c0_369, %c0_370], %546 {strides = array<i32>} : memref<1x512xf32, #tpu.memory_space<vmem>>, vector<1x64xf32>,
    %548 = vector.extract_strided_slice %545 {offsets = [1, 0], sizes = [1, 64], strides = [1, 1]} : vector<8x64xf32> to vector<1x64xf32>
    %c0_371 = arith.constant 0 : index
    %c64 = arith.constant 64 : index
    %549 = vector.load %arg11[%c0_371, %c64] : memref<1x512xf32, #tpu.memory_space<vmem>>, vector<1x64xf32>
    tpu.vector_store %arg11[%c0_371, %c64], %548 {strides = array<i32>} : memref<1x512xf32, #tpu.memory_space<vmem>>, vector<1x64xf32>,
    %550 = vector.extract_strided_slice %545 {offsets = [2, 0], sizes = [1, 64], strides = [1, 1]} : vector<8x64xf32> to vector<1x64xf32>
    %c0_372 = arith.constant 0 : index
    %c128 = arith.constant 128 : index
    %551 = vector.load %arg11[%c0_372, %c128] : memref<1x512xf32, #tpu.memory_space<vmem>>, vector<1x64xf32>
    tpu.vector_store %arg11[%c0_372, %c128], %550 {strides = array<i32>} : memref<1x512xf32, #tpu.memory_space<vmem>>, vector<1x64xf32>,
    %552 = vector.extract_strided_slice %545 {offsets = [3, 0], sizes = [1, 64], strides = [1, 1]} : vector<8x64xf32> to vector<1x64xf32>
    %c0_373 = arith.constant 0 : index
    %c192 = arith.constant 192 : index
    %553 = vector.load %arg11[%c0_373, %c192] : memref<1x512xf32, #tpu.memory_space<vmem>>, vector<1x64xf32>
    tpu.vector_store %arg11[%c0_373, %c192], %552 {strides = array<i32>} : memref<1x512xf32, #tpu.memory_space<vmem>>, vector<1x64xf32>,
    %554 = vector.extract_strided_slice %545 {offsets = [4, 0], sizes = [1, 64], strides = [1, 1]} : vector<8x64xf32> to vector<1x64xf32>
    %c0_374 = arith.constant 0 : index
    %c256 = arith.constant 256 : index
    %555 = vector.load %arg11[%c0_374, %c256] : memref<1x512xf32, #tpu.memory_space<vmem>>, vector<1x64xf32>
    tpu.vector_store %arg11[%c0_374, %c256], %554 {strides = array<i32>} : memref<1x512xf32, #tpu.memory_space<vmem>>, vector<1x64xf32>,
    %556 = vector.extract_strided_slice %545 {offsets = [5, 0], sizes = [1, 64], strides = [1, 1]} : vector<8x64xf32> to vector<1x64xf32>
    %c0_375 = arith.constant 0 : index
    %c320 = arith.constant 320 : index
    %557 = vector.load %arg11[%c0_375, %c320] : memref<1x512xf32, #tpu.memory_space<vmem>>, vector<1x64xf32>
    tpu.vector_store %arg11[%c0_375, %c320], %556 {strides = array<i32>} : memref<1x512xf32, #tpu.memory_space<vmem>>, vector<1x64xf32>,
    %558 = vector.extract_strided_slice %545 {offsets = [6, 0], sizes = [1, 64], strides = [1, 1]} : vector<8x64xf32> to vector<1x64xf32>
    %c0_376 = arith.constant 0 : index
    %c384 = arith.constant 384 : index
    %559 = vector.load %arg11[%c0_376, %c384] : memref<1x512xf32, #tpu.memory_space<vmem>>, vector<1x64xf32>
    tpu.vector_store %arg11[%c0_376, %c384], %558 {strides = array<i32>} : memref<1x512xf32, #tpu.memory_space<vmem>>, vector<1x64xf32>,
    %560 = vector.extract_strided_slice %545 {offsets = [7, 0], sizes = [1, 64], strides = [1, 1]} : vector<8x64xf32> to vector<1x64xf32>
    %c0_377 = arith.constant 0 : index
    %c448 = arith.constant 448 : index
    %561 = vector.load %arg11[%c0_377, %c448] : memref<1x512xf32, #tpu.memory_space<vmem>>, vector<1x64xf32>
    tpu.vector_store %arg11[%c0_377, %c448], %560 {strides = array<i32>} : memref<1x512xf32, #tpu.memory_space<vmem>>, vector<1x64xf32>,
    %c0_378 = arith.constant 0 : index
    %c0_379 = arith.constant 0 : index
    %562 = vector.load %arg11[%c0_378, %c0_379] : memref<1x512xf32, #tpu.memory_space<vmem>>, vector<1x512xf32>
    %563 = vector.broadcast %562 : vector<1x512xf32> to vector<32x512xf32>
    %564 = arith.mulf %34, %563 : vector<32x512xf32>
    %c0_380 = arith.constant 0 : index
    %c0_381 = arith.constant 0 : index
    %c0_382 = arith.constant 0 : index
    %565 = vector.load %arg8[%c0_380, %c0_381, %c0_382] : memref<1x32x512xf32, #tpu.memory_space<vmem>>, vector<1x32x512xf32>
    %566 = vector.shape_cast %565 : vector<1x32x512xf32> to vector<32x512xf32>
    %567 = vector.shape_cast %564 : vector<32x512xf32> to vector<1x32x512xf32>
    tpu.vector_store %arg8[%c0_380, %c0_381, %c0_382], %567 {strides = array<i32>} : memref<1x32x512xf32, #tpu.memory_space<vmem>>, vector<1x32x512xf32>,
    return
  }
  func.func @transform_0(%arg0: i32) -> (i32, i32, i32) {
    %c0_i32 = arith.constant 0 : i32
    %c0_i32_0 = arith.constant 0 : i32
    %c0_i32_1 = arith.constant 0 : i32
    return %arg0, %c0_i32, %c0_i32_0 : i32, i32, i32
  }
  func.func @transform_1(%arg0: i32) -> (i32, i32) {
    %c0_i32 = arith.constant 0 : i32
    %c0_i32_0 = arith.constant 0 : i32
    %c0_i32_1 = arith.constant 0 : i32
    return %c0_i32, %c0_i32_0 : i32, i32
  }
  func.func @transform_2(%arg0: i32) -> (i32, i32) {
    %c0_i32 = arith.constant 0 : i32
    %c0_i32_0 = arith.constant 0 : i32
    %c0_i32_1 = arith.constant 0 : i32
    return %c0_i32, %c0_i32_0 : i32, i32
  }
  func.func @transform_3(%arg0: i32) -> (i32, i32) {
    %c0_i32 = arith.constant 0 : i32
    %c0_i32_0 = arith.constant 0 : i32
    %c0_i32_1 = arith.constant 0 : i32
    return %c0_i32, %c0_i32_0 : i32, i32
  }
  func.func @transform_4(%arg0: i32) -> (i32, i32) {
    %c0_i32 = arith.constant 0 : i32
    %c0_i32_0 = arith.constant 0 : i32
    %c0_i32_1 = arith.constant 0 : i32
    return %c0_i32, %c0_i32_0 : i32, i32
  }
  func.func @transform_5(%arg0: i32) -> (i32, i32, i32) {
    %c0_i32 = arith.constant 0 : i32
    %c0_i32_0 = arith.constant 0 : i32
    %c0_i32_1 = arith.constant 0 : i32
    %c0_i32_2 = arith.constant 0 : i32
    return %c0_i32, %c0_i32_0, %c0_i32_1 : i32, i32, i32
  }
  func.func @transform_6(%arg0: i32) -> (i32, i32, i32) {
    %c0_i32 = arith.constant 0 : i32
    %c0_i32_0 = arith.constant 0 : i32
    %c0_i32_1 = arith.constant 0 : i32
    %c0_i32_2 = arith.constant 0 : i32
    return %c0_i32, %c0_i32_0, %c0_i32_1 : i32, i32, i32
  }
  func.func @transform_7(%arg0: i32) -> (i32, i32, i32) {
    %c0_i32 = arith.constant 0 : i32
    %c0_i32_0 = arith.constant 0 : i32
    %c0_i32_1 = arith.constant 0 : i32
    return %arg0, %c0_i32, %c0_i32_0 : i32, i32, i32
  }
}

</mosaic_0001>

<llo_original>
// kernel: tpu_custom_call.1
$region0: #{tpu_custom_call.1}
  #allocation0 [shape = 'u32[]', space=smem, size = 0x4, offset = 0x4, fixed_abs, tag = 'smem constant byte address 0x4 - core index']
  #allocation1 [shape = 'u32[144,128]{1,0:T(1,128)}', space=vmem, size = 0x12000, scoped, tag = 'internal scratch']
  #allocation2 [shape = 'f32[32,2]{1,0:T(8,128)}', space=vmem, size = 0x4000, scoped, tag = 'scratch operand']
  #allocation3 [shape = 'f32[16,118]{1,0:T(8,128)}', space=vmem, size = 0x2000, scoped, tag = 'scratch operand']
  #allocation4 [shape = 'f32[1,512]{1,0:T(1,128)}', space=vmem, size = 0x800, scoped, tag = 'scratch operand']
  %s0 = inlined_call_operand.vmem [shape: f32[2,32,512], index: 0, kind: input, shape index: {}]
  %s1 = inlined_call_operand.vmem [shape: f32[2,32], index: 1, kind: input, shape index: {}]
  %s2 = inlined_call_operand.vmem [shape: f32[2,1], index: 2, kind: input, shape index: {}]
  %s3 = inlined_call_operand.vmem [shape: f32[32,2], index: 3, kind: input, shape index: {}]
  %s4 = inlined_call_operand.vmem [shape: f32[32,1], index: 4, kind: input, shape index: {}]
  %s5 = inlined_call_operand.vmem [shape: f32[49,8,16], index: 5, kind: input, shape index: {}]
  %s6 = inlined_call_operand.vmem [shape: f32[49,1,64], index: 6, kind: input, shape index: {}]
  %s7 = inlined_call_operand.hbm [shape: f32[2,32,512], index: 7, kind: output, shape index: {}]
  %s8 = sld [smem:[#allocation0]]
  $region61: #{tpu_custom_call.1} parent=0
    _
  %s10 = ssub.s32 1, %s8
  %s11 = scalar_select 0, %s10, %s8
  $region1: #{tpu_custom_call.1} parent=0
    #allocation5 [shape = 'u8[131072]{0}', space=vmem, size = 0x20000, scoped, tag = 'output window, operand 0']
    #allocation6 [shape = 's32[2]{0}', space=sflag, size = 0x8, scoped, tag = 'scoped memory for tpu_custom_call.1']
    %12 = vsyncpa [#allocation6], 0
    %s13 = scalar_lea.sflag [#allocation6], 1
    %14 = vsyncpa %s13, 0
    loop: start=0, step=1, limit=4
    $region2: #{tpu_custom_call.1} parent=1 // loop_pre_header
      _
    $region3: #{tpu_custom_call.1} parent=1 // loop_header
      %s16 = sphi 0, %s20
      %p17 = scmp.ge.s32.totalorder %s16, 4
      %s26 = sphi 0, %s28
      %s29 = sphi 0, %s26
      %s30 = sphi 0, %s29
      %s46 = sphi 0, %s30
      %s50 = sphi 0, %s50
      %s52 = sphi 0, %s50
      %s53 = sphi 0, %s52
      %s67 = sphi 0, %s53
      %s71 = sphi 0, %s71
      %s73 = sphi 0, %s71
      %s74 = sphi 0, %s73
      %s88 = sphi 0, %s74
      %s92 = sphi 0, %s92
      %s94 = sphi 0, %s92
      %s95 = sphi 0, %s94
      %s109 = sphi 0, %s95
      %s113 = sphi 0, %s113
      %s115 = sphi 0, %s113
      %s116 = sphi 0, %s115
      %s130 = sphi 0, %s116
      %s134 = sphi 0, %s134
      %s136 = sphi 0, %s134
      %s137 = sphi 0, %s136
      %s151 = sphi 0, %s137
      %s155 = sphi 0, %s155
      %s157 = sphi 0, %s155
      %s158 = sphi 0, %s157
      %s172 = sphi 0, %s158
      %s178 = sphi 0, %s180
      %s181 = sphi 0, %s178
      %s182 = sphi 0, %s181
      %s198 = sphi 0, %s182
    $region4: #{tpu_custom_call.1} parent=1 // loop_header_branch
      %19 = sbr.rel (%p17) target = $region8
    $region5: #{tpu_custom_call.1} parent=1 // loop_body
      %s21 = ssub.s32 %s16, 1
      %s22 = ssub.s32 %s16, 2
      %s23 = sadd.s32 %s16, 1
      %s24 = ssub.s32 %s16, %s23
      %p25 = scmp.eq.s32.totalorder %s24, 0
      %s27 = sadd.s32 %s26, 1
      %s28 = scalar_select %p25, %s26, %s27
      %p31 = pneg %p25
      %p32 = scmp.eq.s32.totalorder %s16, 1
      %p33 = por %p31, %p32
      %p34 = scmp.ne.s32.totalorder %s26, %s29
      %p35 = scmp.eq.s32.totalorder %s16, 0
      %p36 = por %p34, %p35
      %p37 = scmp.ne.s32.totalorder %s26, %s29
      %p38 = scmp.eq.s32.totalorder %s21, 1
      %p39 = por %p37, %p38
      %p40 = scmp.ne.s32.totalorder %s29, %s30
      %p41 = scmp.eq.s32.totalorder %s21, 0
      %p42 = por %p40, %p41
      %p43 = scmp.ne.s32.totalorder %s29, %s30
      %p44 = scmp.eq.s32.totalorder %s22, 1
      %p45 = por %p43, %p44
      %p47 = scmp.ne.s32.totalorder %s30, %s46
      %p48 = scmp.eq.s32.totalorder %s22, 0
      %p49 = por %p47, %p48
      %s51 = sadd.s32 %s50, 1
      %p54 = scmp.eq.s32.totalorder %s16, 1
      %p55 = scmp.ne.s32.totalorder %s50, %s52
      %p56 = scmp.eq.s32.totalorder %s16, 0
      %p57 = por %p55, %p56
      %p58 = scmp.ne.s32.totalorder %s50, %s52
      %p59 = scmp.eq.s32.totalorder %s21, 1
      %p60 = por %p58, %p59
      %p61 = scmp.ne.s32.totalorder %s52, %s53
      %p62 = scmp.eq.s32.totalorder %s21, 0
      %p63 = por %p61, %p62
      %p64 = scmp.ne.s32.totalorder %s52, %s53
      %p65 = scmp.eq.s32.totalorder %s22, 1
      %p66 = por %p64, %p65
      %p68 = scmp.ne.s32.totalorder %s53, %s67
      %p69 = scmp.eq.s32.totalorder %s22, 0
      %p70 = por %p68, %p69
      %s72 = sadd.s32 %s71, 1
      %p75 = scmp.eq.s32.totalorder %s16, 1
      %p76 = scmp.ne.s32.totalorder %s71, %s73
      %p77 = scmp.eq.s32.totalorder %s16, 0
      %p78 = por %p76, %p77
      %p79 = scmp.ne.s32.totalorder %s71, %s73
      %p80 = scmp.eq.s32.totalorder %s21, 1
      %p81 = por %p79, %p80
      %p82 = scmp.ne.s32.totalorder %s73, %s74
      %p83 = scmp.eq.s32.totalorder %s21, 0
      %p84 = por %p82, %p83
      %p85 = scmp.ne.s32.totalorder %s73, %s74
      %p86 = scmp.eq.s32.totalorder %s22, 1
      %p87 = por %p85, %p86
      %p89 = scmp.ne.s32.totalorder %s74, %s88
      %p90 = scmp.eq.s32.totalorder %s22, 0
      %p91 = por %p89, %p90
      %s93 = sadd.s32 %s92, 1
      %p96 = scmp.eq.s32.totalorder %s16, 1
      %p97 = scmp.ne.s32.totalorder %s92, %s94
      %p98 = scmp.eq.s32.totalorder %s16, 0
      %p99 = por %p97, %p98
      %p100 = scmp.ne.s32.totalorder %s92, %s94
      %p101 = scmp.eq.s32.totalorder %s21, 1
      %p102 = por %p100, %p101
      %p103 = scmp.ne.s32.totalorder %s94, %s95
      %p104 = scmp.eq.s32.totalorder %s21, 0
      %p105 = por %p103, %p104
      %p106 = scmp.ne.s32.totalorder %s94, %s95
      %p107 = scmp.eq.s32.totalorder %s22, 1
      %p108 = por %p106, %p107
      %p110 = scmp.ne.s32.totalorder %s95, %s109
      %p111 = scmp.eq.s32.totalorder %s22, 0
      %p112 = por %p110, %p111
      %s114 = sadd.s32 %s113, 1
      %p117 = scmp.eq.s32.totalorder %s16, 1
      %p118 = scmp.ne.s32.totalorder %s113, %s115
      %p119 = scmp.eq.s32.totalorder %s16, 0
      %p120 = por %p118, %p119
      %p121 = scmp.ne.s32.totalorder %s113, %s115
      %p122 = scmp.eq.s32.totalorder %s21, 1
      %p123 = por %p121, %p122
      %p124 = scmp.ne.s32.totalorder %s115, %s116
      %p125 = scmp.eq.s32.totalorder %s21, 0
      %p126 = por %p124, %p125
      %p127 = scmp.ne.s32.totalorder %s115, %s116
      %p128 = scmp.eq.s32.totalorder %s22, 1
      %p129 = por %p127, %p128
      %p131 = scmp.ne.s32.totalorder %s116, %s130
      %p132 = scmp.eq.s32.totalorder %s22, 0
      %p133 = por %p131, %p132
      %s135 = sadd.s32 %s134, 1
      %p138 = scmp.eq.s32.totalorder %s16, 1
      %p139 = scmp.ne.s32.totalorder %s134, %s136
      %p140 = scmp.eq.s32.totalorder %s16, 0
      %p141 = por %p139, %p140
      %p142 = scmp.ne.s32.totalorder %s134, %s136
      %p143 = scmp.eq.s32.totalorder %s21, 1
      %p144 = por %p142, %p143
      %p145 = scmp.ne.s32.totalorder %s136, %s137
      %p146 = scmp.eq.s32.totalorder %s21, 0
      %p147 = por %p145, %p146
      %p148 = scmp.ne.s32.totalorder %s136, %s137
      %p149 = scmp.eq.s32.totalorder %s22, 1
      %p150 = por %p148, %p149
      %p152 = scmp.ne.s32.totalorder %s137, %s151
      %p153 = scmp.eq.s32.totalorder %s22, 0
      %p154 = por %p152, %p153
      %s156 = sadd.s32 %s155, 1
      %p159 = scmp.eq.s32.totalorder %s16, 1
      %p160 = scmp.ne.s32.totalorder %s155, %s157
      %p161 = scmp.eq.s32.totalorder %s16, 0
      %p162 = por %p160, %p161
      %p163 = scmp.ne.s32.totalorder %s155, %s157
      %p164 = scmp.eq.s32.totalorder %s21, 1
      %p165 = por %p163, %p164
      %p166 = scmp.ne.s32.totalorder %s157, %s158
      %p167 = scmp.eq.s32.totalorder %s21, 0
      %p168 = por %p166, %p167
      %p169 = scmp.ne.s32.totalorder %s157, %s158
      %p170 = scmp.eq.s32.totalorder %s22, 1
      %p171 = por %p169, %p170
      %p173 = scmp.ne.s32.totalorder %s158, %s172
      %p174 = scmp.eq.s32.totalorder %s22, 0
      %p175 = por %p173, %p174
      %s176 = ssub.s32 %s16, %s23
      %p177 = scmp.eq.s32.totalorder %s176, 0
      %s179 = sadd.s32 %s178, 1
      %s180 = scalar_select %p177, %s178, %s179
      %p183 = pneg %p177
      %p184 = scmp.eq.s32.totalorder %s16, 1
      %p185 = por %p183, %p184
      %p186 = scmp.ne.s32.totalorder %s178, %s181
      %p187 = scmp.eq.s32.totalorder %s16, 0
      %p188 = por %p186, %p187
      %p189 = scmp.ne.s32.totalorder %s178, %s181
      %p190 = scmp.eq.s32.totalorder %s21, 1
      %p191 = por %p189, %p190
      %p192 = scmp.ne.s32.totalorder %s181, %s182
      %p193 = scmp.eq.s32.totalorder %s21, 0
      %p194 = por %p192, %p193
      %p195 = scmp.ne.s32.totalorder %s181, %s182
      %p196 = scmp.eq.s32.totalorder %s22, 1
      %p197 = por %p195, %p196
      %p199 = scmp.ne.s32.totalorder %s182, %s198
      %p200 = scmp.eq.s32.totalorder %s22, 0
      %p201 = por %p199, %p200
      %p202 = scmp.le.s32.totalorder 1, %s16
      %p203 = scmp.lt.s32.totalorder %s16, 3
      %p204 = pnand %p202, %p203
      %p205 = pneg %p204
      // Predicated region
      $region9: #{tpu_custom_call.1} parent=5 // pred_check
        _
      $region10: #{tpu_custom_call.1} parent=5 // pred_check_branch
        %207 = sbr.rel (%p204) target = $region12
      $region11: #{tpu_custom_call.1} parent=5 // pred_region
        %s208 = ssub.s32 %s16, 1
        // Predicated region
        $region13: #{tpu_custom_call.1} parent=11 // pred_check
          %p209 = pneg %p63
        $region14: #{tpu_custom_call.1} parent=11 // pred_check_branch
          %211 = sbr.rel (%p209) target = $region16
        $region15: #{tpu_custom_call.1} parent=11 // pred_region
          _
        $region16: #{tpu_custom_call.1} parent=11 // pred_fallthru
          _
        // Predicated region
        $region17: #{tpu_custom_call.1} parent=11 // pred_check
          %p212 = pneg %p84
        $region18: #{tpu_custom_call.1} parent=11 // pred_check_branch
          %214 = sbr.rel (%p212) target = $region20
        $region19: #{tpu_custom_call.1} parent=11 // pred_region
          _
        $region20: #{tpu_custom_call.1} parent=11 // pred_fallthru
          _
        // Predicated region
        $region21: #{tpu_custom_call.1} parent=11 // pred_check
          %p215 = pneg %p105
        $region22: #{tpu_custom_call.1} parent=11 // pred_check_branch
          %217 = sbr.rel (%p215) target = $region24
        $region23: #{tpu_custom_call.1} parent=11 // pred_region
          _
        $region24: #{tpu_custom_call.1} parent=11 // pred_fallthru
          _
        // Predicated region
        $region25: #{tpu_custom_call.1} parent=11 // pred_check
          %p218 = pneg %p126
        $region26: #{tpu_custom_call.1} parent=11 // pred_check_branch
          %220 = sbr.rel (%p218) target = $region28
        $region27: #{tpu_custom_call.1} parent=11 // pred_region
          _
        $region28: #{tpu_custom_call.1} parent=11 // pred_fallthru
          _
        // Predicated region
        $region29: #{tpu_custom_call.1} parent=11 // pred_check
          %p221 = pneg %p147
        $region30: #{tpu_custom_call.1} parent=11 // pred_check_branch
          %223 = sbr.rel (%p221) target = $region32
        $region31: #{tpu_custom_call.1} parent=11 // pred_region
          _
        $region32: #{tpu_custom_call.1} parent=11 // pred_fallthru
          _
        // Predicated region
        $region33: #{tpu_custom_call.1} parent=11 // pred_check
          %p224 = pneg %p168
        $region34: #{tpu_custom_call.1} parent=11 // pred_check_branch
          %226 = sbr.rel (%p224) target = $region36
        $region35: #{tpu_custom_call.1} parent=11 // pred_region
          _
        $region36: #{tpu_custom_call.1} parent=11 // pred_fallthru
          _
      $region12: #{tpu_custom_call.1} parent=5 // pred_fallthru
        _
      %p227 = scmp.lt.s32.totalorder %s16, 2
      // Predicated region
      $region37: #{tpu_custom_call.1} parent=5 // pred_check
        %p228 = pneg %p227
      $region38: #{tpu_custom_call.1} parent=5 // pred_check_branch
        %230 = sbr.rel (%p228) target = $region40
      $region39: #{tpu_custom_call.1} parent=5 // pred_region
        // Predicated region
        $region41: #{tpu_custom_call.1} parent=39 // pred_check
          %p231 = pneg %p36
        $region42: #{tpu_custom_call.1} parent=39 // pred_check_branch
          %233 = sbr.rel (%p231) target = $region44
        $region43: #{tpu_custom_call.1} parent=39 // pred_region
          %p234 = scmp.lt.s32.totalorder %s16, 1
          %s235 = scalar_select %p234, %s16, 1
          %s236 = smul.addr %s235, 16
          %s237 = smul.addr %s236, 8
          %s238 = scalar_lea.vmem %s0, %s237
        $region44: #{tpu_custom_call.1} parent=39 // pred_fallthru
          _
      $region40: #{tpu_custom_call.1} parent=5 // pred_fallthru
        _
      %p239 = scmp.le.s32.totalorder 1, %s16
      %p240 = scmp.lt.s32.totalorder %s16, 3
      %p241 = pnand %p239, %p240
      %p242 = pneg %p241
      // Predicated region
      $region45: #{tpu_custom_call.1} parent=5 // pred_check
        _
      $region46: #{tpu_custom_call.1} parent=5 // pred_check_branch
        %244 = sbr.rel (%p241) target = $region48
      $region47: #{tpu_custom_call.1} parent=5 // pred_region
        %s245 = ssub.s32 %s16, 1
        %p246 = scmp.lt.s32.totalorder %s21, 1
        %s247 = scalar_select %p246, %s21, 1
        %s248 = smul.addr %s247, 16
        %s249 = smul.addr %s248, 8
        %s250 = scalar_lea.vmem %s0, %s249
        %p251 = pneg %p42
        %p252 = pneg %p39
        %p253 = pneg %p63
        %p254 = pneg %p60
        %p255 = pneg %p84
        %p256 = pneg %p81
        %p257 = pneg %p105
        %p258 = pneg %p102
        %p259 = pneg %p126
        %p260 = pneg %p123
        %p261 = pneg %p147
        %p262 = pneg %p144
        %p263 = pneg %p168
        %p264 = pneg %p165
        %p265 = pneg %p194
        %p266 = pneg %p191
        %s267 = sand.u32 %s181, 1
        %s268 = scalar_lea.sflag [#allocation6], %s267
        %s269 = sand.u32 %s181, 1
        %s270 = smul.addr %s269, 128
        %s271 = scalar_lea.vmem [#allocation5], %s270
        %p272 = scmp.lt.s32.totalorder %s21, 1
        %s273 = scalar_select %p272, %s21, 1
        %s274 = smul.addr %s273, 16
        %s275 = smul.addr %s274, 8
        %s276 = scalar_lea.vmem %s0, %s275
        %v277 = vld [vmem:[%s276] sm:$0xff]
        %v278 = vld [vmem:[%s276 + $0x8] sm:$0xff]
        %v279 = vld [vmem:[%s276 + $0x10] sm:$0xff]
        %v280 = vld [vmem:[%s276 + $0x18] sm:$0xff]
        %v281 = vld [vmem:[%s276 + $0x20] sm:$0xff]
        %v282 = vld [vmem:[%s276 + $0x28] sm:$0xff]
        %v283 = vld [vmem:[%s276 + $0x30] sm:$0xff]
        %v284 = vld [vmem:[%s276 + $0x38] sm:$0xff]
        %v285 = vld [vmem:[%s276 + $0x40] sm:$0xff]
        %v286 = vld [vmem:[%s276 + $0x48] sm:$0xff]
        %v287 = vld [vmem:[%s276 + $0x50] sm:$0xff]
        %v288 = vld [vmem:[%s276 + $0x58] sm:$0xff]
        %v289 = vld [vmem:[%s276 + $0x60] sm:$0xff]
        %v290 = vld [vmem:[%s276 + $0x68] sm:$0xff]
        %v291 = vld [vmem:[%s276 + $0x70] sm:$0xff]
        %v292 = vld [vmem:[%s276 + $0x78] sm:$0xff]
        %v293 = vadd.f32 %v277, %v278
        %v294 = vadd.f32 %v293, %v279
        %v295 = vadd.f32 %v294, %v280
        %296 = vadd.xlane.f32.xlu0 %v295
        %v297 = vpop.xlane.xlu0 %296
        %v298 = vadd.f32 %v281, %v282
        %v299 = vadd.f32 %v298, %v283
        %v300 = vadd.f32 %v299, %v284
        %301 = vadd.xlane.f32.xlu0 %v300
        %v302 = vpop.xlane.xlu0 %301
        %v303 = vadd.f32 %v285, %v286
        %v304 = vadd.f32 %v303, %v287
        %v305 = vadd.f32 %v304, %v288
        %306 = vadd.xlane.f32.xlu0 %v305
        %v307 = vpop.xlane.xlu0 %306
        %v308 = vadd.f32 %v289, %v290
        %v309 = vadd.f32 %v308, %v291
        %v310 = vadd.f32 %v309, %v292
        %311 = vadd.xlane.f32.xlu0 %v310
        %v312 = vpop.xlane.xlu0 %311
        %v313 = vrcp.pop 512.0
        %v314 = vmul.f32 %v297, %v313
        %v315 = vmul.f32 %v302, %v313
        %v316 = vmul.f32 %v307, %v313
        %v317 = vmul.f32 %v312, %v313
        %vm318 = vcmask 7168
        %319 = vst.msk [vmem:[#allocation2] sm:$0xff] %vm318, %v314
        %320 = vst.msk [vmem:[#allocation2 + $0x8] sm:$0xff] %vm318, %v315
        %321 = vst.msk [vmem:[#allocation2 + $0x10] sm:$0xff] %vm318, %v316
        %322 = vst.msk [vmem:[#allocation2 + $0x18] sm:$0xff] %vm318, %v317
        %v323 = vmax.f32 %v277, %v278
        %v324 = vmax.f32 %v323, %v279
        %v325 = vmax.f32 %v324, %v280
        %326 = vmax.xlane.f32.xlu0 %v325
        %v327 = vpop.xlane.xlu0 %326
        %v328 = vmax.f32 %v281, %v282
        %v329 = vmax.f32 %v328, %v283
        %v330 = vmax.f32 %v329, %v284
        %331 = vmax.xlane.f32.xlu0 %v330
        %v332 = vpop.xlane.xlu0 %331
        %v333 = vmax.f32 %v285, %v286
        %v334 = vmax.f32 %v333, %v287
        %v335 = vmax.f32 %v334, %v288
        %336 = vmax.xlane.f32.xlu0 %v335
        %v337 = vpop.xlane.xlu0 %336
        %v338 = vmax.f32 %v289, %v290
        %v339 = vmax.f32 %v338, %v291
        %v340 = vmax.f32 %v339, %v292
        %341 = vmax.xlane.f32.xlu0 %v340
        %v342 = vpop.xlane.xlu0 %341
        %vm343 = vcmask 15368
        %344 = vst.msk [vmem:[#allocation2] sm:$0xff] %vm343, %v327
        %345 = vst.msk [vmem:[#allocation2 + $0x8] sm:$0xff] %vm343, %v332
        %346 = vst.msk [vmem:[#allocation2 + $0x10] sm:$0xff] %vm343, %v337
        %347 = vst.msk [vmem:[#allocation2 + $0x18] sm:$0xff] %vm343, %v342
        %v348 = vld [vmem:[#allocation2] sm:$0xff]
        %v349 = vld [vmem:[#allocation2 + $0x8] sm:$0xff]
        %v350 = vld [vmem:[#allocation2 + $0x10] sm:$0xff]
        %v351 = vld [vmem:[#allocation2 + $0x18] sm:$0xff]
        %v352 = vld [vmem:[%s1] sm:$0x3]
        %v353 = vld [vmem:[%s2] sm:$0x3]
        %355 = vset.pattern.permute.xlu0 0
        %356 = vperm.xlu0 %355, %v353
        %v357 = vpop.permute.xlu0 %356
        %vm359 = vcmask 261120
        %v361 = vsel %vm359, %v352, 0
        %363 = vmatprep.subr.mxu0 0.0
        %364 = vmatpush1.msra.mxu0 %v348
        %365 = vmatprep.subr.mxu0 0.0
        %366 = vmatpush1.msra.mxu0 %v349
        %367 = vmatprep.subr.mxu0 0.0
        %368 = vmatpush1.msra.mxu0 %v350
        %369 = vmatprep.subr.mxu0 0.0
        %370 = vmatpush1.msra.mxu0 %v351
        %371 = vmatprep.subr.mxu0 0.0
        %372 = vmatpush1.msra.mxu0 0.0
        %373 = vmatprep.subr.mxu0 0.0
        %374 = vmatpush1.msra.mxu0 0.0
        %375 = vmatprep.subr.mxu0 0.0
        %376 = vmatpush1.msra.mxu0 0.0
        %377 = vmatprep.subr.mxu0 0.0
        %378 = vmatpush1.msra.mxu0 0.0
        %379 = vmatprep.subr.mxu0 0.0
        %380 = vmatpush1.msra.mxu0 0.0
        %381 = vmatprep.subr.mxu0 0.0
        %382 = vmatpush1.msra.mxu0 0.0
        %383 = vmatprep.subr.mxu0 0.0
        %384 = vmatpush1.msra.mxu0 0.0
        %385 = vmatprep.subr.mxu0 0.0
        %386 = vmatpush1.msra.mxu0 0.0
        %387 = vmatprep.subr.mxu0 0.0
        %388 = vmatpush1.msra.mxu0 0.0
        %389 = vmatprep.subr.mxu0 0.0
        %390 = vmatpush1.msra.mxu0 0.0
        %391 = vmatprep.subr.mxu0 0.0
        %392 = vmatpush1.msra.mxu0 0.0
        %393 = vmatprep.subr.mxu0 0.0
        %394 = vmatpush1.msra.mxu0 0.0
        %395 = vmatprep.subr.mxu0 0.0
        %396 = vmatpush1.msra.mxu0 0.0
        %397 = vmatprep.subr.mxu0 0.0
        %398 = vmatpush1.msra.mxu0 0.0
        %399 = vmatprep.subr.mxu0 0.0
        %400 = vmatpush1.msra.mxu0 0.0
        %401 = vmatprep.subr.mxu0 0.0
        %402 = vmatpush1.msra.mxu0 0.0
        %403 = vmatprep.subr.mxu0 0.0
        %404 = vmatpush1.msra.mxu0 0.0
        %405 = vmatprep.subr.mxu0 0.0
        %406 = vmatpush1.msra.mxu0 0.0
        %407 = vmatprep.subr.mxu0 0.0
        %408 = vmatpush1.msra.mxu0 0.0
        %409 = vmatprep.subr.mxu0 0.0
        %410 = vmatpush1.msra.mxu0 0.0
        %411 = vmatprep.subr.mxu0 0.0
        %412 = vmatpush1.msra.mxu0 0.0
        %413 = vmatprep.subr.mxu0 0.0
        %414 = vmatpush1.msra.mxu0 0.0
        %415 = vmatprep.subr.mxu0 0.0
        %416 = vmatpush1.msra.mxu0 0.0
        %417 = vmatprep.subr.mxu0 0.0
        %418 = vmatpush1.msra.mxu0 0.0
        %419 = vmatprep.subr.mxu0 0.0
        %420 = vmatpush1.msra.mxu0 0.0
        %421 = vmatprep.subr.mxu0 0.0
        %422 = vmatpush1.msra.mxu0 0.0
        %423 = vmatprep.subr.mxu0 0.0
        %424 = vmatpush1.msra.mxu0 0.0
        %425 = vmatprep.subr.mxu0 0.0
        %426 = vmatpush1.msra.mxu0 0.0
        %427 = vmatprep.mubr.f32.mxu0 0.0
        %428 = vmatmul.mubr.f32.gmra.mrb[0].mxu0 %v361
        %v429 = vpop.f32.mrb[0].mxu0
        %v430 = vadd.f32 %v357, %v429
        %v431 = vpop.f32.mrb[0].mxu0
        %432 = vdwg.mxu0
        %v433 = vmax.f32 %v430, 0.0
        %v434 = vld [vmem:[%s3] sm:$0xff]
        %v435 = vld [vmem:[%s3 + $0x8] sm:$0xff]
        %v436 = vld [vmem:[%s3 + $0x10] sm:$0xff]
        %v437 = vld [vmem:[%s3 + $0x18] sm:$0xff]
        %v438 = vld [vmem:[%s4] sm:$0xff]
        %v439 = vld [vmem:[%s4 + $0x8] sm:$0xff]
        %v440 = vld [vmem:[%s4 + $0x10] sm:$0xff]
        %v441 = vld [vmem:[%s4 + $0x18] sm:$0xff]
        %443 = vset.pattern.permute.xlu0 0
        %444 = vperm.xlu0 %443, %v438
        %v445 = vpop.permute.xlu0 %444
        %448 = vset.pattern.permute.xlu0 0
        %449 = vperm.xlu0 %448, %v439
        %v450 = vpop.permute.xlu0 %449
        %453 = vset.pattern.permute.xlu0 0
        %454 = vperm.xlu0 %453, %v440
        %v455 = vpop.permute.xlu0 %454
        %458 = vset.pattern.permute.xlu0 0
        %459 = vperm.xlu0 %458, %v441
        %v460 = vpop.permute.xlu0 %459
        %vm462 = vcmask 15360
        %v464 = vsel %vm462, %v434, 0
        %v467 = vsel %vm462, %v435, 0
        %v470 = vsel %vm462, %v436, 0
        %v473 = vsel %vm462, %v437, 0
        %vm475 = vcmask 1041408
        %v477 = vsel %vm475, %v433, 0
        %479 = vmatprep.subr.mxu0 0.0
        %480 = vmatpush1.msra.mxu0 %v477
        %481 = vmatprep.subr.mxu0 0.0
        %482 = vmatpush1.msra.mxu0 0.0
        %483 = vmatprep.subr.mxu0 0.0
        %484 = vmatpush1.msra.mxu0 0.0
        %485 = vmatprep.subr.mxu0 0.0
        %486 = vmatpush1.msra.mxu0 0.0
        %487 = vmatprep.subr.mxu0 0.0
        %488 = vmatpush1.msra.mxu0 0.0
        %489 = vmatprep.subr.mxu0 0.0
        %490 = vmatpush1.msra.mxu0 0.0
        %491 = vmatprep.subr.mxu0 0.0
        %492 = vmatpush1.msra.mxu0 0.0
        %493 = vmatprep.subr.mxu0 0.0
        %494 = vmatpush1.msra.mxu0 0.0
        %495 = vmatprep.subr.mxu0 0.0
        %496 = vmatpush1.msra.mxu0 0.0
        %497 = vmatprep.subr.mxu0 0.0
        %498 = vmatpush1.msra.mxu0 0.0
        %499 = vmatprep.subr.mxu0 0.0
        %500 = vmatpush1.msra.mxu0 0.0
        %501 = vmatprep.subr.mxu0 0.0
        %502 = vmatpush1.msra.mxu0 0.0
        %503 = vmatprep.subr.mxu0 0.0
        %504 = vmatpush1.msra.mxu0 0.0
        %505 = vmatprep.subr.mxu0 0.0
        %506 = vmatpush1.msra.mxu0 0.0
        %507 = vmatprep.subr.mxu0 0.0
        %508 = vmatpush1.msra.mxu0 0.0
        %509 = vmatprep.subr.mxu0 0.0
        %510 = vmatpush1.msra.mxu0 0.0
        %511 = vmatprep.subr.mxu0 0.0
        %512 = vmatpush1.msra.mxu0 0.0
        %513 = vmatprep.subr.mxu0 0.0
        %514 = vmatpush1.msra.mxu0 0.0
        %515 = vmatprep.subr.mxu0 0.0
        %516 = vmatpush1.msra.mxu0 0.0
        %517 = vmatprep.subr.mxu0 0.0
        %518 = vmatpush1.msra.mxu0 0.0
        %519 = vmatprep.subr.mxu0 0.0
        %520 = vmatpush1.msra.mxu0 0.0
        %521 = vmatprep.subr.mxu0 0.0
        %522 = vmatpush1.msra.mxu0 0.0
        %523 = vmatprep.subr.mxu0 0.0
        %524 = vmatpush1.msra.mxu0 0.0
        %525 = vmatprep.subr.mxu0 0.0
        %526 = vmatpush1.msra.mxu0 0.0
        %527 = vmatprep.subr.mxu0 0.0
        %528 = vmatpush1.msra.mxu0 0.0
        %529 = vmatprep.subr.mxu0 0.0
        %530 = vmatpush1.msra.mxu0 0.0
        %531 = vmatprep.subr.mxu0 0.0
        %532 = vmatpush1.msra.mxu0 0.0
        %533 = vmatprep.subr.mxu0 0.0
        %534 = vmatpush1.msra.mxu0 0.0
        %535 = vmatprep.subr.mxu0 0.0
        %536 = vmatpush1.msra.mxu0 0.0
        %537 = vmatprep.subr.mxu0 0.0
        %538 = vmatpush1.msra.mxu0 0.0
        %539 = vmatprep.subr.mxu0 0.0
        %540 = vmatpush1.msra.mxu0 0.0
        %541 = vmatprep.subr.mxu0 0.0
        %542 = vmatpush1.msra.mxu0 0.0
        %543 = vmatprep.mubr.f32.mxu0 0.0
        %544 = vmatmul.mubr.f32.gmra.mrb[0].mxu0 %v464
        %v545 = vpop.f32.mrb[0].mxu0
        %v546 = vadd.f32 %v445, %v545
        %v547 = vpop.f32.mrb[0].mxu0
        %548 = vmatprep.mubr.f32.mxu0 0.0
        %549 = vmatmul.mubr.f32.gmra.mrb[0].mxu0 %v467
        %v550 = vpop.f32.mrb[0].mxu0
        %v551 = vadd.f32 %v450, %v550
        %v552 = vpop.f32.mrb[0].mxu0
        %553 = vmatprep.mubr.f32.mxu0 0.0
        %554 = vmatmul.mubr.f32.gmra.mrb[0].mxu0 %v470
        %v555 = vpop.f32.mrb[0].mxu0
        %v556 = vadd.f32 %v455, %v555
        %v557 = vpop.f32.mrb[0].mxu0
        %558 = vmatprep.mubr.f32.mxu0 0.0
        %559 = vmatmul.mubr.f32.gmra.mrb[0].mxu0 %v473
        %v560 = vpop.f32.mrb[0].mxu0
        %v561 = vadd.f32 %v460, %v560
        %v562 = vpop.f32.mrb[0].mxu0
        %563 = vdwg.mxu0
        %568 = vrot.lane.b32.xlu0 %v546, 127
        %v569 = vpop.permute.xlu0 %568
        %570 = vrot.lane.b32.xlu0 %v551, 127
        %v571 = vpop.permute.xlu0 %570
        %572 = vrot.lane.b32.xlu0 %v556, 127
        %v573 = vpop.permute.xlu0 %572
        %574 = vrot.lane.b32.xlu0 %v561, 127
        %v575 = vpop.permute.xlu0 %574
        %v580 = vadd.f32 %v546, %v569
        %v581 = vadd.f32 %v551, %v571
        %v582 = vadd.f32 %v556, %v573
        %v583 = vadd.f32 %v561, %v575
        %v584 = vmul.f32 %v580, 0.5
        %v585 = vmul.f32 %v581, 0.5
        %v586 = vmul.f32 %v582, 0.5
        %v587 = vmul.f32 %v583, 0.5
        %v588 = vtanh.pop %v584
        %v589 = vtanh.pop %v585
        %v590 = vtanh.pop %v586
        %v591 = vtanh.pop %v587
        %v592 = vadd.f32 %v588, 1.0
        %v593 = vadd.f32 %v589, 1.0
        %v594 = vadd.f32 %v590, 1.0
        %v595 = vadd.f32 %v591, 1.0
        %v596 = vmul.f32 %v592, 0.5
        %v597 = vmul.f32 %v593, 0.5
        %v598 = vmul.f32 %v594, 0.5
        %v599 = vmul.f32 %v595, 0.5
        %601 = vset.pattern.permute.xlu0 0
        %602 = vperm.xlu0 %601, %v596
        %v603 = vpop.permute.xlu0 %602
        %606 = vset.pattern.permute.xlu0 0
        %607 = vperm.xlu0 %606, %v597
        %v608 = vpop.permute.xlu0 %607
        %611 = vset.pattern.permute.xlu0 0
        %612 = vperm.xlu0 %611, %v598
        %v613 = vpop.permute.xlu0 %612
        %616 = vset.pattern.permute.xlu0 0
        %617 = vperm.xlu0 %616, %v599
        %v618 = vpop.permute.xlu0 %617
        %v620 = vmul.f32 %v277, %v603
        %v621 = vmul.f32 %v278, %v603
        %v622 = vmul.f32 %v279, %v603
        %v623 = vmul.f32 %v280, %v603
        %v624 = vmul.f32 %v281, %v608
        %v625 = vmul.f32 %v282, %v608
        %v626 = vmul.f32 %v283, %v608
        %v627 = vmul.f32 %v284, %v608
        %v628 = vmul.f32 %v285, %v613
        %v629 = vmul.f32 %v286, %v613
        %v630 = vmul.f32 %v287, %v613
        %v631 = vmul.f32 %v288, %v613
        %v632 = vmul.f32 %v289, %v618
        %v633 = vmul.f32 %v290, %v618
        %v634 = vmul.f32 %v291, %v618
        %v635 = vmul.f32 %v292, %v618
        %v636 = vmax.f32 %v620, %v624
        %v637 = vmax.f32 %v636, %v628
        %v638 = vmax.f32 %v637, %v632
        %v639 = vrot.slane %v638, 4
        %v640 = vmax.f32 %v638, %v639
        %v641 = vrot.slane %v640, 2
        %v642 = vmax.f32 %v640, %v641
        %v643 = vrot.slane %v642, 1
        %v644 = vmax.f32 %v642, %v643
        %v645 = vmax.f32 %v621, %v625
        %v646 = vmax.f32 %v645, %v629
        %v647 = vmax.f32 %v646, %v633
        %v648 = vrot.slane %v647, 4
        %v649 = vmax.f32 %v647, %v648
        %v650 = vrot.slane %v649, 2
        %v651 = vmax.f32 %v649, %v650
        %v652 = vrot.slane %v651, 1
        %v653 = vmax.f32 %v651, %v652
        %v654 = vmax.f32 %v622, %v626
        %v655 = vmax.f32 %v654, %v630
        %v656 = vmax.f32 %v655, %v634
        %v657 = vrot.slane %v656, 4
        %v658 = vmax.f32 %v656, %v657
        %v659 = vrot.slane %v658, 2
        %v660 = vmax.f32 %v658, %v659
        %v661 = vrot.slane %v660, 1
        %v662 = vmax.f32 %v660, %v661
        %v663 = vmax.f32 %v623, %v627
        %v664 = vmax.f32 %v663, %v631
        %v665 = vmax.f32 %v664, %v635
        %v666 = vrot.slane %v665, 4
        %v667 = vmax.f32 %v665, %v666
        %v668 = vrot.slane %v667, 2
        %v669 = vmax.f32 %v667, %v668
        %v670 = vrot.slane %v669, 1
        %v671 = vmax.f32 %v669, %v670
        %v672 = vadd.f32 %v620, %v624
        %v673 = vadd.f32 %v672, %v628
        %v674 = vadd.f32 %v673, %v632
        %v675 = vrot.slane %v674, 4
        %v676 = vadd.f32 %v674, %v675
        %v677 = vrot.slane %v676, 2
        %v678 = vadd.f32 %v676, %v677
        %v679 = vrot.slane %v678, 1
        %v680 = vadd.f32 %v678, %v679
        %v681 = vadd.f32 %v621, %v625
        %v682 = vadd.f32 %v681, %v629
        %v683 = vadd.f32 %v682, %v633
        %v684 = vrot.slane %v683, 4
        %v685 = vadd.f32 %v683, %v684
        %v686 = vrot.slane %v685, 2
        %v687 = vadd.f32 %v685, %v686
        %v688 = vrot.slane %v687, 1
        %v689 = vadd.f32 %v687, %v688
        %v690 = vadd.f32 %v622, %v626
        %v691 = vadd.f32 %v690, %v630
        %v692 = vadd.f32 %v691, %v634
        %v693 = vrot.slane %v692, 4
        %v694 = vadd.f32 %v692, %v693
        %v695 = vrot.slane %v694, 2
        %v696 = vadd.f32 %v694, %v695
        %v697 = vrot.slane %v696, 1
        %v698 = vadd.f32 %v696, %v697
        %v699 = vadd.f32 %v623, %v627
        %v700 = vadd.f32 %v699, %v631
        %v701 = vadd.f32 %v700, %v635
        %v702 = vrot.slane %v701, 4
        %v703 = vadd.f32 %v701, %v702
        %v704 = vrot.slane %v703, 2
        %v705 = vadd.f32 %v703, %v704
        %v706 = vrot.slane %v705, 1
        %v707 = vadd.f32 %v705, %v706
        %v708 = vrcp.pop 32.0
        %v709 = vmul.f32 %v680, %v708
        %v710 = vmul.f32 %v689, %v708
        %v711 = vmul.f32 %v698, %v708
        %v712 = vmul.f32 %v707, %v708
        %vm713 = vcmask 965632
        %714 = vst.msk [vmem:[#allocation3] sm:$0xff] %vm713, 0.0
        %715 = vst.msk [vmem:[#allocation3 + $0x8] sm:$0xff] %vm713, 0.0
        %717 = vrot.lane.b32.xlu0 %v644, 27
        %v718 = vpop.permute.xlu0 %717
        %vm720 = vcmask 737496
        %721 = vst.msk [vmem:[#allocation3] sm:$0x1] %vm720, %v718
        %723 = vrot.lane.b32.xlu0 %v709, 27
        %v724 = vpop.permute.xlu0 %723
        %726 = vst.msk [vmem:[#allocation3 + $0x8] sm:$0x1] %vm720, %v724
        %727 = vrot.lane.b32.xlu0 %v644, 91
        %v728 = vpop.permute.xlu0 %727
        %730 = vst.msk [vmem:[#allocation3 + $0x1] sm:$0x1] %vm720, %v728
        %731 = vrot.lane.b32.xlu0 %v709, 91
        %v732 = vpop.permute.xlu0 %731
        %734 = vst.msk [vmem:[#allocation3 + $0x9] sm:$0x1] %vm720, %v732
        %736 = vrot.lane.b32.xlu0 %v653, 27
        %v737 = vpop.permute.xlu0 %736
        %739 = vst.msk [vmem:[#allocation3 + $0x2] sm:$0x1] %vm720, %v737
        %741 = vrot.lane.b32.xlu0 %v710, 27
        %v742 = vpop.permute.xlu0 %741
        %744 = vst.msk [vmem:[#allocation3 + $0xa] sm:$0x1] %vm720, %v742
        %745 = vrot.lane.b32.xlu0 %v653, 91
        %v746 = vpop.permute.xlu0 %745
        %748 = vst.msk [vmem:[#allocation3 + $0x3] sm:$0x1] %vm720, %v746
        %749 = vrot.lane.b32.xlu0 %v710, 91
        %v750 = vpop.permute.xlu0 %749
        %752 = vst.msk [vmem:[#allocation3 + $0xb] sm:$0x1] %vm720, %v750
        %754 = vrot.lane.b32.xlu0 %v662, 27
        %v755 = vpop.permute.xlu0 %754
        %757 = vst.msk [vmem:[#allocation3 + $0x4] sm:$0x1] %vm720, %v755
        %759 = vrot.lane.b32.xlu0 %v711, 27
        %v760 = vpop.permute.xlu0 %759
        %762 = vst.msk [vmem:[#allocation3 + $0xc] sm:$0x1] %vm720, %v760
        %763 = vrot.lane.b32.xlu0 %v662, 91
        %v764 = vpop.permute.xlu0 %763
        %766 = vst.msk [vmem:[#allocation3 + $0x5] sm:$0x1] %vm720, %v764
        %767 = vrot.lane.b32.xlu0 %v711, 91
        %v768 = vpop.permute.xlu0 %767
        %770 = vst.msk [vmem:[#allocation3 + $0xd] sm:$0x1] %vm720, %v768
        %772 = vrot.lane.b32.xlu0 %v671, 27
        %v773 = vpop.permute.xlu0 %772
        %775 = vst.msk [vmem:[#allocation3 + $0x6] sm:$0x1] %vm720, %v773
        %777 = vrot.lane.b32.xlu0 %v712, 27
        %v778 = vpop.permute.xlu0 %777
        %780 = vst.msk [vmem:[#allocation3 + $0xe] sm:$0x1] %vm720, %v778
        %781 = vrot.lane.b32.xlu0 %v671, 91
        %v782 = vpop.permute.xlu0 %781
        %784 = vst.msk [vmem:[#allocation3 + $0x7] sm:$0x1] %vm720, %v782
        %785 = vrot.lane.b32.xlu0 %v712, 91
        %v786 = vpop.permute.xlu0 %785
        %788 = vst.msk [vmem:[#allocation3 + $0xf] sm:$0x1] %vm720, %v786
        %v789 = vld [vmem:[#allocation3] sm:$0xff]
        %v790 = vld [vmem:[#allocation3 + $0x8] sm:$0xff]
        %v791 = vld [vmem:[%s5] sm:$0xff]
        %vm792 = vcmask 130048
        %v794 = vsel %vm792, %v791, 0
        %796 = vmatprep.subr.mxu0 0.0
        %797 = vmatpush1.msra.mxu0 %v789
        %798 = vmatprep.subr.mxu0 0.0
        %799 = vmatpush1.msra.mxu0 %v790
        %800 = vmatprep.subr.mxu0 0.0
        %801 = vmatpush1.msra.mxu0 0.0
        %802 = vmatprep.subr.mxu0 0.0
        %803 = vmatpush1.msra.mxu0 0.0
        %804 = vmatprep.subr.mxu0 0.0
        %805 = vmatpush1.msra.mxu0 0.0
        %806 = vmatprep.subr.mxu0 0.0
        %807 = vmatpush1.msra.mxu0 0.0
        %808 = vmatprep.subr.mxu0 0.0
        %809 = vmatpush1.msra.mxu0 0.0
        %810 = vmatprep.subr.mxu0 0.0
        %811 = vmatpush1.msra.mxu0 0.0
        %812 = vmatprep.subr.mxu0 0.0
        %813 = vmatpush1.msra.mxu0 0.0
        %814 = vmatprep.subr.mxu0 0.0
        %815 = vmatpush1.msra.mxu0 0.0
        %816 = vmatprep.subr.mxu0 0.0
        %817 = vmatpush1.msra.mxu0 0.0
        %818 = vmatprep.subr.mxu0 0.0
        %819 = vmatpush1.msra.mxu0 0.0
        %820 = vmatprep.subr.mxu0 0.0
        %821 = vmatpush1.msra.mxu0 0.0
        %822 = vmatprep.subr.mxu0 0.0
        %823 = vmatpush1.msra.mxu0 0.0
        %824 = vmatprep.subr.mxu0 0.0
        %825 = vmatpush1.msra.mxu0 0.0
        %826 = vmatprep.subr.mxu0 0.0
        %827 = vmatpush1.msra.mxu0 0.0
        %828 = vmatprep.subr.mxu0 0.0
        %829 = vmatpush1.msra.mxu0 0.0
        %830 = vmatprep.subr.mxu0 0.0
        %831 = vmatpush1.msra.mxu0 0.0
        %832 = vmatprep.subr.mxu0 0.0
        %833 = vmatpush1.msra.mxu0 0.0
        %834 = vmatprep.subr.mxu0 0.0
        %835 = vmatpush1.msra.mxu0 0.0
        %836 = vmatprep.subr.mxu0 0.0
        %837 = vmatpush1.msra.mxu0 0.0
        %838 = vmatprep.subr.mxu0 0.0
        %839 = vmatpush1.msra.mxu0 0.0
        %840 = vmatprep.subr.mxu0 0.0
        %841 = vmatpush1.msra.mxu0 0.0
        %842 = vmatprep.subr.mxu0 0.0
        %843 = vmatpush1.msra.mxu0 0.0
        %844 = vmatprep.subr.mxu0 0.0
        %845 = vmatpush1.msra.mxu0 0.0
        %846 = vmatprep.subr.mxu0 0.0
        %847 = vmatpush1.msra.mxu0 0.0
        %848 = vmatprep.subr.mxu0 0.0
        %849 = vmatpush1.msra.mxu0 0.0
        %850 = vmatprep.subr.mxu0 0.0
        %851 = vmatpush1.msra.mxu0 0.0
        %852 = vmatprep.subr.mxu0 0.0
        %853 = vmatpush1.msra.mxu0 0.0
        %854 = vmatprep.subr.mxu0 0.0
        %855 = vmatpush1.msra.mxu0 0.0
        %856 = vmatprep.subr.mxu0 0.0
        %857 = vmatpush1.msra.mxu0 0.0
        %858 = vmatprep.subr.mxu0 0.0
        %859 = vmatpush1.msra.mxu0 0.0
        %860 = vmatprep.mubr.f32.mxu0 0.0
        %861 = vmatmul.mubr.f32.gmra.mrb[0].mxu0 %v794
        %v862 = vpop.f32.mrb[0].mxu0
        %v863 = vadd.f32 0.0, %v862
        %v864 = vpop.f32.mrb[0].mxu0
        %865 = vdwg.mxu0
        %v866 = vld [vmem:[%s6] sm:$0x1]
        %v868 = vlaneseq
        %v869 = vshrl.u32 %v868, 7
        %v870 = vsub.s32 0, %v869
        %v871 = vrot.slane %v866, %v870
        %v873 = vmul.f32 %v863, %v871
        %v874 = vadd.f32 %v873, 0.0
        %s875 = scalar_lea.vmem %s5, 8
        %v876 = vld [vmem:[%s875] sm:$0xff]
        %879 = vrot.lane.b32.xlu0 %v789, 127
        %v880 = vpop.permute.xlu0 %879
        %881 = vrot.lane.b32.xlu0 %v790, 127
        %v882 = vpop.permute.xlu0 %881
        %v886 = vsel %vm792, %v876, 0
        %888 = vmatprep.subr.mxu0 0.0
        %889 = vmatpush1.msra.mxu0 %v880
        %890 = vmatprep.subr.mxu0 0.0
        %891 = vmatpush1.msra.mxu0 %v882
        %892 = vmatprep.subr.mxu0 0.0
        %893 = vmatpush1.msra.mxu0 0.0
        %894 = vmatprep.subr.mxu0 0.0
        %895 = vmatpush1.msra.mxu0 0.0
        %896 = vmatprep.subr.mxu0 0.0
        %897 = vmatpush1.msra.mxu0 0.0
        %898 = vmatprep.subr.mxu0 0.0
        %899 = vmatpush1.msra.mxu0 0.0
        %900 = vmatprep.subr.mxu0 0.0
        %901 = vmatpush1.msra.mxu0 0.0
        %902 = vmatprep.subr.mxu0 0.0
        %903 = vmatpush1.msra.mxu0 0.0
        %904 = vmatprep.subr.mxu0 0.0
        %905 = vmatpush1.msra.mxu0 0.0
        %906 = vmatprep.subr.mxu0 0.0
        %907 = vmatpush1.msra.mxu0 0.0
        %908 = vmatprep.subr.mxu0 0.0
        %909 = vmatpush1.msra.mxu0 0.0
        %910 = vmatprep.subr.mxu0 0.0
        %911 = vmatpush1.msra.mxu0 0.0
        %912 = vmatprep.subr.mxu0 0.0
        %913 = vmatpush1.msra.mxu0 0.0
        %914 = vmatprep.subr.mxu0 0.0
        %915 = vmatpush1.msra.mxu0 0.0
        %916 = vmatprep.subr.mxu0 0.0
        %917 = vmatpush1.msra.mxu0 0.0
        %918 = vmatprep.subr.mxu0 0.0
        %919 = vmatpush1.msra.mxu0 0.0
        %920 = vmatprep.subr.mxu0 0.0
        %921 = vmatpush1.msra.mxu0 0.0
        %922 = vmatprep.subr.mxu0 0.0
        %923 = vmatpush1.msra.mxu0 0.0
        %924 = vmatprep.subr.mxu0 0.0
        %925 = vmatpush1.msra.mxu0 0.0
        %926 = vmatprep.subr.mxu0 0.0
        %927 = vmatpush1.msra.mxu0 0.0
        %928 = vmatprep.subr.mxu0 0.0
        %929 = vmatpush1.msra.mxu0 0.0
        %930 = vmatprep.subr.mxu0 0.0
        %931 = vmatpush1.msra.mxu0 0.0
        %932 = vmatprep.subr.mxu0 0.0
        %933 = vmatpush1.msra.mxu0 0.0
        %934 = vmatprep.subr.mxu0 0.0
        %935 = vmatpush1.msra.mxu0 0.0
        %936 = vmatprep.subr.mxu0 0.0
        %937 = vmatpush1.msra.mxu0 0.0
        %938 = vmatprep.subr.mxu0 0.0
        %939 = vmatpush1.msra.mxu0 0.0
        %940 = vmatprep.subr.mxu0 0.0
        %941 = vmatpush1.msra.mxu0 0.0
        %942 = vmatprep.subr.mxu0 0.0
        %943 = vmatpush1.msra.mxu0 0.0
        %944 = vmatprep.subr.mxu0 0.0
        %945 = vmatpush1.msra.mxu0 0.0
        %946 = vmatprep.subr.mxu0 0.0
        %947 = vmatpush1.msra.mxu0 0.0
        %948 = vmatprep.subr.mxu0 0.0
        %949 = vmatpush1.msra.mxu0 0.0
        %950 = vmatprep.subr.mxu0 0.0
        %951 = vmatpush1.msra.mxu0 0.0
        %952 = vmatprep.mubr.f32.mxu0 0.0
        %953 = vmatmul.mubr.f32.gmra.mrb[0].mxu0 %v886
        %v954 = vpop.f32.mrb[0].mxu0
        %v955 = vadd.f32 0.0, %v954
        %v956 = vpop.f32.mrb[0].mxu0
        %957 = vdwg.mxu0
        %s958 = scalar_lea.vmem %s6, 1
        %v959 = vld [vmem:[%s958] sm:$0x1]
        %v961 = vlaneseq
        %v962 = vshrl.u32 %v961, 7
        %v963 = vsub.s32 0, %v962
        %v964 = vrot.slane %v959, %v963
        %v966 = vmul.f32 %v955, %v964
        %v967 = vadd.f32 %v874, %v966
        %s968 = scalar_lea.vmem %s5, 16
        %v969 = vld [vmem:[%s968] sm:$0xff]
        %970 = vrot.lane.b32.xlu0 %v789, 126
        %v971 = vpop.permute.xlu0 %970
        %972 = vrot.lane.b32.xlu0 %v790, 126
        %v973 = vpop.permute.xlu0 %972
        %v977 = vsel %vm792, %v969, 0
        %979 = vmatprep.subr.mxu0 0.0
        %980 = vmatpush1.msra.mxu0 %v971
        %981 = vmatprep.subr.mxu0 0.0
        %982 = vmatpush1.msra.mxu0 %v973
        %983 = vmatprep.subr.mxu0 0.0
        %984 = vmatpush1.msra.mxu0 0.0
        %985 = vmatprep.subr.mxu0 0.0
        %986 = vmatpush1.msra.mxu0 0.0
        %987 = vmatprep.subr.mxu0 0.0
        %988 = vmatpush1.msra.mxu0 0.0
        %989 = vmatprep.subr.mxu0 0.0
        %990 = vmatpush1.msra.mxu0 0.0
        %991 = vmatprep.subr.mxu0 0.0
        %992 = vmatpush1.msra.mxu0 0.0
        %993 = vmatprep.subr.mxu0 0.0
        %994 = vmatpush1.msra.mxu0 0.0
        %995 = vmatprep.subr.mxu0 0.0
        %996 = vmatpush1.msra.mxu0 0.0
        %997 = vmatprep.subr.mxu0 0.0
        %998 = vmatpush1.msra.mxu0 0.0
        %999 = vmatprep.subr.mxu0 0.0
        %1000 = vmatpush1.msra.mxu0 0.0
        %1001 = vmatprep.subr.mxu0 0.0
        %1002 = vmatpush1.msra.mxu0 0.0
        %1003 = vmatprep.subr.mxu0 0.0
        %1004 = vmatpush1.msra.mxu0 0.0
        %1005 = vmatprep.subr.mxu0 0.0
        %1006 = vmatpush1.msra.mxu0 0.0
        %1007 = vmatprep.subr.mxu0 0.0
        %1008 = vmatpush1.msra.mxu0 0.0
        %1009 = vmatprep.subr.mxu0 0.0
        %1010 = vmatpush1.msra.mxu0 0.0
        %1011 = vmatprep.subr.mxu0 0.0
        %1012 = vmatpush1.msra.mxu0 0.0
        %1013 = vmatprep.subr.mxu0 0.0
        %1014 = vmatpush1.msra.mxu0 0.0
        %1015 = vmatprep.subr.mxu0 0.0
        %1016 = vmatpush1.msra.mxu0 0.0
        %1017 = vmatprep.subr.mxu0 0.0
        %1018 = vmatpush1.msra.mxu0 0.0
        %1019 = vmatprep.subr.mxu0 0.0
        %1020 = vmatpush1.msra.mxu0 0.0
        %1021 = vmatprep.subr.mxu0 0.0
        %1022 = vmatpush1.msra.mxu0 0.0
        %1023 = vmatprep.subr.mxu0 0.0
        %1024 = vmatpush1.msra.mxu0 0.0
        %1025 = vmatprep.subr.mxu0 0.0
        %1026 = vmatpush1.msra.mxu0 0.0
        %1027 = vmatprep.subr.mxu0 0.0
        %1028 = vmatpush1.msra.mxu0 0.0
        %1029 = vmatprep.subr.mxu0 0.0
        %1030 = vmatpush1.msra.mxu0 0.0
        %1031 = vmatprep.subr.mxu0 0.0
        %1032 = vmatpush1.msra.mxu0 0.0
        %1033 = vmatprep.subr.mxu0 0.0
        %1034 = vmatpush1.msra.mxu0 0.0
        %1035 = vmatprep.subr.mxu0 0.0
        %1036 = vmatpush1.msra.mxu0 0.0
        %1037 = vmatprep.subr.mxu0 0.0
        %1038 = vmatpush1.msra.mxu0 0.0
        %1039 = vmatprep.subr.mxu0 0.0
        %1040 = vmatpush1.msra.mxu0 0.0
        %1041 = vmatprep.subr.mxu0 0.0
        %1042 = vmatpush1.msra.mxu0 0.0
        %1043 = vmatprep.mubr.f32.mxu0 0.0
        %1044 = vmatmul.mubr.f32.gmra.mrb[0].mxu0 %v977
        %v1045 = vpop.f32.mrb[0].mxu0
        %v1046 = vadd.f32 0.0, %v1045
        %v1047 = vpop.f32.mrb[0].mxu0
        %1048 = vdwg.mxu0
        %s1049 = scalar_lea.vmem %s6, 2
        %v1050 = vld [vmem:[%s1049] sm:$0x1]
        %v1052 = vlaneseq
        %v1053 = vshrl.u32 %v1052, 7
        %v1054 = vsub.s32 0, %v1053
        %v1055 = vrot.slane %v1050, %v1054
        %v1057 = vmul.f32 %v1046, %v1055
        %v1058 = vadd.f32 %v967, %v1057
        %s1059 = scalar_lea.vmem %s5, 24
        %v1060 = vld [vmem:[%s1059] sm:$0xff]
        %1061 = vrot.lane.b32.xlu0 %v789, 125
        %v1062 = vpop.permute.xlu0 %1061
        %1063 = vrot.lane.b32.xlu0 %v790, 125
        %v1064 = vpop.permute.xlu0 %1063
        %v1068 = vsel %vm792, %v1060, 0
        %1070 = vmatprep.subr.mxu0 0.0
        %1071 = vmatpush1.msra.mxu0 %v1062
        %1072 = vmatprep.subr.mxu0 0.0
        %1073 = vmatpush1.msra.mxu0 %v1064
        %1074 = vmatprep.subr.mxu0 0.0
        %1075 = vmatpush1.msra.mxu0 0.0
        %1076 = vmatprep.subr.mxu0 0.0
        %1077 = vmatpush1.msra.mxu0 0.0
        %1078 = vmatprep.subr.mxu0 0.0
        %1079 = vmatpush1.msra.mxu0 0.0
        %1080 = vmatprep.subr.mxu0 0.0
        %1081 = vmatpush1.msra.mxu0 0.0
        %1082 = vmatprep.subr.mxu0 0.0
        %1083 = vmatpush1.msra.mxu0 0.0
        %1084 = vmatprep.subr.mxu0 0.0
        %1085 = vmatpush1.msra.mxu0 0.0
        %1086 = vmatprep.subr.mxu0 0.0
        %1087 = vmatpush1.msra.mxu0 0.0
        %1088 = vmatprep.subr.mxu0 0.0
        %1089 = vmatpush1.msra.mxu0 0.0
        %1090 = vmatprep.subr.mxu0 0.0
        %1091 = vmatpush1.msra.mxu0 0.0
        %1092 = vmatprep.subr.mxu0 0.0
        %1093 = vmatpush1.msra.mxu0 0.0
        %1094 = vmatprep.subr.mxu0 0.0
        %1095 = vmatpush1.msra.mxu0 0.0
        %1096 = vmatprep.subr.mxu0 0.0
        %1097 = vmatpush1.msra.mxu0 0.0
        %1098 = vmatprep.subr.mxu0 0.0
        %1099 = vmatpush1.msra.mxu0 0.0
        %1100 = vmatprep.subr.mxu0 0.0
        %1101 = vmatpush1.msra.mxu0 0.0
        %1102 = vmatprep.subr.mxu0 0.0
        %1103 = vmatpush1.msra.mxu0 0.0
        %1104 = vmatprep.subr.mxu0 0.0
        %1105 = vmatpush1.msra.mxu0 0.0
        %1106 = vmatprep.subr.mxu0 0.0
        %1107 = vmatpush1.msra.mxu0 0.0
        %1108 = vmatprep.subr.mxu0 0.0
        %1109 = vmatpush1.msra.mxu0 0.0
        %1110 = vmatprep.subr.mxu0 0.0
        %1111 = vmatpush1.msra.mxu0 0.0
        %1112 = vmatprep.subr.mxu0 0.0
        %1113 = vmatpush1.msra.mxu0 0.0
        %1114 = vmatprep.subr.mxu0 0.0
        %1115 = vmatpush1.msra.mxu0 0.0
        %1116 = vmatprep.subr.mxu0 0.0
        %1117 = vmatpush1.msra.mxu0 0.0
        %1118 = vmatprep.subr.mxu0 0.0
        %1119 = vmatpush1.msra.mxu0 0.0
        %1120 = vmatprep.subr.mxu0 0.0
        %1121 = vmatpush1.msra.mxu0 0.0
        %1122 = vmatprep.subr.mxu0 0.0
        %1123 = vmatpush1.msra.mxu0 0.0
        %1124 = vmatprep.subr.mxu0 0.0
        %1125 = vmatpush1.msra.mxu0 0.0
        %1126 = vmatprep.subr.mxu0 0.0
        %1127 = vmatpush1.msra.mxu0 0.0
        %1128 = vmatprep.subr.mxu0 0.0
        %1129 = vmatpush1.msra.mxu0 0.0
        %1130 = vmatprep.subr.mxu0 0.0
        %1131 = vmatpush1.msra.mxu0 0.0
        %1132 = vmatprep.subr.mxu0 0.0
        %1133 = vmatpush1.msra.mxu0 0.0
        %1134 = vmatprep.mubr.f32.mxu0 0.0
        %1135 = vmatmul.mubr.f32.gmra.mrb[0].mxu0 %v1068
        %v1136 = vpop.f32.mrb[0].mxu0
        %v1137 = vadd.f32 0.0, %v1136
        %v1138 = vpop.f32.mrb[0].mxu0
        %1139 = vdwg.mxu0
        %s1140 = scalar_lea.vmem %s6, 3
        %v1141 = vld [vmem:[%s1140] sm:$0x1]
        %v1143 = vlaneseq
        %v1144 = vshrl.u32 %v1143, 7
        %v1145 = vsub.s32 0, %v1144
        %v1146 = vrot.slane %v1141, %v1145
        %v1148 = vmul.f32 %v1137, %v1146
        %v1149 = vadd.f32 %v1058, %v1148
        %s1150 = scalar_lea.vmem %s5, 32
        %v1151 = vld [vmem:[%s1150] sm:$0xff]
        %1152 = vrot.lane.b32.xlu0 %v789, 124
        %v1153 = vpop.permute.xlu0 %1152
        %1154 = vrot.lane.b32.xlu0 %v790, 124
        %v1155 = vpop.permute.xlu0 %1154
        %v1159 = vsel %vm792, %v1151, 0
        %1161 = vmatprep.subr.mxu0 0.0
        %1162 = vmatpush1.msra.mxu0 %v1153
        %1163 = vmatprep.subr.mxu0 0.0
        %1164 = vmatpush1.msra.mxu0 %v1155
        %1165 = vmatprep.subr.mxu0 0.0
        %1166 = vmatpush1.msra.mxu0 0.0
        %1167 = vmatprep.subr.mxu0 0.0
        %1168 = vmatpush1.msra.mxu0 0.0
        %1169 = vmatprep.subr.mxu0 0.0
        %1170 = vmatpush1.msra.mxu0 0.0
        %1171 = vmatprep.subr.mxu0 0.0
        %1172 = vmatpush1.msra.mxu0 0.0
        %1173 = vmatprep.subr.mxu0 0.0
        %1174 = vmatpush1.msra.mxu0 0.0
        %1175 = vmatprep.subr.mxu0 0.0
        %1176 = vmatpush1.msra.mxu0 0.0
        %1177 = vmatprep.subr.mxu0 0.0
        %1178 = vmatpush1.msra.mxu0 0.0
        %1179 = vmatprep.subr.mxu0 0.0
        %1180 = vmatpush1.msra.mxu0 0.0
        %1181 = vmatprep.subr.mxu0 0.0
        %1182 = vmatpush1.msra.mxu0 0.0
        %1183 = vmatprep.subr.mxu0 0.0
        %1184 = vmatpush1.msra.mxu0 0.0
        %1185 = vmatprep.subr.mxu0 0.0
        %1186 = vmatpush1.msra.mxu0 0.0
        %1187 = vmatprep.subr.mxu0 0.0
        %1188 = vmatpush1.msra.mxu0 0.0
        %1189 = vmatprep.subr.mxu0 0.0
        %1190 = vmatpush1.msra.mxu0 0.0
        %1191 = vmatprep.subr.mxu0 0.0
        %1192 = vmatpush1.msra.mxu0 0.0
        %1193 = vmatprep.subr.mxu0 0.0
        %1194 = vmatpush1.msra.mxu0 0.0
        %1195 = vmatprep.subr.mxu0 0.0
        %1196 = vmatpush1.msra.mxu0 0.0
        %1197 = vmatprep.subr.mxu0 0.0
        %1198 = vmatpush1.msra.mxu0 0.0
        %1199 = vmatprep.subr.mxu0 0.0
        %1200 = vmatpush1.msra.mxu0 0.0
        %1201 = vmatprep.subr.mxu0 0.0
        %1202 = vmatpush1.msra.mxu0 0.0
        %1203 = vmatprep.subr.mxu0 0.0
        %1204 = vmatpush1.msra.mxu0 0.0
        %1205 = vmatprep.subr.mxu0 0.0
        %1206 = vmatpush1.msra.mxu0 0.0
        %1207 = vmatprep.subr.mxu0 0.0
        %1208 = vmatpush1.msra.mxu0 0.0
        %1209 = vmatprep.subr.mxu0 0.0
        %1210 = vmatpush1.msra.mxu0 0.0
        %1211 = vmatprep.subr.mxu0 0.0
        %1212 = vmatpush1.msra.mxu0 0.0
        %1213 = vmatprep.subr.mxu0 0.0
        %1214 = vmatpush1.msra.mxu0 0.0
        %1215 = vmatprep.subr.mxu0 0.0
        %1216 = vmatpush1.msra.mxu0 0.0
        %1217 = vmatprep.subr.mxu0 0.0
        %1218 = vmatpush1.msra.mxu0 0.0
        %1219 = vmatprep.subr.mxu0 0.0
        %1220 = vmatpush1.msra.mxu0 0.0
        %1221 = vmatprep.subr.mxu0 0.0
        %1222 = vmatpush1.msra.mxu0 0.0
        %1223 = vmatprep.subr.mxu0 0.0
        %1224 = vmatpush1.msra.mxu0 0.0
        %1225 = vmatprep.mubr.f32.mxu0 0.0
        %1226 = vmatmul.mubr.f32.gmra.mrb[0].mxu0 %v1159
        %v1227 = vpop.f32.mrb[0].mxu0
        %v1228 = vadd.f32 0.0, %v1227
        %v1229 = vpop.f32.mrb[0].mxu0
        %1230 = vdwg.mxu0
        %s1231 = scalar_lea.vmem %s6, 4
        %v1232 = vld [vmem:[%s1231] sm:$0x1]
        %v1234 = vlaneseq
        %v1235 = vshrl.u32 %v1234, 7
        %v1236 = vsub.s32 0, %v1235
        %v1237 = vrot.slane %v1232, %v1236
        %v1239 = vmul.f32 %v1228, %v1237
        %v1240 = vadd.f32 %v1149, %v1239
        %s1241 = scalar_lea.vmem %s5, 40
        %v1242 = vld [vmem:[%s1241] sm:$0xff]
        %1243 = vrot.lane.b32.xlu0 %v789, 123
        %v1244 = vpop.permute.xlu0 %1243
        %1245 = vrot.lane.b32.xlu0 %v790, 123
        %v1246 = vpop.permute.xlu0 %1245
        %v1250 = vsel %vm792, %v1242, 0
        %1252 = vmatprep.subr.mxu0 0.0
        %1253 = vmatpush1.msra.mxu0 %v1244
        %1254 = vmatprep.subr.mxu0 0.0
        %1255 = vmatpush1.msra.mxu0 %v1246
        %1256 = vmatprep.subr.mxu0 0.0
        %1257 = vmatpush1.msra.mxu0 0.0
        %1258 = vmatprep.subr.mxu0 0.0
        %1259 = vmatpush1.msra.mxu0 0.0
        %1260 = vmatprep.subr.mxu0 0.0
        %1261 = vmatpush1.msra.mxu0 0.0
        %1262 = vmatprep.subr.mxu0 0.0
        %1263 = vmatpush1.msra.mxu0 0.0
        %1264 = vmatprep.subr.mxu0 0.0
        %1265 = vmatpush1.msra.mxu0 0.0
        %1266 = vmatprep.subr.mxu0 0.0
        %1267 = vmatpush1.msra.mxu0 0.0
        %1268 = vmatprep.subr.mxu0 0.0
        %1269 = vmatpush1.msra.mxu0 0.0
        %1270 = vmatprep.subr.mxu0 0.0
        %1271 = vmatpush1.msra.mxu0 0.0
        %1272 = vmatprep.subr.mxu0 0.0
        %1273 = vmatpush1.msra.mxu0 0.0
        %1274 = vmatprep.subr.mxu0 0.0
        %1275 = vmatpush1.msra.mxu0 0.0
        %1276 = vmatprep.subr.mxu0 0.0
        %1277 = vmatpush1.msra.mxu0 0.0
        %1278 = vmatprep.subr.mxu0 0.0
        %1279 = vmatpush1.msra.mxu0 0.0
        %1280 = vmatprep.subr.mxu0 0.0
        %1281 = vmatpush1.msra.mxu0 0.0
        %1282 = vmatprep.subr.mxu0 0.0
        %1283 = vmatpush1.msra.mxu0 0.0
        %1284 = vmatprep.subr.mxu0 0.0
        %1285 = vmatpush1.msra.mxu0 0.0
        %1286 = vmatprep.subr.mxu0 0.0
        %1287 = vmatpush1.msra.mxu0 0.0
        %1288 = vmatprep.subr.mxu0 0.0
        %1289 = vmatpush1.msra.mxu0 0.0
        %1290 = vmatprep.subr.mxu0 0.0
        %1291 = vmatpush1.msra.mxu0 0.0
        %1292 = vmatprep.subr.mxu0 0.0
        %1293 = vmatpush1.msra.mxu0 0.0
        %1294 = vmatprep.subr.mxu0 0.0
        %1295 = vmatpush1.msra.mxu0 0.0
        %1296 = vmatprep.subr.mxu0 0.0
        %1297 = vmatpush1.msra.mxu0 0.0
        %1298 = vmatprep.subr.mxu0 0.0
        %1299 = vmatpush1.msra.mxu0 0.0
        %1300 = vmatprep.subr.mxu0 0.0
        %1301 = vmatpush1.msra.mxu0 0.0
        %1302 = vmatprep.subr.mxu0 0.0
        %1303 = vmatpush1.msra.mxu0 0.0
        %1304 = vmatprep.subr.mxu0 0.0
        %1305 = vmatpush1.msra.mxu0 0.0
        %1306 = vmatprep.subr.mxu0 0.0
        %1307 = vmatpush1.msra.mxu0 0.0
        %1308 = vmatprep.subr.mxu0 0.0
        %1309 = vmatpush1.msra.mxu0 0.0
        %1310 = vmatprep.subr.mxu0 0.0
        %1311 = vmatpush1.msra.mxu0 0.0
        %1312 = vmatprep.subr.mxu0 0.0
        %1313 = vmatpush1.msra.mxu0 0.0
        %1314 = vmatprep.subr.mxu0 0.0
        %1315 = vmatpush1.msra.mxu0 0.0
        %1316 = vmatprep.mubr.f32.mxu0 0.0
        %1317 = vmatmul.mubr.f32.gmra.mrb[0].mxu0 %v1250
        %v1318 = vpop.f32.mrb[0].mxu0
        %v1319 = vadd.f32 0.0, %v1318
        %v1320 = vpop.f32.mrb[0].mxu0
        %1321 = vdwg.mxu0
        %s1322 = scalar_lea.vmem %s6, 5
        %v1323 = vld [vmem:[%s1322] sm:$0x1]
        %v1325 = vlaneseq
        %v1326 = vshrl.u32 %v1325, 7
        %v1327 = vsub.s32 0, %v1326
        %v1328 = vrot.slane %v1323, %v1327
        %v1330 = vmul.f32 %v1319, %v1328
        %v1331 = vadd.f32 %v1240, %v1330
        %s1332 = scalar_lea.vmem %s5, 48
        %v1333 = vld [vmem:[%s1332] sm:$0xff]
        %1334 = vrot.lane.b32.xlu0 %v789, 122
        %v1335 = vpop.permute.xlu0 %1334
        %1336 = vrot.lane.b32.xlu0 %v790, 122
        %v1337 = vpop.permute.xlu0 %1336
        %v1341 = vsel %vm792, %v1333, 0
        %1343 = vmatprep.subr.mxu0 0.0
        %1344 = vmatpush1.msra.mxu0 %v1335
        %1345 = vmatprep.subr.mxu0 0.0
        %1346 = vmatpush1.msra.mxu0 %v1337
        %1347 = vmatprep.subr.mxu0 0.0
        %1348 = vmatpush1.msra.mxu0 0.0
        %1349 = vmatprep.subr.mxu0 0.0
        %1350 = vmatpush1.msra.mxu0 0.0
        %1351 = vmatprep.subr.mxu0 0.0
        %1352 = vmatpush1.msra.mxu0 0.0
        %1353 = vmatprep.subr.mxu0 0.0
        %1354 = vmatpush1.msra.mxu0 0.0
        %1355 = vmatprep.subr.mxu0 0.0
        %1356 = vmatpush1.msra.mxu0 0.0
        %1357 = vmatprep.subr.mxu0 0.0
        %1358 = vmatpush1.msra.mxu0 0.0
        %1359 = vmatprep.subr.mxu0 0.0
        %1360 = vmatpush1.msra.mxu0 0.0
        %1361 = vmatprep.subr.mxu0 0.0
        %1362 = vmatpush1.msra.mxu0 0.0
        %1363 = vmatprep.subr.mxu0 0.0
        %1364 = vmatpush1.msra.mxu0 0.0
        %1365 = vmatprep.subr.mxu0 0.0
        %1366 = vmatpush1.msra.mxu0 0.0
        %1367 = vmatprep.subr.mxu0 0.0
        %1368 = vmatpush1.msra.mxu0 0.0
        %1369 = vmatprep.subr.mxu0 0.0
        %1370 = vmatpush1.msra.mxu0 0.0
        %1371 = vmatprep.subr.mxu0 0.0
        %1372 = vmatpush1.msra.mxu0 0.0
        %1373 = vmatprep.subr.mxu0 0.0
        %1374 = vmatpush1.msra.mxu0 0.0
        %1375 = vmatprep.subr.mxu0 0.0
        %1376 = vmatpush1.msra.mxu0 0.0
        %1377 = vmatprep.subr.mxu0 0.0
        %1378 = vmatpush1.msra.mxu0 0.0
        %1379 = vmatprep.subr.mxu0 0.0
        %1380 = vmatpush1.msra.mxu0 0.0
        %1381 = vmatprep.subr.mxu0 0.0
        %1382 = vmatpush1.msra.mxu0 0.0
        %1383 = vmatprep.subr.mxu0 0.0
        %1384 = vmatpush1.msra.mxu0 0.0
        %1385 = vmatprep.subr.mxu0 0.0
        %1386 = vmatpush1.msra.mxu0 0.0
        %1387 = vmatprep.subr.mxu0 0.0
        %1388 = vmatpush1.msra.mxu0 0.0
        %1389 = vmatprep.subr.mxu0 0.0
        %1390 = vmatpush1.msra.mxu0 0.0
        %1391 = vmatprep.subr.mxu0 0.0
        %1392 = vmatpush1.msra.mxu0 0.0
        %1393 = vmatprep.subr.mxu0 0.0
        %1394 = vmatpush1.msra.mxu0 0.0
        %1395 = vmatprep.subr.mxu0 0.0
        %1396 = vmatpush1.msra.mxu0 0.0
        %1397 = vmatprep.subr.mxu0 0.0
        %1398 = vmatpush1.msra.mxu0 0.0
        %1399 = vmatprep.subr.mxu0 0.0
        %1400 = vmatpush1.msra.mxu0 0.0
        %1401 = vmatprep.subr.mxu0 0.0
        %1402 = vmatpush1.msra.mxu0 0.0
        %1403 = vmatprep.subr.mxu0 0.0
        %1404 = vmatpush1.msra.mxu0 0.0
        %1405 = vmatprep.subr.mxu0 0.0
        %1406 = vmatpush1.msra.mxu0 0.0
        %1407 = vmatprep.mubr.f32.mxu0 0.0
        %1408 = vmatmul.mubr.f32.gmra.mrb[0].mxu0 %v1341
        %v1409 = vpop.f32.mrb[0].mxu0
        %v1410 = vadd.f32 0.0, %v1409
        %v1411 = vpop.f32.mrb[0].mxu0
        %1412 = vdwg.mxu0
        %s1413 = scalar_lea.vmem %s6, 6
        %v1414 = vld [vmem:[%s1413] sm:$0x1]
        %v1416 = vlaneseq
        %v1417 = vshrl.u32 %v1416, 7
        %v1418 = vsub.s32 0, %v1417
        %v1419 = vrot.slane %v1414, %v1418
        %v1421 = vmul.f32 %v1410, %v1419
        %v1422 = vadd.f32 %v1331, %v1421
        %s1423 = scalar_lea.vmem %s5, 56
        %v1424 = vld [vmem:[%s1423] sm:$0xff]
        %1425 = vrot.lane.b32.xlu0 %v789, 120
        %v1426 = vpop.permute.xlu0 %1425
        %1427 = vrot.lane.b32.xlu0 %v790, 120
        %v1428 = vpop.permute.xlu0 %1427
        %v1432 = vsel %vm792, %v1424, 0
        %1434 = vmatprep.subr.mxu0 0.0
        %1435 = vmatpush1.msra.mxu0 %v1426
        %1436 = vmatprep.subr.mxu0 0.0
        %1437 = vmatpush1.msra.mxu0 %v1428
        %1438 = vmatprep.subr.mxu0 0.0
        %1439 = vmatpush1.msra.mxu0 0.0
        %1440 = vmatprep.subr.mxu0 0.0
        %1441 = vmatpush1.msra.mxu0 0.0
        %1442 = vmatprep.subr.mxu0 0.0
        %1443 = vmatpush1.msra.mxu0 0.0
        %1444 = vmatprep.subr.mxu0 0.0
        %1445 = vmatpush1.msra.mxu0 0.0
        %1446 = vmatprep.subr.mxu0 0.0
        %1447 = vmatpush1.msra.mxu0 0.0
        %1448 = vmatprep.subr.mxu0 0.0
        %1449 = vmatpush1.msra.mxu0 0.0
        %1450 = vmatprep.subr.mxu0 0.0
        %1451 = vmatpush1.msra.mxu0 0.0
        %1452 = vmatprep.subr.mxu0 0.0
        %1453 = vmatpush1.msra.mxu0 0.0
        %1454 = vmatprep.subr.mxu0 0.0
        %1455 = vmatpush1.msra.mxu0 0.0
        %1456 = vmatprep.subr.mxu0 0.0
        %1457 = vmatpush1.msra.mxu0 0.0
        %1458 = vmatprep.subr.mxu0 0.0
        %1459 = vmatpush1.msra.mxu0 0.0
        %1460 = vmatprep.subr.mxu0 0.0
        %1461 = vmatpush1.msra.mxu0 0.0
        %1462 = vmatprep.subr.mxu0 0.0
        %1463 = vmatpush1.msra.mxu0 0.0
        %1464 = vmatprep.subr.mxu0 0.0
        %1465 = vmatpush1.msra.mxu0 0.0
        %1466 = vmatprep.subr.mxu0 0.0
        %1467 = vmatpush1.msra.mxu0 0.0
        %1468 = vmatprep.subr.mxu0 0.0
        %1469 = vmatpush1.msra.mxu0 0.0
        %1470 = vmatprep.subr.mxu0 0.0
        %1471 = vmatpush1.msra.mxu0 0.0
        %1472 = vmatprep.subr.mxu0 0.0
        %1473 = vmatpush1.msra.mxu0 0.0
        %1474 = vmatprep.subr.mxu0 0.0
        %1475 = vmatpush1.msra.mxu0 0.0
        %1476 = vmatprep.subr.mxu0 0.0
        %1477 = vmatpush1.msra.mxu0 0.0
        %1478 = vmatprep.subr.mxu0 0.0
        %1479 = vmatpush1.msra.mxu0 0.0
        %1480 = vmatprep.subr.mxu0 0.0
        %1481 = vmatpush1.msra.mxu0 0.0
        %1482 = vmatprep.subr.mxu0 0.0
        %1483 = vmatpush1.msra.mxu0 0.0
        %1484 = vmatprep.subr.mxu0 0.0
        %1485 = vmatpush1.msra.mxu0 0.0
        %1486 = vmatprep.subr.mxu0 0.0
        %1487 = vmatpush1.msra.mxu0 0.0
        %1488 = vmatprep.subr.mxu0 0.0
        %1489 = vmatpush1.msra.mxu0 0.0
        %1490 = vmatprep.subr.mxu0 0.0
        %1491 = vmatpush1.msra.mxu0 0.0
        %1492 = vmatprep.subr.mxu0 0.0
        %1493 = vmatpush1.msra.mxu0 0.0
        %1494 = vmatprep.subr.mxu0 0.0
        %1495 = vmatpush1.msra.mxu0 0.0
        %1496 = vmatprep.subr.mxu0 0.0
        %1497 = vmatpush1.msra.mxu0 0.0
        %1498 = vmatprep.mubr.f32.mxu0 0.0
        %1499 = vmatmul.mubr.f32.gmra.mrb[0].mxu0 %v1432
        %v1500 = vpop.f32.mrb[0].mxu0
        %v1501 = vadd.f32 0.0, %v1500
        %v1502 = vpop.f32.mrb[0].mxu0
        %1503 = vdwg.mxu0
        %s1504 = scalar_lea.vmem %s6, 7
        %v1505 = vld [vmem:[%s1504] sm:$0x1]
        %v1507 = vlaneseq
        %v1508 = vshrl.u32 %v1507, 7
        %v1509 = vsub.s32 0, %v1508
        %v1510 = vrot.slane %v1505, %v1509
        %v1512 = vmul.f32 %v1501, %v1510
        %v1513 = vadd.f32 %v1422, %v1512
        %s1514 = scalar_lea.vmem %s5, 64
        %v1515 = vld [vmem:[%s1514] sm:$0xff]
        %1516 = vrot.lane.b32.xlu0 %v789, 119
        %v1517 = vpop.permute.xlu0 %1516
        %1518 = vrot.lane.b32.xlu0 %v790, 119
        %v1519 = vpop.permute.xlu0 %1518
        %v1523 = vsel %vm792, %v1515, 0
        %1525 = vmatprep.subr.mxu0 0.0
        %1526 = vmatpush1.msra.mxu0 %v1517
        %1527 = vmatprep.subr.mxu0 0.0
        %1528 = vmatpush1.msra.mxu0 %v1519
        %1529 = vmatprep.subr.mxu0 0.0
        %1530 = vmatpush1.msra.mxu0 0.0
        %1531 = vmatprep.subr.mxu0 0.0
        %1532 = vmatpush1.msra.mxu0 0.0
        %1533 = vmatprep.subr.mxu0 0.0
        %1534 = vmatpush1.msra.mxu0 0.0
        %1535 = vmatprep.subr.mxu0 0.0
        %1536 = vmatpush1.msra.mxu0 0.0
        %1537 = vmatprep.subr.mxu0 0.0
        %1538 = vmatpush1.msra.mxu0 0.0
        %1539 = vmatprep.subr.mxu0 0.0
        %1540 = vmatpush1.msra.mxu0 0.0
        %1541 = vmatprep.subr.mxu0 0.0
        %1542 = vmatpush1.msra.mxu0 0.0
        %1543 = vmatprep.subr.mxu0 0.0
        %1544 = vmatpush1.msra.mxu0 0.0
        %1545 = vmatprep.subr.mxu0 0.0
        %1546 = vmatpush1.msra.mxu0 0.0
        %1547 = vmatprep.subr.mxu0 0.0
        %1548 = vmatpush1.msra.mxu0 0.0
        %1549 = vmatprep.subr.mxu0 0.0
        %1550 = vmatpush1.msra.mxu0 0.0
        %1551 = vmatprep.subr.mxu0 0.0
        %1552 = vmatpush1.msra.mxu0 0.0
        %1553 = vmatprep.subr.mxu0 0.0
        %1554 = vmatpush1.msra.mxu0 0.0
        %1555 = vmatprep.subr.mxu0 0.0
        %1556 = vmatpush1.msra.mxu0 0.0
        %1557 = vmatprep.subr.mxu0 0.0
        %1558 = vmatpush1.msra.mxu0 0.0
        %1559 = vmatprep.subr.mxu0 0.0
        %1560 = vmatpush1.msra.mxu0 0.0
        %1561 = vmatprep.subr.mxu0 0.0
        %1562 = vmatpush1.msra.mxu0 0.0
        %1563 = vmatprep.subr.mxu0 0.0
        %1564 = vmatpush1.msra.mxu0 0.0
        %1565 = vmatprep.subr.mxu0 0.0
        %1566 = vmatpush1.msra.mxu0 0.0
        %1567 = vmatprep.subr.mxu0 0.0
        %1568 = vmatpush1.msra.mxu0 0.0
        %1569 = vmatprep.subr.mxu0 0.0
        %1570 = vmatpush1.msra.mxu0 0.0
        %1571 = vmatprep.subr.mxu0 0.0
        %1572 = vmatpush1.msra.mxu0 0.0
        %1573 = vmatprep.subr.mxu0 0.0
        %1574 = vmatpush1.msra.mxu0 0.0
        %1575 = vmatprep.subr.mxu0 0.0
        %1576 = vmatpush1.msra.mxu0 0.0
        %1577 = vmatprep.subr.mxu0 0.0
        %1578 = vmatpush1.msra.mxu0 0.0
        %1579 = vmatprep.subr.mxu0 0.0
        %1580 = vmatpush1.msra.mxu0 0.0
        %1581 = vmatprep.subr.mxu0 0.0
        %1582 = vmatpush1.msra.mxu0 0.0
        %1583 = vmatprep.subr.mxu0 0.0
        %1584 = vmatpush1.msra.mxu0 0.0
        %1585 = vmatprep.subr.mxu0 0.0
        %1586 = vmatpush1.msra.mxu0 0.0
        %1587 = vmatprep.subr.mxu0 0.0
        %1588 = vmatpush1.msra.mxu0 0.0
        %1589 = vmatprep.mubr.f32.mxu0 0.0
        %1590 = vmatmul.mubr.f32.gmra.mrb[0].mxu0 %v1523
        %v1591 = vpop.f32.mrb[0].mxu0
        %v1592 = vadd.f32 0.0, %v1591
        %v1593 = vpop.f32.mrb[0].mxu0
        %1594 = vdwg.mxu0
        %s1595 = scalar_lea.vmem %s6, 8
        %v1596 = vld [vmem:[%s1595] sm:$0x1]
        %v1598 = vlaneseq
        %v1599 = vshrl.u32 %v1598, 7
        %v1600 = vsub.s32 0, %v1599
        %v1601 = vrot.slane %v1596, %v1600
        %v1603 = vmul.f32 %v1592, %v1601
        %v1604 = vadd.f32 %v1513, %v1603
        %s1605 = scalar_lea.vmem %s5, 72
        %v1606 = vld [vmem:[%s1605] sm:$0xff]
        %1607 = vrot.lane.b32.xlu0 %v789, 118
        %v1608 = vpop.permute.xlu0 %1607
        %1609 = vrot.lane.b32.xlu0 %v790, 118
        %v1610 = vpop.permute.xlu0 %1609
        %v1614 = vsel %vm792, %v1606, 0
        %1616 = vmatprep.subr.mxu0 0.0
        %1617 = vmatpush1.msra.mxu0 %v1608
        %1618 = vmatprep.subr.mxu0 0.0
        %1619 = vmatpush1.msra.mxu0 %v1610
        %1620 = vmatprep.subr.mxu0 0.0
        %1621 = vmatpush1.msra.mxu0 0.0
        %1622 = vmatprep.subr.mxu0 0.0
        %1623 = vmatpush1.msra.mxu0 0.0
        %1624 = vmatprep.subr.mxu0 0.0
        %1625 = vmatpush1.msra.mxu0 0.0
        %1626 = vmatprep.subr.mxu0 0.0
        %1627 = vmatpush1.msra.mxu0 0.0
        %1628 = vmatprep.subr.mxu0 0.0
        %1629 = vmatpush1.msra.mxu0 0.0
        %1630 = vmatprep.subr.mxu0 0.0
        %1631 = vmatpush1.msra.mxu0 0.0
        %1632 = vmatprep.subr.mxu0 0.0
        %1633 = vmatpush1.msra.mxu0 0.0
        %1634 = vmatprep.subr.mxu0 0.0
        %1635 = vmatpush1.msra.mxu0 0.0
        %1636 = vmatprep.subr.mxu0 0.0
        %1637 = vmatpush1.msra.mxu0 0.0
        %1638 = vmatprep.subr.mxu0 0.0
        %1639 = vmatpush1.msra.mxu0 0.0
        %1640 = vmatprep.subr.mxu0 0.0
        %1641 = vmatpush1.msra.mxu0 0.0
        %1642 = vmatprep.subr.mxu0 0.0
        %1643 = vmatpush1.msra.mxu0 0.0
        %1644 = vmatprep.subr.mxu0 0.0
        %1645 = vmatpush1.msra.mxu0 0.0
        %1646 = vmatprep.subr.mxu0 0.0
        %1647 = vmatpush1.msra.mxu0 0.0
        %1648 = vmatprep.subr.mxu0 0.0
        %1649 = vmatpush1.msra.mxu0 0.0
        %1650 = vmatprep.subr.mxu0 0.0
        %1651 = vmatpush1.msra.mxu0 0.0
        %1652 = vmatprep.subr.mxu0 0.0
        %1653 = vmatpush1.msra.mxu0 0.0
        %1654 = vmatprep.subr.mxu0 0.0
        %1655 = vmatpush1.msra.mxu0 0.0
        %1656 = vmatprep.subr.mxu0 0.0
        %1657 = vmatpush1.msra.mxu0 0.0
        %1658 = vmatprep.subr.mxu0 0.0
        %1659 = vmatpush1.msra.mxu0 0.0
        %1660 = vmatprep.subr.mxu0 0.0
        %1661 = vmatpush1.msra.mxu0 0.0
        %1662 = vmatprep.subr.mxu0 0.0
        %1663 = vmatpush1.msra.mxu0 0.0
        %1664 = vmatprep.subr.mxu0 0.0
        %1665 = vmatpush1.msra.mxu0 0.0
        %1666 = vmatprep.subr.mxu0 0.0
        %1667 = vmatpush1.msra.mxu0 0.0
        %1668 = vmatprep.subr.mxu0 0.0
        %1669 = vmatpush1.msra.mxu0 0.0
        %1670 = vmatprep.subr.mxu0 0.0
        %1671 = vmatpush1.msra.mxu0 0.0
        %1672 = vmatprep.subr.mxu0 0.0
        %1673 = vmatpush1.msra.mxu0 0.0
        %1674 = vmatprep.subr.mxu0 0.0
        %1675 = vmatpush1.msra.mxu0 0.0
        %1676 = vmatprep.subr.mxu0 0.0
        %1677 = vmatpush1.msra.mxu0 0.0
        %1678 = vmatprep.subr.mxu0 0.0
        %1679 = vmatpush1.msra.mxu0 0.0
        %1680 = vmatprep.mubr.f32.mxu0 0.0
        %1681 = vmatmul.mubr.f32.gmra.mrb[0].mxu0 %v1614
        %v1682 = vpop.f32.mrb[0].mxu0
        %v1683 = vadd.f32 0.0, %v1682
        %v1684 = vpop.f32.mrb[0].mxu0
        %1685 = vdwg.mxu0
        %s1686 = scalar_lea.vmem %s6, 9
        %v1687 = vld [vmem:[%s1686] sm:$0x1]
        %v1689 = vlaneseq
        %v1690 = vshrl.u32 %v1689, 7
        %v1691 = vsub.s32 0, %v1690
        %v1692 = vrot.slane %v1687, %v1691
        %v1694 = vmul.f32 %v1683, %v1692
        %v1695 = vadd.f32 %v1604, %v1694
        %s1696 = scalar_lea.vmem %s5, 80
        %v1697 = vld [vmem:[%s1696] sm:$0xff]
        %1698 = vrot.lane.b32.xlu0 %v789, 117
        %v1699 = vpop.permute.xlu0 %1698
        %1700 = vrot.lane.b32.xlu0 %v790, 117
        %v1701 = vpop.permute.xlu0 %1700
        %v1705 = vsel %vm792, %v1697, 0
        %1707 = vmatprep.subr.mxu0 0.0
        %1708 = vmatpush1.msra.mxu0 %v1699
        %1709 = vmatprep.subr.mxu0 0.0
        %1710 = vmatpush1.msra.mxu0 %v1701
        %1711 = vmatprep.subr.mxu0 0.0
        %1712 = vmatpush1.msra.mxu0 0.0
        %1713 = vmatprep.subr.mxu0 0.0
        %1714 = vmatpush1.msra.mxu0 0.0
        %1715 = vmatprep.subr.mxu0 0.0
        %1716 = vmatpush1.msra.mxu0 0.0
        %1717 = vmatprep.subr.mxu0 0.0
        %1718 = vmatpush1.msra.mxu0 0.0
        %1719 = vmatprep.subr.mxu0 0.0
        %1720 = vmatpush1.msra.mxu0 0.0
        %1721 = vmatprep.subr.mxu0 0.0
        %1722 = vmatpush1.msra.mxu0 0.0
        %1723 = vmatprep.subr.mxu0 0.0
        %1724 = vmatpush1.msra.mxu0 0.0
        %1725 = vmatprep.subr.mxu0 0.0
        %1726 = vmatpush1.msra.mxu0 0.0
        %1727 = vmatprep.subr.mxu0 0.0
        %1728 = vmatpush1.msra.mxu0 0.0
        %1729 = vmatprep.subr.mxu0 0.0
        %1730 = vmatpush1.msra.mxu0 0.0
        %1731 = vmatprep.subr.mxu0 0.0
        %1732 = vmatpush1.msra.mxu0 0.0
        %1733 = vmatprep.subr.mxu0 0.0
        %1734 = vmatpush1.msra.mxu0 0.0
        %1735 = vmatprep.subr.mxu0 0.0
        %1736 = vmatpush1.msra.mxu0 0.0
        %1737 = vmatprep.subr.mxu0 0.0
        %1738 = vmatpush1.msra.mxu0 0.0
        %1739 = vmatprep.subr.mxu0 0.0
        %1740 = vmatpush1.msra.mxu0 0.0
        %1741 = vmatprep.subr.mxu0 0.0
        %1742 = vmatpush1.msra.mxu0 0.0
        %1743 = vmatprep.subr.mxu0 0.0
        %1744 = vmatpush1.msra.mxu0 0.0
        %1745 = vmatprep.subr.mxu0 0.0
        %1746 = vmatpush1.msra.mxu0 0.0
        %1747 = vmatprep.subr.mxu0 0.0
        %1748 = vmatpush1.msra.mxu0 0.0
        %1749 = vmatprep.subr.mxu0 0.0
        %1750 = vmatpush1.msra.mxu0 0.0
        %1751 = vmatprep.subr.mxu0 0.0
        %1752 = vmatpush1.msra.mxu0 0.0
        %1753 = vmatprep.subr.mxu0 0.0
        %1754 = vmatpush1.msra.mxu0 0.0
        %1755 = vmatprep.subr.mxu0 0.0
        %1756 = vmatpush1.msra.mxu0 0.0
        %1757 = vmatprep.subr.mxu0 0.0
        %1758 = vmatpush1.msra.mxu0 0.0
        %1759 = vmatprep.subr.mxu0 0.0
        %1760 = vmatpush1.msra.mxu0 0.0
        %1761 = vmatprep.subr.mxu0 0.0
        %1762 = vmatpush1.msra.mxu0 0.0
        %1763 = vmatprep.subr.mxu0 0.0
        %1764 = vmatpush1.msra.mxu0 0.0
        %1765 = vmatprep.subr.mxu0 0.0
        %1766 = vmatpush1.msra.mxu0 0.0
        %1767 = vmatprep.subr.mxu0 0.0
        %1768 = vmatpush1.msra.mxu0 0.0
        %1769 = vmatprep.subr.mxu0 0.0
        %1770 = vmatpush1.msra.mxu0 0.0
        %1771 = vmatprep.mubr.f32.mxu0 0.0
        %1772 = vmatmul.mubr.f32.gmra.mrb[0].mxu0 %v1705
        %v1773 = vpop.f32.mrb[0].mxu0
        %v1774 = vadd.f32 0.0, %v1773
        %v1775 = vpop.f32.mrb[0].mxu0
        %1776 = vdwg.mxu0
        %s1777 = scalar_lea.vmem %s6, 10
        %v1778 = vld [vmem:[%s1777] sm:$0x1]
        %v1780 = vlaneseq
        %v1781 = vshrl.u32 %v1780, 7
        %v1782 = vsub.s32 0, %v1781
        %v1783 = vrot.slane %v1778, %v1782
        %v1785 = vmul.f32 %v1774, %v1783
        %v1786 = vadd.f32 %v1695, %v1785
        %s1787 = scalar_lea.vmem %s5, 88
        %v1788 = vld [vmem:[%s1787] sm:$0xff]
        %1789 = vrot.lane.b32.xlu0 %v789, 116
        %v1790 = vpop.permute.xlu0 %1789
        %1791 = vrot.lane.b32.xlu0 %v790, 116
        %v1792 = vpop.permute.xlu0 %1791
        %v1796 = vsel %vm792, %v1788, 0
        %1798 = vmatprep.subr.mxu0 0.0
        %1799 = vmatpush1.msra.mxu0 %v1790
        %1800 = vmatprep.subr.mxu0 0.0
        %1801 = vmatpush1.msra.mxu0 %v1792
        %1802 = vmatprep.subr.mxu0 0.0
        %1803 = vmatpush1.msra.mxu0 0.0
        %1804 = vmatprep.subr.mxu0 0.0
        %1805 = vmatpush1.msra.mxu0 0.0
        %1806 = vmatprep.subr.mxu0 0.0
        %1807 = vmatpush1.msra.mxu0 0.0
        %1808 = vmatprep.subr.mxu0 0.0
        %1809 = vmatpush1.msra.mxu0 0.0
        %1810 = vmatprep.subr.mxu0 0.0
        %1811 = vmatpush1.msra.mxu0 0.0
        %1812 = vmatprep.subr.mxu0 0.0
        %1813 = vmatpush1.msra.mxu0 0.0
        %1814 = vmatprep.subr.mxu0 0.0
        %1815 = vmatpush1.msra.mxu0 0.0
        %1816 = vmatprep.subr.mxu0 0.0
        %1817 = vmatpush1.msra.mxu0 0.0
        %1818 = vmatprep.subr.mxu0 0.0
        %1819 = vmatpush1.msra.mxu0 0.0
        %1820 = vmatprep.subr.mxu0 0.0
        %1821 = vmatpush1.msra.mxu0 0.0
        %1822 = vmatprep.subr.mxu0 0.0
        %1823 = vmatpush1.msra.mxu0 0.0
        %1824 = vmatprep.subr.mxu0 0.0
        %1825 = vmatpush1.msra.mxu0 0.0
        %1826 = vmatprep.subr.mxu0 0.0
        %1827 = vmatpush1.msra.mxu0 0.0
        %1828 = vmatprep.subr.mxu0 0.0
        %1829 = vmatpush1.msra.mxu0 0.0
        %1830 = vmatprep.subr.mxu0 0.0
        %1831 = vmatpush1.msra.mxu0 0.0
        %1832 = vmatprep.subr.mxu0 0.0
        %1833 = vmatpush1.msra.mxu0 0.0
        %1834 = vmatprep.subr.mxu0 0.0
        %1835 = vmatpush1.msra.mxu0 0.0
        %1836 = vmatprep.subr.mxu0 0.0
        %1837 = vmatpush1.msra.mxu0 0.0
        %1838 = vmatprep.subr.mxu0 0.0
        %1839 = vmatpush1.msra.mxu0 0.0
        %1840 = vmatprep.subr.mxu0 0.0
        %1841 = vmatpush1.msra.mxu0 0.0
        %1842 = vmatprep.subr.mxu0 0.0
        %1843 = vmatpush1.msra.mxu0 0.0
        %1844 = vmatprep.subr.mxu0 0.0
        %1845 = vmatpush1.msra.mxu0 0.0
        %1846 = vmatprep.subr.mxu0 0.0
        %1847 = vmatpush1.msra.mxu0 0.0
        %1848 = vmatprep.subr.mxu0 0.0
        %1849 = vmatpush1.msra.mxu0 0.0
        %1850 = vmatprep.subr.mxu0 0.0
        %1851 = vmatpush1.msra.mxu0 0.0
        %1852 = vmatprep.subr.mxu0 0.0
        %1853 = vmatpush1.msra.mxu0 0.0
        %1854 = vmatprep.subr.mxu0 0.0
        %1855 = vmatpush1.msra.mxu0 0.0
        %1856 = vmatprep.subr.mxu0 0.0
        %1857 = vmatpush1.msra.mxu0 0.0
        %1858 = vmatprep.subr.mxu0 0.0
        %1859 = vmatpush1.msra.mxu0 0.0
        %1860 = vmatprep.subr.mxu0 0.0
        %1861 = vmatpush1.msra.mxu0 0.0
        %1862 = vmatprep.mubr.f32.mxu0 0.0
        %1863 = vmatmul.mubr.f32.gmra.mrb[0].mxu0 %v1796
        %v1864 = vpop.f32.mrb[0].mxu0
        %v1865 = vadd.f32 0.0, %v1864
        %v1866 = vpop.f32.mrb[0].mxu0
        %1867 = vdwg.mxu0
        %s1868 = scalar_lea.vmem %s6, 11
        %v1869 = vld [vmem:[%s1868] sm:$0x1]
        %v1871 = vlaneseq
        %v1872 = vshrl.u32 %v1871, 7
        %v1873 = vsub.s32 0, %v1872
        %v1874 = vrot.slane %v1869, %v1873
        %v1876 = vmul.f32 %v1865, %v1874
        %v1877 = vadd.f32 %v1786, %v1876
        %s1878 = scalar_lea.vmem %s5, 96
        %v1879 = vld [vmem:[%s1878] sm:$0xff]
        %1880 = vrot.lane.b32.xlu0 %v789, 115
        %v1881 = vpop.permute.xlu0 %1880
        %1882 = vrot.lane.b32.xlu0 %v790, 115
        %v1883 = vpop.permute.xlu0 %1882
        %v1887 = vsel %vm792, %v1879, 0
        %1889 = vmatprep.subr.mxu0 0.0
        %1890 = vmatpush1.msra.mxu0 %v1881
        %1891 = vmatprep.subr.mxu0 0.0
        %1892 = vmatpush1.msra.mxu0 %v1883
        %1893 = vmatprep.subr.mxu0 0.0
        %1894 = vmatpush1.msra.mxu0 0.0
        %1895 = vmatprep.subr.mxu0 0.0
        %1896 = vmatpush1.msra.mxu0 0.0
        %1897 = vmatprep.subr.mxu0 0.0
        %1898 = vmatpush1.msra.mxu0 0.0
        %1899 = vmatprep.subr.mxu0 0.0
        %1900 = vmatpush1.msra.mxu0 0.0
        %1901 = vmatprep.subr.mxu0 0.0
        %1902 = vmatpush1.msra.mxu0 0.0
        %1903 = vmatprep.subr.mxu0 0.0
        %1904 = vmatpush1.msra.mxu0 0.0
        %1905 = vmatprep.subr.mxu0 0.0
        %1906 = vmatpush1.msra.mxu0 0.0
        %1907 = vmatprep.subr.mxu0 0.0
        %1908 = vmatpush1.msra.mxu0 0.0
        %1909 = vmatprep.subr.mxu0 0.0
        %1910 = vmatpush1.msra.mxu0 0.0
        %1911 = vmatprep.subr.mxu0 0.0
        %1912 = vmatpush1.msra.mxu0 0.0
        %1913 = vmatprep.subr.mxu0 0.0
        %1914 = vmatpush1.msra.mxu0 0.0
        %1915 = vmatprep.subr.mxu0 0.0
        %1916 = vmatpush1.msra.mxu0 0.0
        %1917 = vmatprep.subr.mxu0 0.0
        %1918 = vmatpush1.msra.mxu0 0.0
        %1919 = vmatprep.subr.mxu0 0.0
        %1920 = vmatpush1.msra.mxu0 0.0
        %1921 = vmatprep.subr.mxu0 0.0
        %1922 = vmatpush1.msra.mxu0 0.0
        %1923 = vmatprep.subr.mxu0 0.0
        %1924 = vmatpush1.msra.mxu0 0.0
        %1925 = vmatprep.subr.mxu0 0.0
        %1926 = vmatpush1.msra.mxu0 0.0
        %1927 = vmatprep.subr.mxu0 0.0
        %1928 = vmatpush1.msra.mxu0 0.0
        %1929 = vmatprep.subr.mxu0 0.0
        %1930 = vmatpush1.msra.mxu0 0.0
        %1931 = vmatprep.subr.mxu0 0.0
        %1932 = vmatpush1.msra.mxu0 0.0
        %1933 = vmatprep.subr.mxu0 0.0
        %1934 = vmatpush1.msra.mxu0 0.0
        %1935 = vmatprep.subr.mxu0 0.0
        %1936 = vmatpush1.msra.mxu0 0.0
        %1937 = vmatprep.subr.mxu0 0.0
        %1938 = vmatpush1.msra.mxu0 0.0
        %1939 = vmatprep.subr.mxu0 0.0
        %1940 = vmatpush1.msra.mxu0 0.0
        %1941 = vmatprep.subr.mxu0 0.0
        %1942 = vmatpush1.msra.mxu0 0.0
        %1943 = vmatprep.subr.mxu0 0.0
        %1944 = vmatpush1.msra.mxu0 0.0
        %1945 = vmatprep.subr.mxu0 0.0
        %1946 = vmatpush1.msra.mxu0 0.0
        %1947 = vmatprep.subr.mxu0 0.0
        %1948 = vmatpush1.msra.mxu0 0.0
        %1949 = vmatprep.subr.mxu0 0.0
        %1950 = vmatpush1.msra.mxu0 0.0
        %1951 = vmatprep.subr.mxu0 0.0
        %1952 = vmatpush1.msra.mxu0 0.0
        %1953 = vmatprep.mubr.f32.mxu0 0.0
        %1954 = vmatmul.mubr.f32.gmra.mrb[0].mxu0 %v1887
        %v1955 = vpop.f32.mrb[0].mxu0
        %v1956 = vadd.f32 0.0, %v1955
        %v1957 = vpop.f32.mrb[0].mxu0
        %1958 = vdwg.mxu0
        %s1959 = scalar_lea.vmem %s6, 12
        %v1960 = vld [vmem:[%s1959] sm:$0x1]
        %v1962 = vlaneseq
        %v1963 = vshrl.u32 %v1962, 7
        %v1964 = vsub.s32 0, %v1963
        %v1965 = vrot.slane %v1960, %v1964
        %v1967 = vmul.f32 %v1956, %v1965
        %v1968 = vadd.f32 %v1877, %v1967
        %s1969 = scalar_lea.vmem %s5, 104
        %v1970 = vld [vmem:[%s1969] sm:$0xff]
        %1971 = vrot.lane.b32.xlu0 %v789, 114
        %v1972 = vpop.permute.xlu0 %1971
        %1973 = vrot.lane.b32.xlu0 %v790, 114
        %v1974 = vpop.permute.xlu0 %1973
        %v1978 = vsel %vm792, %v1970, 0
        %1980 = vmatprep.subr.mxu0 0.0
        %1981 = vmatpush1.msra.mxu0 %v1972
        %1982 = vmatprep.subr.mxu0 0.0
        %1983 = vmatpush1.msra.mxu0 %v1974
        %1984 = vmatprep.subr.mxu0 0.0
        %1985 = vmatpush1.msra.mxu0 0.0
        %1986 = vmatprep.subr.mxu0 0.0
        %1987 = vmatpush1.msra.mxu0 0.0
        %1988 = vmatprep.subr.mxu0 0.0
        %1989 = vmatpush1.msra.mxu0 0.0
        %1990 = vmatprep.subr.mxu0 0.0
        %1991 = vmatpush1.msra.mxu0 0.0
        %1992 = vmatprep.subr.mxu0 0.0
        %1993 = vmatpush1.msra.mxu0 0.0
        %1994 = vmatprep.subr.mxu0 0.0
        %1995 = vmatpush1.msra.mxu0 0.0
        %1996 = vmatprep.subr.mxu0 0.0
        %1997 = vmatpush1.msra.mxu0 0.0
        %1998 = vmatprep.subr.mxu0 0.0
        %1999 = vmatpush1.msra.mxu0 0.0
        %2000 = vmatprep.subr.mxu0 0.0
        %2001 = vmatpush1.msra.mxu0 0.0
        %2002 = vmatprep.subr.mxu0 0.0
        %2003 = vmatpush1.msra.mxu0 0.0
        %2004 = vmatprep.subr.mxu0 0.0
        %2005 = vmatpush1.msra.mxu0 0.0
        %2006 = vmatprep.subr.mxu0 0.0
        %2007 = vmatpush1.msra.mxu0 0.0
        %2008 = vmatprep.subr.mxu0 0.0
        %2009 = vmatpush1.msra.mxu0 0.0
        %2010 = vmatprep.subr.mxu0 0.0
        %2011 = vmatpush1.msra.mxu0 0.0
        %2012 = vmatprep.subr.mxu0 0.0
        %2013 = vmatpush1.msra.mxu0 0.0
        %2014 = vmatprep.subr.mxu0 0.0
        %2015 = vmatpush1.msra.mxu0 0.0
        %2016 = vmatprep.subr.mxu0 0.0
        %2017 = vmatpush1.msra.mxu0 0.0
        %2018 = vmatprep.subr.mxu0 0.0
        %2019 = vmatpush1.msra.mxu0 0.0
        %2020 = vmatprep.subr.mxu0 0.0
        %2021 = vmatpush1.msra.mxu0 0.0
        %2022 = vmatprep.subr.mxu0 0.0
        %2023 = vmatpush1.msra.mxu0 0.0
        %2024 = vmatprep.subr.mxu0 0.0
        %2025 = vmatpush1.msra.mxu0 0.0
        %2026 = vmatprep.subr.mxu0 0.0
        %2027 = vmatpush1.msra.mxu0 0.0
        %2028 = vmatprep.subr.mxu0 0.0
        %2029 = vmatpush1.msra.mxu0 0.0
        %2030 = vmatprep.subr.mxu0 0.0
        %2031 = vmatpush1.msra.mxu0 0.0
        %2032 = vmatprep.subr.mxu0 0.0
        %2033 = vmatpush1.msra.mxu0 0.0
        %2034 = vmatprep.subr.mxu0 0.0
        %2035 = vmatpush1.msra.mxu0 0.0
        %2036 = vmatprep.subr.mxu0 0.0
        %2037 = vmatpush1.msra.mxu0 0.0
        %2038 = vmatprep.subr.mxu0 0.0
        %2039 = vmatpush1.msra.mxu0 0.0
        %2040 = vmatprep.subr.mxu0 0.0
        %2041 = vmatpush1.msra.mxu0 0.0
        %2042 = vmatprep.subr.mxu0 0.0
        %2043 = vmatpush1.msra.mxu0 0.0
        %2044 = vmatprep.mubr.f32.mxu0 0.0
        %2045 = vmatmul.mubr.f32.gmra.mrb[0].mxu0 %v1978
        %v2046 = vpop.f32.mrb[0].mxu0
        %v2047 = vadd.f32 0.0, %v2046
        %v2048 = vpop.f32.mrb[0].mxu0
        %2049 = vdwg.mxu0
        %s2050 = scalar_lea.vmem %s6, 13
        %v2051 = vld [vmem:[%s2050] sm:$0x1]
        %v2053 = vlaneseq
        %v2054 = vshrl.u32 %v2053, 7
        %v2055 = vsub.s32 0, %v2054
        %v2056 = vrot.slane %v2051, %v2055
        %v2058 = vmul.f32 %v2047, %v2056
        %v2059 = vadd.f32 %v1968, %v2058
        %s2060 = scalar_lea.vmem %s5, 112
        %v2061 = vld [vmem:[%s2060] sm:$0xff]
        %2062 = vrot.lane.b32.xlu0 %v789, 112
        %v2063 = vpop.permute.xlu0 %2062
        %2064 = vrot.lane.b32.xlu0 %v790, 112
        %v2065 = vpop.permute.xlu0 %2064
        %v2069 = vsel %vm792, %v2061, 0
        %2071 = vmatprep.subr.mxu0 0.0
        %2072 = vmatpush1.msra.mxu0 %v2063
        %2073 = vmatprep.subr.mxu0 0.0
        %2074 = vmatpush1.msra.mxu0 %v2065
        %2075 = vmatprep.subr.mxu0 0.0
        %2076 = vmatpush1.msra.mxu0 0.0
        %2077 = vmatprep.subr.mxu0 0.0
        %2078 = vmatpush1.msra.mxu0 0.0
        %2079 = vmatprep.subr.mxu0 0.0
        %2080 = vmatpush1.msra.mxu0 0.0
        %2081 = vmatprep.subr.mxu0 0.0
        %2082 = vmatpush1.msra.mxu0 0.0
        %2083 = vmatprep.subr.mxu0 0.0
        %2084 = vmatpush1.msra.mxu0 0.0
        %2085 = vmatprep.subr.mxu0 0.0
        %2086 = vmatpush1.msra.mxu0 0.0
        %2087 = vmatprep.subr.mxu0 0.0
        %2088 = vmatpush1.msra.mxu0 0.0
        %2089 = vmatprep.subr.mxu0 0.0
        %2090 = vmatpush1.msra.mxu0 0.0
        %2091 = vmatprep.subr.mxu0 0.0
        %2092 = vmatpush1.msra.mxu0 0.0
        %2093 = vmatprep.subr.mxu0 0.0
        %2094 = vmatpush1.msra.mxu0 0.0
        %2095 = vmatprep.subr.mxu0 0.0
        %2096 = vmatpush1.msra.mxu0 0.0
        %2097 = vmatprep.subr.mxu0 0.0
        %2098 = vmatpush1.msra.mxu0 0.0
        %2099 = vmatprep.subr.mxu0 0.0
        %2100 = vmatpush1.msra.mxu0 0.0
        %2101 = vmatprep.subr.mxu0 0.0
        %2102 = vmatpush1.msra.mxu0 0.0
        %2103 = vmatprep.subr.mxu0 0.0
        %2104 = vmatpush1.msra.mxu0 0.0
        %2105 = vmatprep.subr.mxu0 0.0
        %2106 = vmatpush1.msra.mxu0 0.0
        %2107 = vmatprep.subr.mxu0 0.0
        %2108 = vmatpush1.msra.mxu0 0.0
        %2109 = vmatprep.subr.mxu0 0.0
        %2110 = vmatpush1.msra.mxu0 0.0
        %2111 = vmatprep.subr.mxu0 0.0
        %2112 = vmatpush1.msra.mxu0 0.0
        %2113 = vmatprep.subr.mxu0 0.0
        %2114 = vmatpush1.msra.mxu0 0.0
        %2115 = vmatprep.subr.mxu0 0.0
        %2116 = vmatpush1.msra.mxu0 0.0
        %2117 = vmatprep.subr.mxu0 0.0
        %2118 = vmatpush1.msra.mxu0 0.0
        %2119 = vmatprep.subr.mxu0 0.0
        %2120 = vmatpush1.msra.mxu0 0.0
        %2121 = vmatprep.subr.mxu0 0.0
        %2122 = vmatpush1.msra.mxu0 0.0
        %2123 = vmatprep.subr.mxu0 0.0
        %2124 = vmatpush1.msra.mxu0 0.0
        %2125 = vmatprep.subr.mxu0 0.0
        %2126 = vmatpush1.msra.mxu0 0.0
        %2127 = vmatprep.subr.mxu0 0.0
        %2128 = vmatpush1.msra.mxu0 0.0
        %2129 = vmatprep.subr.mxu0 0.0
        %2130 = vmatpush1.msra.mxu0 0.0
        %2131 = vmatprep.subr.mxu0 0.0
        %2132 = vmatpush1.msra.mxu0 0.0
        %2133 = vmatprep.subr.mxu0 0.0
        %2134 = vmatpush1.msra.mxu0 0.0
        %2135 = vmatprep.mubr.f32.mxu0 0.0
        %2136 = vmatmul.mubr.f32.gmra.mrb[0].mxu0 %v2069
        %v2137 = vpop.f32.mrb[0].mxu0
        %v2138 = vadd.f32 0.0, %v2137
        %v2139 = vpop.f32.mrb[0].mxu0
        %2140 = vdwg.mxu0
        %s2141 = scalar_lea.vmem %s6, 14
        %v2142 = vld [vmem:[%s2141] sm:$0x1]
        %v2144 = vlaneseq
        %v2145 = vshrl.u32 %v2144, 7
        %v2146 = vsub.s32 0, %v2145
        %v2147 = vrot.slane %v2142, %v2146
        %v2149 = vmul.f32 %v2138, %v2147
        %v2150 = vadd.f32 %v2059, %v2149
        %s2151 = scalar_lea.vmem %s5, 120
        %v2152 = vld [vmem:[%s2151] sm:$0xff]
        %2153 = vrot.lane.b32.xlu0 %v789, 111
        %v2154 = vpop.permute.xlu0 %2153
        %2155 = vrot.lane.b32.xlu0 %v790, 111
        %v2156 = vpop.permute.xlu0 %2155
        %v2160 = vsel %vm792, %v2152, 0
        %2162 = vmatprep.subr.mxu0 0.0
        %2163 = vmatpush1.msra.mxu0 %v2154
        %2164 = vmatprep.subr.mxu0 0.0
        %2165 = vmatpush1.msra.mxu0 %v2156
        %2166 = vmatprep.subr.mxu0 0.0
        %2167 = vmatpush1.msra.mxu0 0.0
        %2168 = vmatprep.subr.mxu0 0.0
        %2169 = vmatpush1.msra.mxu0 0.0
        %2170 = vmatprep.subr.mxu0 0.0
        %2171 = vmatpush1.msra.mxu0 0.0
        %2172 = vmatprep.subr.mxu0 0.0
        %2173 = vmatpush1.msra.mxu0 0.0
        %2174 = vmatprep.subr.mxu0 0.0
        %2175 = vmatpush1.msra.mxu0 0.0
        %2176 = vmatprep.subr.mxu0 0.0
        %2177 = vmatpush1.msra.mxu0 0.0
        %2178 = vmatprep.subr.mxu0 0.0
        %2179 = vmatpush1.msra.mxu0 0.0
        %2180 = vmatprep.subr.mxu0 0.0
        %2181 = vmatpush1.msra.mxu0 0.0
        %2182 = vmatprep.subr.mxu0 0.0
        %2183 = vmatpush1.msra.mxu0 0.0
        %2184 = vmatprep.subr.mxu0 0.0
        %2185 = vmatpush1.msra.mxu0 0.0
        %2186 = vmatprep.subr.mxu0 0.0
        %2187 = vmatpush1.msra.mxu0 0.0
        %2188 = vmatprep.subr.mxu0 0.0
        %2189 = vmatpush1.msra.mxu0 0.0
        %2190 = vmatprep.subr.mxu0 0.0
        %2191 = vmatpush1.msra.mxu0 0.0
        %2192 = vmatprep.subr.mxu0 0.0
        %2193 = vmatpush1.msra.mxu0 0.0
        %2194 = vmatprep.subr.mxu0 0.0
        %2195 = vmatpush1.msra.mxu0 0.0
        %2196 = vmatprep.subr.mxu0 0.0
        %2197 = vmatpush1.msra.mxu0 0.0
        %2198 = vmatprep.subr.mxu0 0.0
        %2199 = vmatpush1.msra.mxu0 0.0
        %2200 = vmatprep.subr.mxu0 0.0
        %2201 = vmatpush1.msra.mxu0 0.0
        %2202 = vmatprep.subr.mxu0 0.0
        %2203 = vmatpush1.msra.mxu0 0.0
        %2204 = vmatprep.subr.mxu0 0.0
        %2205 = vmatpush1.msra.mxu0 0.0
        %2206 = vmatprep.subr.mxu0 0.0
        %2207 = vmatpush1.msra.mxu0 0.0
        %2208 = vmatprep.subr.mxu0 0.0
        %2209 = vmatpush1.msra.mxu0 0.0
        %2210 = vmatprep.subr.mxu0 0.0
        %2211 = vmatpush1.msra.mxu0 0.0
        %2212 = vmatprep.subr.mxu0 0.0
        %2213 = vmatpush1.msra.mxu0 0.0
        %2214 = vmatprep.subr.mxu0 0.0
        %2215 = vmatpush1.msra.mxu0 0.0
        %2216 = vmatprep.subr.mxu0 0.0
        %2217 = vmatpush1.msra.mxu0 0.0
        %2218 = vmatprep.subr.mxu0 0.0
        %2219 = vmatpush1.msra.mxu0 0.0
        %2220 = vmatprep.subr.mxu0 0.0
        %2221 = vmatpush1.msra.mxu0 0.0
        %2222 = vmatprep.subr.mxu0 0.0
        %2223 = vmatpush1.msra.mxu0 0.0
        %2224 = vmatprep.subr.mxu0 0.0
        %2225 = vmatpush1.msra.mxu0 0.0
        %2226 = vmatprep.mubr.f32.mxu0 0.0
        %2227 = vmatmul.mubr.f32.gmra.mrb[0].mxu0 %v2160
        %v2228 = vpop.f32.mrb[0].mxu0
        %v2229 = vadd.f32 0.0, %v2228
        %v2230 = vpop.f32.mrb[0].mxu0
        %2231 = vdwg.mxu0
        %s2232 = scalar_lea.vmem %s6, 15
        %v2233 = vld [vmem:[%s2232] sm:$0x1]
        %v2235 = vlaneseq
        %v2236 = vshrl.u32 %v2235, 7
        %v2237 = vsub.s32 0, %v2236
        %v2238 = vrot.slane %v2233, %v2237
        %v2240 = vmul.f32 %v2229, %v2238
        %v2241 = vadd.f32 %v2150, %v2240
        %s2242 = scalar_lea.vmem %s5, 128
        %v2243 = vld [vmem:[%s2242] sm:$0xff]
        %2244 = vrot.lane.b32.xlu0 %v789, 110
        %v2245 = vpop.permute.xlu0 %2244
        %2246 = vrot.lane.b32.xlu0 %v790, 110
        %v2247 = vpop.permute.xlu0 %2246
        %v2251 = vsel %vm792, %v2243, 0
        %2253 = vmatprep.subr.mxu0 0.0
        %2254 = vmatpush1.msra.mxu0 %v2245
        %2255 = vmatprep.subr.mxu0 0.0
        %2256 = vmatpush1.msra.mxu0 %v2247
        %2257 = vmatprep.subr.mxu0 0.0
        %2258 = vmatpush1.msra.mxu0 0.0
        %2259 = vmatprep.subr.mxu0 0.0
        %2260 = vmatpush1.msra.mxu0 0.0
        %2261 = vmatprep.subr.mxu0 0.0
        %2262 = vmatpush1.msra.mxu0 0.0
        %2263 = vmatprep.subr.mxu0 0.0
        %2264 = vmatpush1.msra.mxu0 0.0
        %2265 = vmatprep.subr.mxu0 0.0
        %2266 = vmatpush1.msra.mxu0 0.0
        %2267 = vmatprep.subr.mxu0 0.0
        %2268 = vmatpush1.msra.mxu0 0.0
        %2269 = vmatprep.subr.mxu0 0.0
        %2270 = vmatpush1.msra.mxu0 0.0
        %2271 = vmatprep.subr.mxu0 0.0
        %2272 = vmatpush1.msra.mxu0 0.0
        %2273 = vmatprep.subr.mxu0 0.0
        %2274 = vmatpush1.msra.mxu0 0.0
        %2275 = vmatprep.subr.mxu0 0.0
        %2276 = vmatpush1.msra.mxu0 0.0
        %2277 = vmatprep.subr.mxu0 0.0
        %2278 = vmatpush1.msra.mxu0 0.0
        %2279 = vmatprep.subr.mxu0 0.0
        %2280 = vmatpush1.msra.mxu0 0.0
        %2281 = vmatprep.subr.mxu0 0.0
        %2282 = vmatpush1.msra.mxu0 0.0
        %2283 = vmatprep.subr.mxu0 0.0
        %2284 = vmatpush1.msra.mxu0 0.0
        %2285 = vmatprep.subr.mxu0 0.0
        %2286 = vmatpush1.msra.mxu0 0.0
        %2287 = vmatprep.subr.mxu0 0.0
        %2288 = vmatpush1.msra.mxu0 0.0
        %2289 = vmatprep.subr.mxu0 0.0
        %2290 = vmatpush1.msra.mxu0 0.0
        %2291 = vmatprep.subr.mxu0 0.0
        %2292 = vmatpush1.msra.mxu0 0.0
        %2293 = vmatprep.subr.mxu0 0.0
        %2294 = vmatpush1.msra.mxu0 0.0
        %2295 = vmatprep.subr.mxu0 0.0
        %2296 = vmatpush1.msra.mxu0 0.0
        %2297 = vmatprep.subr.mxu0 0.0
        %2298 = vmatpush1.msra.mxu0 0.0
        %2299 = vmatprep.subr.mxu0 0.0
        %2300 = vmatpush1.msra.mxu0 0.0
        %2301 = vmatprep.subr.mxu0 0.0
        %2302 = vmatpush1.msra.mxu0 0.0
        %2303 = vmatprep.subr.mxu0 0.0
        %2304 = vmatpush1.msra.mxu0 0.0
        %2305 = vmatprep.subr.mxu0 0.0
        %2306 = vmatpush1.msra.mxu0 0.0
        %2307 = vmatprep.subr.mxu0 0.0
        %2308 = vmatpush1.msra.mxu0 0.0
        %2309 = vmatprep.subr.mxu0 0.0
        %2310 = vmatpush1.msra.mxu0 0.0
        %2311 = vmatprep.subr.mxu0 0.0
        %2312 = vmatpush1.msra.mxu0 0.0
        %2313 = vmatprep.subr.mxu0 0.0
        %2314 = vmatpush1.msra.mxu0 0.0
        %2315 = vmatprep.subr.mxu0 0.0
        %2316 = vmatpush1.msra.mxu0 0.0
        %2317 = vmatprep.mubr.f32.mxu0 0.0
        %2318 = vmatmul.mubr.f32.gmra.mrb[0].mxu0 %v2251
        %v2319 = vpop.f32.mrb[0].mxu0
        %v2320 = vadd.f32 0.0, %v2319
        %v2321 = vpop.f32.mrb[0].mxu0
        %2322 = vdwg.mxu0
        %s2323 = scalar_lea.vmem %s6, 16
        %v2324 = vld [vmem:[%s2323] sm:$0x1]
        %v2326 = vlaneseq
        %v2327 = vshrl.u32 %v2326, 7
        %v2328 = vsub.s32 0, %v2327
        %v2329 = vrot.slane %v2324, %v2328
        %v2331 = vmul.f32 %v2320, %v2329
        %v2332 = vadd.f32 %v2241, %v2331
        %s2333 = scalar_lea.vmem %s5, 136
        %v2334 = vld [vmem:[%s2333] sm:$0xff]
        %2335 = vrot.lane.b32.xlu0 %v789, 109
        %v2336 = vpop.permute.xlu0 %2335
        %2337 = vrot.lane.b32.xlu0 %v790, 109
        %v2338 = vpop.permute.xlu0 %2337
        %v2342 = vsel %vm792, %v2334, 0
        %2344 = vmatprep.subr.mxu0 0.0
        %2345 = vmatpush1.msra.mxu0 %v2336
        %2346 = vmatprep.subr.mxu0 0.0
        %2347 = vmatpush1.msra.mxu0 %v2338
        %2348 = vmatprep.subr.mxu0 0.0
        %2349 = vmatpush1.msra.mxu0 0.0
        %2350 = vmatprep.subr.mxu0 0.0
        %2351 = vmatpush1.msra.mxu0 0.0
        %2352 = vmatprep.subr.mxu0 0.0
        %2353 = vmatpush1.msra.mxu0 0.0
        %2354 = vmatprep.subr.mxu0 0.0
        %2355 = vmatpush1.msra.mxu0 0.0
        %2356 = vmatprep.subr.mxu0 0.0
        %2357 = vmatpush1.msra.mxu0 0.0
        %2358 = vmatprep.subr.mxu0 0.0
        %2359 = vmatpush1.msra.mxu0 0.0
        %2360 = vmatprep.subr.mxu0 0.0
        %2361 = vmatpush1.msra.mxu0 0.0
        %2362 = vmatprep.subr.mxu0 0.0
        %2363 = vmatpush1.msra.mxu0 0.0
        %2364 = vmatprep.subr.mxu0 0.0
        %2365 = vmatpush1.msra.mxu0 0.0
        %2366 = vmatprep.subr.mxu0 0.0
        %2367 = vmatpush1.msra.mxu0 0.0
        %2368 = vmatprep.subr.mxu0 0.0
        %2369 = vmatpush1.msra.mxu0 0.0
        %2370 = vmatprep.subr.mxu0 0.0
        %2371 = vmatpush1.msra.mxu0 0.0
        %2372 = vmatprep.subr.mxu0 0.0
        %2373 = vmatpush1.msra.mxu0 0.0
        %2374 = vmatprep.subr.mxu0 0.0
        %2375 = vmatpush1.msra.mxu0 0.0
        %2376 = vmatprep.subr.mxu0 0.0
        %2377 = vmatpush1.msra.mxu0 0.0
        %2378 = vmatprep.subr.mxu0 0.0
        %2379 = vmatpush1.msra.mxu0 0.0
        %2380 = vmatprep.subr.mxu0 0.0
        %2381 = vmatpush1.msra.mxu0 0.0
        %2382 = vmatprep.subr.mxu0 0.0
        %2383 = vmatpush1.msra.mxu0 0.0
        %2384 = vmatprep.subr.mxu0 0.0
        %2385 = vmatpush1.msra.mxu0 0.0
        %2386 = vmatprep.subr.mxu0 0.0
        %2387 = vmatpush1.msra.mxu0 0.0
        %2388 = vmatprep.subr.mxu0 0.0
        %2389 = vmatpush1.msra.mxu0 0.0
        %2390 = vmatprep.subr.mxu0 0.0
        %2391 = vmatpush1.msra.mxu0 0.0
        %2392 = vmatprep.subr.mxu0 0.0
        %2393 = vmatpush1.msra.mxu0 0.0
        %2394 = vmatprep.subr.mxu0 0.0
        %2395 = vmatpush1.msra.mxu0 0.0
        %2396 = vmatprep.subr.mxu0 0.0
        %2397 = vmatpush1.msra.mxu0 0.0
        %2398 = vmatprep.subr.mxu0 0.0
        %2399 = vmatpush1.msra.mxu0 0.0
        %2400 = vmatprep.subr.mxu0 0.0
        %2401 = vmatpush1.msra.mxu0 0.0
        %2402 = vmatprep.subr.mxu0 0.0
        %2403 = vmatpush1.msra.mxu0 0.0
        %2404 = vmatprep.subr.mxu0 0.0
        %2405 = vmatpush1.msra.mxu0 0.0
        %2406 = vmatprep.subr.mxu0 0.0
        %2407 = vmatpush1.msra.mxu0 0.0
        %2408 = vmatprep.mubr.f32.mxu0 0.0
        %2409 = vmatmul.mubr.f32.gmra.mrb[0].mxu0 %v2342
        %v2410 = vpop.f32.mrb[0].mxu0
        %v2411 = vadd.f32 0.0, %v2410
        %v2412 = vpop.f32.mrb[0].mxu0
        %2413 = vdwg.mxu0
        %s2414 = scalar_lea.vmem %s6, 17
        %v2415 = vld [vmem:[%s2414] sm:$0x1]
        %v2417 = vlaneseq
        %v2418 = vshrl.u32 %v2417, 7
        %v2419 = vsub.s32 0, %v2418
        %v2420 = vrot.slane %v2415, %v2419
        %v2422 = vmul.f32 %v2411, %v2420
        %v2423 = vadd.f32 %v2332, %v2422
        %s2424 = scalar_lea.vmem %s5, 144
        %v2425 = vld [vmem:[%s2424] sm:$0xff]
        %2426 = vrot.lane.b32.xlu0 %v789, 108
        %v2427 = vpop.permute.xlu0 %2426
        %2428 = vrot.lane.b32.xlu0 %v790, 108
        %v2429 = vpop.permute.xlu0 %2428
        %v2433 = vsel %vm792, %v2425, 0
        %2435 = vmatprep.subr.mxu0 0.0
        %2436 = vmatpush1.msra.mxu0 %v2427
        %2437 = vmatprep.subr.mxu0 0.0
        %2438 = vmatpush1.msra.mxu0 %v2429
        %2439 = vmatprep.subr.mxu0 0.0
        %2440 = vmatpush1.msra.mxu0 0.0
        %2441 = vmatprep.subr.mxu0 0.0
        %2442 = vmatpush1.msra.mxu0 0.0
        %2443 = vmatprep.subr.mxu0 0.0
        %2444 = vmatpush1.msra.mxu0 0.0
        %2445 = vmatprep.subr.mxu0 0.0
        %2446 = vmatpush1.msra.mxu0 0.0
        %2447 = vmatprep.subr.mxu0 0.0
        %2448 = vmatpush1.msra.mxu0 0.0
        %2449 = vmatprep.subr.mxu0 0.0
        %2450 = vmatpush1.msra.mxu0 0.0
        %2451 = vmatprep.subr.mxu0 0.0
        %2452 = vmatpush1.msra.mxu0 0.0
        %2453 = vmatprep.subr.mxu0 0.0
        %2454 = vmatpush1.msra.mxu0 0.0
        %2455 = vmatprep.subr.mxu0 0.0
        %2456 = vmatpush1.msra.mxu0 0.0
        %2457 = vmatprep.subr.mxu0 0.0
        %2458 = vmatpush1.msra.mxu0 0.0
        %2459 = vmatprep.subr.mxu0 0.0
        %2460 = vmatpush1.msra.mxu0 0.0
        %2461 = vmatprep.subr.mxu0 0.0
        %2462 = vmatpush1.msra.mxu0 0.0
        %2463 = vmatprep.subr.mxu0 0.0
        %2464 = vmatpush1.msra.mxu0 0.0
        %2465 = vmatprep.subr.mxu0 0.0
        %2466 = vmatpush1.msra.mxu0 0.0
        %2467 = vmatprep.subr.mxu0 0.0
        %2468 = vmatpush1.msra.mxu0 0.0
        %2469 = vmatprep.subr.mxu0 0.0
        %2470 = vmatpush1.msra.mxu0 0.0
        %2471 = vmatprep.subr.mxu0 0.0
        %2472 = vmatpush1.msra.mxu0 0.0
        %2473 = vmatprep.subr.mxu0 0.0
        %2474 = vmatpush1.msra.mxu0 0.0
        %2475 = vmatprep.subr.mxu0 0.0
        %2476 = vmatpush1.msra.mxu0 0.0
        %2477 = vmatprep.subr.mxu0 0.0
        %2478 = vmatpush1.msra.mxu0 0.0
        %2479 = vmatprep.subr.mxu0 0.0
        %2480 = vmatpush1.msra.mxu0 0.0
        %2481 = vmatprep.subr.mxu0 0.0
        %2482 = vmatpush1.msra.mxu0 0.0
        %2483 = vmatprep.subr.mxu0 0.0
        %2484 = vmatpush1.msra.mxu0 0.0
        %2485 = vmatprep.subr.mxu0 0.0
        %2486 = vmatpush1.msra.mxu0 0.0
        %2487 = vmatprep.subr.mxu0 0.0
        %2488 = vmatpush1.msra.mxu0 0.0
        %2489 = vmatprep.subr.mxu0 0.0
        %2490 = vmatpush1.msra.mxu0 0.0
        %2491 = vmatprep.subr.mxu0 0.0
        %2492 = vmatpush1.msra.mxu0 0.0
        %2493 = vmatprep.subr.mxu0 0.0
        %2494 = vmatpush1.msra.mxu0 0.0
        %2495 = vmatprep.subr.mxu0 0.0
        %2496 = vmatpush1.msra.mxu0 0.0
        %2497 = vmatprep.subr.mxu0 0.0
        %2498 = vmatpush1.msra.mxu0 0.0
        %2499 = vmatprep.mubr.f32.mxu0 0.0
        %2500 = vmatmul.mubr.f32.gmra.mrb[0].mxu0 %v2433
        %v2501 = vpop.f32.mrb[0].mxu0
        %v2502 = vadd.f32 0.0, %v2501
        %v2503 = vpop.f32.mrb[0].mxu0
        %2504 = vdwg.mxu0
        %s2505 = scalar_lea.vmem %s6, 18
        %v2506 = vld [vmem:[%s2505] sm:$0x1]
        %v2508 = vlaneseq
        %v2509 = vshrl.u32 %v2508, 7
        %v2510 = vsub.s32 0, %v2509
        %v2511 = vrot.slane %v2506, %v2510
        %v2513 = vmul.f32 %v2502, %v2511
        %v2514 = vadd.f32 %v2423, %v2513
        %s2515 = scalar_lea.vmem %s5, 152
        %v2516 = vld [vmem:[%s2515] sm:$0xff]
        %2517 = vrot.lane.b32.xlu0 %v789, 107
        %v2518 = vpop.permute.xlu0 %2517
        %2519 = vrot.lane.b32.xlu0 %v790, 107
        %v2520 = vpop.permute.xlu0 %2519
        %v2524 = vsel %vm792, %v2516, 0
        %2526 = vmatprep.subr.mxu0 0.0
        %2527 = vmatpush1.msra.mxu0 %v2518
        %2528 = vmatprep.subr.mxu0 0.0
        %2529 = vmatpush1.msra.mxu0 %v2520
        %2530 = vmatprep.subr.mxu0 0.0
        %2531 = vmatpush1.msra.mxu0 0.0
        %2532 = vmatprep.subr.mxu0 0.0
        %2533 = vmatpush1.msra.mxu0 0.0
        %2534 = vmatprep.subr.mxu0 0.0
        %2535 = vmatpush1.msra.mxu0 0.0
        %2536 = vmatprep.subr.mxu0 0.0
        %2537 = vmatpush1.msra.mxu0 0.0
        %2538 = vmatprep.subr.mxu0 0.0
        %2539 = vmatpush1.msra.mxu0 0.0
        %2540 = vmatprep.subr.mxu0 0.0
        %2541 = vmatpush1.msra.mxu0 0.0
        %2542 = vmatprep.subr.mxu0 0.0
        %2543 = vmatpush1.msra.mxu0 0.0
        %2544 = vmatprep.subr.mxu0 0.0
        %2545 = vmatpush1.msra.mxu0 0.0
        %2546 = vmatprep.subr.mxu0 0.0
        %2547 = vmatpush1.msra.mxu0 0.0
        %2548 = vmatprep.subr.mxu0 0.0
        %2549 = vmatpush1.msra.mxu0 0.0
        %2550 = vmatprep.subr.mxu0 0.0
        %2551 = vmatpush1.msra.mxu0 0.0
        %2552 = vmatprep.subr.mxu0 0.0
        %2553 = vmatpush1.msra.mxu0 0.0
        %2554 = vmatprep.subr.mxu0 0.0
        %2555 = vmatpush1.msra.mxu0 0.0
        %2556 = vmatprep.subr.mxu0 0.0
        %2557 = vmatpush1.msra.mxu0 0.0
        %2558 = vmatprep.subr.mxu0 0.0
        %2559 = vmatpush1.msra.mxu0 0.0
        %2560 = vmatprep.subr.mxu0 0.0
        %2561 = vmatpush1.msra.mxu0 0.0
        %2562 = vmatprep.subr.mxu0 0.0
        %2563 = vmatpush1.msra.mxu0 0.0
        %2564 = vmatprep.subr.mxu0 0.0
        %2565 = vmatpush1.msra.mxu0 0.0
        %2566 = vmatprep.subr.mxu0 0.0
        %2567 = vmatpush1.msra.mxu0 0.0
        %2568 = vmatprep.subr.mxu0 0.0
        %2569 = vmatpush1.msra.mxu0 0.0
        %2570 = vmatprep.subr.mxu0 0.0
        %2571 = vmatpush1.msra.mxu0 0.0
        %2572 = vmatprep.subr.mxu0 0.0
        %2573 = vmatpush1.msra.mxu0 0.0
        %2574 = vmatprep.subr.mxu0 0.0
        %2575 = vmatpush1.msra.mxu0 0.0
        %2576 = vmatprep.subr.mxu0 0.0
        %2577 = vmatpush1.msra.mxu0 0.0
        %2578 = vmatprep.subr.mxu0 0.0
        %2579 = vmatpush1.msra.mxu0 0.0
        %2580 = vmatprep.subr.mxu0 0.0
        %2581 = vmatpush1.msra.mxu0 0.0
        %2582 = vmatprep.subr.mxu0 0.0
        %2583 = vmatpush1.msra.mxu0 0.0
        %2584 = vmatprep.subr.mxu0 0.0
        %2585 = vmatpush1.msra.mxu0 0.0
        %2586 = vmatprep.subr.mxu0 0.0
        %2587 = vmatpush1.msra.mxu0 0.0
        %2588 = vmatprep.subr.mxu0 0.0
        %2589 = vmatpush1.msra.mxu0 0.0
        %2590 = vmatprep.mubr.f32.mxu0 0.0
        %2591 = vmatmul.mubr.f32.gmra.mrb[0].mxu0 %v2524
        %v2592 = vpop.f32.mrb[0].mxu0
        %v2593 = vadd.f32 0.0, %v2592
        %v2594 = vpop.f32.mrb[0].mxu0
        %2595 = vdwg.mxu0
        %s2596 = scalar_lea.vmem %s6, 19
        %v2597 = vld [vmem:[%s2596] sm:$0x1]
        %v2599 = vlaneseq
        %v2600 = vshrl.u32 %v2599, 7
        %v2601 = vsub.s32 0, %v2600
        %v2602 = vrot.slane %v2597, %v2601
        %v2604 = vmul.f32 %v2593, %v2602
        %v2605 = vadd.f32 %v2514, %v2604
        %s2606 = scalar_lea.vmem %s5, 160
        %v2607 = vld [vmem:[%s2606] sm:$0xff]
        %2608 = vrot.lane.b32.xlu0 %v789, 106
        %v2609 = vpop.permute.xlu0 %2608
        %2610 = vrot.lane.b32.xlu0 %v790, 106
        %v2611 = vpop.permute.xlu0 %2610
        %v2615 = vsel %vm792, %v2607, 0
        %2617 = vmatprep.subr.mxu0 0.0
        %2618 = vmatpush1.msra.mxu0 %v2609
        %2619 = vmatprep.subr.mxu0 0.0
        %2620 = vmatpush1.msra.mxu0 %v2611
        %2621 = vmatprep.subr.mxu0 0.0
        %2622 = vmatpush1.msra.mxu0 0.0
        %2623 = vmatprep.subr.mxu0 0.0
        %2624 = vmatpush1.msra.mxu0 0.0
        %2625 = vmatprep.subr.mxu0 0.0
        %2626 = vmatpush1.msra.mxu0 0.0
        %2627 = vmatprep.subr.mxu0 0.0
        %2628 = vmatpush1.msra.mxu0 0.0
        %2629 = vmatprep.subr.mxu0 0.0
        %2630 = vmatpush1.msra.mxu0 0.0
        %2631 = vmatprep.subr.mxu0 0.0
        %2632 = vmatpush1.msra.mxu0 0.0
        %2633 = vmatprep.subr.mxu0 0.0
        %2634 = vmatpush1.msra.mxu0 0.0
        %2635 = vmatprep.subr.mxu0 0.0
        %2636 = vmatpush1.msra.mxu0 0.0
        %2637 = vmatprep.subr.mxu0 0.0
        %2638 = vmatpush1.msra.mxu0 0.0
        %2639 = vmatprep.subr.mxu0 0.0
        %2640 = vmatpush1.msra.mxu0 0.0
        %2641 = vmatprep.subr.mxu0 0.0
        %2642 = vmatpush1.msra.mxu0 0.0
        %2643 = vmatprep.subr.mxu0 0.0
        %2644 = vmatpush1.msra.mxu0 0.0
        %2645 = vmatprep.subr.mxu0 0.0
        %2646 = vmatpush1.msra.mxu0 0.0
        %2647 = vmatprep.subr.mxu0 0.0
        %2648 = vmatpush1.msra.mxu0 0.0
        %2649 = vmatprep.subr.mxu0 0.0
        %2650 = vmatpush1.msra.mxu0 0.0
        %2651 = vmatprep.subr.mxu0 0.0
        %2652 = vmatpush1.msra.mxu0 0.0
        %2653 = vmatprep.subr.mxu0 0.0
        %2654 = vmatpush1.msra.mxu0 0.0
        %2655 = vmatprep.subr.mxu0 0.0
        %2656 = vmatpush1.msra.mxu0 0.0
        %2657 = vmatprep.subr.mxu0 0.0
        %2658 = vmatpush1.msra.mxu0 0.0
        %2659 = vmatprep.subr.mxu0 0.0
        %2660 = vmatpush1.msra.mxu0 0.0
        %2661 = vmatprep.subr.mxu0 0.0
        %2662 = vmatpush1.msra.mxu0 0.0
        %2663 = vmatprep.subr.mxu0 0.0
        %2664 = vmatpush1.msra.mxu0 0.0
        %2665 = vmatprep.subr.mxu0 0.0
        %2666 = vmatpush1.msra.mxu0 0.0
        %2667 = vmatprep.subr.mxu0 0.0
        %2668 = vmatpush1.msra.mxu0 0.0
        %2669 = vmatprep.subr.mxu0 0.0
        %2670 = vmatpush1.msra.mxu0 0.0
        %2671 = vmatprep.subr.mxu0 0.0
        %2672 = vmatpush1.msra.mxu0 0.0
        %2673 = vmatprep.subr.mxu0 0.0
        %2674 = vmatpush1.msra.mxu0 0.0
        %2675 = vmatprep.subr.mxu0 0.0
        %2676 = vmatpush1.msra.mxu0 0.0
        %2677 = vmatprep.subr.mxu0 0.0
        %2678 = vmatpush1.msra.mxu0 0.0
        %2679 = vmatprep.subr.mxu0 0.0
        %2680 = vmatpush1.msra.mxu0 0.0
        %2681 = vmatprep.mubr.f32.mxu0 0.0
        %2682 = vmatmul.mubr.f32.gmra.mrb[0].mxu0 %v2615
        %v2683 = vpop.f32.mrb[0].mxu0
        %v2684 = vadd.f32 0.0, %v2683
        %v2685 = vpop.f32.mrb[0].mxu0
        %2686 = vdwg.mxu0
        %s2687 = scalar_lea.vmem %s6, 20
        %v2688 = vld [vmem:[%s2687] sm:$0x1]
        %v2690 = vlaneseq
        %v2691 = vshrl.u32 %v2690, 7
        %v2692 = vsub.s32 0, %v2691
        %v2693 = vrot.slane %v2688, %v2692
        %v2695 = vmul.f32 %v2684, %v2693
        %v2696 = vadd.f32 %v2605, %v2695
        %s2697 = scalar_lea.vmem %s5, 168
        %v2698 = vld [vmem:[%s2697] sm:$0xff]
        %2699 = vrot.lane.b32.xlu0 %v789, 104
        %v2700 = vpop.permute.xlu0 %2699
        %2701 = vrot.lane.b32.xlu0 %v790, 104
        %v2702 = vpop.permute.xlu0 %2701
        %v2706 = vsel %vm792, %v2698, 0
        %2708 = vmatprep.subr.mxu0 0.0
        %2709 = vmatpush1.msra.mxu0 %v2700
        %2710 = vmatprep.subr.mxu0 0.0
        %2711 = vmatpush1.msra.mxu0 %v2702
        %2712 = vmatprep.subr.mxu0 0.0
        %2713 = vmatpush1.msra.mxu0 0.0
        %2714 = vmatprep.subr.mxu0 0.0
        %2715 = vmatpush1.msra.mxu0 0.0
        %2716 = vmatprep.subr.mxu0 0.0
        %2717 = vmatpush1.msra.mxu0 0.0
        %2718 = vmatprep.subr.mxu0 0.0
        %2719 = vmatpush1.msra.mxu0 0.0
        %2720 = vmatprep.subr.mxu0 0.0
        %2721 = vmatpush1.msra.mxu0 0.0
        %2722 = vmatprep.subr.mxu0 0.0
        %2723 = vmatpush1.msra.mxu0 0.0
        %2724 = vmatprep.subr.mxu0 0.0
        %2725 = vmatpush1.msra.mxu0 0.0
        %2726 = vmatprep.subr.mxu0 0.0
        %2727 = vmatpush1.msra.mxu0 0.0
        %2728 = vmatprep.subr.mxu0 0.0
        %2729 = vmatpush1.msra.mxu0 0.0
        %2730 = vmatprep.subr.mxu0 0.0
        %2731 = vmatpush1.msra.mxu0 0.0
        %2732 = vmatprep.subr.mxu0 0.0
        %2733 = vmatpush1.msra.mxu0 0.0
        %2734 = vmatprep.subr.mxu0 0.0
        %2735 = vmatpush1.msra.mxu0 0.0
        %2736 = vmatprep.subr.mxu0 0.0
        %2737 = vmatpush1.msra.mxu0 0.0
        %2738 = vmatprep.subr.mxu0 0.0
        %2739 = vmatpush1.msra.mxu0 0.0
        %2740 = vmatprep.subr.mxu0 0.0
        %2741 = vmatpush1.msra.mxu0 0.0
        %2742 = vmatprep.subr.mxu0 0.0
        %2743 = vmatpush1.msra.mxu0 0.0
        %2744 = vmatprep.subr.mxu0 0.0
        %2745 = vmatpush1.msra.mxu0 0.0
        %2746 = vmatprep.subr.mxu0 0.0
        %2747 = vmatpush1.msra.mxu0 0.0
        %2748 = vmatprep.subr.mxu0 0.0
        %2749 = vmatpush1.msra.mxu0 0.0
        %2750 = vmatprep.subr.mxu0 0.0
        %2751 = vmatpush1.msra.mxu0 0.0
        %2752 = vmatprep.subr.mxu0 0.0
        %2753 = vmatpush1.msra.mxu0 0.0
        %2754 = vmatprep.subr.mxu0 0.0
        %2755 = vmatpush1.msra.mxu0 0.0
        %2756 = vmatprep.subr.mxu0 0.0
        %2757 = vmatpush1.msra.mxu0 0.0
        %2758 = vmatprep.subr.mxu0 0.0
        %2759 = vmatpush1.msra.mxu0 0.0
        %2760 = vmatprep.subr.mxu0 0.0
        %2761 = vmatpush1.msra.mxu0 0.0
        %2762 = vmatprep.subr.mxu0 0.0
        %2763 = vmatpush1.msra.mxu0 0.0
        %2764 = vmatprep.subr.mxu0 0.0
        %2765 = vmatpush1.msra.mxu0 0.0
        %2766 = vmatprep.subr.mxu0 0.0
        %2767 = vmatpush1.msra.mxu0 0.0
        %2768 = vmatprep.subr.mxu0 0.0
        %2769 = vmatpush1.msra.mxu0 0.0
        %2770 = vmatprep.subr.mxu0 0.0
        %2771 = vmatpush1.msra.mxu0 0.0
        %2772 = vmatprep.mubr.f32.mxu0 0.0
        %2773 = vmatmul.mubr.f32.gmra.mrb[0].mxu0 %v2706
        %v2774 = vpop.f32.mrb[0].mxu0
        %v2775 = vadd.f32 0.0, %v2774
        %v2776 = vpop.f32.mrb[0].mxu0
        %2777 = vdwg.mxu0
        %s2778 = scalar_lea.vmem %s6, 21
        %v2779 = vld [vmem:[%s2778] sm:$0x1]
        %v2781 = vlaneseq
        %v2782 = vshrl.u32 %v2781, 7
        %v2783 = vsub.s32 0, %v2782
        %v2784 = vrot.slane %v2779, %v2783
        %v2786 = vmul.f32 %v2775, %v2784
        %v2787 = vadd.f32 %v2696, %v2786
        %s2788 = scalar_lea.vmem %s5, 176
        %v2789 = vld [vmem:[%s2788] sm:$0xff]
        %2790 = vrot.lane.b32.xlu0 %v789, 103
        %v2791 = vpop.permute.xlu0 %2790
        %2792 = vrot.lane.b32.xlu0 %v790, 103
        %v2793 = vpop.permute.xlu0 %2792
        %v2797 = vsel %vm792, %v2789, 0
        %2799 = vmatprep.subr.mxu0 0.0
        %2800 = vmatpush1.msra.mxu0 %v2791
        %2801 = vmatprep.subr.mxu0 0.0
        %2802 = vmatpush1.msra.mxu0 %v2793
        %2803 = vmatprep.subr.mxu0 0.0
        %2804 = vmatpush1.msra.mxu0 0.0
        %2805 = vmatprep.subr.mxu0 0.0
        %2806 = vmatpush1.msra.mxu0 0.0
        %2807 = vmatprep.subr.mxu0 0.0
        %2808 = vmatpush1.msra.mxu0 0.0
        %2809 = vmatprep.subr.mxu0 0.0
        %2810 = vmatpush1.msra.mxu0 0.0
        %2811 = vmatprep.subr.mxu0 0.0
        %2812 = vmatpush1.msra.mxu0 0.0
        %2813 = vmatprep.subr.mxu0 0.0
        %2814 = vmatpush1.msra.mxu0 0.0
        %2815 = vmatprep.subr.mxu0 0.0
        %2816 = vmatpush1.msra.mxu0 0.0
        %2817 = vmatprep.subr.mxu0 0.0
        %2818 = vmatpush1.msra.mxu0 0.0
        %2819 = vmatprep.subr.mxu0 0.0
        %2820 = vmatpush1.msra.mxu0 0.0
        %2821 = vmatprep.subr.mxu0 0.0
        %2822 = vmatpush1.msra.mxu0 0.0
        %2823 = vmatprep.subr.mxu0 0.0
        %2824 = vmatpush1.msra.mxu0 0.0
        %2825 = vmatprep.subr.mxu0 0.0
        %2826 = vmatpush1.msra.mxu0 0.0
        %2827 = vmatprep.subr.mxu0 0.0
        %2828 = vmatpush1.msra.mxu0 0.0
        %2829 = vmatprep.subr.mxu0 0.0
        %2830 = vmatpush1.msra.mxu0 0.0
        %2831 = vmatprep.subr.mxu0 0.0
        %2832 = vmatpush1.msra.mxu0 0.0
        %2833 = vmatprep.subr.mxu0 0.0
        %2834 = vmatpush1.msra.mxu0 0.0
        %2835 = vmatprep.subr.mxu0 0.0
        %2836 = vmatpush1.msra.mxu0 0.0
        %2837 = vmatprep.subr.mxu0 0.0
        %2838 = vmatpush1.msra.mxu0 0.0
        %2839 = vmatprep.subr.mxu0 0.0
        %2840 = vmatpush1.msra.mxu0 0.0
        %2841 = vmatprep.subr.mxu0 0.0
        %2842 = vmatpush1.msra.mxu0 0.0
        %2843 = vmatprep.subr.mxu0 0.0
        %2844 = vmatpush1.msra.mxu0 0.0
        %2845 = vmatprep.subr.mxu0 0.0
        %2846 = vmatpush1.msra.mxu0 0.0
        %2847 = vmatprep.subr.mxu0 0.0
        %2848 = vmatpush1.msra.mxu0 0.0
        %2849 = vmatprep.subr.mxu0 0.0
        %2850 = vmatpush1.msra.mxu0 0.0
        %2851 = vmatprep.subr.mxu0 0.0
        %2852 = vmatpush1.msra.mxu0 0.0
        %2853 = vmatprep.subr.mxu0 0.0
        %2854 = vmatpush1.msra.mxu0 0.0
        %2855 = vmatprep.subr.mxu0 0.0
        %2856 = vmatpush1.msra.mxu0 0.0
        %2857 = vmatprep.subr.mxu0 0.0
        %2858 = vmatpush1.msra.mxu0 0.0
        %2859 = vmatprep.subr.mxu0 0.0
        %2860 = vmatpush1.msra.mxu0 0.0
        %2861 = vmatprep.subr.mxu0 0.0
        %2862 = vmatpush1.msra.mxu0 0.0
        %2863 = vmatprep.mubr.f32.mxu0 0.0
        %2864 = vmatmul.mubr.f32.gmra.mrb[0].mxu0 %v2797
        %v2865 = vpop.f32.mrb[0].mxu0
        %v2866 = vadd.f32 0.0, %v2865
        %v2867 = vpop.f32.mrb[0].mxu0
        %2868 = vdwg.mxu0
        %s2869 = scalar_lea.vmem %s6, 22
        %v2870 = vld [vmem:[%s2869] sm:$0x1]
        %v2872 = vlaneseq
        %v2873 = vshrl.u32 %v2872, 7
        %v2874 = vsub.s32 0, %v2873
        %v2875 = vrot.slane %v2870, %v2874
        %v2877 = vmul.f32 %v2866, %v2875
        %v2878 = vadd.f32 %v2787, %v2877
        %s2879 = scalar_lea.vmem %s5, 184
        %v2880 = vld [vmem:[%s2879] sm:$0xff]
        %2881 = vrot.lane.b32.xlu0 %v789, 102
        %v2882 = vpop.permute.xlu0 %2881
        %2883 = vrot.lane.b32.xlu0 %v790, 102
        %v2884 = vpop.permute.xlu0 %2883
        %v2888 = vsel %vm792, %v2880, 0
        %2890 = vmatprep.subr.mxu0 0.0
        %2891 = vmatpush1.msra.mxu0 %v2882
        %2892 = vmatprep.subr.mxu0 0.0
        %2893 = vmatpush1.msra.mxu0 %v2884
        %2894 = vmatprep.subr.mxu0 0.0
        %2895 = vmatpush1.msra.mxu0 0.0
        %2896 = vmatprep.subr.mxu0 0.0
        %2897 = vmatpush1.msra.mxu0 0.0
        %2898 = vmatprep.subr.mxu0 0.0
        %2899 = vmatpush1.msra.mxu0 0.0
        %2900 = vmatprep.subr.mxu0 0.0
        %2901 = vmatpush1.msra.mxu0 0.0
        %2902 = vmatprep.subr.mxu0 0.0
        %2903 = vmatpush1.msra.mxu0 0.0
        %2904 = vmatprep.subr.mxu0 0.0
        %2905 = vmatpush1.msra.mxu0 0.0
        %2906 = vmatprep.subr.mxu0 0.0
        %2907 = vmatpush1.msra.mxu0 0.0
        %2908 = vmatprep.subr.mxu0 0.0
        %2909 = vmatpush1.msra.mxu0 0.0
        %2910 = vmatprep.subr.mxu0 0.0
        %2911 = vmatpush1.msra.mxu0 0.0
        %2912 = vmatprep.subr.mxu0 0.0
        %2913 = vmatpush1.msra.mxu0 0.0
        %2914 = vmatprep.subr.mxu0 0.0
        %2915 = vmatpush1.msra.mxu0 0.0
        %2916 = vmatprep.subr.mxu0 0.0
        %2917 = vmatpush1.msra.mxu0 0.0
        %2918 = vmatprep.subr.mxu0 0.0
        %2919 = vmatpush1.msra.mxu0 0.0
        %2920 = vmatprep.subr.mxu0 0.0
        %2921 = vmatpush1.msra.mxu0 0.0
        %2922 = vmatprep.subr.mxu0 0.0
        %2923 = vmatpush1.msra.mxu0 0.0
        %2924 = vmatprep.subr.mxu0 0.0
        %2925 = vmatpush1.msra.mxu0 0.0
        %2926 = vmatprep.subr.mxu0 0.0
        %2927 = vmatpush1.msra.mxu0 0.0
        %2928 = vmatprep.subr.mxu0 0.0
        %2929 = vmatpush1.msra.mxu0 0.0
        %2930 = vmatprep.subr.mxu0 0.0
        %2931 = vmatpush1.msra.mxu0 0.0
        %2932 = vmatprep.subr.mxu0 0.0
        %2933 = vmatpush1.msra.mxu0 0.0
        %2934 = vmatprep.subr.mxu0 0.0
        %2935 = vmatpush1.msra.mxu0 0.0
        %2936 = vmatprep.subr.mxu0 0.0
        %2937 = vmatpush1.msra.mxu0 0.0
        %2938 = vmatprep.subr.mxu0 0.0
        %2939 = vmatpush1.msra.mxu0 0.0
        %2940 = vmatprep.subr.mxu0 0.0
        %2941 = vmatpush1.msra.mxu0 0.0
        %2942 = vmatprep.subr.mxu0 0.0
        %2943 = vmatpush1.msra.mxu0 0.0
        %2944 = vmatprep.subr.mxu0 0.0
        %2945 = vmatpush1.msra.mxu0 0.0
        %2946 = vmatprep.subr.mxu0 0.0
        %2947 = vmatpush1.msra.mxu0 0.0
        %2948 = vmatprep.subr.mxu0 0.0
        %2949 = vmatpush1.msra.mxu0 0.0
        %2950 = vmatprep.subr.mxu0 0.0
        %2951 = vmatpush1.msra.mxu0 0.0
        %2952 = vmatprep.subr.mxu0 0.0
        %2953 = vmatpush1.msra.mxu0 0.0
        %2954 = vmatprep.mubr.f32.mxu0 0.0
        %2955 = vmatmul.mubr.f32.gmra.mrb[0].mxu0 %v2888
        %v2956 = vpop.f32.mrb[0].mxu0
        %v2957 = vadd.f32 0.0, %v2956
        %v2958 = vpop.f32.mrb[0].mxu0
        %2959 = vdwg.mxu0
        %s2960 = scalar_lea.vmem %s6, 23
        %v2961 = vld [vmem:[%s2960] sm:$0x1]
        %v2963 = vlaneseq
        %v2964 = vshrl.u32 %v2963, 7
        %v2965 = vsub.s32 0, %v2964
        %v2966 = vrot.slane %v2961, %v2965
        %v2968 = vmul.f32 %v2957, %v2966
        %v2969 = vadd.f32 %v2878, %v2968
        %s2970 = scalar_lea.vmem %s5, 192
        %v2971 = vld [vmem:[%s2970] sm:$0xff]
        %2972 = vrot.lane.b32.xlu0 %v789, 101
        %v2973 = vpop.permute.xlu0 %2972
        %2974 = vrot.lane.b32.xlu0 %v790, 101
        %v2975 = vpop.permute.xlu0 %2974
        %v2979 = vsel %vm792, %v2971, 0
        %2981 = vmatprep.subr.mxu0 0.0
        %2982 = vmatpush1.msra.mxu0 %v2973
        %2983 = vmatprep.subr.mxu0 0.0
        %2984 = vmatpush1.msra.mxu0 %v2975
        %2985 = vmatprep.subr.mxu0 0.0
        %2986 = vmatpush1.msra.mxu0 0.0
        %2987 = vmatprep.subr.mxu0 0.0
        %2988 = vmatpush1.msra.mxu0 0.0
        %2989 = vmatprep.subr.mxu0 0.0
        %2990 = vmatpush1.msra.mxu0 0.0
        %2991 = vmatprep.subr.mxu0 0.0
        %2992 = vmatpush1.msra.mxu0 0.0
        %2993 = vmatprep.subr.mxu0 0.0
        %2994 = vmatpush1.msra.mxu0 0.0
        %2995 = vmatprep.subr.mxu0 0.0
        %2996 = vmatpush1.msra.mxu0 0.0
        %2997 = vmatprep.subr.mxu0 0.0
        %2998 = vmatpush1.msra.mxu0 0.0
        %2999 = vmatprep.subr.mxu0 0.0
        %3000 = vmatpush1.msra.mxu0 0.0
        %3001 = vmatprep.subr.mxu0 0.0
        %3002 = vmatpush1.msra.mxu0 0.0
        %3003 = vmatprep.subr.mxu0 0.0
        %3004 = vmatpush1.msra.mxu0 0.0
        %3005 = vmatprep.subr.mxu0 0.0
        %3006 = vmatpush1.msra.mxu0 0.0
        %3007 = vmatprep.subr.mxu0 0.0
        %3008 = vmatpush1.msra.mxu0 0.0
        %3009 = vmatprep.subr.mxu0 0.0
        %3010 = vmatpush1.msra.mxu0 0.0
        %3011 = vmatprep.subr.mxu0 0.0
        %3012 = vmatpush1.msra.mxu0 0.0
        %3013 = vmatprep.subr.mxu0 0.0
        %3014 = vmatpush1.msra.mxu0 0.0
        %3015 = vmatprep.subr.mxu0 0.0
        %3016 = vmatpush1.msra.mxu0 0.0
        %3017 = vmatprep.subr.mxu0 0.0
        %3018 = vmatpush1.msra.mxu0 0.0
        %3019 = vmatprep.subr.mxu0 0.0
        %3020 = vmatpush1.msra.mxu0 0.0
        %3021 = vmatprep.subr.mxu0 0.0
        %3022 = vmatpush1.msra.mxu0 0.0
        %3023 = vmatprep.subr.mxu0 0.0
        %3024 = vmatpush1.msra.mxu0 0.0
        %3025 = vmatprep.subr.mxu0 0.0
        %3026 = vmatpush1.msra.mxu0 0.0
        %3027 = vmatprep.subr.mxu0 0.0
        %3028 = vmatpush1.msra.mxu0 0.0
        %3029 = vmatprep.subr.mxu0 0.0
        %3030 = vmatpush1.msra.mxu0 0.0
        %3031 = vmatprep.subr.mxu0 0.0
        %3032 = vmatpush1.msra.mxu0 0.0
        %3033 = vmatprep.subr.mxu0 0.0
        %3034 = vmatpush1.msra.mxu0 0.0
        %3035 = vmatprep.subr.mxu0 0.0
        %3036 = vmatpush1.msra.mxu0 0.0
        %3037 = vmatprep.subr.mxu0 0.0
        %3038 = vmatpush1.msra.mxu0 0.0
        %3039 = vmatprep.subr.mxu0 0.0
        %3040 = vmatpush1.msra.mxu0 0.0
        %3041 = vmatprep.subr.mxu0 0.0
        %3042 = vmatpush1.msra.mxu0 0.0
        %3043 = vmatprep.subr.mxu0 0.0
        %3044 = vmatpush1.msra.mxu0 0.0
        %3045 = vmatprep.mubr.f32.mxu0 0.0
        %3046 = vmatmul.mubr.f32.gmra.mrb[0].mxu0 %v2979
        %v3047 = vpop.f32.mrb[0].mxu0
        %v3048 = vadd.f32 0.0, %v3047
        %v3049 = vpop.f32.mrb[0].mxu0
        %3050 = vdwg.mxu0
        %s3051 = scalar_lea.vmem %s6, 24
        %v3052 = vld [vmem:[%s3051] sm:$0x1]
        %v3054 = vlaneseq
        %v3055 = vshrl.u32 %v3054, 7
        %v3056 = vsub.s32 0, %v3055
        %v3057 = vrot.slane %v3052, %v3056
        %v3059 = vmul.f32 %v3048, %v3057
        %v3060 = vadd.f32 %v2969, %v3059
        %s3061 = scalar_lea.vmem %s5, 200
        %v3062 = vld [vmem:[%s3061] sm:$0xff]
        %3063 = vrot.lane.b32.xlu0 %v789, 100
        %v3064 = vpop.permute.xlu0 %3063
        %3065 = vrot.lane.b32.xlu0 %v790, 100
        %v3066 = vpop.permute.xlu0 %3065
        %v3070 = vsel %vm792, %v3062, 0
        %3072 = vmatprep.subr.mxu0 0.0
        %3073 = vmatpush1.msra.mxu0 %v3064
        %3074 = vmatprep.subr.mxu0 0.0
        %3075 = vmatpush1.msra.mxu0 %v3066
        %3076 = vmatprep.subr.mxu0 0.0
        %3077 = vmatpush1.msra.mxu0 0.0
        %3078 = vmatprep.subr.mxu0 0.0
        %3079 = vmatpush1.msra.mxu0 0.0
        %3080 = vmatprep.subr.mxu0 0.0
        %3081 = vmatpush1.msra.mxu0 0.0
        %3082 = vmatprep.subr.mxu0 0.0
        %3083 = vmatpush1.msra.mxu0 0.0
        %3084 = vmatprep.subr.mxu0 0.0
        %3085 = vmatpush1.msra.mxu0 0.0
        %3086 = vmatprep.subr.mxu0 0.0
        %3087 = vmatpush1.msra.mxu0 0.0
        %3088 = vmatprep.subr.mxu0 0.0
        %3089 = vmatpush1.msra.mxu0 0.0
        %3090 = vmatprep.subr.mxu0 0.0
        %3091 = vmatpush1.msra.mxu0 0.0
        %3092 = vmatprep.subr.mxu0 0.0
        %3093 = vmatpush1.msra.mxu0 0.0
        %3094 = vmatprep.subr.mxu0 0.0
        %3095 = vmatpush1.msra.mxu0 0.0
        %3096 = vmatprep.subr.mxu0 0.0
        %3097 = vmatpush1.msra.mxu0 0.0
        %3098 = vmatprep.subr.mxu0 0.0
        %3099 = vmatpush1.msra.mxu0 0.0
        %3100 = vmatprep.subr.mxu0 0.0
        %3101 = vmatpush1.msra.mxu0 0.0
        %3102 = vmatprep.subr.mxu0 0.0
        %3103 = vmatpush1.msra.mxu0 0.0
        %3104 = vmatprep.subr.mxu0 0.0
        %3105 = vmatpush1.msra.mxu0 0.0
        %3106 = vmatprep.subr.mxu0 0.0
        %3107 = vmatpush1.msra.mxu0 0.0
        %3108 = vmatprep.subr.mxu0 0.0
        %3109 = vmatpush1.msra.mxu0 0.0
        %3110 = vmatprep.subr.mxu0 0.0
        %3111 = vmatpush1.msra.mxu0 0.0
        %3112 = vmatprep.subr.mxu0 0.0
        %3113 = vmatpush1.msra.mxu0 0.0
        %3114 = vmatprep.subr.mxu0 0.0
        %3115 = vmatpush1.msra.mxu0 0.0
        %3116 = vmatprep.subr.mxu0 0.0
        %3117 = vmatpush1.msra.mxu0 0.0
        %3118 = vmatprep.subr.mxu0 0.0
        %3119 = vmatpush1.msra.mxu0 0.0
        %3120 = vmatprep.subr.mxu0 0.0
        %3121 = vmatpush1.msra.mxu0 0.0
        %3122 = vmatprep.subr.mxu0 0.0
        %3123 = vmatpush1.msra.mxu0 0.0
        %3124 = vmatprep.subr.mxu0 0.0
        %3125 = vmatpush1.msra.mxu0 0.0
        %3126 = vmatprep.subr.mxu0 0.0
        %3127 = vmatpush1.msra.mxu0 0.0
        %3128 = vmatprep.subr.mxu0 0.0
        %3129 = vmatpush1.msra.mxu0 0.0
        %3130 = vmatprep.subr.mxu0 0.0
        %3131 = vmatpush1.msra.mxu0 0.0
        %3132 = vmatprep.subr.mxu0 0.0
        %3133 = vmatpush1.msra.mxu0 0.0
        %3134 = vmatprep.subr.mxu0 0.0
        %3135 = vmatpush1.msra.mxu0 0.0
        %3136 = vmatprep.mubr.f32.mxu0 0.0
        %3137 = vmatmul.mubr.f32.gmra.mrb[0].mxu0 %v3070
        %v3138 = vpop.f32.mrb[0].mxu0
        %v3139 = vadd.f32 0.0, %v3138
        %v3140 = vpop.f32.mrb[0].mxu0
        %3141 = vdwg.mxu0
        %s3142 = scalar_lea.vmem %s6, 25
        %v3143 = vld [vmem:[%s3142] sm:$0x1]
        %v3145 = vlaneseq
        %v3146 = vshrl.u32 %v3145, 7
        %v3147 = vsub.s32 0, %v3146
        %v3148 = vrot.slane %v3143, %v3147
        %v3150 = vmul.f32 %v3139, %v3148
        %v3151 = vadd.f32 %v3060, %v3150
        %s3152 = scalar_lea.vmem %s5, 208
        %v3153 = vld [vmem:[%s3152] sm:$0xff]
        %3154 = vrot.lane.b32.xlu0 %v789, 99
        %v3155 = vpop.permute.xlu0 %3154
        %3156 = vrot.lane.b32.xlu0 %v790, 99
        %v3157 = vpop.permute.xlu0 %3156
        %v3161 = vsel %vm792, %v3153, 0
        %3163 = vmatprep.subr.mxu0 0.0
        %3164 = vmatpush1.msra.mxu0 %v3155
        %3165 = vmatprep.subr.mxu0 0.0
        %3166 = vmatpush1.msra.mxu0 %v3157
        %3167 = vmatprep.subr.mxu0 0.0
        %3168 = vmatpush1.msra.mxu0 0.0
        %3169 = vmatprep.subr.mxu0 0.0
        %3170 = vmatpush1.msra.mxu0 0.0
        %3171 = vmatprep.subr.mxu0 0.0
        %3172 = vmatpush1.msra.mxu0 0.0
        %3173 = vmatprep.subr.mxu0 0.0
        %3174 = vmatpush1.msra.mxu0 0.0
        %3175 = vmatprep.subr.mxu0 0.0
        %3176 = vmatpush1.msra.mxu0 0.0
        %3177 = vmatprep.subr.mxu0 0.0
        %3178 = vmatpush1.msra.mxu0 0.0
        %3179 = vmatprep.subr.mxu0 0.0
        %3180 = vmatpush1.msra.mxu0 0.0
        %3181 = vmatprep.subr.mxu0 0.0
        %3182 = vmatpush1.msra.mxu0 0.0
        %3183 = vmatprep.subr.mxu0 0.0
        %3184 = vmatpush1.msra.mxu0 0.0
        %3185 = vmatprep.subr.mxu0 0.0
        %3186 = vmatpush1.msra.mxu0 0.0
        %3187 = vmatprep.subr.mxu0 0.0
        %3188 = vmatpush1.msra.mxu0 0.0
        %3189 = vmatprep.subr.mxu0 0.0
        %3190 = vmatpush1.msra.mxu0 0.0
        %3191 = vmatprep.subr.mxu0 0.0
        %3192 = vmatpush1.msra.mxu0 0.0
        %3193 = vmatprep.subr.mxu0 0.0
        %3194 = vmatpush1.msra.mxu0 0.0
        %3195 = vmatprep.subr.mxu0 0.0
        %3196 = vmatpush1.msra.mxu0 0.0
        %3197 = vmatprep.subr.mxu0 0.0
        %3198 = vmatpush1.msra.mxu0 0.0
        %3199 = vmatprep.subr.mxu0 0.0
        %3200 = vmatpush1.msra.mxu0 0.0
        %3201 = vmatprep.subr.mxu0 0.0
        %3202 = vmatpush1.msra.mxu0 0.0
        %3203 = vmatprep.subr.mxu0 0.0
        %3204 = vmatpush1.msra.mxu0 0.0
        %3205 = vmatprep.subr.mxu0 0.0
        %3206 = vmatpush1.msra.mxu0 0.0
        %3207 = vmatprep.subr.mxu0 0.0
        %3208 = vmatpush1.msra.mxu0 0.0
        %3209 = vmatprep.subr.mxu0 0.0
        %3210 = vmatpush1.msra.mxu0 0.0
        %3211 = vmatprep.subr.mxu0 0.0
        %3212 = vmatpush1.msra.mxu0 0.0
        %3213 = vmatprep.subr.mxu0 0.0
        %3214 = vmatpush1.msra.mxu0 0.0
        %3215 = vmatprep.subr.mxu0 0.0
        %3216 = vmatpush1.msra.mxu0 0.0
        %3217 = vmatprep.subr.mxu0 0.0
        %3218 = vmatpush1.msra.mxu0 0.0
        %3219 = vmatprep.subr.mxu0 0.0
        %3220 = vmatpush1.msra.mxu0 0.0
        %3221 = vmatprep.subr.mxu0 0.0
        %3222 = vmatpush1.msra.mxu0 0.0
        %3223 = vmatprep.subr.mxu0 0.0
        %3224 = vmatpush1.msra.mxu0 0.0
        %3225 = vmatprep.subr.mxu0 0.0
        %3226 = vmatpush1.msra.mxu0 0.0
        %3227 = vmatprep.mubr.f32.mxu0 0.0
        %3228 = vmatmul.mubr.f32.gmra.mrb[0].mxu0 %v3161
        %v3229 = vpop.f32.mrb[0].mxu0
        %v3230 = vadd.f32 0.0, %v3229
        %v3231 = vpop.f32.mrb[0].mxu0
        %3232 = vdwg.mxu0
        %s3233 = scalar_lea.vmem %s6, 26
        %v3234 = vld [vmem:[%s3233] sm:$0x1]
        %v3236 = vlaneseq
        %v3237 = vshrl.u32 %v3236, 7
        %v3238 = vsub.s32 0, %v3237
        %v3239 = vrot.slane %v3234, %v3238
        %v3241 = vmul.f32 %v3230, %v3239
        %v3242 = vadd.f32 %v3151, %v3241
        %s3243 = scalar_lea.vmem %s5, 216
        %v3244 = vld [vmem:[%s3243] sm:$0xff]
        %3245 = vrot.lane.b32.xlu0 %v789, 98
        %v3246 = vpop.permute.xlu0 %3245
        %3247 = vrot.lane.b32.xlu0 %v790, 98
        %v3248 = vpop.permute.xlu0 %3247
        %v3252 = vsel %vm792, %v3244, 0
        %3254 = vmatprep.subr.mxu0 0.0
        %3255 = vmatpush1.msra.mxu0 %v3246
        %3256 = vmatprep.subr.mxu0 0.0
        %3257 = vmatpush1.msra.mxu0 %v3248
        %3258 = vmatprep.subr.mxu0 0.0
        %3259 = vmatpush1.msra.mxu0 0.0
        %3260 = vmatprep.subr.mxu0 0.0
        %3261 = vmatpush1.msra.mxu0 0.0
        %3262 = vmatprep.subr.mxu0 0.0
        %3263 = vmatpush1.msra.mxu0 0.0
        %3264 = vmatprep.subr.mxu0 0.0
        %3265 = vmatpush1.msra.mxu0 0.0
        %3266 = vmatprep.subr.mxu0 0.0
        %3267 = vmatpush1.msra.mxu0 0.0
        %3268 = vmatprep.subr.mxu0 0.0
        %3269 = vmatpush1.msra.mxu0 0.0
        %3270 = vmatprep.subr.mxu0 0.0
        %3271 = vmatpush1.msra.mxu0 0.0
        %3272 = vmatprep.subr.mxu0 0.0
        %3273 = vmatpush1.msra.mxu0 0.0
        %3274 = vmatprep.subr.mxu0 0.0
        %3275 = vmatpush1.msra.mxu0 0.0
        %3276 = vmatprep.subr.mxu0 0.0
        %3277 = vmatpush1.msra.mxu0 0.0
        %3278 = vmatprep.subr.mxu0 0.0
        %3279 = vmatpush1.msra.mxu0 0.0
        %3280 = vmatprep.subr.mxu0 0.0
        %3281 = vmatpush1.msra.mxu0 0.0
        %3282 = vmatprep.subr.mxu0 0.0
        %3283 = vmatpush1.msra.mxu0 0.0
        %3284 = vmatprep.subr.mxu0 0.0
        %3285 = vmatpush1.msra.mxu0 0.0
        %3286 = vmatprep.subr.mxu0 0.0
        %3287 = vmatpush1.msra.mxu0 0.0
        %3288 = vmatprep.subr.mxu0 0.0
        %3289 = vmatpush1.msra.mxu0 0.0
        %3290 = vmatprep.subr.mxu0 0.0
        %3291 = vmatpush1.msra.mxu0 0.0
        %3292 = vmatprep.subr.mxu0 0.0
        %3293 = vmatpush1.msra.mxu0 0.0
        %3294 = vmatprep.subr.mxu0 0.0
        %3295 = vmatpush1.msra.mxu0 0.0
        %3296 = vmatprep.subr.mxu0 0.0
        %3297 = vmatpush1.msra.mxu0 0.0
        %3298 = vmatprep.subr.mxu0 0.0
        %3299 = vmatpush1.msra.mxu0 0.0
        %3300 = vmatprep.subr.mxu0 0.0
        %3301 = vmatpush1.msra.mxu0 0.0
        %3302 = vmatprep.subr.mxu0 0.0
        %3303 = vmatpush1.msra.mxu0 0.0
        %3304 = vmatprep.subr.mxu0 0.0
        %3305 = vmatpush1.msra.mxu0 0.0
        %3306 = vmatprep.subr.mxu0 0.0
        %3307 = vmatpush1.msra.mxu0 0.0
        %3308 = vmatprep.subr.mxu0 0.0
        %3309 = vmatpush1.msra.mxu0 0.0
        %3310 = vmatprep.subr.mxu0 0.0
        %3311 = vmatpush1.msra.mxu0 0.0
        %3312 = vmatprep.subr.mxu0 0.0
        %3313 = vmatpush1.msra.mxu0 0.0
        %3314 = vmatprep.subr.mxu0 0.0
        %3315 = vmatpush1.msra.mxu0 0.0
        %3316 = vmatprep.subr.mxu0 0.0
        %3317 = vmatpush1.msra.mxu0 0.0
        %3318 = vmatprep.mubr.f32.mxu0 0.0
        %3319 = vmatmul.mubr.f32.gmra.mrb[0].mxu0 %v3252
        %v3320 = vpop.f32.mrb[0].mxu0
        %v3321 = vadd.f32 0.0, %v3320
        %v3322 = vpop.f32.mrb[0].mxu0
        %3323 = vdwg.mxu0
        %s3324 = scalar_lea.vmem %s6, 27
        %v3325 = vld [vmem:[%s3324] sm:$0x1]
        %v3327 = vlaneseq
        %v3328 = vshrl.u32 %v3327, 7
        %v3329 = vsub.s32 0, %v3328
        %v3330 = vrot.slane %v3325, %v3329
        %v3332 = vmul.f32 %v3321, %v3330
        %v3333 = vadd.f32 %v3242, %v3332
        %s3334 = scalar_lea.vmem %s5, 224
        %v3335 = vld [vmem:[%s3334] sm:$0xff]
        %3336 = vrot.lane.b32.xlu0 %v789, 96
        %v3337 = vpop.permute.xlu0 %3336
        %3338 = vrot.lane.b32.xlu0 %v790, 96
        %v3339 = vpop.permute.xlu0 %3338
        %v3343 = vsel %vm792, %v3335, 0
        %3345 = vmatprep.subr.mxu0 0.0
        %3346 = vmatpush1.msra.mxu0 %v3337
        %3347 = vmatprep.subr.mxu0 0.0
        %3348 = vmatpush1.msra.mxu0 %v3339
        %3349 = vmatprep.subr.mxu0 0.0
        %3350 = vmatpush1.msra.mxu0 0.0
        %3351 = vmatprep.subr.mxu0 0.0
        %3352 = vmatpush1.msra.mxu0 0.0
        %3353 = vmatprep.subr.mxu0 0.0
        %3354 = vmatpush1.msra.mxu0 0.0
        %3355 = vmatprep.subr.mxu0 0.0
        %3356 = vmatpush1.msra.mxu0 0.0
        %3357 = vmatprep.subr.mxu0 0.0
        %3358 = vmatpush1.msra.mxu0 0.0
        %3359 = vmatprep.subr.mxu0 0.0
        %3360 = vmatpush1.msra.mxu0 0.0
        %3361 = vmatprep.subr.mxu0 0.0
        %3362 = vmatpush1.msra.mxu0 0.0
        %3363 = vmatprep.subr.mxu0 0.0
        %3364 = vmatpush1.msra.mxu0 0.0
        %3365 = vmatprep.subr.mxu0 0.0
        %3366 = vmatpush1.msra.mxu0 0.0
        %3367 = vmatprep.subr.mxu0 0.0
        %3368 = vmatpush1.msra.mxu0 0.0
        %3369 = vmatprep.subr.mxu0 0.0
        %3370 = vmatpush1.msra.mxu0 0.0
        %3371 = vmatprep.subr.mxu0 0.0
        %3372 = vmatpush1.msra.mxu0 0.0
        %3373 = vmatprep.subr.mxu0 0.0
        %3374 = vmatpush1.msra.mxu0 0.0
        %3375 = vmatprep.subr.mxu0 0.0
        %3376 = vmatpush1.msra.mxu0 0.0
        %3377 = vmatprep.subr.mxu0 0.0
        %3378 = vmatpush1.msra.mxu0 0.0
        %3379 = vmatprep.subr.mxu0 0.0
        %3380 = vmatpush1.msra.mxu0 0.0
        %3381 = vmatprep.subr.mxu0 0.0
        %3382 = vmatpush1.msra.mxu0 0.0
        %3383 = vmatprep.subr.mxu0 0.0
        %3384 = vmatpush1.msra.mxu0 0.0
        %3385 = vmatprep.subr.mxu0 0.0
        %3386 = vmatpush1.msra.mxu0 0.0
        %3387 = vmatprep.subr.mxu0 0.0
        %3388 = vmatpush1.msra.mxu0 0.0
        %3389 = vmatprep.subr.mxu0 0.0
        %3390 = vmatpush1.msra.mxu0 0.0
        %3391 = vmatprep.subr.mxu0 0.0
        %3392 = vmatpush1.msra.mxu0 0.0
        %3393 = vmatprep.subr.mxu0 0.0
        %3394 = vmatpush1.msra.mxu0 0.0
        %3395 = vmatprep.subr.mxu0 0.0
        %3396 = vmatpush1.msra.mxu0 0.0
        %3397 = vmatprep.subr.mxu0 0.0
        %3398 = vmatpush1.msra.mxu0 0.0
        %3399 = vmatprep.subr.mxu0 0.0
        %3400 = vmatpush1.msra.mxu0 0.0
        %3401 = vmatprep.subr.mxu0 0.0
        %3402 = vmatpush1.msra.mxu0 0.0
        %3403 = vmatprep.subr.mxu0 0.0
        %3404 = vmatpush1.msra.mxu0 0.0
        %3405 = vmatprep.subr.mxu0 0.0
        %3406 = vmatpush1.msra.mxu0 0.0
        %3407 = vmatprep.subr.mxu0 0.0
        %3408 = vmatpush1.msra.mxu0 0.0
        %3409 = vmatprep.mubr.f32.mxu0 0.0
        %3410 = vmatmul.mubr.f32.gmra.mrb[0].mxu0 %v3343
        %v3411 = vpop.f32.mrb[0].mxu0
        %v3412 = vadd.f32 0.0, %v3411
        %v3413 = vpop.f32.mrb[0].mxu0
        %3414 = vdwg.mxu0
        %s3415 = scalar_lea.vmem %s6, 28
        %v3416 = vld [vmem:[%s3415] sm:$0x1]
        %v3418 = vlaneseq
        %v3419 = vshrl.u32 %v3418, 7
        %v3420 = vsub.s32 0, %v3419
        %v3421 = vrot.slane %v3416, %v3420
        %v3423 = vmul.f32 %v3412, %v3421
        %v3424 = vadd.f32 %v3333, %v3423
        %s3425 = scalar_lea.vmem %s5, 232
        %v3426 = vld [vmem:[%s3425] sm:$0xff]
        %3427 = vrot.lane.b32.xlu0 %v789, 95
        %v3428 = vpop.permute.xlu0 %3427
        %3429 = vrot.lane.b32.xlu0 %v790, 95
        %v3430 = vpop.permute.xlu0 %3429
        %v3434 = vsel %vm792, %v3426, 0
        %3436 = vmatprep.subr.mxu0 0.0
        %3437 = vmatpush1.msra.mxu0 %v3428
        %3438 = vmatprep.subr.mxu0 0.0
        %3439 = vmatpush1.msra.mxu0 %v3430
        %3440 = vmatprep.subr.mxu0 0.0
        %3441 = vmatpush1.msra.mxu0 0.0
        %3442 = vmatprep.subr.mxu0 0.0
        %3443 = vmatpush1.msra.mxu0 0.0
        %3444 = vmatprep.subr.mxu0 0.0
        %3445 = vmatpush1.msra.mxu0 0.0
        %3446 = vmatprep.subr.mxu0 0.0
        %3447 = vmatpush1.msra.mxu0 0.0
        %3448 = vmatprep.subr.mxu0 0.0
        %3449 = vmatpush1.msra.mxu0 0.0
        %3450 = vmatprep.subr.mxu0 0.0
        %3451 = vmatpush1.msra.mxu0 0.0
        %3452 = vmatprep.subr.mxu0 0.0
        %3453 = vmatpush1.msra.mxu0 0.0
        %3454 = vmatprep.subr.mxu0 0.0
        %3455 = vmatpush1.msra.mxu0 0.0
        %3456 = vmatprep.subr.mxu0 0.0
        %3457 = vmatpush1.msra.mxu0 0.0
        %3458 = vmatprep.subr.mxu0 0.0
        %3459 = vmatpush1.msra.mxu0 0.0
        %3460 = vmatprep.subr.mxu0 0.0
        %3461 = vmatpush1.msra.mxu0 0.0
        %3462 = vmatprep.subr.mxu0 0.0
        %3463 = vmatpush1.msra.mxu0 0.0
        %3464 = vmatprep.subr.mxu0 0.0
        %3465 = vmatpush1.msra.mxu0 0.0
        %3466 = vmatprep.subr.mxu0 0.0
        %3467 = vmatpush1.msra.mxu0 0.0
        %3468 = vmatprep.subr.mxu0 0.0
        %3469 = vmatpush1.msra.mxu0 0.0
        %3470 = vmatprep.subr.mxu0 0.0
        %3471 = vmatpush1.msra.mxu0 0.0
        %3472 = vmatprep.subr.mxu0 0.0
        %3473 = vmatpush1.msra.mxu0 0.0
        %3474 = vmatprep.subr.mxu0 0.0
        %3475 = vmatpush1.msra.mxu0 0.0
        %3476 = vmatprep.subr.mxu0 0.0
        %3477 = vmatpush1.msra.mxu0 0.0
        %3478 = vmatprep.subr.mxu0 0.0
        %3479 = vmatpush1.msra.mxu0 0.0
        %3480 = vmatprep.subr.mxu0 0.0
        %3481 = vmatpush1.msra.mxu0 0.0
        %3482 = vmatprep.subr.mxu0 0.0
        %3483 = vmatpush1.msra.mxu0 0.0
        %3484 = vmatprep.subr.mxu0 0.0
        %3485 = vmatpush1.msra.mxu0 0.0
        %3486 = vmatprep.subr.mxu0 0.0
        %3487 = vmatpush1.msra.mxu0 0.0
        %3488 = vmatprep.subr.mxu0 0.0
        %3489 = vmatpush1.msra.mxu0 0.0
        %3490 = vmatprep.subr.mxu0 0.0
        %3491 = vmatpush1.msra.mxu0 0.0
        %3492 = vmatprep.subr.mxu0 0.0
        %3493 = vmatpush1.msra.mxu0 0.0
        %3494 = vmatprep.subr.mxu0 0.0
        %3495 = vmatpush1.msra.mxu0 0.0
        %3496 = vmatprep.subr.mxu0 0.0
        %3497 = vmatpush1.msra.mxu0 0.0
        %3498 = vmatprep.subr.mxu0 0.0
        %3499 = vmatpush1.msra.mxu0 0.0
        %3500 = vmatprep.mubr.f32.mxu0 0.0
        %3501 = vmatmul.mubr.f32.gmra.mrb[0].mxu0 %v3434
        %v3502 = vpop.f32.mrb[0].mxu0
        %v3503 = vadd.f32 0.0, %v3502
        %v3504 = vpop.f32.mrb[0].mxu0
        %3505 = vdwg.mxu0
        %s3506 = scalar_lea.vmem %s6, 29
        %v3507 = vld [vmem:[%s3506] sm:$0x1]
        %v3509 = vlaneseq
        %v3510 = vshrl.u32 %v3509, 7
        %v3511 = vsub.s32 0, %v3510
        %v3512 = vrot.slane %v3507, %v3511
        %v3514 = vmul.f32 %v3503, %v3512
        %v3515 = vadd.f32 %v3424, %v3514
        %s3516 = scalar_lea.vmem %s5, 240
        %v3517 = vld [vmem:[%s3516] sm:$0xff]
        %3518 = vrot.lane.b32.xlu0 %v789, 94
        %v3519 = vpop.permute.xlu0 %3518
        %3520 = vrot.lane.b32.xlu0 %v790, 94
        %v3521 = vpop.permute.xlu0 %3520
        %v3525 = vsel %vm792, %v3517, 0
        %3527 = vmatprep.subr.mxu0 0.0
        %3528 = vmatpush1.msra.mxu0 %v3519
        %3529 = vmatprep.subr.mxu0 0.0
        %3530 = vmatpush1.msra.mxu0 %v3521
        %3531 = vmatprep.subr.mxu0 0.0
        %3532 = vmatpush1.msra.mxu0 0.0
        %3533 = vmatprep.subr.mxu0 0.0
        %3534 = vmatpush1.msra.mxu0 0.0
        %3535 = vmatprep.subr.mxu0 0.0
        %3536 = vmatpush1.msra.mxu0 0.0
        %3537 = vmatprep.subr.mxu0 0.0
        %3538 = vmatpush1.msra.mxu0 0.0
        %3539 = vmatprep.subr.mxu0 0.0
        %3540 = vmatpush1.msra.mxu0 0.0
        %3541 = vmatprep.subr.mxu0 0.0
        %3542 = vmatpush1.msra.mxu0 0.0
        %3543 = vmatprep.subr.mxu0 0.0
        %3544 = vmatpush1.msra.mxu0 0.0
        %3545 = vmatprep.subr.mxu0 0.0
        %3546 = vmatpush1.msra.mxu0 0.0
        %3547 = vmatprep.subr.mxu0 0.0
        %3548 = vmatpush1.msra.mxu0 0.0
        %3549 = vmatprep.subr.mxu0 0.0
        %3550 = vmatpush1.msra.mxu0 0.0
        %3551 = vmatprep.subr.mxu0 0.0
        %3552 = vmatpush1.msra.mxu0 0.0
        %3553 = vmatprep.subr.mxu0 0.0
        %3554 = vmatpush1.msra.mxu0 0.0
        %3555 = vmatprep.subr.mxu0 0.0
        %3556 = vmatpush1.msra.mxu0 0.0
        %3557 = vmatprep.subr.mxu0 0.0
        %3558 = vmatpush1.msra.mxu0 0.0
        %3559 = vmatprep.subr.mxu0 0.0
        %3560 = vmatpush1.msra.mxu0 0.0
        %3561 = vmatprep.subr.mxu0 0.0
        %3562 = vmatpush1.msra.mxu0 0.0
        %3563 = vmatprep.subr.mxu0 0.0
        %3564 = vmatpush1.msra.mxu0 0.0
        %3565 = vmatprep.subr.mxu0 0.0
        %3566 = vmatpush1.msra.mxu0 0.0
        %3567 = vmatprep.subr.mxu0 0.0
        %3568 = vmatpush1.msra.mxu0 0.0
        %3569 = vmatprep.subr.mxu0 0.0
        %3570 = vmatpush1.msra.mxu0 0.0
        %3571 = vmatprep.subr.mxu0 0.0
        %3572 = vmatpush1.msra.mxu0 0.0
        %3573 = vmatprep.subr.mxu0 0.0
        %3574 = vmatpush1.msra.mxu0 0.0
        %3575 = vmatprep.subr.mxu0 0.0
        %3576 = vmatpush1.msra.mxu0 0.0
        %3577 = vmatprep.subr.mxu0 0.0
        %3578 = vmatpush1.msra.mxu0 0.0
        %3579 = vmatprep.subr.mxu0 0.0
        %3580 = vmatpush1.msra.mxu0 0.0
        %3581 = vmatprep.subr.mxu0 0.0
        %3582 = vmatpush1.msra.mxu0 0.0
        %3583 = vmatprep.subr.mxu0 0.0
        %3584 = vmatpush1.msra.mxu0 0.0
        %3585 = vmatprep.subr.mxu0 0.0
        %3586 = vmatpush1.msra.mxu0 0.0
        %3587 = vmatprep.subr.mxu0 0.0
        %3588 = vmatpush1.msra.mxu0 0.0
        %3589 = vmatprep.subr.mxu0 0.0
        %3590 = vmatpush1.msra.mxu0 0.0
        %3591 = vmatprep.mubr.f32.mxu0 0.0
        %3592 = vmatmul.mubr.f32.gmra.mrb[0].mxu0 %v3525
        %v3593 = vpop.f32.mrb[0].mxu0
        %v3594 = vadd.f32 0.0, %v3593
        %v3595 = vpop.f32.mrb[0].mxu0
        %3596 = vdwg.mxu0
        %s3597 = scalar_lea.vmem %s6, 30
        %v3598 = vld [vmem:[%s3597] sm:$0x1]
        %v3600 = vlaneseq
        %v3601 = vshrl.u32 %v3600, 7
        %v3602 = vsub.s32 0, %v3601
        %v3603 = vrot.slane %v3598, %v3602
        %v3605 = vmul.f32 %v3594, %v3603
        %v3606 = vadd.f32 %v3515, %v3605
        %s3607 = scalar_lea.vmem %s5, 248
        %v3608 = vld [vmem:[%s3607] sm:$0xff]
        %3609 = vrot.lane.b32.xlu0 %v789, 93
        %v3610 = vpop.permute.xlu0 %3609
        %3611 = vrot.lane.b32.xlu0 %v790, 93
        %v3612 = vpop.permute.xlu0 %3611
        %v3616 = vsel %vm792, %v3608, 0
        %3618 = vmatprep.subr.mxu0 0.0
        %3619 = vmatpush1.msra.mxu0 %v3610
        %3620 = vmatprep.subr.mxu0 0.0
        %3621 = vmatpush1.msra.mxu0 %v3612
        %3622 = vmatprep.subr.mxu0 0.0
        %3623 = vmatpush1.msra.mxu0 0.0
        %3624 = vmatprep.subr.mxu0 0.0
        %3625 = vmatpush1.msra.mxu0 0.0
        %3626 = vmatprep.subr.mxu0 0.0
        %3627 = vmatpush1.msra.mxu0 0.0
        %3628 = vmatprep.subr.mxu0 0.0
        %3629 = vmatpush1.msra.mxu0 0.0
        %3630 = vmatprep.subr.mxu0 0.0
        %3631 = vmatpush1.msra.mxu0 0.0
        %3632 = vmatprep.subr.mxu0 0.0
        %3633 = vmatpush1.msra.mxu0 0.0
        %3634 = vmatprep.subr.mxu0 0.0
        %3635 = vmatpush1.msra.mxu0 0.0
        %3636 = vmatprep.subr.mxu0 0.0
        %3637 = vmatpush1.msra.mxu0 0.0
        %3638 = vmatprep.subr.mxu0 0.0
        %3639 = vmatpush1.msra.mxu0 0.0
        %3640 = vmatprep.subr.mxu0 0.0
        %3641 = vmatpush1.msra.mxu0 0.0
        %3642 = vmatprep.subr.mxu0 0.0
        %3643 = vmatpush1.msra.mxu0 0.0
        %3644 = vmatprep.subr.mxu0 0.0
        %3645 = vmatpush1.msra.mxu0 0.0
        %3646 = vmatprep.subr.mxu0 0.0
        %3647 = vmatpush1.msra.mxu0 0.0
        %3648 = vmatprep.subr.mxu0 0.0
        %3649 = vmatpush1.msra.mxu0 0.0
        %3650 = vmatprep.subr.mxu0 0.0
        %3651 = vmatpush1.msra.mxu0 0.0
        %3652 = vmatprep.subr.mxu0 0.0
        %3653 = vmatpush1.msra.mxu0 0.0
        %3654 = vmatprep.subr.mxu0 0.0
        %3655 = vmatpush1.msra.mxu0 0.0
        %3656 = vmatprep.subr.mxu0 0.0
        %3657 = vmatpush1.msra.mxu0 0.0
        %3658 = vmatprep.subr.mxu0 0.0
        %3659 = vmatpush1.msra.mxu0 0.0
        %3660 = vmatprep.subr.mxu0 0.0
        %3661 = vmatpush1.msra.mxu0 0.0
        %3662 = vmatprep.subr.mxu0 0.0
        %3663 = vmatpush1.msra.mxu0 0.0
        %3664 = vmatprep.subr.mxu0 0.0
        %3665 = vmatpush1.msra.mxu0 0.0
        %3666 = vmatprep.subr.mxu0 0.0
        %3667 = vmatpush1.msra.mxu0 0.0
        %3668 = vmatprep.subr.mxu0 0.0
        %3669 = vmatpush1.msra.mxu0 0.0
        %3670 = vmatprep.subr.mxu0 0.0
        %3671 = vmatpush1.msra.mxu0 0.0
        %3672 = vmatprep.subr.mxu0 0.0
        %3673 = vmatpush1.msra.mxu0 0.0
        %3674 = vmatprep.subr.mxu0 0.0
        %3675 = vmatpush1.msra.mxu0 0.0
        %3676 = vmatprep.subr.mxu0 0.0
        %3677 = vmatpush1.msra.mxu0 0.0
        %3678 = vmatprep.subr.mxu0 0.0
        %3679 = vmatpush1.msra.mxu0 0.0
        %3680 = vmatprep.subr.mxu0 0.0
        %3681 = vmatpush1.msra.mxu0 0.0
        %3682 = vmatprep.mubr.f32.mxu0 0.0
        %3683 = vmatmul.mubr.f32.gmra.mrb[0].mxu0 %v3616
        %v3684 = vpop.f32.mrb[0].mxu0
        %v3685 = vadd.f32 0.0, %v3684
        %v3686 = vpop.f32.mrb[0].mxu0
        %3687 = vdwg.mxu0
        %s3688 = scalar_lea.vmem %s6, 31
        %v3689 = vld [vmem:[%s3688] sm:$0x1]
        %v3691 = vlaneseq
        %v3692 = vshrl.u32 %v3691, 7
        %v3693 = vsub.s32 0, %v3692
        %v3694 = vrot.slane %v3689, %v3693
        %v3696 = vmul.f32 %v3685, %v3694
        %v3697 = vadd.f32 %v3606, %v3696
        %s3698 = scalar_lea.vmem %s5, 256
        %v3699 = vld [vmem:[%s3698] sm:$0xff]
        %3700 = vrot.lane.b32.xlu0 %v789, 92
        %v3701 = vpop.permute.xlu0 %3700
        %3702 = vrot.lane.b32.xlu0 %v790, 92
        %v3703 = vpop.permute.xlu0 %3702
        %v3707 = vsel %vm792, %v3699, 0
        %3709 = vmatprep.subr.mxu0 0.0
        %3710 = vmatpush1.msra.mxu0 %v3701
        %3711 = vmatprep.subr.mxu0 0.0
        %3712 = vmatpush1.msra.mxu0 %v3703
        %3713 = vmatprep.subr.mxu0 0.0
        %3714 = vmatpush1.msra.mxu0 0.0
        %3715 = vmatprep.subr.mxu0 0.0
        %3716 = vmatpush1.msra.mxu0 0.0
        %3717 = vmatprep.subr.mxu0 0.0
        %3718 = vmatpush1.msra.mxu0 0.0
        %3719 = vmatprep.subr.mxu0 0.0
        %3720 = vmatpush1.msra.mxu0 0.0
        %3721 = vmatprep.subr.mxu0 0.0
        %3722 = vmatpush1.msra.mxu0 0.0
        %3723 = vmatprep.subr.mxu0 0.0
        %3724 = vmatpush1.msra.mxu0 0.0
        %3725 = vmatprep.subr.mxu0 0.0
        %3726 = vmatpush1.msra.mxu0 0.0
        %3727 = vmatprep.subr.mxu0 0.0
        %3728 = vmatpush1.msra.mxu0 0.0
        %3729 = vmatprep.subr.mxu0 0.0
        %3730 = vmatpush1.msra.mxu0 0.0
        %3731 = vmatprep.subr.mxu0 0.0
        %3732 = vmatpush1.msra.mxu0 0.0
        %3733 = vmatprep.subr.mxu0 0.0
        %3734 = vmatpush1.msra.mxu0 0.0
        %3735 = vmatprep.subr.mxu0 0.0
        %3736 = vmatpush1.msra.mxu0 0.0
        %3737 = vmatprep.subr.mxu0 0.0
        %3738 = vmatpush1.msra.mxu0 0.0
        %3739 = vmatprep.subr.mxu0 0.0
        %3740 = vmatpush1.msra.mxu0 0.0
        %3741 = vmatprep.subr.mxu0 0.0
        %3742 = vmatpush1.msra.mxu0 0.0
        %3743 = vmatprep.subr.mxu0 0.0
        %3744 = vmatpush1.msra.mxu0 0.0
        %3745 = vmatprep.subr.mxu0 0.0
        %3746 = vmatpush1.msra.mxu0 0.0
        %3747 = vmatprep.subr.mxu0 0.0
        %3748 = vmatpush1.msra.mxu0 0.0
        %3749 = vmatprep.subr.mxu0 0.0
        %3750 = vmatpush1.msra.mxu0 0.0
        %3751 = vmatprep.subr.mxu0 0.0
        %3752 = vmatpush1.msra.mxu0 0.0
        %3753 = vmatprep.subr.mxu0 0.0
        %3754 = vmatpush1.msra.mxu0 0.0
        %3755 = vmatprep.subr.mxu0 0.0
        %3756 = vmatpush1.msra.mxu0 0.0
        %3757 = vmatprep.subr.mxu0 0.0
        %3758 = vmatpush1.msra.mxu0 0.0
        %3759 = vmatprep.subr.mxu0 0.0
        %3760 = vmatpush1.msra.mxu0 0.0
        %3761 = vmatprep.subr.mxu0 0.0
        %3762 = vmatpush1.msra.mxu0 0.0
        %3763 = vmatprep.subr.mxu0 0.0
        %3764 = vmatpush1.msra.mxu0 0.0
        %3765 = vmatprep.subr.mxu0 0.0
        %3766 = vmatpush1.msra.mxu0 0.0
        %3767 = vmatprep.subr.mxu0 0.0
        %3768 = vmatpush1.msra.mxu0 0.0
        %3769 = vmatprep.subr.mxu0 0.0
        %3770 = vmatpush1.msra.mxu0 0.0
        %3771 = vmatprep.subr.mxu0 0.0
        %3772 = vmatpush1.msra.mxu0 0.0
        %3773 = vmatprep.mubr.f32.mxu0 0.0
        %3774 = vmatmul.mubr.f32.gmra.mrb[0].mxu0 %v3707
        %v3775 = vpop.f32.mrb[0].mxu0
        %v3776 = vadd.f32 0.0, %v3775
        %v3777 = vpop.f32.mrb[0].mxu0
        %3778 = vdwg.mxu0
        %s3779 = scalar_lea.vmem %s6, 32
        %v3780 = vld [vmem:[%s3779] sm:$0x1]
        %v3782 = vlaneseq
        %v3783 = vshrl.u32 %v3782, 7
        %v3784 = vsub.s32 0, %v3783
        %v3785 = vrot.slane %v3780, %v3784
        %v3787 = vmul.f32 %v3776, %v3785
        %v3788 = vadd.f32 %v3697, %v3787
        %s3789 = scalar_lea.vmem %s5, 264
        %v3790 = vld [vmem:[%s3789] sm:$0xff]
        %3791 = vrot.lane.b32.xlu0 %v789, 91
        %v3792 = vpop.permute.xlu0 %3791
        %3793 = vrot.lane.b32.xlu0 %v790, 91
        %v3794 = vpop.permute.xlu0 %3793
        %v3798 = vsel %vm792, %v3790, 0
        %3800 = vmatprep.subr.mxu0 0.0
        %3801 = vmatpush1.msra.mxu0 %v3792
        %3802 = vmatprep.subr.mxu0 0.0
        %3803 = vmatpush1.msra.mxu0 %v3794
        %3804 = vmatprep.subr.mxu0 0.0
        %3805 = vmatpush1.msra.mxu0 0.0
        %3806 = vmatprep.subr.mxu0 0.0
        %3807 = vmatpush1.msra.mxu0 0.0
        %3808 = vmatprep.subr.mxu0 0.0
        %3809 = vmatpush1.msra.mxu0 0.0
        %3810 = vmatprep.subr.mxu0 0.0
        %3811 = vmatpush1.msra.mxu0 0.0
        %3812 = vmatprep.subr.mxu0 0.0
        %3813 = vmatpush1.msra.mxu0 0.0
        %3814 = vmatprep.subr.mxu0 0.0
        %3815 = vmatpush1.msra.mxu0 0.0
        %3816 = vmatprep.subr.mxu0 0.0
        %3817 = vmatpush1.msra.mxu0 0.0
        %3818 = vmatprep.subr.mxu0 0.0
        %3819 = vmatpush1.msra.mxu0 0.0
        %3820 = vmatprep.subr.mxu0 0.0
        %3821 = vmatpush1.msra.mxu0 0.0
        %3822 = vmatprep.subr.mxu0 0.0
        %3823 = vmatpush1.msra.mxu0 0.0
        %3824 = vmatprep.subr.mxu0 0.0
        %3825 = vmatpush1.msra.mxu0 0.0
        %3826 = vmatprep.subr.mxu0 0.0
        %3827 = vmatpush1.msra.mxu0 0.0
        %3828 = vmatprep.subr.mxu0 0.0
        %3829 = vmatpush1.msra.mxu0 0.0
        %3830 = vmatprep.subr.mxu0 0.0
        %3831 = vmatpush1.msra.mxu0 0.0
        %3832 = vmatprep.subr.mxu0 0.0
        %3833 = vmatpush1.msra.mxu0 0.0
        %3834 = vmatprep.subr.mxu0 0.0
        %3835 = vmatpush1.msra.mxu0 0.0
        %3836 = vmatprep.subr.mxu0 0.0
        %3837 = vmatpush1.msra.mxu0 0.0
        %3838 = vmatprep.subr.mxu0 0.0
        %3839 = vmatpush1.msra.mxu0 0.0
        %3840 = vmatprep.subr.mxu0 0.0
        %3841 = vmatpush1.msra.mxu0 0.0
        %3842 = vmatprep.subr.mxu0 0.0
        %3843 = vmatpush1.msra.mxu0 0.0
        %3844 = vmatprep.subr.mxu0 0.0
        %3845 = vmatpush1.msra.mxu0 0.0
        %3846 = vmatprep.subr.mxu0 0.0
        %3847 = vmatpush1.msra.mxu0 0.0
        %3848 = vmatprep.subr.mxu0 0.0
        %3849 = vmatpush1.msra.mxu0 0.0
        %3850 = vmatprep.subr.mxu0 0.0
        %3851 = vmatpush1.msra.mxu0 0.0
        %3852 = vmatprep.subr.mxu0 0.0
        %3853 = vmatpush1.msra.mxu0 0.0
        %3854 = vmatprep.subr.mxu0 0.0
        %3855 = vmatpush1.msra.mxu0 0.0
        %3856 = vmatprep.subr.mxu0 0.0
        %3857 = vmatpush1.msra.mxu0 0.0
        %3858 = vmatprep.subr.mxu0 0.0
        %3859 = vmatpush1.msra.mxu0 0.0
        %3860 = vmatprep.subr.mxu0 0.0
        %3861 = vmatpush1.msra.mxu0 0.0
        %3862 = vmatprep.subr.mxu0 0.0
        %3863 = vmatpush1.msra.mxu0 0.0
        %3864 = vmatprep.mubr.f32.mxu0 0.0
        %3865 = vmatmul.mubr.f32.gmra.mrb[0].mxu0 %v3798
        %v3866 = vpop.f32.mrb[0].mxu0
        %v3867 = vadd.f32 0.0, %v3866
        %v3868 = vpop.f32.mrb[0].mxu0
        %3869 = vdwg.mxu0
        %s3870 = scalar_lea.vmem %s6, 33
        %v3871 = vld [vmem:[%s3870] sm:$0x1]
        %v3873 = vlaneseq
        %v3874 = vshrl.u32 %v3873, 7
        %v3875 = vsub.s32 0, %v3874
        %v3876 = vrot.slane %v3871, %v3875
        %v3878 = vmul.f32 %v3867, %v3876
        %v3879 = vadd.f32 %v3788, %v3878
        %s3880 = scalar_lea.vmem %s5, 272
        %v3881 = vld [vmem:[%s3880] sm:$0xff]
        %3882 = vrot.lane.b32.xlu0 %v789, 90
        %v3883 = vpop.permute.xlu0 %3882
        %3884 = vrot.lane.b32.xlu0 %v790, 90
        %v3885 = vpop.permute.xlu0 %3884
        %v3889 = vsel %vm792, %v3881, 0
        %3891 = vmatprep.subr.mxu0 0.0
        %3892 = vmatpush1.msra.mxu0 %v3883
        %3893 = vmatprep.subr.mxu0 0.0
        %3894 = vmatpush1.msra.mxu0 %v3885
        %3895 = vmatprep.subr.mxu0 0.0
        %3896 = vmatpush1.msra.mxu0 0.0
        %3897 = vmatprep.subr.mxu0 0.0
        %3898 = vmatpush1.msra.mxu0 0.0
        %3899 = vmatprep.subr.mxu0 0.0
        %3900 = vmatpush1.msra.mxu0 0.0
        %3901 = vmatprep.subr.mxu0 0.0
        %3902 = vmatpush1.msra.mxu0 0.0
        %3903 = vmatprep.subr.mxu0 0.0
        %3904 = vmatpush1.msra.mxu0 0.0
        %3905 = vmatprep.subr.mxu0 0.0
        %3906 = vmatpush1.msra.mxu0 0.0
        %3907 = vmatprep.subr.mxu0 0.0
        %3908 = vmatpush1.msra.mxu0 0.0
        %3909 = vmatprep.subr.mxu0 0.0
        %3910 = vmatpush1.msra.mxu0 0.0
        %3911 = vmatprep.subr.mxu0 0.0
        %3912 = vmatpush1.msra.mxu0 0.0
        %3913 = vmatprep.subr.mxu0 0.0
        %3914 = vmatpush1.msra.mxu0 0.0
        %3915 = vmatprep.subr.mxu0 0.0
        %3916 = vmatpush1.msra.mxu0 0.0
        %3917 = vmatprep.subr.mxu0 0.0
        %3918 = vmatpush1.msra.mxu0 0.0
        %3919 = vmatprep.subr.mxu0 0.0
        %3920 = vmatpush1.msra.mxu0 0.0
        %3921 = vmatprep.subr.mxu0 0.0
        %3922 = vmatpush1.msra.mxu0 0.0
        %3923 = vmatprep.subr.mxu0 0.0
        %3924 = vmatpush1.msra.mxu0 0.0
        %3925 = vmatprep.subr.mxu0 0.0
        %3926 = vmatpush1.msra.mxu0 0.0
        %3927 = vmatprep.subr.mxu0 0.0
        %3928 = vmatpush1.msra.mxu0 0.0
        %3929 = vmatprep.subr.mxu0 0.0
        %3930 = vmatpush1.msra.mxu0 0.0
        %3931 = vmatprep.subr.mxu0 0.0
        %3932 = vmatpush1.msra.mxu0 0.0
        %3933 = vmatprep.subr.mxu0 0.0
        %3934 = vmatpush1.msra.mxu0 0.0
        %3935 = vmatprep.subr.mxu0 0.0
        %3936 = vmatpush1.msra.mxu0 0.0
        %3937 = vmatprep.subr.mxu0 0.0
        %3938 = vmatpush1.msra.mxu0 0.0
        %3939 = vmatprep.subr.mxu0 0.0
        %3940 = vmatpush1.msra.mxu0 0.0
        %3941 = vmatprep.subr.mxu0 0.0
        %3942 = vmatpush1.msra.mxu0 0.0
        %3943 = vmatprep.subr.mxu0 0.0
        %3944 = vmatpush1.msra.mxu0 0.0
        %3945 = vmatprep.subr.mxu0 0.0
        %3946 = vmatpush1.msra.mxu0 0.0
        %3947 = vmatprep.subr.mxu0 0.0
        %3948 = vmatpush1.msra.mxu0 0.0
        %3949 = vmatprep.subr.mxu0 0.0
        %3950 = vmatpush1.msra.mxu0 0.0
        %3951 = vmatprep.subr.mxu0 0.0
        %3952 = vmatpush1.msra.mxu0 0.0
        %3953 = vmatprep.subr.mxu0 0.0
        %3954 = vmatpush1.msra.mxu0 0.0
        %3955 = vmatprep.mubr.f32.mxu0 0.0
        %3956 = vmatmul.mubr.f32.gmra.mrb[0].mxu0 %v3889
        %v3957 = vpop.f32.mrb[0].mxu0
        %v3958 = vadd.f32 0.0, %v3957
        %v3959 = vpop.f32.mrb[0].mxu0
        %3960 = vdwg.mxu0
        %s3961 = scalar_lea.vmem %s6, 34
        %v3962 = vld [vmem:[%s3961] sm:$0x1]
        %v3964 = vlaneseq
        %v3965 = vshrl.u32 %v3964, 7
        %v3966 = vsub.s32 0, %v3965
        %v3967 = vrot.slane %v3962, %v3966
        %v3969 = vmul.f32 %v3958, %v3967
        %v3970 = vadd.f32 %v3879, %v3969
        %s3971 = scalar_lea.vmem %s5, 280
        %v3972 = vld [vmem:[%s3971] sm:$0xff]
        %3973 = vrot.lane.b32.xlu0 %v789, 88
        %v3974 = vpop.permute.xlu0 %3973
        %3975 = vrot.lane.b32.xlu0 %v790, 88
        %v3976 = vpop.permute.xlu0 %3975
        %v3980 = vsel %vm792, %v3972, 0
        %3982 = vmatprep.subr.mxu0 0.0
        %3983 = vmatpush1.msra.mxu0 %v3974
        %3984 = vmatprep.subr.mxu0 0.0
        %3985 = vmatpush1.msra.mxu0 %v3976
        %3986 = vmatprep.subr.mxu0 0.0
        %3987 = vmatpush1.msra.mxu0 0.0
        %3988 = vmatprep.subr.mxu0 0.0
        %3989 = vmatpush1.msra.mxu0 0.0
        %3990 = vmatprep.subr.mxu0 0.0
        %3991 = vmatpush1.msra.mxu0 0.0
        %3992 = vmatprep.subr.mxu0 0.0
        %3993 = vmatpush1.msra.mxu0 0.0
        %3994 = vmatprep.subr.mxu0 0.0
        %3995 = vmatpush1.msra.mxu0 0.0
        %3996 = vmatprep.subr.mxu0 0.0
        %3997 = vmatpush1.msra.mxu0 0.0
        %3998 = vmatprep.subr.mxu0 0.0
        %3999 = vmatpush1.msra.mxu0 0.0
        %4000 = vmatprep.subr.mxu0 0.0
        %4001 = vmatpush1.msra.mxu0 0.0
        %4002 = vmatprep.subr.mxu0 0.0
        %4003 = vmatpush1.msra.mxu0 0.0
        %4004 = vmatprep.subr.mxu0 0.0
        %4005 = vmatpush1.msra.mxu0 0.0
        %4006 = vmatprep.subr.mxu0 0.0
        %4007 = vmatpush1.msra.mxu0 0.0
        %4008 = vmatprep.subr.mxu0 0.0
        %4009 = vmatpush1.msra.mxu0 0.0
        %4010 = vmatprep.subr.mxu0 0.0
        %4011 = vmatpush1.msra.mxu0 0.0
        %4012 = vmatprep.subr.mxu0 0.0
        %4013 = vmatpush1.msra.mxu0 0.0
        %4014 = vmatprep.subr.mxu0 0.0
        %4015 = vmatpush1.msra.mxu0 0.0
        %4016 = vmatprep.subr.mxu0 0.0
        %4017 = vmatpush1.msra.mxu0 0.0
        %4018 = vmatprep.subr.mxu0 0.0
        %4019 = vmatpush1.msra.mxu0 0.0
        %4020 = vmatprep.subr.mxu0 0.0
        %4021 = vmatpush1.msra.mxu0 0.0
        %4022 = vmatprep.subr.mxu0 0.0
        %4023 = vmatpush1.msra.mxu0 0.0
        %4024 = vmatprep.subr.mxu0 0.0
        %4025 = vmatpush1.msra.mxu0 0.0
        %4026 = vmatprep.subr.mxu0 0.0
        %4027 = vmatpush1.msra.mxu0 0.0
        %4028 = vmatprep.subr.mxu0 0.0
        %4029 = vmatpush1.msra.mxu0 0.0
        %4030 = vmatprep.subr.mxu0 0.0
        %4031 = vmatpush1.msra.mxu0 0.0
        %4032 = vmatprep.subr.mxu0 0.0
        %4033 = vmatpush1.msra.mxu0 0.0
        %4034 = vmatprep.subr.mxu0 0.0
        %4035 = vmatpush1.msra.mxu0 0.0
        %4036 = vmatprep.subr.mxu0 0.0
        %4037 = vmatpush1.msra.mxu0 0.0
        %4038 = vmatprep.subr.mxu0 0.0
        %4039 = vmatpush1.msra.mxu0 0.0
        %4040 = vmatprep.subr.mxu0 0.0
        %4041 = vmatpush1.msra.mxu0 0.0
        %4042 = vmatprep.subr.mxu0 0.0
        %4043 = vmatpush1.msra.mxu0 0.0
        %4044 = vmatprep.subr.mxu0 0.0
        %4045 = vmatpush1.msra.mxu0 0.0
        %4046 = vmatprep.mubr.f32.mxu0 0.0
        %4047 = vmatmul.mubr.f32.gmra.mrb[0].mxu0 %v3980
        %v4048 = vpop.f32.mrb[0].mxu0
        %v4049 = vadd.f32 0.0, %v4048
        %v4050 = vpop.f32.mrb[0].mxu0
        %4051 = vdwg.mxu0
        %s4052 = scalar_lea.vmem %s6, 35
        %v4053 = vld [vmem:[%s4052] sm:$0x1]
        %v4055 = vlaneseq
        %v4056 = vshrl.u32 %v4055, 7
        %v4057 = vsub.s32 0, %v4056
        %v4058 = vrot.slane %v4053, %v4057
        %v4060 = vmul.f32 %v4049, %v4058
        %v4061 = vadd.f32 %v3970, %v4060
        %s4062 = scalar_lea.vmem %s5, 288
        %v4063 = vld [vmem:[%s4062] sm:$0xff]
        %4064 = vrot.lane.b32.xlu0 %v789, 87
        %v4065 = vpop.permute.xlu0 %4064
        %4066 = vrot.lane.b32.xlu0 %v790, 87
        %v4067 = vpop.permute.xlu0 %4066
        %v4071 = vsel %vm792, %v4063, 0
        %4073 = vmatprep.subr.mxu0 0.0
        %4074 = vmatpush1.msra.mxu0 %v4065
        %4075 = vmatprep.subr.mxu0 0.0
        %4076 = vmatpush1.msra.mxu0 %v4067
        %4077 = vmatprep.subr.mxu0 0.0
        %4078 = vmatpush1.msra.mxu0 0.0
        %4079 = vmatprep.subr.mxu0 0.0
        %4080 = vmatpush1.msra.mxu0 0.0
        %4081 = vmatprep.subr.mxu0 0.0
        %4082 = vmatpush1.msra.mxu0 0.0
        %4083 = vmatprep.subr.mxu0 0.0
        %4084 = vmatpush1.msra.mxu0 0.0
        %4085 = vmatprep.subr.mxu0 0.0
        %4086 = vmatpush1.msra.mxu0 0.0
        %4087 = vmatprep.subr.mxu0 0.0
        %4088 = vmatpush1.msra.mxu0 0.0
        %4089 = vmatprep.subr.mxu0 0.0
        %4090 = vmatpush1.msra.mxu0 0.0
        %4091 = vmatprep.subr.mxu0 0.0
        %4092 = vmatpush1.msra.mxu0 0.0
        %4093 = vmatprep.subr.mxu0 0.0
        %4094 = vmatpush1.msra.mxu0 0.0
        %4095 = vmatprep.subr.mxu0 0.0
        %4096 = vmatpush1.msra.mxu0 0.0
        %4097 = vmatprep.subr.mxu0 0.0
        %4098 = vmatpush1.msra.mxu0 0.0
        %4099 = vmatprep.subr.mxu0 0.0
        %4100 = vmatpush1.msra.mxu0 0.0
        %4101 = vmatprep.subr.mxu0 0.0
        %4102 = vmatpush1.msra.mxu0 0.0
        %4103 = vmatprep.subr.mxu0 0.0
        %4104 = vmatpush1.msra.mxu0 0.0
        %4105 = vmatprep.subr.mxu0 0.0
        %4106 = vmatpush1.msra.mxu0 0.0
        %4107 = vmatprep.subr.mxu0 0.0
        %4108 = vmatpush1.msra.mxu0 0.0
        %4109 = vmatprep.subr.mxu0 0.0
        %4110 = vmatpush1.msra.mxu0 0.0
        %4111 = vmatprep.subr.mxu0 0.0
        %4112 = vmatpush1.msra.mxu0 0.0
        %4113 = vmatprep.subr.mxu0 0.0
        %4114 = vmatpush1.msra.mxu0 0.0
        %4115 = vmatprep.subr.mxu0 0.0
        %4116 = vmatpush1.msra.mxu0 0.0
        %4117 = vmatprep.subr.mxu0 0.0
        %4118 = vmatpush1.msra.mxu0 0.0
        %4119 = vmatprep.subr.mxu0 0.0
        %4120 = vmatpush1.msra.mxu0 0.0
        %4121 = vmatprep.subr.mxu0 0.0
        %4122 = vmatpush1.msra.mxu0 0.0
        %4123 = vmatprep.subr.mxu0 0.0
        %4124 = vmatpush1.msra.mxu0 0.0
        %4125 = vmatprep.subr.mxu0 0.0
        %4126 = vmatpush1.msra.mxu0 0.0
        %4127 = vmatprep.subr.mxu0 0.0
        %4128 = vmatpush1.msra.mxu0 0.0
        %4129 = vmatprep.subr.mxu0 0.0
        %4130 = vmatpush1.msra.mxu0 0.0
        %4131 = vmatprep.subr.mxu0 0.0
        %4132 = vmatpush1.msra.mxu0 0.0
        %4133 = vmatprep.subr.mxu0 0.0
        %4134 = vmatpush1.msra.mxu0 0.0
        %4135 = vmatprep.subr.mxu0 0.0
        %4136 = vmatpush1.msra.mxu0 0.0
        %4137 = vmatprep.mubr.f32.mxu0 0.0
        %4138 = vmatmul.mubr.f32.gmra.mrb[0].mxu0 %v4071
        %v4139 = vpop.f32.mrb[0].mxu0
        %v4140 = vadd.f32 0.0, %v4139
        %v4141 = vpop.f32.mrb[0].mxu0
        %4142 = vdwg.mxu0
        %s4143 = scalar_lea.vmem %s6, 36
        %v4144 = vld [vmem:[%s4143] sm:$0x1]
        %v4146 = vlaneseq
        %v4147 = vshrl.u32 %v4146, 7
        %v4148 = vsub.s32 0, %v4147
        %v4149 = vrot.slane %v4144, %v4148
        %v4151 = vmul.f32 %v4140, %v4149
        %v4152 = vadd.f32 %v4061, %v4151
        %s4153 = scalar_lea.vmem %s5, 296
        %v4154 = vld [vmem:[%s4153] sm:$0xff]
        %4155 = vrot.lane.b32.xlu0 %v789, 86
        %v4156 = vpop.permute.xlu0 %4155
        %4157 = vrot.lane.b32.xlu0 %v790, 86
        %v4158 = vpop.permute.xlu0 %4157
        %v4162 = vsel %vm792, %v4154, 0
        %4164 = vmatprep.subr.mxu0 0.0
        %4165 = vmatpush1.msra.mxu0 %v4156
        %4166 = vmatprep.subr.mxu0 0.0
        %4167 = vmatpush1.msra.mxu0 %v4158
        %4168 = vmatprep.subr.mxu0 0.0
        %4169 = vmatpush1.msra.mxu0 0.0
        %4170 = vmatprep.subr.mxu0 0.0
        %4171 = vmatpush1.msra.mxu0 0.0
        %4172 = vmatprep.subr.mxu0 0.0
        %4173 = vmatpush1.msra.mxu0 0.0
        %4174 = vmatprep.subr.mxu0 0.0
        %4175 = vmatpush1.msra.mxu0 0.0
        %4176 = vmatprep.subr.mxu0 0.0
        %4177 = vmatpush1.msra.mxu0 0.0
        %4178 = vmatprep.subr.mxu0 0.0
        %4179 = vmatpush1.msra.mxu0 0.0
        %4180 = vmatprep.subr.mxu0 0.0
        %4181 = vmatpush1.msra.mxu0 0.0
        %4182 = vmatprep.subr.mxu0 0.0
        %4183 = vmatpush1.msra.mxu0 0.0
        %4184 = vmatprep.subr.mxu0 0.0
        %4185 = vmatpush1.msra.mxu0 0.0
        %4186 = vmatprep.subr.mxu0 0.0
        %4187 = vmatpush1.msra.mxu0 0.0
        %4188 = vmatprep.subr.mxu0 0.0
        %4189 = vmatpush1.msra.mxu0 0.0
        %4190 = vmatprep.subr.mxu0 0.0
        %4191 = vmatpush1.msra.mxu0 0.0
        %4192 = vmatprep.subr.mxu0 0.0
        %4193 = vmatpush1.msra.mxu0 0.0
        %4194 = vmatprep.subr.mxu0 0.0
        %4195 = vmatpush1.msra.mxu0 0.0
        %4196 = vmatprep.subr.mxu0 0.0
        %4197 = vmatpush1.msra.mxu0 0.0
        %4198 = vmatprep.subr.mxu0 0.0
        %4199 = vmatpush1.msra.mxu0 0.0
        %4200 = vmatprep.subr.mxu0 0.0
        %4201 = vmatpush1.msra.mxu0 0.0
        %4202 = vmatprep.subr.mxu0 0.0
        %4203 = vmatpush1.msra.mxu0 0.0
        %4204 = vmatprep.subr.mxu0 0.0
        %4205 = vmatpush1.msra.mxu0 0.0
        %4206 = vmatprep.subr.mxu0 0.0
        %4207 = vmatpush1.msra.mxu0 0.0
        %4208 = vmatprep.subr.mxu0 0.0
        %4209 = vmatpush1.msra.mxu0 0.0
        %4210 = vmatprep.subr.mxu0 0.0
        %4211 = vmatpush1.msra.mxu0 0.0
        %4212 = vmatprep.subr.mxu0 0.0
        %4213 = vmatpush1.msra.mxu0 0.0
        %4214 = vmatprep.subr.mxu0 0.0
        %4215 = vmatpush1.msra.mxu0 0.0
        %4216 = vmatprep.subr.mxu0 0.0
        %4217 = vmatpush1.msra.mxu0 0.0
        %4218 = vmatprep.subr.mxu0 0.0
        %4219 = vmatpush1.msra.mxu0 0.0
        %4220 = vmatprep.subr.mxu0 0.0
        %4221 = vmatpush1.msra.mxu0 0.0
        %4222 = vmatprep.subr.mxu0 0.0
        %4223 = vmatpush1.msra.mxu0 0.0
        %4224 = vmatprep.subr.mxu0 0.0
        %4225 = vmatpush1.msra.mxu0 0.0
        %4226 = vmatprep.subr.mxu0 0.0
        %4227 = vmatpush1.msra.mxu0 0.0
        %4228 = vmatprep.mubr.f32.mxu0 0.0
        %4229 = vmatmul.mubr.f32.gmra.mrb[0].mxu0 %v4162
        %v4230 = vpop.f32.mrb[0].mxu0
        %v4231 = vadd.f32 0.0, %v4230
        %v4232 = vpop.f32.mrb[0].mxu0
        %4233 = vdwg.mxu0
        %s4234 = scalar_lea.vmem %s6, 37
        %v4235 = vld [vmem:[%s4234] sm:$0x1]
        %v4237 = vlaneseq
        %v4238 = vshrl.u32 %v4237, 7
        %v4239 = vsub.s32 0, %v4238
        %v4240 = vrot.slane %v4235, %v4239
        %v4242 = vmul.f32 %v4231, %v4240
        %v4243 = vadd.f32 %v4152, %v4242
        %s4244 = scalar_lea.vmem %s5, 304
        %v4245 = vld [vmem:[%s4244] sm:$0xff]
        %4246 = vrot.lane.b32.xlu0 %v789, 85
        %v4247 = vpop.permute.xlu0 %4246
        %4248 = vrot.lane.b32.xlu0 %v790, 85
        %v4249 = vpop.permute.xlu0 %4248
        %v4253 = vsel %vm792, %v4245, 0
        %4255 = vmatprep.subr.mxu0 0.0
        %4256 = vmatpush1.msra.mxu0 %v4247
        %4257 = vmatprep.subr.mxu0 0.0
        %4258 = vmatpush1.msra.mxu0 %v4249
        %4259 = vmatprep.subr.mxu0 0.0
        %4260 = vmatpush1.msra.mxu0 0.0
        %4261 = vmatprep.subr.mxu0 0.0
        %4262 = vmatpush1.msra.mxu0 0.0
        %4263 = vmatprep.subr.mxu0 0.0
        %4264 = vmatpush1.msra.mxu0 0.0
        %4265 = vmatprep.subr.mxu0 0.0
        %4266 = vmatpush1.msra.mxu0 0.0
        %4267 = vmatprep.subr.mxu0 0.0
        %4268 = vmatpush1.msra.mxu0 0.0
        %4269 = vmatprep.subr.mxu0 0.0
        %4270 = vmatpush1.msra.mxu0 0.0
        %4271 = vmatprep.subr.mxu0 0.0
        %4272 = vmatpush1.msra.mxu0 0.0
        %4273 = vmatprep.subr.mxu0 0.0
        %4274 = vmatpush1.msra.mxu0 0.0
        %4275 = vmatprep.subr.mxu0 0.0
        %4276 = vmatpush1.msra.mxu0 0.0
        %4277 = vmatprep.subr.mxu0 0.0
        %4278 = vmatpush1.msra.mxu0 0.0
        %4279 = vmatprep.subr.mxu0 0.0
        %4280 = vmatpush1.msra.mxu0 0.0
        %4281 = vmatprep.subr.mxu0 0.0
        %4282 = vmatpush1.msra.mxu0 0.0
        %4283 = vmatprep.subr.mxu0 0.0
        %4284 = vmatpush1.msra.mxu0 0.0
        %4285 = vmatprep.subr.mxu0 0.0
        %4286 = vmatpush1.msra.mxu0 0.0
        %4287 = vmatprep.subr.mxu0 0.0
        %4288 = vmatpush1.msra.mxu0 0.0
        %4289 = vmatprep.subr.mxu0 0.0
        %4290 = vmatpush1.msra.mxu0 0.0
        %4291 = vmatprep.subr.mxu0 0.0
        %4292 = vmatpush1.msra.mxu0 0.0
        %4293 = vmatprep.subr.mxu0 0.0
        %4294 = vmatpush1.msra.mxu0 0.0
        %4295 = vmatprep.subr.mxu0 0.0
        %4296 = vmatpush1.msra.mxu0 0.0
        %4297 = vmatprep.subr.mxu0 0.0
        %4298 = vmatpush1.msra.mxu0 0.0
        %4299 = vmatprep.subr.mxu0 0.0
        %4300 = vmatpush1.msra.mxu0 0.0
        %4301 = vmatprep.subr.mxu0 0.0
        %4302 = vmatpush1.msra.mxu0 0.0
        %4303 = vmatprep.subr.mxu0 0.0
        %4304 = vmatpush1.msra.mxu0 0.0
        %4305 = vmatprep.subr.mxu0 0.0
        %4306 = vmatpush1.msra.mxu0 0.0
        %4307 = vmatprep.subr.mxu0 0.0
        %4308 = vmatpush1.msra.mxu0 0.0
        %4309 = vmatprep.subr.mxu0 0.0
        %4310 = vmatpush1.msra.mxu0 0.0
        %4311 = vmatprep.subr.mxu0 0.0
        %4312 = vmatpush1.msra.mxu0 0.0
        %4313 = vmatprep.subr.mxu0 0.0
        %4314 = vmatpush1.msra.mxu0 0.0
        %4315 = vmatprep.subr.mxu0 0.0
        %4316 = vmatpush1.msra.mxu0 0.0
        %4317 = vmatprep.subr.mxu0 0.0
        %4318 = vmatpush1.msra.mxu0 0.0
        %4319 = vmatprep.mubr.f32.mxu0 0.0
        %4320 = vmatmul.mubr.f32.gmra.mrb[0].mxu0 %v4253
        %v4321 = vpop.f32.mrb[0].mxu0
        %v4322 = vadd.f32 0.0, %v4321
        %v4323 = vpop.f32.mrb[0].mxu0
        %4324 = vdwg.mxu0
        %s4325 = scalar_lea.vmem %s6, 38
        %v4326 = vld [vmem:[%s4325] sm:$0x1]
        %v4328 = vlaneseq
        %v4329 = vshrl.u32 %v4328, 7
        %v4330 = vsub.s32 0, %v4329
        %v4331 = vrot.slane %v4326, %v4330
        %v4333 = vmul.f32 %v4322, %v4331
        %v4334 = vadd.f32 %v4243, %v4333
        %s4335 = scalar_lea.vmem %s5, 312
        %v4336 = vld [vmem:[%s4335] sm:$0xff]
        %4337 = vrot.lane.b32.xlu0 %v789, 84
        %v4338 = vpop.permute.xlu0 %4337
        %4339 = vrot.lane.b32.xlu0 %v790, 84
        %v4340 = vpop.permute.xlu0 %4339
        %v4344 = vsel %vm792, %v4336, 0
        %4346 = vmatprep.subr.mxu0 0.0
        %4347 = vmatpush1.msra.mxu0 %v4338
        %4348 = vmatprep.subr.mxu0 0.0
        %4349 = vmatpush1.msra.mxu0 %v4340
        %4350 = vmatprep.subr.mxu0 0.0
        %4351 = vmatpush1.msra.mxu0 0.0
        %4352 = vmatprep.subr.mxu0 0.0
        %4353 = vmatpush1.msra.mxu0 0.0
        %4354 = vmatprep.subr.mxu0 0.0
        %4355 = vmatpush1.msra.mxu0 0.0
        %4356 = vmatprep.subr.mxu0 0.0
        %4357 = vmatpush1.msra.mxu0 0.0
        %4358 = vmatprep.subr.mxu0 0.0
        %4359 = vmatpush1.msra.mxu0 0.0
        %4360 = vmatprep.subr.mxu0 0.0
        %4361 = vmatpush1.msra.mxu0 0.0
        %4362 = vmatprep.subr.mxu0 0.0
        %4363 = vmatpush1.msra.mxu0 0.0
        %4364 = vmatprep.subr.mxu0 0.0
        %4365 = vmatpush1.msra.mxu0 0.0
        %4366 = vmatprep.subr.mxu0 0.0
        %4367 = vmatpush1.msra.mxu0 0.0
        %4368 = vmatprep.subr.mxu0 0.0
        %4369 = vmatpush1.msra.mxu0 0.0
        %4370 = vmatprep.subr.mxu0 0.0
        %4371 = vmatpush1.msra.mxu0 0.0
        %4372 = vmatprep.subr.mxu0 0.0
        %4373 = vmatpush1.msra.mxu0 0.0
        %4374 = vmatprep.subr.mxu0 0.0
        %4375 = vmatpush1.msra.mxu0 0.0
        %4376 = vmatprep.subr.mxu0 0.0
        %4377 = vmatpush1.msra.mxu0 0.0
        %4378 = vmatprep.subr.mxu0 0.0
        %4379 = vmatpush1.msra.mxu0 0.0
        %4380 = vmatprep.subr.mxu0 0.0
        %4381 = vmatpush1.msra.mxu0 0.0
        %4382 = vmatprep.subr.mxu0 0.0
        %4383 = vmatpush1.msra.mxu0 0.0
        %4384 = vmatprep.subr.mxu0 0.0
        %4385 = vmatpush1.msra.mxu0 0.0
        %4386 = vmatprep.subr.mxu0 0.0
        %4387 = vmatpush1.msra.mxu0 0.0
        %4388 = vmatprep.subr.mxu0 0.0
        %4389 = vmatpush1.msra.mxu0 0.0
        %4390 = vmatprep.subr.mxu0 0.0
        %4391 = vmatpush1.msra.mxu0 0.0
        %4392 = vmatprep.subr.mxu0 0.0
        %4393 = vmatpush1.msra.mxu0 0.0
        %4394 = vmatprep.subr.mxu0 0.0
        %4395 = vmatpush1.msra.mxu0 0.0
        %4396 = vmatprep.subr.mxu0 0.0
        %4397 = vmatpush1.msra.mxu0 0.0
        %4398 = vmatprep.subr.mxu0 0.0
        %4399 = vmatpush1.msra.mxu0 0.0
        %4400 = vmatprep.subr.mxu0 0.0
        %4401 = vmatpush1.msra.mxu0 0.0
        %4402 = vmatprep.subr.mxu0 0.0
        %4403 = vmatpush1.msra.mxu0 0.0
        %4404 = vmatprep.subr.mxu0 0.0
        %4405 = vmatpush1.msra.mxu0 0.0
        %4406 = vmatprep.subr.mxu0 0.0
        %4407 = vmatpush1.msra.mxu0 0.0
        %4408 = vmatprep.subr.mxu0 0.0
        %4409 = vmatpush1.msra.mxu0 0.0
        %4410 = vmatprep.mubr.f32.mxu0 0.0
        %4411 = vmatmul.mubr.f32.gmra.mrb[0].mxu0 %v4344
        %v4412 = vpop.f32.mrb[0].mxu0
        %v4413 = vadd.f32 0.0, %v4412
        %v4414 = vpop.f32.mrb[0].mxu0
        %4415 = vdwg.mxu0
        %s4416 = scalar_lea.vmem %s6, 39
        %v4417 = vld [vmem:[%s4416] sm:$0x1]
        %v4419 = vlaneseq
        %v4420 = vshrl.u32 %v4419, 7
        %v4421 = vsub.s32 0, %v4420
        %v4422 = vrot.slane %v4417, %v4421
        %v4424 = vmul.f32 %v4413, %v4422
        %v4425 = vadd.f32 %v4334, %v4424
        %s4426 = scalar_lea.vmem %s5, 320
        %v4427 = vld [vmem:[%s4426] sm:$0xff]
        %4428 = vrot.lane.b32.xlu0 %v789, 83
        %v4429 = vpop.permute.xlu0 %4428
        %4430 = vrot.lane.b32.xlu0 %v790, 83
        %v4431 = vpop.permute.xlu0 %4430
        %v4435 = vsel %vm792, %v4427, 0
        %4437 = vmatprep.subr.mxu0 0.0
        %4438 = vmatpush1.msra.mxu0 %v4429
        %4439 = vmatprep.subr.mxu0 0.0
        %4440 = vmatpush1.msra.mxu0 %v4431
        %4441 = vmatprep.subr.mxu0 0.0
        %4442 = vmatpush1.msra.mxu0 0.0
        %4443 = vmatprep.subr.mxu0 0.0
        %4444 = vmatpush1.msra.mxu0 0.0
        %4445 = vmatprep.subr.mxu0 0.0
        %4446 = vmatpush1.msra.mxu0 0.0
        %4447 = vmatprep.subr.mxu0 0.0
        %4448 = vmatpush1.msra.mxu0 0.0
        %4449 = vmatprep.subr.mxu0 0.0
        %4450 = vmatpush1.msra.mxu0 0.0
        %4451 = vmatprep.subr.mxu0 0.0
        %4452 = vmatpush1.msra.mxu0 0.0
        %4453 = vmatprep.subr.mxu0 0.0
        %4454 = vmatpush1.msra.mxu0 0.0
        %4455 = vmatprep.subr.mxu0 0.0
        %4456 = vmatpush1.msra.mxu0 0.0
        %4457 = vmatprep.subr.mxu0 0.0
        %4458 = vmatpush1.msra.mxu0 0.0
        %4459 = vmatprep.subr.mxu0 0.0
        %4460 = vmatpush1.msra.mxu0 0.0
        %4461 = vmatprep.subr.mxu0 0.0
        %4462 = vmatpush1.msra.mxu0 0.0
        %4463 = vmatprep.subr.mxu0 0.0
        %4464 = vmatpush1.msra.mxu0 0.0
        %4465 = vmatprep.subr.mxu0 0.0
        %4466 = vmatpush1.msra.mxu0 0.0
        %4467 = vmatprep.subr.mxu0 0.0
        %4468 = vmatpush1.msra.mxu0 0.0
        %4469 = vmatprep.subr.mxu0 0.0
        %4470 = vmatpush1.msra.mxu0 0.0
        %4471 = vmatprep.subr.mxu0 0.0
        %4472 = vmatpush1.msra.mxu0 0.0
        %4473 = vmatprep.subr.mxu0 0.0
        %4474 = vmatpush1.msra.mxu0 0.0
        %4475 = vmatprep.subr.mxu0 0.0
        %4476 = vmatpush1.msra.mxu0 0.0
        %4477 = vmatprep.subr.mxu0 0.0
        %4478 = vmatpush1.msra.mxu0 0.0
        %4479 = vmatprep.subr.mxu0 0.0
        %4480 = vmatpush1.msra.mxu0 0.0
        %4481 = vmatprep.subr.mxu0 0.0
        %4482 = vmatpush1.msra.mxu0 0.0
        %4483 = vmatprep.subr.mxu0 0.0
        %4484 = vmatpush1.msra.mxu0 0.0
        %4485 = vmatprep.subr.mxu0 0.0
        %4486 = vmatpush1.msra.mxu0 0.0
        %4487 = vmatprep.subr.mxu0 0.0
        %4488 = vmatpush1.msra.mxu0 0.0
        %4489 = vmatprep.subr.mxu0 0.0
        %4490 = vmatpush1.msra.mxu0 0.0
        %4491 = vmatprep.subr.mxu0 0.0
        %4492 = vmatpush1.msra.mxu0 0.0
        %4493 = vmatprep.subr.mxu0 0.0
        %4494 = vmatpush1.msra.mxu0 0.0
        %4495 = vmatprep.subr.mxu0 0.0
        %4496 = vmatpush1.msra.mxu0 0.0
        %4497 = vmatprep.subr.mxu0 0.0
        %4498 = vmatpush1.msra.mxu0 0.0
        %4499 = vmatprep.subr.mxu0 0.0
        %4500 = vmatpush1.msra.mxu0 0.0
        %4501 = vmatprep.mubr.f32.mxu0 0.0
        %4502 = vmatmul.mubr.f32.gmra.mrb[0].mxu0 %v4435
        %v4503 = vpop.f32.mrb[0].mxu0
        %v4504 = vadd.f32 0.0, %v4503
        %v4505 = vpop.f32.mrb[0].mxu0
        %4506 = vdwg.mxu0
        %s4507 = scalar_lea.vmem %s6, 40
        %v4508 = vld [vmem:[%s4507] sm:$0x1]
        %v4510 = vlaneseq
        %v4511 = vshrl.u32 %v4510, 7
        %v4512 = vsub.s32 0, %v4511
        %v4513 = vrot.slane %v4508, %v4512
        %v4515 = vmul.f32 %v4504, %v4513
        %v4516 = vadd.f32 %v4425, %v4515
        %s4517 = scalar_lea.vmem %s5, 328
        %v4518 = vld [vmem:[%s4517] sm:$0xff]
        %4519 = vrot.lane.b32.xlu0 %v789, 82
        %v4520 = vpop.permute.xlu0 %4519
        %4521 = vrot.lane.b32.xlu0 %v790, 82
        %v4522 = vpop.permute.xlu0 %4521
        %v4526 = vsel %vm792, %v4518, 0
        %4528 = vmatprep.subr.mxu0 0.0
        %4529 = vmatpush1.msra.mxu0 %v4520
        %4530 = vmatprep.subr.mxu0 0.0
        %4531 = vmatpush1.msra.mxu0 %v4522
        %4532 = vmatprep.subr.mxu0 0.0
        %4533 = vmatpush1.msra.mxu0 0.0
        %4534 = vmatprep.subr.mxu0 0.0
        %4535 = vmatpush1.msra.mxu0 0.0
        %4536 = vmatprep.subr.mxu0 0.0
        %4537 = vmatpush1.msra.mxu0 0.0
        %4538 = vmatprep.subr.mxu0 0.0
        %4539 = vmatpush1.msra.mxu0 0.0
        %4540 = vmatprep.subr.mxu0 0.0
        %4541 = vmatpush1.msra.mxu0 0.0
        %4542 = vmatprep.subr.mxu0 0.0
        %4543 = vmatpush1.msra.mxu0 0.0
        %4544 = vmatprep.subr.mxu0 0.0
        %4545 = vmatpush1.msra.mxu0 0.0
        %4546 = vmatprep.subr.mxu0 0.0
        %4547 = vmatpush1.msra.mxu0 0.0
        %4548 = vmatprep.subr.mxu0 0.0
        %4549 = vmatpush1.msra.mxu0 0.0
        %4550 = vmatprep.subr.mxu0 0.0
        %4551 = vmatpush1.msra.mxu0 0.0
        %4552 = vmatprep.subr.mxu0 0.0
        %4553 = vmatpush1.msra.mxu0 0.0
        %4554 = vmatprep.subr.mxu0 0.0
        %4555 = vmatpush1.msra.mxu0 0.0
        %4556 = vmatprep.subr.mxu0 0.0
        %4557 = vmatpush1.msra.mxu0 0.0
        %4558 = vmatprep.subr.mxu0 0.0
        %4559 = vmatpush1.msra.mxu0 0.0
        %4560 = vmatprep.subr.mxu0 0.0
        %4561 = vmatpush1.msra.mxu0 0.0
        %4562 = vmatprep.subr.mxu0 0.0
        %4563 = vmatpush1.msra.mxu0 0.0
        %4564 = vmatprep.subr.mxu0 0.0
        %4565 = vmatpush1.msra.mxu0 0.0
        %4566 = vmatprep.subr.mxu0 0.0
        %4567 = vmatpush1.msra.mxu0 0.0
        %4568 = vmatprep.subr.mxu0 0.0
        %4569 = vmatpush1.msra.mxu0 0.0
        %4570 = vmatprep.subr.mxu0 0.0
        %4571 = vmatpush1.msra.mxu0 0.0
        %4572 = vmatprep.subr.mxu0 0.0
        %4573 = vmatpush1.msra.mxu0 0.0
        %4574 = vmatprep.subr.mxu0 0.0
        %4575 = vmatpush1.msra.mxu0 0.0
        %4576 = vmatprep.subr.mxu0 0.0
        %4577 = vmatpush1.msra.mxu0 0.0
        %4578 = vmatprep.subr.mxu0 0.0
        %4579 = vmatpush1.msra.mxu0 0.0
        %4580 = vmatprep.subr.mxu0 0.0
        %4581 = vmatpush1.msra.mxu0 0.0
        %4582 = vmatprep.subr.mxu0 0.0
        %4583 = vmatpush1.msra.mxu0 0.0
        %4584 = vmatprep.subr.mxu0 0.0
        %4585 = vmatpush1.msra.mxu0 0.0
        %4586 = vmatprep.subr.mxu0 0.0
        %4587 = vmatpush1.msra.mxu0 0.0
        %4588 = vmatprep.subr.mxu0 0.0
        %4589 = vmatpush1.msra.mxu0 0.0
        %4590 = vmatprep.subr.mxu0 0.0
        %4591 = vmatpush1.msra.mxu0 0.0
        %4592 = vmatprep.mubr.f32.mxu0 0.0
        %4593 = vmatmul.mubr.f32.gmra.mrb[0].mxu0 %v4526
        %v4594 = vpop.f32.mrb[0].mxu0
        %v4595 = vadd.f32 0.0, %v4594
        %v4596 = vpop.f32.mrb[0].mxu0
        %4597 = vdwg.mxu0
        %s4598 = scalar_lea.vmem %s6, 41
        %v4599 = vld [vmem:[%s4598] sm:$0x1]
        %v4601 = vlaneseq
        %v4602 = vshrl.u32 %v4601, 7
        %v4603 = vsub.s32 0, %v4602
        %v4604 = vrot.slane %v4599, %v4603
        %v4606 = vmul.f32 %v4595, %v4604
        %v4607 = vadd.f32 %v4516, %v4606
        %s4608 = scalar_lea.vmem %s5, 336
        %v4609 = vld [vmem:[%s4608] sm:$0xff]
        %4610 = vrot.lane.b32.xlu0 %v789, 80
        %v4611 = vpop.permute.xlu0 %4610
        %4612 = vrot.lane.b32.xlu0 %v790, 80
        %v4613 = vpop.permute.xlu0 %4612
        %v4617 = vsel %vm792, %v4609, 0
        %4619 = vmatprep.subr.mxu0 0.0
        %4620 = vmatpush1.msra.mxu0 %v4611
        %4621 = vmatprep.subr.mxu0 0.0
        %4622 = vmatpush1.msra.mxu0 %v4613
        %4623 = vmatprep.subr.mxu0 0.0
        %4624 = vmatpush1.msra.mxu0 0.0
        %4625 = vmatprep.subr.mxu0 0.0
        %4626 = vmatpush1.msra.mxu0 0.0
        %4627 = vmatprep.subr.mxu0 0.0
        %4628 = vmatpush1.msra.mxu0 0.0
        %4629 = vmatprep.subr.mxu0 0.0
        %4630 = vmatpush1.msra.mxu0 0.0
        %4631 = vmatprep.subr.mxu0 0.0
        %4632 = vmatpush1.msra.mxu0 0.0
        %4633 = vmatprep.subr.mxu0 0.0
        %4634 = vmatpush1.msra.mxu0 0.0
        %4635 = vmatprep.subr.mxu0 0.0
        %4636 = vmatpush1.msra.mxu0 0.0
        %4637 = vmatprep.subr.mxu0 0.0
        %4638 = vmatpush1.msra.mxu0 0.0
        %4639 = vmatprep.subr.mxu0 0.0
        %4640 = vmatpush1.msra.mxu0 0.0
        %4641 = vmatprep.subr.mxu0 0.0
        %4642 = vmatpush1.msra.mxu0 0.0
        %4643 = vmatprep.subr.mxu0 0.0
        %4644 = vmatpush1.msra.mxu0 0.0
        %4645 = vmatprep.subr.mxu0 0.0
        %4646 = vmatpush1.msra.mxu0 0.0
        %4647 = vmatprep.subr.mxu0 0.0
        %4648 = vmatpush1.msra.mxu0 0.0
        %4649 = vmatprep.subr.mxu0 0.0
        %4650 = vmatpush1.msra.mxu0 0.0
        %4651 = vmatprep.subr.mxu0 0.0
        %4652 = vmatpush1.msra.mxu0 0.0
        %4653 = vmatprep.subr.mxu0 0.0
        %4654 = vmatpush1.msra.mxu0 0.0
        %4655 = vmatprep.subr.mxu0 0.0
        %4656 = vmatpush1.msra.mxu0 0.0
        %4657 = vmatprep.subr.mxu0 0.0
        %4658 = vmatpush1.msra.mxu0 0.0
        %4659 = vmatprep.subr.mxu0 0.0
        %4660 = vmatpush1.msra.mxu0 0.0
        %4661 = vmatprep.subr.mxu0 0.0
        %4662 = vmatpush1.msra.mxu0 0.0
        %4663 = vmatprep.subr.mxu0 0.0
        %4664 = vmatpush1.msra.mxu0 0.0
        %4665 = vmatprep.subr.mxu0 0.0
        %4666 = vmatpush1.msra.mxu0 0.0
        %4667 = vmatprep.subr.mxu0 0.0
        %4668 = vmatpush1.msra.mxu0 0.0
        %4669 = vmatprep.subr.mxu0 0.0
        %4670 = vmatpush1.msra.mxu0 0.0
        %4671 = vmatprep.subr.mxu0 0.0
        %4672 = vmatpush1.msra.mxu0 0.0
        %4673 = vmatprep.subr.mxu0 0.0
        %4674 = vmatpush1.msra.mxu0 0.0
        %4675 = vmatprep.subr.mxu0 0.0
        %4676 = vmatpush1.msra.mxu0 0.0
        %4677 = vmatprep.subr.mxu0 0.0
        %4678 = vmatpush1.msra.mxu0 0.0
        %4679 = vmatprep.subr.mxu0 0.0
        %4680 = vmatpush1.msra.mxu0 0.0
        %4681 = vmatprep.subr.mxu0 0.0
        %4682 = vmatpush1.msra.mxu0 0.0
        %4683 = vmatprep.mubr.f32.mxu0 0.0
        %4684 = vmatmul.mubr.f32.gmra.mrb[0].mxu0 %v4617
        %v4685 = vpop.f32.mrb[0].mxu0
        %v4686 = vadd.f32 0.0, %v4685
        %v4687 = vpop.f32.mrb[0].mxu0
        %4688 = vdwg.mxu0
        %s4689 = scalar_lea.vmem %s6, 42
        %v4690 = vld [vmem:[%s4689] sm:$0x1]
        %v4692 = vlaneseq
        %v4693 = vshrl.u32 %v4692, 7
        %v4694 = vsub.s32 0, %v4693
        %v4695 = vrot.slane %v4690, %v4694
        %v4697 = vmul.f32 %v4686, %v4695
        %v4698 = vadd.f32 %v4607, %v4697
        %s4699 = scalar_lea.vmem %s5, 344
        %v4700 = vld [vmem:[%s4699] sm:$0xff]
        %4701 = vrot.lane.b32.xlu0 %v789, 79
        %v4702 = vpop.permute.xlu0 %4701
        %4703 = vrot.lane.b32.xlu0 %v790, 79
        %v4704 = vpop.permute.xlu0 %4703
        %v4708 = vsel %vm792, %v4700, 0
        %4710 = vmatprep.subr.mxu0 0.0
        %4711 = vmatpush1.msra.mxu0 %v4702
        %4712 = vmatprep.subr.mxu0 0.0
        %4713 = vmatpush1.msra.mxu0 %v4704
        %4714 = vmatprep.subr.mxu0 0.0
        %4715 = vmatpush1.msra.mxu0 0.0
        %4716 = vmatprep.subr.mxu0 0.0
        %4717 = vmatpush1.msra.mxu0 0.0
        %4718 = vmatprep.subr.mxu0 0.0
        %4719 = vmatpush1.msra.mxu0 0.0
        %4720 = vmatprep.subr.mxu0 0.0
        %4721 = vmatpush1.msra.mxu0 0.0
        %4722 = vmatprep.subr.mxu0 0.0
        %4723 = vmatpush1.msra.mxu0 0.0
        %4724 = vmatprep.subr.mxu0 0.0
        %4725 = vmatpush1.msra.mxu0 0.0
        %4726 = vmatprep.subr.mxu0 0.0
        %4727 = vmatpush1.msra.mxu0 0.0
        %4728 = vmatprep.subr.mxu0 0.0
        %4729 = vmatpush1.msra.mxu0 0.0
        %4730 = vmatprep.subr.mxu0 0.0
        %4731 = vmatpush1.msra.mxu0 0.0
        %4732 = vmatprep.subr.mxu0 0.0
        %4733 = vmatpush1.msra.mxu0 0.0
        %4734 = vmatprep.subr.mxu0 0.0
        %4735 = vmatpush1.msra.mxu0 0.0
        %4736 = vmatprep.subr.mxu0 0.0
        %4737 = vmatpush1.msra.mxu0 0.0
        %4738 = vmatprep.subr.mxu0 0.0
        %4739 = vmatpush1.msra.mxu0 0.0
        %4740 = vmatprep.subr.mxu0 0.0
        %4741 = vmatpush1.msra.mxu0 0.0
        %4742 = vmatprep.subr.mxu0 0.0
        %4743 = vmatpush1.msra.mxu0 0.0
        %4744 = vmatprep.subr.mxu0 0.0
        %4745 = vmatpush1.msra.mxu0 0.0
        %4746 = vmatprep.subr.mxu0 0.0
        %4747 = vmatpush1.msra.mxu0 0.0
        %4748 = vmatprep.subr.mxu0 0.0
        %4749 = vmatpush1.msra.mxu0 0.0
        %4750 = vmatprep.subr.mxu0 0.0
        %4751 = vmatpush1.msra.mxu0 0.0
        %4752 = vmatprep.subr.mxu0 0.0
        %4753 = vmatpush1.msra.mxu0 0.0
        %4754 = vmatprep.subr.mxu0 0.0
        %4755 = vmatpush1.msra.mxu0 0.0
        %4756 = vmatprep.subr.mxu0 0.0
        %4757 = vmatpush1.msra.mxu0 0.0
        %4758 = vmatprep.subr.mxu0 0.0
        %4759 = vmatpush1.msra.mxu0 0.0
        %4760 = vmatprep.subr.mxu0 0.0
        %4761 = vmatpush1.msra.mxu0 0.0
        %4762 = vmatprep.subr.mxu0 0.0
        %4763 = vmatpush1.msra.mxu0 0.0
        %4764 = vmatprep.subr.mxu0 0.0
        %4765 = vmatpush1.msra.mxu0 0.0
        %4766 = vmatprep.subr.mxu0 0.0
        %4767 = vmatpush1.msra.mxu0 0.0
        %4768 = vmatprep.subr.mxu0 0.0
        %4769 = vmatpush1.msra.mxu0 0.0
        %4770 = vmatprep.subr.mxu0 0.0
        %4771 = vmatpush1.msra.mxu0 0.0
        %4772 = vmatprep.subr.mxu0 0.0
        %4773 = vmatpush1.msra.mxu0 0.0
        %4774 = vmatprep.mubr.f32.mxu0 0.0
        %4775 = vmatmul.mubr.f32.gmra.mrb[0].mxu0 %v4708
        %v4776 = vpop.f32.mrb[0].mxu0
        %v4777 = vadd.f32 0.0, %v4776
        %v4778 = vpop.f32.mrb[0].mxu0
        %4779 = vdwg.mxu0
        %s4780 = scalar_lea.vmem %s6, 43
        %v4781 = vld [vmem:[%s4780] sm:$0x1]
        %v4783 = vlaneseq
        %v4784 = vshrl.u32 %v4783, 7
        %v4785 = vsub.s32 0, %v4784
        %v4786 = vrot.slane %v4781, %v4785
        %v4788 = vmul.f32 %v4777, %v4786
        %v4789 = vadd.f32 %v4698, %v4788
        %s4790 = scalar_lea.vmem %s5, 352
        %v4791 = vld [vmem:[%s4790] sm:$0xff]
        %4792 = vrot.lane.b32.xlu0 %v789, 78
        %v4793 = vpop.permute.xlu0 %4792
        %4794 = vrot.lane.b32.xlu0 %v790, 78
        %v4795 = vpop.permute.xlu0 %4794
        %v4799 = vsel %vm792, %v4791, 0
        %4801 = vmatprep.subr.mxu0 0.0
        %4802 = vmatpush1.msra.mxu0 %v4793
        %4803 = vmatprep.subr.mxu0 0.0
        %4804 = vmatpush1.msra.mxu0 %v4795
        %4805 = vmatprep.subr.mxu0 0.0
        %4806 = vmatpush1.msra.mxu0 0.0
        %4807 = vmatprep.subr.mxu0 0.0
        %4808 = vmatpush1.msra.mxu0 0.0
        %4809 = vmatprep.subr.mxu0 0.0
        %4810 = vmatpush1.msra.mxu0 0.0
        %4811 = vmatprep.subr.mxu0 0.0
        %4812 = vmatpush1.msra.mxu0 0.0
        %4813 = vmatprep.subr.mxu0 0.0
        %4814 = vmatpush1.msra.mxu0 0.0
        %4815 = vmatprep.subr.mxu0 0.0
        %4816 = vmatpush1.msra.mxu0 0.0
        %4817 = vmatprep.subr.mxu0 0.0
        %4818 = vmatpush1.msra.mxu0 0.0
        %4819 = vmatprep.subr.mxu0 0.0
        %4820 = vmatpush1.msra.mxu0 0.0
        %4821 = vmatprep.subr.mxu0 0.0
        %4822 = vmatpush1.msra.mxu0 0.0
        %4823 = vmatprep.subr.mxu0 0.0
        %4824 = vmatpush1.msra.mxu0 0.0
        %4825 = vmatprep.subr.mxu0 0.0
        %4826 = vmatpush1.msra.mxu0 0.0
        %4827 = vmatprep.subr.mxu0 0.0
        %4828 = vmatpush1.msra.mxu0 0.0
        %4829 = vmatprep.subr.mxu0 0.0
        %4830 = vmatpush1.msra.mxu0 0.0
        %4831 = vmatprep.subr.mxu0 0.0
        %4832 = vmatpush1.msra.mxu0 0.0
        %4833 = vmatprep.subr.mxu0 0.0
        %4834 = vmatpush1.msra.mxu0 0.0
        %4835 = vmatprep.subr.mxu0 0.0
        %4836 = vmatpush1.msra.mxu0 0.0
        %4837 = vmatprep.subr.mxu0 0.0
        %4838 = vmatpush1.msra.mxu0 0.0
        %4839 = vmatprep.subr.mxu0 0.0
        %4840 = vmatpush1.msra.mxu0 0.0
        %4841 = vmatprep.subr.mxu0 0.0
        %4842 = vmatpush1.msra.mxu0 0.0
        %4843 = vmatprep.subr.mxu0 0.0
        %4844 = vmatpush1.msra.mxu0 0.0
        %4845 = vmatprep.subr.mxu0 0.0
        %4846 = vmatpush1.msra.mxu0 0.0
        %4847 = vmatprep.subr.mxu0 0.0
        %4848 = vmatpush1.msra.mxu0 0.0
        %4849 = vmatprep.subr.mxu0 0.0
        %4850 = vmatpush1.msra.mxu0 0.0
        %4851 = vmatprep.subr.mxu0 0.0
        %4852 = vmatpush1.msra.mxu0 0.0
        %4853 = vmatprep.subr.mxu0 0.0
        %4854 = vmatpush1.msra.mxu0 0.0
        %4855 = vmatprep.subr.mxu0 0.0
        %4856 = vmatpush1.msra.mxu0 0.0
        %4857 = vmatprep.subr.mxu0 0.0
        %4858 = vmatpush1.msra.mxu0 0.0
        %4859 = vmatprep.subr.mxu0 0.0
        %4860 = vmatpush1.msra.mxu0 0.0
        %4861 = vmatprep.subr.mxu0 0.0
        %4862 = vmatpush1.msra.mxu0 0.0
        %4863 = vmatprep.subr.mxu0 0.0
        %4864 = vmatpush1.msra.mxu0 0.0
        %4865 = vmatprep.mubr.f32.mxu0 0.0
        %4866 = vmatmul.mubr.f32.gmra.mrb[0].mxu0 %v4799
        %v4867 = vpop.f32.mrb[0].mxu0
        %v4868 = vadd.f32 0.0, %v4867
        %v4869 = vpop.f32.mrb[0].mxu0
        %4870 = vdwg.mxu0
        %s4871 = scalar_lea.vmem %s6, 44
        %v4872 = vld [vmem:[%s4871] sm:$0x1]
        %v4874 = vlaneseq
        %v4875 = vshrl.u32 %v4874, 7
        %v4876 = vsub.s32 0, %v4875
        %v4877 = vrot.slane %v4872, %v4876
        %v4879 = vmul.f32 %v4868, %v4877
        %v4880 = vadd.f32 %v4789, %v4879
        %s4881 = scalar_lea.vmem %s5, 360
        %v4882 = vld [vmem:[%s4881] sm:$0xff]
        %4883 = vrot.lane.b32.xlu0 %v789, 77
        %v4884 = vpop.permute.xlu0 %4883
        %4885 = vrot.lane.b32.xlu0 %v790, 77
        %v4886 = vpop.permute.xlu0 %4885
        %v4890 = vsel %vm792, %v4882, 0
        %4892 = vmatprep.subr.mxu0 0.0
        %4893 = vmatpush1.msra.mxu0 %v4884
        %4894 = vmatprep.subr.mxu0 0.0
        %4895 = vmatpush1.msra.mxu0 %v4886
        %4896 = vmatprep.subr.mxu0 0.0
        %4897 = vmatpush1.msra.mxu0 0.0
        %4898 = vmatprep.subr.mxu0 0.0
        %4899 = vmatpush1.msra.mxu0 0.0
        %4900 = vmatprep.subr.mxu0 0.0
        %4901 = vmatpush1.msra.mxu0 0.0
        %4902 = vmatprep.subr.mxu0 0.0
        %4903 = vmatpush1.msra.mxu0 0.0
        %4904 = vmatprep.subr.mxu0 0.0
        %4905 = vmatpush1.msra.mxu0 0.0
        %4906 = vmatprep.subr.mxu0 0.0
        %4907 = vmatpush1.msra.mxu0 0.0
        %4908 = vmatprep.subr.mxu0 0.0
        %4909 = vmatpush1.msra.mxu0 0.0
        %4910 = vmatprep.subr.mxu0 0.0
        %4911 = vmatpush1.msra.mxu0 0.0
        %4912 = vmatprep.subr.mxu0 0.0
        %4913 = vmatpush1.msra.mxu0 0.0
        %4914 = vmatprep.subr.mxu0 0.0
        %4915 = vmatpush1.msra.mxu0 0.0
        %4916 = vmatprep.subr.mxu0 0.0
        %4917 = vmatpush1.msra.mxu0 0.0
        %4918 = vmatprep.subr.mxu0 0.0
        %4919 = vmatpush1.msra.mxu0 0.0
        %4920 = vmatprep.subr.mxu0 0.0
        %4921 = vmatpush1.msra.mxu0 0.0
        %4922 = vmatprep.subr.mxu0 0.0
        %4923 = vmatpush1.msra.mxu0 0.0
        %4924 = vmatprep.subr.mxu0 0.0
        %4925 = vmatpush1.msra.mxu0 0.0
        %4926 = vmatprep.subr.mxu0 0.0
        %4927 = vmatpush1.msra.mxu0 0.0
        %4928 = vmatprep.subr.mxu0 0.0
        %4929 = vmatpush1.msra.mxu0 0.0
        %4930 = vmatprep.subr.mxu0 0.0
        %4931 = vmatpush1.msra.mxu0 0.0
        %4932 = vmatprep.subr.mxu0 0.0
        %4933 = vmatpush1.msra.mxu0 0.0
        %4934 = vmatprep.subr.mxu0 0.0
        %4935 = vmatpush1.msra.mxu0 0.0
        %4936 = vmatprep.subr.mxu0 0.0
        %4937 = vmatpush1.msra.mxu0 0.0
        %4938 = vmatprep.subr.mxu0 0.0
        %4939 = vmatpush1.msra.mxu0 0.0
        %4940 = vmatprep.subr.mxu0 0.0
        %4941 = vmatpush1.msra.mxu0 0.0
        %4942 = vmatprep.subr.mxu0 0.0
        %4943 = vmatpush1.msra.mxu0 0.0
        %4944 = vmatprep.subr.mxu0 0.0
        %4945 = vmatpush1.msra.mxu0 0.0
        %4946 = vmatprep.subr.mxu0 0.0
        %4947 = vmatpush1.msra.mxu0 0.0
        %4948 = vmatprep.subr.mxu0 0.0
        %4949 = vmatpush1.msra.mxu0 0.0
        %4950 = vmatprep.subr.mxu0 0.0
        %4951 = vmatpush1.msra.mxu0 0.0
        %4952 = vmatprep.subr.mxu0 0.0
        %4953 = vmatpush1.msra.mxu0 0.0
        %4954 = vmatprep.subr.mxu0 0.0
        %4955 = vmatpush1.msra.mxu0 0.0
        %4956 = vmatprep.mubr.f32.mxu0 0.0
        %4957 = vmatmul.mubr.f32.gmra.mrb[0].mxu0 %v4890
        %v4958 = vpop.f32.mrb[0].mxu0
        %v4959 = vadd.f32 0.0, %v4958
        %v4960 = vpop.f32.mrb[0].mxu0
        %4961 = vdwg.mxu0
        %s4962 = scalar_lea.vmem %s6, 45
        %v4963 = vld [vmem:[%s4962] sm:$0x1]
        %v4965 = vlaneseq
        %v4966 = vshrl.u32 %v4965, 7
        %v4967 = vsub.s32 0, %v4966
        %v4968 = vrot.slane %v4963, %v4967
        %v4970 = vmul.f32 %v4959, %v4968
        %v4971 = vadd.f32 %v4880, %v4970
        %s4972 = scalar_lea.vmem %s5, 368
        %v4973 = vld [vmem:[%s4972] sm:$0xff]
        %4974 = vrot.lane.b32.xlu0 %v789, 76
        %v4975 = vpop.permute.xlu0 %4974
        %4976 = vrot.lane.b32.xlu0 %v790, 76
        %v4977 = vpop.permute.xlu0 %4976
        %v4981 = vsel %vm792, %v4973, 0
        %4983 = vmatprep.subr.mxu0 0.0
        %4984 = vmatpush1.msra.mxu0 %v4975
        %4985 = vmatprep.subr.mxu0 0.0
        %4986 = vmatpush1.msra.mxu0 %v4977
        %4987 = vmatprep.subr.mxu0 0.0
        %4988 = vmatpush1.msra.mxu0 0.0
        %4989 = vmatprep.subr.mxu0 0.0
        %4990 = vmatpush1.msra.mxu0 0.0
        %4991 = vmatprep.subr.mxu0 0.0
        %4992 = vmatpush1.msra.mxu0 0.0
        %4993 = vmatprep.subr.mxu0 0.0
        %4994 = vmatpush1.msra.mxu0 0.0
        %4995 = vmatprep.subr.mxu0 0.0
        %4996 = vmatpush1.msra.mxu0 0.0
        %4997 = vmatprep.subr.mxu0 0.0
        %4998 = vmatpush1.msra.mxu0 0.0
        %4999 = vmatprep.subr.mxu0 0.0
        %5000 = vmatpush1.msra.mxu0 0.0
        %5001 = vmatprep.subr.mxu0 0.0
        %5002 = vmatpush1.msra.mxu0 0.0
        %5003 = vmatprep.subr.mxu0 0.0
        %5004 = vmatpush1.msra.mxu0 0.0
        %5005 = vmatprep.subr.mxu0 0.0
        %5006 = vmatpush1.msra.mxu0 0.0
        %5007 = vmatprep.subr.mxu0 0.0
        %5008 = vmatpush1.msra.mxu0 0.0
        %5009 = vmatprep.subr.mxu0 0.0
        %5010 = vmatpush1.msra.mxu0 0.0
        %5011 = vmatprep.subr.mxu0 0.0
        %5012 = vmatpush1.msra.mxu0 0.0
        %5013 = vmatprep.subr.mxu0 0.0
        %5014 = vmatpush1.msra.mxu0 0.0
        %5015 = vmatprep.subr.mxu0 0.0
        %5016 = vmatpush1.msra.mxu0 0.0
        %5017 = vmatprep.subr.mxu0 0.0
        %5018 = vmatpush1.msra.mxu0 0.0
        %5019 = vmatprep.subr.mxu0 0.0
        %5020 = vmatpush1.msra.mxu0 0.0
        %5021 = vmatprep.subr.mxu0 0.0
        %5022 = vmatpush1.msra.mxu0 0.0
        %5023 = vmatprep.subr.mxu0 0.0
        %5024 = vmatpush1.msra.mxu0 0.0
        %5025 = vmatprep.subr.mxu0 0.0
        %5026 = vmatpush1.msra.mxu0 0.0
        %5027 = vmatprep.subr.mxu0 0.0
        %5028 = vmatpush1.msra.mxu0 0.0
        %5029 = vmatprep.subr.mxu0 0.0
        %5030 = vmatpush1.msra.mxu0 0.0
        %5031 = vmatprep.subr.mxu0 0.0
        %5032 = vmatpush1.msra.mxu0 0.0
        %5033 = vmatprep.subr.mxu0 0.0
        %5034 = vmatpush1.msra.mxu0 0.0
        %5035 = vmatprep.subr.mxu0 0.0
        %5036 = vmatpush1.msra.mxu0 0.0
        %5037 = vmatprep.subr.mxu0 0.0
        %5038 = vmatpush1.msra.mxu0 0.0
        %5039 = vmatprep.subr.mxu0 0.0
        %5040 = vmatpush1.msra.mxu0 0.0
        %5041 = vmatprep.subr.mxu0 0.0
        %5042 = vmatpush1.msra.mxu0 0.0
        %5043 = vmatprep.subr.mxu0 0.0
        %5044 = vmatpush1.msra.mxu0 0.0
        %5045 = vmatprep.subr.mxu0 0.0
        %5046 = vmatpush1.msra.mxu0 0.0
        %5047 = vmatprep.mubr.f32.mxu0 0.0
        %5048 = vmatmul.mubr.f32.gmra.mrb[0].mxu0 %v4981
        %v5049 = vpop.f32.mrb[0].mxu0
        %v5050 = vadd.f32 0.0, %v5049
        %v5051 = vpop.f32.mrb[0].mxu0
        %5052 = vdwg.mxu0
        %s5053 = scalar_lea.vmem %s6, 46
        %v5054 = vld [vmem:[%s5053] sm:$0x1]
        %v5056 = vlaneseq
        %v5057 = vshrl.u32 %v5056, 7
        %v5058 = vsub.s32 0, %v5057
        %v5059 = vrot.slane %v5054, %v5058
        %v5061 = vmul.f32 %v5050, %v5059
        %v5062 = vadd.f32 %v4971, %v5061
        %s5063 = scalar_lea.vmem %s5, 376
        %v5064 = vld [vmem:[%s5063] sm:$0xff]
        %5065 = vrot.lane.b32.xlu0 %v789, 75
        %v5066 = vpop.permute.xlu0 %5065
        %5067 = vrot.lane.b32.xlu0 %v790, 75
        %v5068 = vpop.permute.xlu0 %5067
        %v5072 = vsel %vm792, %v5064, 0
        %5074 = vmatprep.subr.mxu0 0.0
        %5075 = vmatpush1.msra.mxu0 %v5066
        %5076 = vmatprep.subr.mxu0 0.0
        %5077 = vmatpush1.msra.mxu0 %v5068
        %5078 = vmatprep.subr.mxu0 0.0
        %5079 = vmatpush1.msra.mxu0 0.0
        %5080 = vmatprep.subr.mxu0 0.0
        %5081 = vmatpush1.msra.mxu0 0.0
        %5082 = vmatprep.subr.mxu0 0.0
        %5083 = vmatpush1.msra.mxu0 0.0
        %5084 = vmatprep.subr.mxu0 0.0
        %5085 = vmatpush1.msra.mxu0 0.0
        %5086 = vmatprep.subr.mxu0 0.0
        %5087 = vmatpush1.msra.mxu0 0.0
        %5088 = vmatprep.subr.mxu0 0.0
        %5089 = vmatpush1.msra.mxu0 0.0
        %5090 = vmatprep.subr.mxu0 0.0
        %5091 = vmatpush1.msra.mxu0 0.0
        %5092 = vmatprep.subr.mxu0 0.0
        %5093 = vmatpush1.msra.mxu0 0.0
        %5094 = vmatprep.subr.mxu0 0.0
        %5095 = vmatpush1.msra.mxu0 0.0
        %5096 = vmatprep.subr.mxu0 0.0
        %5097 = vmatpush1.msra.mxu0 0.0
        %5098 = vmatprep.subr.mxu0 0.0
        %5099 = vmatpush1.msra.mxu0 0.0
        %5100 = vmatprep.subr.mxu0 0.0
        %5101 = vmatpush1.msra.mxu0 0.0
        %5102 = vmatprep.subr.mxu0 0.0
        %5103 = vmatpush1.msra.mxu0 0.0
        %5104 = vmatprep.subr.mxu0 0.0
        %5105 = vmatpush1.msra.mxu0 0.0
        %5106 = vmatprep.subr.mxu0 0.0
        %5107 = vmatpush1.msra.mxu0 0.0
        %5108 = vmatprep.subr.mxu0 0.0
        %5109 = vmatpush1.msra.mxu0 0.0
        %5110 = vmatprep.subr.mxu0 0.0
        %5111 = vmatpush1.msra.mxu0 0.0
        %5112 = vmatprep.subr.mxu0 0.0
        %5113 = vmatpush1.msra.mxu0 0.0
        %5114 = vmatprep.subr.mxu0 0.0
        %5115 = vmatpush1.msra.mxu0 0.0
        %5116 = vmatprep.subr.mxu0 0.0
        %5117 = vmatpush1.msra.mxu0 0.0
        %5118 = vmatprep.subr.mxu0 0.0
        %5119 = vmatpush1.msra.mxu0 0.0
        %5120 = vmatprep.subr.mxu0 0.0
        %5121 = vmatpush1.msra.mxu0 0.0
        %5122 = vmatprep.subr.mxu0 0.0
        %5123 = vmatpush1.msra.mxu0 0.0
        %5124 = vmatprep.subr.mxu0 0.0
        %5125 = vmatpush1.msra.mxu0 0.0
        %5126 = vmatprep.subr.mxu0 0.0
        %5127 = vmatpush1.msra.mxu0 0.0
        %5128 = vmatprep.subr.mxu0 0.0
        %5129 = vmatpush1.msra.mxu0 0.0
        %5130 = vmatprep.subr.mxu0 0.0
        %5131 = vmatpush1.msra.mxu0 0.0
        %5132 = vmatprep.subr.mxu0 0.0
        %5133 = vmatpush1.msra.mxu0 0.0
        %5134 = vmatprep.subr.mxu0 0.0
        %5135 = vmatpush1.msra.mxu0 0.0
        %5136 = vmatprep.subr.mxu0 0.0
        %5137 = vmatpush1.msra.mxu0 0.0
        %5138 = vmatprep.mubr.f32.mxu0 0.0
        %5139 = vmatmul.mubr.f32.gmra.mrb[0].mxu0 %v5072
        %v5140 = vpop.f32.mrb[0].mxu0
        %v5141 = vadd.f32 0.0, %v5140
        %v5142 = vpop.f32.mrb[0].mxu0
        %5143 = vdwg.mxu0
        %s5144 = scalar_lea.vmem %s6, 47
        %v5145 = vld [vmem:[%s5144] sm:$0x1]
        %v5147 = vlaneseq
        %v5148 = vshrl.u32 %v5147, 7
        %v5149 = vsub.s32 0, %v5148
        %v5150 = vrot.slane %v5145, %v5149
        %v5152 = vmul.f32 %v5141, %v5150
        %v5153 = vadd.f32 %v5062, %v5152
        %s5154 = scalar_lea.vmem %s5, 384
        %v5155 = vld [vmem:[%s5154] sm:$0xff]
        %5156 = vrot.lane.b32.xlu0 %v789, 74
        %v5157 = vpop.permute.xlu0 %5156
        %5158 = vrot.lane.b32.xlu0 %v790, 74
        %v5159 = vpop.permute.xlu0 %5158
        %v5163 = vsel %vm792, %v5155, 0
        %5165 = vmatprep.subr.mxu0 0.0
        %5166 = vmatpush1.msra.mxu0 %v5157
        %5167 = vmatprep.subr.mxu0 0.0
        %5168 = vmatpush1.msra.mxu0 %v5159
        %5169 = vmatprep.subr.mxu0 0.0
        %5170 = vmatpush1.msra.mxu0 0.0
        %5171 = vmatprep.subr.mxu0 0.0
        %5172 = vmatpush1.msra.mxu0 0.0
        %5173 = vmatprep.subr.mxu0 0.0
        %5174 = vmatpush1.msra.mxu0 0.0
        %5175 = vmatprep.subr.mxu0 0.0
        %5176 = vmatpush1.msra.mxu0 0.0
        %5177 = vmatprep.subr.mxu0 0.0
        %5178 = vmatpush1.msra.mxu0 0.0
        %5179 = vmatprep.subr.mxu0 0.0
        %5180 = vmatpush1.msra.mxu0 0.0
        %5181 = vmatprep.subr.mxu0 0.0
        %5182 = vmatpush1.msra.mxu0 0.0
        %5183 = vmatprep.subr.mxu0 0.0
        %5184 = vmatpush1.msra.mxu0 0.0
        %5185 = vmatprep.subr.mxu0 0.0
        %5186 = vmatpush1.msra.mxu0 0.0
        %5187 = vmatprep.subr.mxu0 0.0
        %5188 = vmatpush1.msra.mxu0 0.0
        %5189 = vmatprep.subr.mxu0 0.0
        %5190 = vmatpush1.msra.mxu0 0.0
        %5191 = vmatprep.subr.mxu0 0.0
        %5192 = vmatpush1.msra.mxu0 0.0
        %5193 = vmatprep.subr.mxu0 0.0
        %5194 = vmatpush1.msra.mxu0 0.0
        %5195 = vmatprep.subr.mxu0 0.0
        %5196 = vmatpush1.msra.mxu0 0.0
        %5197 = vmatprep.subr.mxu0 0.0
        %5198 = vmatpush1.msra.mxu0 0.0
        %5199 = vmatprep.subr.mxu0 0.0
        %5200 = vmatpush1.msra.mxu0 0.0
        %5201 = vmatprep.subr.mxu0 0.0
        %5202 = vmatpush1.msra.mxu0 0.0
        %5203 = vmatprep.subr.mxu0 0.0
        %5204 = vmatpush1.msra.mxu0 0.0
        %5205 = vmatprep.subr.mxu0 0.0
        %5206 = vmatpush1.msra.mxu0 0.0
        %5207 = vmatprep.subr.mxu0 0.0
        %5208 = vmatpush1.msra.mxu0 0.0
        %5209 = vmatprep.subr.mxu0 0.0
        %5210 = vmatpush1.msra.mxu0 0.0
        %5211 = vmatprep.subr.mxu0 0.0
        %5212 = vmatpush1.msra.mxu0 0.0
        %5213 = vmatprep.subr.mxu0 0.0
        %5214 = vmatpush1.msra.mxu0 0.0
        %5215 = vmatprep.subr.mxu0 0.0
        %5216 = vmatpush1.msra.mxu0 0.0
        %5217 = vmatprep.subr.mxu0 0.0
        %5218 = vmatpush1.msra.mxu0 0.0
        %5219 = vmatprep.subr.mxu0 0.0
        %5220 = vmatpush1.msra.mxu0 0.0
        %5221 = vmatprep.subr.mxu0 0.0
        %5222 = vmatpush1.msra.mxu0 0.0
        %5223 = vmatprep.subr.mxu0 0.0
        %5224 = vmatpush1.msra.mxu0 0.0
        %5225 = vmatprep.subr.mxu0 0.0
        %5226 = vmatpush1.msra.mxu0 0.0
        %5227 = vmatprep.subr.mxu0 0.0
        %5228 = vmatpush1.msra.mxu0 0.0
        %5229 = vmatprep.mubr.f32.mxu0 0.0
        %5230 = vmatmul.mubr.f32.gmra.mrb[0].mxu0 %v5163
        %v5231 = vpop.f32.mrb[0].mxu0
        %v5232 = vadd.f32 0.0, %v5231
        %v5233 = vpop.f32.mrb[0].mxu0
        %5234 = vdwg.mxu0
        %s5235 = scalar_lea.vmem %s6, 48
        %v5236 = vld [vmem:[%s5235] sm:$0x1]
        %v5238 = vlaneseq
        %v5239 = vshrl.u32 %v5238, 7
        %v5240 = vsub.s32 0, %v5239
        %v5241 = vrot.slane %v5236, %v5240
        %v5243 = vmul.f32 %v5232, %v5241
        %v5244 = vadd.f32 %v5153, %v5243
        %vm5245 = vcmask 523264
        %v5246 = vsel %vm5245, %v5244, 0.0
        %5247 = vadd.xlane.f32.xlu0 %v5246
        %v5248 = vpop.xlane.xlu0 %5247
        %v5249 = vrot.slane %v5248, 4
        %v5250 = vadd.f32 %v5248, %v5249
        %v5251 = vrot.slane %v5250, 2
        %v5252 = vadd.f32 %v5250, %v5251
        %v5253 = vrot.slane %v5252, 1
        %v5254 = vadd.f32 %v5252, %v5253
        %s5255 = vtos %v5254
        %v5256 = vrcp.pop 512.0
        %s5257 = vtos %v5256
        %s5258 = smul.f32 %s5255, %s5257
        %v5259 = vstv %s5258
        %v5260 = vsub.f32 %v5244, %v5259
        %v5261 = vmul.f32 %v5260, %v5260
        %v5262 = vsel %vm5245, %v5261, 0.0
        %5263 = vadd.xlane.f32.xlu0 %v5262
        %v5264 = vpop.xlane.xlu0 %5263
        %v5265 = vrot.slane %v5264, 4
        %v5266 = vadd.f32 %v5264, %v5265
        %v5267 = vrot.slane %v5266, 2
        %v5268 = vadd.f32 %v5266, %v5267
        %v5269 = vrot.slane %v5268, 1
        %v5270 = vadd.f32 %v5268, %v5269
        %s5271 = vtos %v5270
        %v5272 = vrcp.pop 512.0
        %s5273 = vtos %v5272
        %s5274 = smul.f32 %s5271, %s5273
        %s5275 = sadd.f32 %s5274, 1e-05
        %v5276 = vstv %s5275
        %v5277 = vrsqrt.pop %v5276
        %s5278 = vtos %v5277
        %v5279 = vstv %s5278
        %v5280 = vmul.f32 %v5260, %v5279
        %v5281 = vmax.f32 %v5280, 0.0
        %v5282 = vmul.f32 %v5281, 0.5
        %v5283 = vtanh.pop %v5282
        %v5284 = vadd.f32 %v5283, 1.0
        %v5285 = vmul.f32 %v5284, 0.5
        %v5286 = vlaneseq
        %vm5287 = vcmp.ge.s32.totalorder %v5286, 0
        %vm5288 = vcmp.lt.s32.totalorder %v5286, 64
        %vm5289 = vmand %vm5287, %vm5288
        %5290 = vst.msk [vmem:[#allocation4] sm:$0x1] %vm5289, %v5285
        %v5293 = vunpack.c.l.s4 1966171168
        %v5294 = vunpack.c.0.s8 %v5293
        %v5295 = vlaneseq
        %v5296 = vshrl.u32 %v5295, 7
        %v5297 = vsub.s32 %v5294, %v5296
        %v5298 = vrot.slane %v5285, %v5297
        %v5299 = vcombine.high %v5298, %v5298
        %v5301 = vunpack.c.l.s4 1966171168
        %v5302 = vunpack.c.0.s8 %v5301
        %v5303 = vlaneseq
        %v5304 = vshrl.u32 %v5303, 7
        %v5305 = vsub.s32 %v5302, %v5304
        %v5306 = vrot.slane %v5298, %v5305
        %v5308 = vunpack.c.l.s4 1966171168
        %v5309 = vunpack.c.0.s8 %v5308
        %v5310 = vlaneseq
        %v5311 = vshrl.u32 %v5310, 7
        %v5312 = vsub.s32 %v5309, %v5311
        %v5313 = vrot.slane %v5299, %v5312
        %5314 = vrot.lane.b32.xlu0 %v5313, 64
        %v5315 = vpop.permute.xlu0 %5314
        %vm5317 = vcmp.ge.s32.totalorder %v5286, 64
        %vm5318 = vcmp.lt.s32.totalorder %v5286, 128
        %vm5319 = vmand %vm5317, %vm5318
        %5320 = vst.msk [vmem:[#allocation4] sm:$0x1] %vm5319, %v5315
        %v5321 = vcombine.high %v5306, %v5306
        %5323 = vst.msk [vmem:[#allocation4 + $0x1] sm:$0x1] %vm5289, %v5321
        %v5324 = vcombine.high %v5313, %v5313
        %5325 = vrot.lane.b32.xlu0 %v5324, 64
        %v5326 = vpop.permute.xlu0 %5325
        %5328 = vst.msk [vmem:[#allocation4 + $0x1] sm:$0x1] %vm5319, %v5326
        %v5329 = vcombine.high %v5285, %v5285
        %v5331 = vunpack.c.l.s4 1966171168
        %v5332 = vunpack.c.0.s8 %v5331
        %v5333 = vlaneseq
        %v5334 = vshrl.u32 %v5333, 7
        %v5335 = vsub.s32 %v5332, %v5334
        %v5336 = vrot.slane %v5329, %v5335
        %v5338 = vunpack.c.l.s4 1966171168
        %v5339 = vunpack.c.0.s8 %v5338
        %v5340 = vlaneseq
        %v5341 = vshrl.u32 %v5340, 7
        %v5342 = vsub.s32 %v5339, %v5341
        %v5343 = vrot.slane %v5336, %v5342
        %5345 = vst.msk [vmem:[#allocation4 + $0x2] sm:$0x1] %vm5289, %v5343
        %v5346 = vcombine.high %v5336, %v5336
        %v5348 = vunpack.c.l.s4 1966171168
        %v5349 = vunpack.c.0.s8 %v5348
        %v5350 = vlaneseq
        %v5351 = vshrl.u32 %v5350, 7
        %v5352 = vsub.s32 %v5349, %v5351
        %v5353 = vrot.slane %v5346, %v5352
        %5354 = vrot.lane.b32.xlu0 %v5353, 64
        %v5355 = vpop.permute.xlu0 %5354
        %5357 = vst.msk [vmem:[#allocation4 + $0x2] sm:$0x1] %vm5319, %v5355
        %v5358 = vcombine.high %v5343, %v5343
        %5360 = vst.msk [vmem:[#allocation4 + $0x3] sm:$0x1] %vm5289, %v5358
        %v5361 = vcombine.high %v5353, %v5353
        %5362 = vrot.lane.b32.xlu0 %v5361, 64
        %v5363 = vpop.permute.xlu0 %5362
        %5365 = vst.msk [vmem:[#allocation4 + $0x3] sm:$0x1] %vm5319, %v5363
        %v5366 = vld [vmem:[#allocation4] sm:$0xf]
        %v5368 = vlaneseq
        %v5369 = vshrl.u32 %v5368, 7
        %v5370 = vsub.s32 0, %v5369
        %v5371 = vrot.slane %v5366, %v5370
        %v5372 = vlaneseq
        %v5373 = vshrl.u32 %v5372, 7
        %v5374 = vsub.s32 1, %v5373
        %v5375 = vrot.slane %v5366, %v5374
        %v5376 = vlaneseq
        %v5377 = vshrl.u32 %v5376, 7
        %v5378 = vsub.s32 2, %v5377
        %v5379 = vrot.slane %v5366, %v5378
        %v5380 = vlaneseq
        %v5381 = vshrl.u32 %v5380, 7
        %v5382 = vsub.s32 3, %v5381
        %v5383 = vrot.slane %v5366, %v5382
        %v5388 = vmul.f32 %v620, %v5371
        %v5389 = vmul.f32 %v621, %v5375
        %v5390 = vmul.f32 %v622, %v5379
        %v5391 = vmul.f32 %v623, %v5383
        %v5392 = vmul.f32 %v624, %v5371
        %v5393 = vmul.f32 %v625, %v5375
        %v5394 = vmul.f32 %v626, %v5379
        %v5395 = vmul.f32 %v627, %v5383
        %v5396 = vmul.f32 %v628, %v5371
        %v5397 = vmul.f32 %v629, %v5375
        %v5398 = vmul.f32 %v630, %v5379
        %v5399 = vmul.f32 %v631, %v5383
        %v5400 = vmul.f32 %v632, %v5371
        %v5401 = vmul.f32 %v633, %v5375
        %v5402 = vmul.f32 %v634, %v5379
        %v5403 = vmul.f32 %v635, %v5383
        %5404 = vst [vmem:[%s271] sm:$0xff] %v5388
        %5405 = vst [vmem:[%s271 + $0x8] sm:$0xff] %v5389
        %5406 = vst [vmem:[%s271 + $0x10] sm:$0xff] %v5390
        %5407 = vst [vmem:[%s271 + $0x18] sm:$0xff] %v5391
        %5408 = vst [vmem:[%s271 + $0x20] sm:$0xff] %v5392
        %5409 = vst [vmem:[%s271 + $0x28] sm:$0xff] %v5393
        %5410 = vst [vmem:[%s271 + $0x30] sm:$0xff] %v5394
        %5411 = vst [vmem:[%s271 + $0x38] sm:$0xff] %v5395
        %5412 = vst [vmem:[%s271 + $0x40] sm:$0xff] %v5396
        %5413 = vst [vmem:[%s271 + $0x48] sm:$0xff] %v5397
        %5414 = vst [vmem:[%s271 + $0x50] sm:$0xff] %v5398
        %5415 = vst [vmem:[%s271 + $0x58] sm:$0xff] %v5399
        %5416 = vst [vmem:[%s271 + $0x60] sm:$0xff] %v5400
        %5417 = vst [vmem:[%s271 + $0x68] sm:$0xff] %v5401
        %5418 = vst [vmem:[%s271 + $0x70] sm:$0xff] %v5402
        %5419 = vst [vmem:[%s271 + $0x78] sm:$0xff] %v5403
        %s5420 = sand.u32 %s181, 1
        %s5421 = scalar_lea.sflag [#allocation6], %s5420
        %s5422 = sand.u32 %s181, 1
        %s5423 = smul.addr %s5422, 128
        %s5424 = scalar_lea.vmem [#allocation5], %s5423
        // Predicated region
        $region49: #{tpu_custom_call.1} parent=47 // pred_check
          %p5425 = pneg %p191
        $region50: #{tpu_custom_call.1} parent=47 // pred_check_branch
          %5427 = sbr.rel (%p5425) target = $region52
        $region51: #{tpu_custom_call.1} parent=47 // pred_region
          %s5429 = ssub.s32 2048, 2048
          %5430 = vsyncadd %s5421, %s5429
          %s5431 = smul.addr %s21, 16
          %s5432 = smul.addr %s5431, 128
          %s5433 = scalar_lea.hbm %s7, %s5432
          %s5434 = sshll.u32 %s5424, 4
          %s5435 = int_to_ptr.vmem [resolvable:$true] %s5434
          %5440 = dma.vmem_to_hbm [thread:$0]  %s5435, 2048, %s5433, %s5421, 512, 512, 32
        $region52: #{tpu_custom_call.1} parent=47 // pred_fallthru
          _
      $region48: #{tpu_custom_call.1} parent=5 // pred_fallthru
        _
      %p5441 = scmp.le.s32.totalorder 2, %s16
      // Predicated region
      $region53: #{tpu_custom_call.1} parent=5 // pred_check
        %p5442 = pneg %p5441
      $region54: #{tpu_custom_call.1} parent=5 // pred_check_branch
        %5444 = sbr.rel (%p5442) target = $region56
      $region55: #{tpu_custom_call.1} parent=5 // pred_region
        %s5445 = ssub.s32 %s16, 2
        // Predicated region
        $region57: #{tpu_custom_call.1} parent=55 // pred_check
          %p5446 = pneg %p197
        $region58: #{tpu_custom_call.1} parent=55 // pred_check_branch
          %5448 = sbr.rel (%p5446) target = $region60
        $region59: #{tpu_custom_call.1} parent=55 // pred_region
          %s5449 = sand.u32 %s182, 1
          %s5450 = scalar_lea.sflag [#allocation6], %s5449
          %s5451 = sand.u32 %s182, 1
          %s5452 = smul.addr %s5451, 128
          %s5453 = scalar_lea.vmem [#allocation5], %s5452
          %5454 = dma.done %s5450, 2048
        $region60: #{tpu_custom_call.1} parent=55 // pred_fallthru
          _
      $region56: #{tpu_custom_call.1} parent=5 // pred_fallthru
        _
    $region6: #{tpu_custom_call.1} parent=1 // loop_footer
      %s20 = sadd.s32 1, %s16
    $region7: #{tpu_custom_call.1} parent=1 // loop_footer_branch
      %15 = sbr.rel target = $region3
    $region8: #{tpu_custom_call.1} parent=1 // loop_exit
      _
    %5455 = vsyncpa [#allocation6], 1
    %s5456 = scalar_lea.sflag [#allocation6], 1
    %5457 = vsyncpa %s5456, 1

</llo_original>
